<compile_context>
chip_gen: v7x
topology: tpu7x:2x2x1
jax: 0.10.0
libtpu: 0.0.40
codegen_flags: <defaults>
</compile_context>

<pallas_src>
import jax
import jax.numpy as jnp
from jax.experimental import pallas as pl
from jax.experimental.pallas import tpu as pltpu


# ----------------------------------------------------------------------------
# Small helpers (in-kernel)
# ----------------------------------------------------------------------------
def _sigmoid(x):
    # tanh-form logistic: single EUP op, numerically stable for large |x|.
    return 0.5 * (jnp.tanh(0.5 * x) + 1.0)


def _bf16_dot(a, b):
    # bf16 MXU matmul with f32 accumulation (weights are stored in bf16 already).
    return jnp.dot(a.astype(jnp.bfloat16), b, preferred_element_type=jnp.float32)


def _lstm_cell(gates, c_prev, H):
    # PyTorch gate order (i, f, g, o); H is lane-aligned (multiple of 128).
    i_g = _sigmoid(gates[:, 0 * H:1 * H])
    f_g = _sigmoid(gates[:, 1 * H:2 * H])
    g_g = jnp.tanh(gates[:, 2 * H:3 * H])
    o_g = _sigmoid(gates[:, 3 * H:4 * H])
    c_new = f_g * c_prev + i_g * g_g
    h_new = o_g * jnp.tanh(c_new)
    return h_new, c_new


def _mxu_is_256_deep():
    # v6e / v7x MXUs are 256-deep; v2..v5 are 128-deep.  Perf-only gate: both recurrent-matmul
    # forms compute identical numbers, so a wrong guess never changes correctness.
    try:
        kind = jax.devices()[0].device_kind.lower()
    except Exception:
        return False
    return not any(tag in kind for tag in ("v2", "v3", "v4", "v5"))


# ----------------------------------------------------------------------------
# Single fused kernel: encoder stand-in + 3-layer bidirectional LSTM + head
#   ids    : (S*B_pad, T) int32, chunk rows ordered s-major (row = s*B_pad + b)
#   output : (B_pad, 1) f32 probability (sigmoid already applied)
# ----------------------------------------------------------------------------
def _make_kernel(S, B, H, blockdiag):
    n_rec = 1 if blockdiag else 2
    n_in = 4 + 3 * (2 + n_rec) + 9

    def kernel(*refs):
        ins = refs[:n_in]
        prob_ref = refs[n_in]
        scratch = refs[n_in + 1:]
        buf_a, buf_b = scratch[0], scratch[1]          # (S*B, 2H) f32 layer-output ping-pong
        hstate = scratch[2] if blockdiag else None     # (B, 2H) f32 packed [h_fwd | h_bwd]

        ids_ref, embed_ref, wenc_ref, benc_ref = ins[0:4]
        idx = 4
        layers = []
        for _ in range(3):
            wih = ins[idx]; idx += 1
            rec = ins[idx:idx + n_rec]; idx += n_rec
            bias = ins[idx]; idx += 1
            layers.append((wih, rec, bias))
        (wlin_ref, blin_ref, wmlp_ref, bmlp_ref,
         wd1_ref, wd2_ref, bd_ref, wout_ref, bout_ref) = ins[idx:idx + 9]

        N, T = ids_ref.shape
        V = embed_ref.shape[0]       # padded to a multiple of 128 (lane-dense)

        # ---- encoder stand-in: masked mean pool of token embeddings + linear + tanh ----------
        # masked mean == (token histogram over vocab) @ embed_table / count  (exact identity;
        # the pad-token row of `embed` is zeroed at init, so no in-kernel select is needed).
        ids = ids_ref[...]                                               # (N, T) int32
        iota_v = jax.lax.broadcasted_iota(jnp.int32, (N, V), 1)          # (N, V)
        hist = jnp.zeros((N, V), jnp.float32)
        for t in range(T):                                               # T small, fully unrolled
            hist = hist + (ids[:, t:t + 1] == iota_v).astype(jnp.float32)
        n_pad = hist[:, 1:2]                                             # count of pad tokens (id==1)
        denom = jnp.maximum(jnp.float32(T) - n_pad, 1.0)                 # attention_mask = ne(1)
        summed = _bf16_dot(hist, embed_ref[...])                         # (N, H) sum of embeddings
        pooled = summed * pl.reciprocal(denom, approx=True)
        cls = jnp.tanh(_bf16_dot(pooled, wenc_ref[...]) + benc_ref[...]) # (N, H) f32 "CLS" embeds

        # ---- 3-layer bidirectional LSTM (gate order i,f,g,o), fully fused & unrolled ---------
        in_buf = None
        for l in range(3):
            wih_ref, rec, b_ref = layers[l]
            out_buf = buf_a if (l % 2 == 0) else buf_b
            # Hoisted input projection: all timesteps + both directions in one matmul.
            x_all = cls if l == 0 else in_buf[...]                       # (S*B, Din)
            xp_all = _bf16_dot(x_all, wih_ref[...]) + b_ref[...]         # (S*B, 8H)

            c_f = jnp.zeros((B, H), jnp.float32)
            c_b = jnp.zeros((B, H), jnp.float32)
            if blockdiag:
                whh_blk = rec[0][...]                                    # (2H, 8H) block-diagonal
                hstate[...] = jnp.zeros_like(hstate)
            else:
                whh_f = rec[0][...]                                      # (H, 4H)
                whh_b = rec[1][...]                                      # (H, 4H)
                h_f = jnp.zeros((B, H), jnp.float32)
                h_b = jnp.zeros((B, H), jnp.float32)

            for t in range(S):
                rf0, rf1 = t * B, (t + 1) * B                            # forward step: time t
                tb = S - 1 - t                                           # backward step: time S-1-t
                rb0, rb1 = tb * B, (tb + 1) * B
                if blockdiag:
                    # one K=2H matmul feeds both directions (fills a 256-deep MXU)
                    g_all = _bf16_dot(hstate[...], whh_blk)              # (B, 8H)
                    g_f = xp_all[rf0:rf1, 0:4 * H] + g_all[:, 0:4 * H]
                    g_b = xp_all[rb0:rb1, 4 * H:8 * H] + g_all[:, 4 * H:8 * H]
                else:
                    g_f = xp_all[rf0:rf1, 0:4 * H] + _bf16_dot(h_f, whh_f)
                    g_b = xp_all[rb0:rb1, 4 * H:8 * H] + _bf16_dot(h_b, whh_b)
                h_f, c_f = _lstm_cell(g_f, c_f, H)
                h_b, c_b = _lstm_cell(g_b, c_b, H)
                if blockdiag:
                    hstate[:, 0:H] = h_f
                    hstate[:, H:2 * H] = h_b
                # layer output written straight into the scratch buffer (no concats)
                out_buf[rf0:rf1, 0:H] = h_f
                out_buf[rb0:rb1, H:2 * H] = h_b
            in_buf = out_buf
            # inter-layer dropout is identity in eval mode

        last = in_buf[(S - 1) * B:S * B, :]                              # outputs[:, -1, :]  (B, 2H)

        # ---- classification head ----------------------------------------------------------------
        x_lin = _bf16_dot(last, wlin_ref[...]) + blin_ref[...]           # self.linear(last)
        x_ori = bmlp_ref[...]                                            # self.linear_mlp(features)
        for s in range(S):                                               # features[:, sH:(s+1)H] == cls chunk s
            x_ori = x_ori + _bf16_dot(cls[s * B:(s + 1) * B, :],
                                      wmlp_ref[s * H:(s + 1) * H, :])
        # cat((x, x_ori), -1) @ W_dense == x @ Wd[:H] + x_ori @ Wd[H:]
        hidden = jnp.tanh(_bf16_dot(x_lin, wd1_ref[...])
                          + _bf16_dot(x_ori, wd2_ref[...]) + bd_ref[...])
        # out_proj as a VPU lane reduction (avoids a 1-wide MXU column)
        logit = jnp.sum(hidden * wout_ref[...], axis=-1, keepdims=True) + bout_ref[...]
        prob_ref[...] = _sigmoid(logit).astype(prob_ref.dtype)

    return kernel


def _fused_call(params, ids_tm, B_pad, S, H, blockdiag):
    args = [ids_tm, params["embed"], params["w_enc_t"], params["b_enc"]]
    for l in range(3):
        args.append(params[f"wih{l}"])
        if blockdiag:
            args.append(params[f"whh_blk{l}"])
        else:
            args.append(params[f"whh_f{l}"])
            args.append(params[f"whh_b{l}"])
        args.append(params[f"b{l}"])
    args += [params["w_lin_t"], params["b_lin"],
             params["w_mlp_t"], params["b_mlp"],
             params["w_dense1_t"], params["w_dense2_t"], params["b_dense"],
             params["w_out_row"], params["b_out"]]

    scratch = [pltpu.VMEM((S * B_pad, 2 * H), jnp.float32),
               pltpu.VMEM((S * B_pad, 2 * H), jnp.float32)]
    if blockdiag:
        scratch.append(pltpu.VMEM((B_pad, 2 * H), jnp.float32))

    vmem = pltpu.MemorySpace.VMEM
    return pl.pallas_call(
        _make_kernel(S, B_pad, H, blockdiag),
        out_shape=jax.ShapeDtypeStruct((B_pad, 1), jnp.float32),
        in_specs=[pl.BlockSpec(memory_space=vmem)] * len(args),
        out_specs=pl.BlockSpec(memory_space=vmem),
        scratch_shapes=scratch,
    )(*args)


# ----------------------------------------------------------------------------
# Full model forward (Model.forward)
# ----------------------------------------------------------------------------
def model_forward(params, seq_ids, labels=None):
    B, S, T = seq_ids.shape
    H = params["w_enc_t"].shape[0]

    # Pad batch to a multiple of 16 rows (full bf16 sublane/MXU M-tile) with all-pad-token chunks.
    B_pad = ((B + 15) // 16) * 16
    if B_pad != B:
        pad_rows = jnp.full((B_pad - B, S, T), 1, dtype=seq_ids.dtype)
        ids_pad = jnp.concatenate([seq_ids, pad_rows], axis=0)
    else:
        ids_pad = seq_ids

    # Time-major chunk order (row = s*B_pad + b) so the kernel needs no in-kernel transpose.
    ids_tm = jnp.transpose(ids_pad, (1, 0, 2)).reshape(S * B_pad, T)

    prob = _fused_call(params, ids_tm, B_pad, S, H, _mxu_is_256_deep())[:B]   # (B, 1), sigmoid'ed

    if labels is not None:
        y = labels.astype(jnp.float32)
        p0 = prob[:, 0]
        loss = -(jnp.log(p0 + 1e-10) * y + jnp.log(1.0 - p0 + 1e-10) * (1.0 - y)).mean()
        return loss, prob
    return prob


# ----------------------------------------------------------------------------
# Deterministic parameter initialization (shapes per the module's __init__)
# Weights stored transposed ([in, out]) and in bf16; biases in f32.
# ----------------------------------------------------------------------------
def init_params(key, H, vocab):
    keys = iter(jax.random.split(key, 64))
    bf = jnp.bfloat16

    def uni(shape, fan_in, dtype=jnp.float32):
        bound = 1.0 / (fan_in ** 0.5)
        return jax.random.uniform(next(keys), shape, jnp.float32, -bound, bound).astype(dtype)

    p = {}
    # encoder stand-in: vocab padded to a lane-dense multiple of 128; pad-token row (id==1) zeroed.
    V_pad = ((vocab + 127) // 128) * 128
    emb = 0.02 * jax.random.normal(next(keys), (vocab, H), jnp.float32)
    emb = emb.at[1].set(0.0)
    p["embed"] = jnp.zeros((V_pad, H), jnp.float32).at[:vocab].set(emb).astype(bf)
    p["w_enc_t"] = uni((H, H), H, bf)
    p["b_enc"] = uni((1, H), H)

    # LSTM(input=H, hidden=H, num_layers=3, bidirectional); fwd|bwd gate weights stacked to 8H.
    for l in range(3):
        din = H if l == 0 else 2 * H
        w_f = uni((din, 4 * H), H)
        w_b = uni((din, 4 * H), H)
        p[f"wih{l}"] = jnp.concatenate([w_f, w_b], axis=1).astype(bf)    # (din, 8H)
        whh_f = uni((H, 4 * H), H)
        whh_b = uni((H, 4 * H), H)
        p[f"whh_f{l}"] = whh_f.astype(bf)                                # (H, 4H)  128-deep path
        p[f"whh_b{l}"] = whh_b.astype(bf)                                # (H, 4H)
        blk = jnp.zeros((2 * H, 8 * H), jnp.float32)                     # block-diag 256-deep path
        blk = blk.at[:H, :4 * H].set(whh_f).at[H:, 4 * H:].set(whh_b)
        p[f"whh_blk{l}"] = blk.astype(bf)                                # (2H, 8H)
        b_f = uni((1, 4 * H), H)
        b_b = uni((1, 4 * H), H)
        p[f"b{l}"] = jnp.concatenate([b_f, b_b], axis=1)                 # (1, 8H) = b_ih + b_hh

    # head linears
    p["w_lin_t"] = uni((2 * H, H), 2 * H, bf)                            # self.linear
    p["b_lin"] = uni((1, H), 2 * H)
    p["w_mlp_t"] = uni((3 * H, H), 3 * H, bf)                            # self.linear_mlp
    p["b_mlp"] = uni((1, H), 3 * H)
    w_dense_t = uni((2 * H, H), 2 * H)                                   # self.dense (split for cat)
    p["w_dense1_t"] = w_dense_t[:H].astype(bf)
    p["w_dense2_t"] = w_dense_t[H:].astype(bf)
    p["b_dense"] = uni((1, H), 2 * H)
    p["w_out_row"] = uni((1, H), H)                                      # self.out_proj (lane-reduced)
    p["b_out"] = uni((1, 1), H)
    # NOTE: Model.linear = nn.Linear(3, 1) is unused in Model.forward; not instantiated.
    return p


# ----------------------------------------------------------------------------
if __name__ == "__main__":
    B, S, T, H, VOCAB = 2, 3, 16, 128, 64   # S=3 chunks (linear_mlp expects 3*H features)

    key = jax.random.PRNGKey(0)
    k_param, k_ids, k_pad, k_lab = jax.random.split(key, 4)

    params = init_params(k_param, H, VOCAB)

    seq_ids = jax.random.randint(k_ids, (B, S, T), 0, VOCAB, dtype=jnp.int32)
    # sprinkle some pad tokens (id == 1) so the attention mask is exercised
    pad_mask = jax.random.bernoulli(k_pad, 0.2, (B, S, T))
    seq_ids = jnp.where(pad_mask, jnp.int32(1), seq_ids)
    labels = jax.random.randint(k_lab, (B,), 0, 2).astype(jnp.float32)

    # inference path (labels is None) -> prob
    prob = model_forward(params, seq_ids)
    # training path (with labels) -> (loss, prob)
    loss, prob2 = model_forward(params, seq_ids, labels)

    jax.block_until_ready((prob, loss, prob2))

    assert prob.shape == (B, 1)
    assert prob2.shape == (B, 1)
    assert loss.shape == ()
    assert bool(jnp.all((prob >= 0.0) & (prob <= 1.0)))
    assert bool(jnp.all(jnp.isfinite(prob))) and bool(jnp.isfinite(loss))
    print("KERNEL_OK")
</pallas_src>

<mosaic_0001>
module attributes {stable_mosaic.version = 11 : i64} {
  func.func @kernel(%arg0: memref<48x16xi32, #tpu.memory_space<vmem>>, %arg1: memref<128x128xbf16, #tpu.memory_space<vmem>>, %arg2: memref<128x128xbf16, #tpu.memory_space<vmem>>, %arg3: memref<1x128xf32, #tpu.memory_space<vmem>>, %arg4: memref<128x1024xbf16, #tpu.memory_space<vmem>>, %arg5: memref<256x1024xbf16, #tpu.memory_space<vmem>>, %arg6: memref<1x1024xf32, #tpu.memory_space<vmem>>, %arg7: memref<256x1024xbf16, #tpu.memory_space<vmem>>, %arg8: memref<256x1024xbf16, #tpu.memory_space<vmem>>, %arg9: memref<1x1024xf32, #tpu.memory_space<vmem>>, %arg10: memref<256x1024xbf16, #tpu.memory_space<vmem>>, %arg11: memref<256x1024xbf16, #tpu.memory_space<vmem>>, %arg12: memref<1x1024xf32, #tpu.memory_space<vmem>>, %arg13: memref<256x128xbf16, #tpu.memory_space<vmem>>, %arg14: memref<1x128xf32, #tpu.memory_space<vmem>>, %arg15: memref<384x128xbf16, #tpu.memory_space<vmem>>, %arg16: memref<1x128xf32, #tpu.memory_space<vmem>>, %arg17: memref<128x128xbf16, #tpu.memory_space<vmem>>, %arg18: memref<128x128xbf16, #tpu.memory_space<vmem>>, %arg19: memref<1x128xf32, #tpu.memory_space<vmem>>, %arg20: memref<1x128xf32, #tpu.memory_space<vmem>>, %arg21: memref<1x1xf32, #tpu.memory_space<vmem>>, %arg22: memref<16x1xf32, #tpu.memory_space<vmem>>, %arg23: memref<48x256xf32, #tpu.memory_space<vmem>>, %arg24: memref<48x256xf32, #tpu.memory_space<vmem>>, %arg25: memref<16x256xf32, #tpu.memory_space<vmem>>) attributes {dimension_semantics = [], scalar_prefetch = 0 : i64, scratch_operands = 3 : i64, tpu.core_type = #tpu.core_type<tc>} {
    %c0 = arith.constant 0 : index
    %c0_0 = arith.constant 0 : index
    %0 = vector.load %arg0[%c0, %c0_0] : memref<48x16xi32, #tpu.memory_space<vmem>>, vector<48x16xi32>
    %1 = tpu.iota {dimensions = array<i32: 1>} : vector<48x128xi32>
    %cst = arith.constant 0.000000e+00 : f32
    %2 = vector.broadcast %cst : f32 to vector<48x128xf32>
    %3 = vector.extract_strided_slice %0 {offsets = [0, 0], sizes = [48, 1], strides = [1, 1]} : vector<48x16xi32> to vector<48x1xi32>
    %4 = vector.broadcast %3 : vector<48x1xi32> to vector<48x128xi32>
    %5 = arith.cmpi eq, %4, %1 : vector<48x128xi32>
    %6 = arith.extui %5 : vector<48x128xi1> to vector<48x128xi32>
    %7 = arith.sitofp %6 : vector<48x128xi32> to vector<48x128xf32>
    %8 = arith.addf %2, %7 : vector<48x128xf32>
    %9 = vector.extract_strided_slice %0 {offsets = [0, 1], sizes = [48, 1], strides = [1, 1]} : vector<48x16xi32> to vector<48x1xi32>
    %10 = vector.broadcast %9 : vector<48x1xi32> to vector<48x128xi32>
    %11 = arith.cmpi eq, %10, %1 : vector<48x128xi32>
    %12 = arith.extui %11 : vector<48x128xi1> to vector<48x128xi32>
    %13 = arith.sitofp %12 : vector<48x128xi32> to vector<48x128xf32>
    %14 = arith.addf %8, %13 : vector<48x128xf32>
    %15 = vector.extract_strided_slice %0 {offsets = [0, 2], sizes = [48, 1], strides = [1, 1]} : vector<48x16xi32> to vector<48x1xi32>
    %16 = vector.broadcast %15 : vector<48x1xi32> to vector<48x128xi32>
    %17 = arith.cmpi eq, %16, %1 : vector<48x128xi32>
    %18 = arith.extui %17 : vector<48x128xi1> to vector<48x128xi32>
    %19 = arith.sitofp %18 : vector<48x128xi32> to vector<48x128xf32>
    %20 = arith.addf %14, %19 : vector<48x128xf32>
    %21 = vector.extract_strided_slice %0 {offsets = [0, 3], sizes = [48, 1], strides = [1, 1]} : vector<48x16xi32> to vector<48x1xi32>
    %22 = vector.broadcast %21 : vector<48x1xi32> to vector<48x128xi32>
    %23 = arith.cmpi eq, %22, %1 : vector<48x128xi32>
    %24 = arith.extui %23 : vector<48x128xi1> to vector<48x128xi32>
    %25 = arith.sitofp %24 : vector<48x128xi32> to vector<48x128xf32>
    %26 = arith.addf %20, %25 : vector<48x128xf32>
    %27 = vector.extract_strided_slice %0 {offsets = [0, 4], sizes = [48, 1], strides = [1, 1]} : vector<48x16xi32> to vector<48x1xi32>
    %28 = vector.broadcast %27 : vector<48x1xi32> to vector<48x128xi32>
    %29 = arith.cmpi eq, %28, %1 : vector<48x128xi32>
    %30 = arith.extui %29 : vector<48x128xi1> to vector<48x128xi32>
    %31 = arith.sitofp %30 : vector<48x128xi32> to vector<48x128xf32>
    %32 = arith.addf %26, %31 : vector<48x128xf32>
    %33 = vector.extract_strided_slice %0 {offsets = [0, 5], sizes = [48, 1], strides = [1, 1]} : vector<48x16xi32> to vector<48x1xi32>
    %34 = vector.broadcast %33 : vector<48x1xi32> to vector<48x128xi32>
    %35 = arith.cmpi eq, %34, %1 : vector<48x128xi32>
    %36 = arith.extui %35 : vector<48x128xi1> to vector<48x128xi32>
    %37 = arith.sitofp %36 : vector<48x128xi32> to vector<48x128xf32>
    %38 = arith.addf %32, %37 : vector<48x128xf32>
    %39 = vector.extract_strided_slice %0 {offsets = [0, 6], sizes = [48, 1], strides = [1, 1]} : vector<48x16xi32> to vector<48x1xi32>
    %40 = vector.broadcast %39 : vector<48x1xi32> to vector<48x128xi32>
    %41 = arith.cmpi eq, %40, %1 : vector<48x128xi32>
    %42 = arith.extui %41 : vector<48x128xi1> to vector<48x128xi32>
    %43 = arith.sitofp %42 : vector<48x128xi32> to vector<48x128xf32>
    %44 = arith.addf %38, %43 : vector<48x128xf32>
    %45 = vector.extract_strided_slice %0 {offsets = [0, 7], sizes = [48, 1], strides = [1, 1]} : vector<48x16xi32> to vector<48x1xi32>
    %46 = vector.broadcast %45 : vector<48x1xi32> to vector<48x128xi32>
    %47 = arith.cmpi eq, %46, %1 : vector<48x128xi32>
    %48 = arith.extui %47 : vector<48x128xi1> to vector<48x128xi32>
    %49 = arith.sitofp %48 : vector<48x128xi32> to vector<48x128xf32>
    %50 = arith.addf %44, %49 : vector<48x128xf32>
    %51 = vector.extract_strided_slice %0 {offsets = [0, 8], sizes = [48, 1], strides = [1, 1]} : vector<48x16xi32> to vector<48x1xi32>
    %52 = vector.broadcast %51 : vector<48x1xi32> to vector<48x128xi32>
    %53 = arith.cmpi eq, %52, %1 : vector<48x128xi32>
    %54 = arith.extui %53 : vector<48x128xi1> to vector<48x128xi32>
    %55 = arith.sitofp %54 : vector<48x128xi32> to vector<48x128xf32>
    %56 = arith.addf %50, %55 : vector<48x128xf32>
    %57 = vector.extract_strided_slice %0 {offsets = [0, 9], sizes = [48, 1], strides = [1, 1]} : vector<48x16xi32> to vector<48x1xi32>
    %58 = vector.broadcast %57 : vector<48x1xi32> to vector<48x128xi32>
    %59 = arith.cmpi eq, %58, %1 : vector<48x128xi32>
    %60 = arith.extui %59 : vector<48x128xi1> to vector<48x128xi32>
    %61 = arith.sitofp %60 : vector<48x128xi32> to vector<48x128xf32>
    %62 = arith.addf %56, %61 : vector<48x128xf32>
    %63 = vector.extract_strided_slice %0 {offsets = [0, 10], sizes = [48, 1], strides = [1, 1]} : vector<48x16xi32> to vector<48x1xi32>
    %64 = vector.broadcast %63 : vector<48x1xi32> to vector<48x128xi32>
    %65 = arith.cmpi eq, %64, %1 : vector<48x128xi32>
    %66 = arith.extui %65 : vector<48x128xi1> to vector<48x128xi32>
    %67 = arith.sitofp %66 : vector<48x128xi32> to vector<48x128xf32>
    %68 = arith.addf %62, %67 : vector<48x128xf32>
    %69 = vector.extract_strided_slice %0 {offsets = [0, 11], sizes = [48, 1], strides = [1, 1]} : vector<48x16xi32> to vector<48x1xi32>
    %70 = vector.broadcast %69 : vector<48x1xi32> to vector<48x128xi32>
    %71 = arith.cmpi eq, %70, %1 : vector<48x128xi32>
    %72 = arith.extui %71 : vector<48x128xi1> to vector<48x128xi32>
    %73 = arith.sitofp %72 : vector<48x128xi32> to vector<48x128xf32>
    %74 = arith.addf %68, %73 : vector<48x128xf32>
    %75 = vector.extract_strided_slice %0 {offsets = [0, 12], sizes = [48, 1], strides = [1, 1]} : vector<48x16xi32> to vector<48x1xi32>
    %76 = vector.broadcast %75 : vector<48x1xi32> to vector<48x128xi32>
    %77 = arith.cmpi eq, %76, %1 : vector<48x128xi32>
    %78 = arith.extui %77 : vector<48x128xi1> to vector<48x128xi32>
    %79 = arith.sitofp %78 : vector<48x128xi32> to vector<48x128xf32>
    %80 = arith.addf %74, %79 : vector<48x128xf32>
    %81 = vector.extract_strided_slice %0 {offsets = [0, 13], sizes = [48, 1], strides = [1, 1]} : vector<48x16xi32> to vector<48x1xi32>
    %82 = vector.broadcast %81 : vector<48x1xi32> to vector<48x128xi32>
    %83 = arith.cmpi eq, %82, %1 : vector<48x128xi32>
    %84 = arith.extui %83 : vector<48x128xi1> to vector<48x128xi32>
    %85 = arith.sitofp %84 : vector<48x128xi32> to vector<48x128xf32>
    %86 = arith.addf %80, %85 : vector<48x128xf32>
    %87 = vector.extract_strided_slice %0 {offsets = [0, 14], sizes = [48, 1], strides = [1, 1]} : vector<48x16xi32> to vector<48x1xi32>
    %88 = vector.broadcast %87 : vector<48x1xi32> to vector<48x128xi32>
    %89 = arith.cmpi eq, %88, %1 : vector<48x128xi32>
    %90 = arith.extui %89 : vector<48x128xi1> to vector<48x128xi32>
    %91 = arith.sitofp %90 : vector<48x128xi32> to vector<48x128xf32>
    %92 = arith.addf %86, %91 : vector<48x128xf32>
    %93 = vector.extract_strided_slice %0 {offsets = [0, 15], sizes = [48, 1], strides = [1, 1]} : vector<48x16xi32> to vector<48x1xi32>
    %94 = vector.broadcast %93 : vector<48x1xi32> to vector<48x128xi32>
    %95 = arith.cmpi eq, %94, %1 : vector<48x128xi32>
    %96 = arith.extui %95 : vector<48x128xi1> to vector<48x128xi32>
    %97 = arith.sitofp %96 : vector<48x128xi32> to vector<48x128xf32>
    %98 = arith.addf %92, %97 : vector<48x128xf32>
    %99 = vector.extract_strided_slice %98 {offsets = [0, 1], sizes = [48, 1], strides = [1, 1]} : vector<48x128xf32> to vector<48x1xf32>
    %cst_1 = arith.constant 1.600000e+01 : f32
    %100 = vector.broadcast %cst_1 : f32 to vector<48x1xf32>
    %101 = arith.subf %100, %99 : vector<48x1xf32>
    %cst_2 = arith.constant 1.000000e+00 : f32
    %102 = vector.broadcast %cst_2 : f32 to vector<48x1xf32>
    %103 = arith.maximumf %101, %102 : vector<48x1xf32>
    %c0_3 = arith.constant 0 : index
    %c0_4 = arith.constant 0 : index
    %104 = vector.load %arg1[%c0_3, %c0_4] : memref<128x128xbf16, #tpu.memory_space<vmem>>, vector<128x128xbf16>
    %105 = arith.truncf %98 : vector<48x128xf32> to vector<48x128xbf16>
    %cst_5 = arith.constant dense<0.000000e+00> : vector<48x128xf32>
    %106 = tpu.matmul %105, %104, %cst_5 {dimension_numbers = #tpu.dot_dimension_numbers<[1], [0], [0], [1], [0, 0, 1, 1], [], []>} : vector<48x128xbf16>, vector<128x128xbf16>, vector<48x128xf32> -> vector<48x128xf32>
    %107 = tpu.reciprocal %103 {approx = true} : vector<48x1xf32> -> vector<48x1xf32>
    %108 = vector.broadcast %107 : vector<48x1xf32> to vector<48x128xf32>
    %109 = arith.mulf %106, %108 : vector<48x128xf32>
    %c0_6 = arith.constant 0 : index
    %c0_7 = arith.constant 0 : index
    %110 = vector.load %arg2[%c0_6, %c0_7] : memref<128x128xbf16, #tpu.memory_space<vmem>>, vector<128x128xbf16>
    %111 = arith.truncf %109 : vector<48x128xf32> to vector<48x128xbf16>
    %cst_8 = arith.constant dense<0.000000e+00> : vector<48x128xf32>
    %112 = tpu.matmul %111, %110, %cst_8 {dimension_numbers = #tpu.dot_dimension_numbers<[1], [0], [0], [1], [0, 0, 1, 1], [], []>} : vector<48x128xbf16>, vector<128x128xbf16>, vector<48x128xf32> -> vector<48x128xf32>
    %c0_9 = arith.constant 0 : index
    %c0_10 = arith.constant 0 : index
    %113 = vector.load %arg3[%c0_9, %c0_10] : memref<1x128xf32, #tpu.memory_space<vmem>>, vector<1x128xf32>
    %114 = vector.broadcast %113 : vector<1x128xf32> to vector<48x128xf32>
    %115 = arith.addf %112, %114 : vector<48x128xf32>
    %116 = math.tanh %115 : vector<48x128xf32>
    %c0_11 = arith.constant 0 : index
    %c0_12 = arith.constant 0 : index
    %117 = vector.load %arg4[%c0_11, %c0_12] : memref<128x1024xbf16, #tpu.memory_space<vmem>>, vector<128x1024xbf16>
    %118 = arith.truncf %116 : vector<48x128xf32> to vector<48x128xbf16>
    %cst_13 = arith.constant dense<0.000000e+00> : vector<48x1024xf32>
    %119 = tpu.matmul %118, %117, %cst_13 {dimension_numbers = #tpu.dot_dimension_numbers<[1], [0], [0], [1], [0, 0, 1, 1], [], []>} : vector<48x128xbf16>, vector<128x1024xbf16>, vector<48x1024xf32> -> vector<48x1024xf32>
    %c0_14 = arith.constant 0 : index
    %c0_15 = arith.constant 0 : index
    %120 = vector.load %arg6[%c0_14, %c0_15] : memref<1x1024xf32, #tpu.memory_space<vmem>>, vector<1x1024xf32>
    %121 = vector.broadcast %120 : vector<1x1024xf32> to vector<48x1024xf32>
    %122 = arith.addf %119, %121 : vector<48x1024xf32>
    %cst_16 = arith.constant 0.000000e+00 : f32
    %123 = vector.broadcast %cst_16 : f32 to vector<16x128xf32>
    %cst_17 = arith.constant 0.000000e+00 : f32
    %124 = vector.broadcast %cst_17 : f32 to vector<16x128xf32>
    %c0_18 = arith.constant 0 : index
    %c0_19 = arith.constant 0 : index
    %125 = vector.load %arg5[%c0_18, %c0_19] : memref<256x1024xbf16, #tpu.memory_space<vmem>>, vector<256x1024xbf16>
    %cst_20 = arith.constant 0.000000e+00 : f32
    %126 = vector.broadcast %cst_20 : f32 to vector<16x256xf32>
    %c0_21 = arith.constant 0 : index
    %c0_22 = arith.constant 0 : index
    %127 = vector.load %arg25[%c0_21, %c0_22] : memref<16x256xf32, #tpu.memory_space<vmem>>, vector<16x256xf32>
    tpu.vector_store %arg25[%c0_21, %c0_22], %126 {strides = array<i32>} : memref<16x256xf32, #tpu.memory_space<vmem>>, vector<16x256xf32>,
    %c0_23 = arith.constant 0 : index
    %c0_24 = arith.constant 0 : index
    %128 = vector.load %arg25[%c0_23, %c0_24] : memref<16x256xf32, #tpu.memory_space<vmem>>, vector<16x256xf32>
    %129 = arith.truncf %128 : vector<16x256xf32> to vector<16x256xbf16>
    %cst_25 = arith.constant dense<0.000000e+00> : vector<16x1024xf32>
    %130 = tpu.matmul %129, %125, %cst_25 {dimension_numbers = #tpu.dot_dimension_numbers<[1], [0], [0], [1], [0, 0, 1, 1], [], []>} : vector<16x256xbf16>, vector<256x1024xbf16>, vector<16x1024xf32> -> vector<16x1024xf32>
    %131 = vector.extract_strided_slice %122 {offsets = [0, 0], sizes = [16, 512], strides = [1, 1]} : vector<48x1024xf32> to vector<16x512xf32>
    %132 = vector.extract_strided_slice %130 {offsets = [0, 0], sizes = [16, 512], strides = [1, 1]} : vector<16x1024xf32> to vector<16x512xf32>
    %133 = arith.addf %131, %132 : vector<16x512xf32>
    %134 = vector.extract_strided_slice %122 {offsets = [32, 512], sizes = [16, 512], strides = [1, 1]} : vector<48x1024xf32> to vector<16x512xf32>
    %135 = vector.extract_strided_slice %130 {offsets = [0, 512], sizes = [16, 512], strides = [1, 1]} : vector<16x1024xf32> to vector<16x512xf32>
    %136 = arith.addf %134, %135 : vector<16x512xf32>
    %137 = vector.extract_strided_slice %133 {offsets = [0, 0], sizes = [16, 128], strides = [1, 1]} : vector<16x512xf32> to vector<16x128xf32>
    %cst_26 = arith.constant 5.000000e-01 : f32
    %138 = vector.broadcast %cst_26 : f32 to vector<16x128xf32>
    %139 = arith.mulf %138, %137 : vector<16x128xf32>
    %140 = math.tanh %139 : vector<16x128xf32>
    %cst_27 = arith.constant 1.000000e+00 : f32
    %141 = vector.broadcast %cst_27 : f32 to vector<16x128xf32>
    %142 = arith.addf %140, %141 : vector<16x128xf32>
    %cst_28 = arith.constant 5.000000e-01 : f32
    %143 = vector.broadcast %cst_28 : f32 to vector<16x128xf32>
    %144 = arith.mulf %143, %142 : vector<16x128xf32>
    %145 = vector.extract_strided_slice %133 {offsets = [0, 128], sizes = [16, 128], strides = [1, 1]} : vector<16x512xf32> to vector<16x128xf32>
    %cst_29 = arith.constant 5.000000e-01 : f32
    %146 = vector.broadcast %cst_29 : f32 to vector<16x128xf32>
    %147 = arith.mulf %146, %145 : vector<16x128xf32>
    %148 = math.tanh %147 : vector<16x128xf32>
    %cst_30 = arith.constant 1.000000e+00 : f32
    %149 = vector.broadcast %cst_30 : f32 to vector<16x128xf32>
    %150 = arith.addf %148, %149 : vector<16x128xf32>
    %cst_31 = arith.constant 5.000000e-01 : f32
    %151 = vector.broadcast %cst_31 : f32 to vector<16x128xf32>
    %152 = arith.mulf %151, %150 : vector<16x128xf32>
    %153 = vector.extract_strided_slice %133 {offsets = [0, 256], sizes = [16, 128], strides = [1, 1]} : vector<16x512xf32> to vector<16x128xf32>
    %154 = math.tanh %153 : vector<16x128xf32>
    %155 = vector.extract_strided_slice %133 {offsets = [0, 384], sizes = [16, 128], strides = [1, 1]} : vector<16x512xf32> to vector<16x128xf32>
    %cst_32 = arith.constant 5.000000e-01 : f32
    %156 = vector.broadcast %cst_32 : f32 to vector<16x128xf32>
    %157 = arith.mulf %156, %155 : vector<16x128xf32>
    %158 = math.tanh %157 : vector<16x128xf32>
    %cst_33 = arith.constant 1.000000e+00 : f32
    %159 = vector.broadcast %cst_33 : f32 to vector<16x128xf32>
    %160 = arith.addf %158, %159 : vector<16x128xf32>
    %cst_34 = arith.constant 5.000000e-01 : f32
    %161 = vector.broadcast %cst_34 : f32 to vector<16x128xf32>
    %162 = arith.mulf %161, %160 : vector<16x128xf32>
    %163 = arith.mulf %152, %123 : vector<16x128xf32>
    %164 = arith.mulf %144, %154 : vector<16x128xf32>
    %165 = arith.addf %163, %164 : vector<16x128xf32>
    %166 = math.tanh %165 : vector<16x128xf32>
    %167 = arith.mulf %162, %166 : vector<16x128xf32>
    %168 = vector.extract_strided_slice %136 {offsets = [0, 0], sizes = [16, 128], strides = [1, 1]} : vector<16x512xf32> to vector<16x128xf32>
    %cst_35 = arith.constant 5.000000e-01 : f32
    %169 = vector.broadcast %cst_35 : f32 to vector<16x128xf32>
    %170 = arith.mulf %169, %168 : vector<16x128xf32>
    %171 = math.tanh %170 : vector<16x128xf32>
    %cst_36 = arith.constant 1.000000e+00 : f32
    %172 = vector.broadcast %cst_36 : f32 to vector<16x128xf32>
    %173 = arith.addf %171, %172 : vector<16x128xf32>
    %cst_37 = arith.constant 5.000000e-01 : f32
    %174 = vector.broadcast %cst_37 : f32 to vector<16x128xf32>
    %175 = arith.mulf %174, %173 : vector<16x128xf32>
    %176 = vector.extract_strided_slice %136 {offsets = [0, 128], sizes = [16, 128], strides = [1, 1]} : vector<16x512xf32> to vector<16x128xf32>
    %cst_38 = arith.constant 5.000000e-01 : f32
    %177 = vector.broadcast %cst_38 : f32 to vector<16x128xf32>
    %178 = arith.mulf %177, %176 : vector<16x128xf32>
    %179 = math.tanh %178 : vector<16x128xf32>
    %cst_39 = arith.constant 1.000000e+00 : f32
    %180 = vector.broadcast %cst_39 : f32 to vector<16x128xf32>
    %181 = arith.addf %179, %180 : vector<16x128xf32>
    %cst_40 = arith.constant 5.000000e-01 : f32
    %182 = vector.broadcast %cst_40 : f32 to vector<16x128xf32>
    %183 = arith.mulf %182, %181 : vector<16x128xf32>
    %184 = vector.extract_strided_slice %136 {offsets = [0, 256], sizes = [16, 128], strides = [1, 1]} : vector<16x512xf32> to vector<16x128xf32>
    %185 = math.tanh %184 : vector<16x128xf32>
    %186 = vector.extract_strided_slice %136 {offsets = [0, 384], sizes = [16, 128], strides = [1, 1]} : vector<16x512xf32> to vector<16x128xf32>
    %cst_41 = arith.constant 5.000000e-01 : f32
    %187 = vector.broadcast %cst_41 : f32 to vector<16x128xf32>
    %188 = arith.mulf %187, %186 : vector<16x128xf32>
    %189 = math.tanh %188 : vector<16x128xf32>
    %cst_42 = arith.constant 1.000000e+00 : f32
    %190 = vector.broadcast %cst_42 : f32 to vector<16x128xf32>
    %191 = arith.addf %189, %190 : vector<16x128xf32>
    %cst_43 = arith.constant 5.000000e-01 : f32
    %192 = vector.broadcast %cst_43 : f32 to vector<16x128xf32>
    %193 = arith.mulf %192, %191 : vector<16x128xf32>
    %194 = arith.mulf %183, %124 : vector<16x128xf32>
    %195 = arith.mulf %175, %185 : vector<16x128xf32>
    %196 = arith.addf %194, %195 : vector<16x128xf32>
    %197 = math.tanh %196 : vector<16x128xf32>
    %198 = arith.mulf %193, %197 : vector<16x128xf32>
    %c0_44 = arith.constant 0 : index
    %c0_45 = arith.constant 0 : index
    %199 = vector.load %arg25[%c0_44, %c0_45] : memref<16x256xf32, #tpu.memory_space<vmem>>, vector<16x128xf32>
    tpu.vector_store %arg25[%c0_44, %c0_45], %167 {strides = array<i32>} : memref<16x256xf32, #tpu.memory_space<vmem>>, vector<16x128xf32>,
    %c0_46 = arith.constant 0 : index
    %c128 = arith.constant 128 : index
    %200 = vector.load %arg25[%c0_46, %c128] : memref<16x256xf32, #tpu.memory_space<vmem>>, vector<16x128xf32>
    tpu.vector_store %arg25[%c0_46, %c128], %198 {strides = array<i32>} : memref<16x256xf32, #tpu.memory_space<vmem>>, vector<16x128xf32>,
    %c0_47 = arith.constant 0 : index
    %c0_48 = arith.constant 0 : index
    %201 = vector.load %arg23[%c0_47, %c0_48] : memref<48x256xf32, #tpu.memory_space<vmem>>, vector<16x128xf32>
    tpu.vector_store %arg23[%c0_47, %c0_48], %167 {strides = array<i32>} : memref<48x256xf32, #tpu.memory_space<vmem>>, vector<16x128xf32>,
    %c32 = arith.constant 32 : index
    %c128_49 = arith.constant 128 : index
    %202 = vector.load %arg23[%c32, %c128_49] : memref<48x256xf32, #tpu.memory_space<vmem>>, vector<16x128xf32>
    tpu.vector_store %arg23[%c32, %c128_49], %198 {strides = array<i32>} : memref<48x256xf32, #tpu.memory_space<vmem>>, vector<16x128xf32>,
    %c0_50 = arith.constant 0 : index
    %c0_51 = arith.constant 0 : index
    %203 = vector.load %arg25[%c0_50, %c0_51] : memref<16x256xf32, #tpu.memory_space<vmem>>, vector<16x256xf32>
    %204 = arith.truncf %203 : vector<16x256xf32> to vector<16x256xbf16>
    %cst_52 = arith.constant dense<0.000000e+00> : vector<16x1024xf32>
    %205 = tpu.matmul %204, %125, %cst_52 {dimension_numbers = #tpu.dot_dimension_numbers<[1], [0], [0], [1], [0, 0, 1, 1], [], []>} : vector<16x256xbf16>, vector<256x1024xbf16>, vector<16x1024xf32> -> vector<16x1024xf32>
    %206 = vector.extract_strided_slice %122 {offsets = [16, 0], sizes = [16, 512], strides = [1, 1]} : vector<48x1024xf32> to vector<16x512xf32>
    %207 = vector.extract_strided_slice %205 {offsets = [0, 0], sizes = [16, 512], strides = [1, 1]} : vector<16x1024xf32> to vector<16x512xf32>
    %208 = arith.addf %206, %207 : vector<16x512xf32>
    %209 = vector.extract_strided_slice %122 {offsets = [16, 512], sizes = [16, 512], strides = [1, 1]} : vector<48x1024xf32> to vector<16x512xf32>
    %210 = vector.extract_strided_slice %205 {offsets = [0, 512], sizes = [16, 512], strides = [1, 1]} : vector<16x1024xf32> to vector<16x512xf32>
    %211 = arith.addf %209, %210 : vector<16x512xf32>
    %212 = vector.extract_strided_slice %208 {offsets = [0, 0], sizes = [16, 128], strides = [1, 1]} : vector<16x512xf32> to vector<16x128xf32>
    %cst_53 = arith.constant 5.000000e-01 : f32
    %213 = vector.broadcast %cst_53 : f32 to vector<16x128xf32>
    %214 = arith.mulf %213, %212 : vector<16x128xf32>
    %215 = math.tanh %214 : vector<16x128xf32>
    %cst_54 = arith.constant 1.000000e+00 : f32
    %216 = vector.broadcast %cst_54 : f32 to vector<16x128xf32>
    %217 = arith.addf %215, %216 : vector<16x128xf32>
    %cst_55 = arith.constant 5.000000e-01 : f32
    %218 = vector.broadcast %cst_55 : f32 to vector<16x128xf32>
    %219 = arith.mulf %218, %217 : vector<16x128xf32>
    %220 = vector.extract_strided_slice %208 {offsets = [0, 128], sizes = [16, 128], strides = [1, 1]} : vector<16x512xf32> to vector<16x128xf32>
    %cst_56 = arith.constant 5.000000e-01 : f32
    %221 = vector.broadcast %cst_56 : f32 to vector<16x128xf32>
    %222 = arith.mulf %221, %220 : vector<16x128xf32>
    %223 = math.tanh %222 : vector<16x128xf32>
    %cst_57 = arith.constant 1.000000e+00 : f32
    %224 = vector.broadcast %cst_57 : f32 to vector<16x128xf32>
    %225 = arith.addf %223, %224 : vector<16x128xf32>
    %cst_58 = arith.constant 5.000000e-01 : f32
    %226 = vector.broadcast %cst_58 : f32 to vector<16x128xf32>
    %227 = arith.mulf %226, %225 : vector<16x128xf32>
    %228 = vector.extract_strided_slice %208 {offsets = [0, 256], sizes = [16, 128], strides = [1, 1]} : vector<16x512xf32> to vector<16x128xf32>
    %229 = math.tanh %228 : vector<16x128xf32>
    %230 = vector.extract_strided_slice %208 {offsets = [0, 384], sizes = [16, 128], strides = [1, 1]} : vector<16x512xf32> to vector<16x128xf32>
    %cst_59 = arith.constant 5.000000e-01 : f32
    %231 = vector.broadcast %cst_59 : f32 to vector<16x128xf32>
    %232 = arith.mulf %231, %230 : vector<16x128xf32>
    %233 = math.tanh %232 : vector<16x128xf32>
    %cst_60 = arith.constant 1.000000e+00 : f32
    %234 = vector.broadcast %cst_60 : f32 to vector<16x128xf32>
    %235 = arith.addf %233, %234 : vector<16x128xf32>
    %cst_61 = arith.constant 5.000000e-01 : f32
    %236 = vector.broadcast %cst_61 : f32 to vector<16x128xf32>
    %237 = arith.mulf %236, %235 : vector<16x128xf32>
    %238 = arith.mulf %227, %165 : vector<16x128xf32>
    %239 = arith.mulf %219, %229 : vector<16x128xf32>
    %240 = arith.addf %238, %239 : vector<16x128xf32>
    %241 = math.tanh %240 : vector<16x128xf32>
    %242 = arith.mulf %237, %241 : vector<16x128xf32>
    %243 = vector.extract_strided_slice %211 {offsets = [0, 0], sizes = [16, 128], strides = [1, 1]} : vector<16x512xf32> to vector<16x128xf32>
    %cst_62 = arith.constant 5.000000e-01 : f32
    %244 = vector.broadcast %cst_62 : f32 to vector<16x128xf32>
    %245 = arith.mulf %244, %243 : vector<16x128xf32>
    %246 = math.tanh %245 : vector<16x128xf32>
    %cst_63 = arith.constant 1.000000e+00 : f32
    %247 = vector.broadcast %cst_63 : f32 to vector<16x128xf32>
    %248 = arith.addf %246, %247 : vector<16x128xf32>
    %cst_64 = arith.constant 5.000000e-01 : f32
    %249 = vector.broadcast %cst_64 : f32 to vector<16x128xf32>
    %250 = arith.mulf %249, %248 : vector<16x128xf32>
    %251 = vector.extract_strided_slice %211 {offsets = [0, 128], sizes = [16, 128], strides = [1, 1]} : vector<16x512xf32> to vector<16x128xf32>
    %cst_65 = arith.constant 5.000000e-01 : f32
    %252 = vector.broadcast %cst_65 : f32 to vector<16x128xf32>
    %253 = arith.mulf %252, %251 : vector<16x128xf32>
    %254 = math.tanh %253 : vector<16x128xf32>
    %cst_66 = arith.constant 1.000000e+00 : f32
    %255 = vector.broadcast %cst_66 : f32 to vector<16x128xf32>
    %256 = arith.addf %254, %255 : vector<16x128xf32>
    %cst_67 = arith.constant 5.000000e-01 : f32
    %257 = vector.broadcast %cst_67 : f32 to vector<16x128xf32>
    %258 = arith.mulf %257, %256 : vector<16x128xf32>
    %259 = vector.extract_strided_slice %211 {offsets = [0, 256], sizes = [16, 128], strides = [1, 1]} : vector<16x512xf32> to vector<16x128xf32>
    %260 = math.tanh %259 : vector<16x128xf32>
    %261 = vector.extract_strided_slice %211 {offsets = [0, 384], sizes = [16, 128], strides = [1, 1]} : vector<16x512xf32> to vector<16x128xf32>
    %cst_68 = arith.constant 5.000000e-01 : f32
    %262 = vector.broadcast %cst_68 : f32 to vector<16x128xf32>
    %263 = arith.mulf %262, %261 : vector<16x128xf32>
    %264 = math.tanh %263 : vector<16x128xf32>
    %cst_69 = arith.constant 1.000000e+00 : f32
    %265 = vector.broadcast %cst_69 : f32 to vector<16x128xf32>
    %266 = arith.addf %264, %265 : vector<16x128xf32>
    %cst_70 = arith.constant 5.000000e-01 : f32
    %267 = vector.broadcast %cst_70 : f32 to vector<16x128xf32>
    %268 = arith.mulf %267, %266 : vector<16x128xf32>
    %269 = arith.mulf %258, %196 : vector<16x128xf32>
    %270 = arith.mulf %250, %260 : vector<16x128xf32>
    %271 = arith.addf %269, %270 : vector<16x128xf32>
    %272 = math.tanh %271 : vector<16x128xf32>
    %273 = arith.mulf %268, %272 : vector<16x128xf32>
    %c0_71 = arith.constant 0 : index
    %c0_72 = arith.constant 0 : index
    %274 = vector.load %arg25[%c0_71, %c0_72] : memref<16x256xf32, #tpu.memory_space<vmem>>, vector<16x128xf32>
    tpu.vector_store %arg25[%c0_71, %c0_72], %242 {strides = array<i32>} : memref<16x256xf32, #tpu.memory_space<vmem>>, vector<16x128xf32>,
    %c0_73 = arith.constant 0 : index
    %c128_74 = arith.constant 128 : index
    %275 = vector.load %arg25[%c0_73, %c128_74] : memref<16x256xf32, #tpu.memory_space<vmem>>, vector<16x128xf32>
    tpu.vector_store %arg25[%c0_73, %c128_74], %273 {strides = array<i32>} : memref<16x256xf32, #tpu.memory_space<vmem>>, vector<16x128xf32>,
    %c16 = arith.constant 16 : index
    %c0_75 = arith.constant 0 : index
    %276 = vector.load %arg23[%c16, %c0_75] : memref<48x256xf32, #tpu.memory_space<vmem>>, vector<16x128xf32>
    tpu.vector_store %arg23[%c16, %c0_75], %242 {strides = array<i32>} : memref<48x256xf32, #tpu.memory_space<vmem>>, vector<16x128xf32>,
    %c16_76 = arith.constant 16 : index
    %c128_77 = arith.constant 128 : index
    %277 = vector.load %arg23[%c16_76, %c128_77] : memref<48x256xf32, #tpu.memory_space<vmem>>, vector<16x128xf32>
    tpu.vector_store %arg23[%c16_76, %c128_77], %273 {strides = array<i32>} : memref<48x256xf32, #tpu.memory_space<vmem>>, vector<16x128xf32>,
    %c0_78 = arith.constant 0 : index
    %c0_79 = arith.constant 0 : index
    %278 = vector.load %arg25[%c0_78, %c0_79] : memref<16x256xf32, #tpu.memory_space<vmem>>, vector<16x256xf32>
    %279 = arith.truncf %278 : vector<16x256xf32> to vector<16x256xbf16>
    %cst_80 = arith.constant dense<0.000000e+00> : vector<16x1024xf32>
    %280 = tpu.matmul %279, %125, %cst_80 {dimension_numbers = #tpu.dot_dimension_numbers<[1], [0], [0], [1], [0, 0, 1, 1], [], []>} : vector<16x256xbf16>, vector<256x1024xbf16>, vector<16x1024xf32> -> vector<16x1024xf32>
    %281 = vector.extract_strided_slice %122 {offsets = [32, 0], sizes = [16, 512], strides = [1, 1]} : vector<48x1024xf32> to vector<16x512xf32>
    %282 = vector.extract_strided_slice %280 {offsets = [0, 0], sizes = [16, 512], strides = [1, 1]} : vector<16x1024xf32> to vector<16x512xf32>
    %283 = arith.addf %281, %282 : vector<16x512xf32>
    %284 = vector.extract_strided_slice %122 {offsets = [0, 512], sizes = [16, 512], strides = [1, 1]} : vector<48x1024xf32> to vector<16x512xf32>
    %285 = vector.extract_strided_slice %280 {offsets = [0, 512], sizes = [16, 512], strides = [1, 1]} : vector<16x1024xf32> to vector<16x512xf32>
    %286 = arith.addf %284, %285 : vector<16x512xf32>
    %287 = vector.extract_strided_slice %283 {offsets = [0, 0], sizes = [16, 128], strides = [1, 1]} : vector<16x512xf32> to vector<16x128xf32>
    %cst_81 = arith.constant 5.000000e-01 : f32
    %288 = vector.broadcast %cst_81 : f32 to vector<16x128xf32>
    %289 = arith.mulf %288, %287 : vector<16x128xf32>
    %290 = math.tanh %289 : vector<16x128xf32>
    %cst_82 = arith.constant 1.000000e+00 : f32
    %291 = vector.broadcast %cst_82 : f32 to vector<16x128xf32>
    %292 = arith.addf %290, %291 : vector<16x128xf32>
    %cst_83 = arith.constant 5.000000e-01 : f32
    %293 = vector.broadcast %cst_83 : f32 to vector<16x128xf32>
    %294 = arith.mulf %293, %292 : vector<16x128xf32>
    %295 = vector.extract_strided_slice %283 {offsets = [0, 128], sizes = [16, 128], strides = [1, 1]} : vector<16x512xf32> to vector<16x128xf32>
    %cst_84 = arith.constant 5.000000e-01 : f32
    %296 = vector.broadcast %cst_84 : f32 to vector<16x128xf32>
    %297 = arith.mulf %296, %295 : vector<16x128xf32>
    %298 = math.tanh %297 : vector<16x128xf32>
    %cst_85 = arith.constant 1.000000e+00 : f32
    %299 = vector.broadcast %cst_85 : f32 to vector<16x128xf32>
    %300 = arith.addf %298, %299 : vector<16x128xf32>
    %cst_86 = arith.constant 5.000000e-01 : f32
    %301 = vector.broadcast %cst_86 : f32 to vector<16x128xf32>
    %302 = arith.mulf %301, %300 : vector<16x128xf32>
    %303 = vector.extract_strided_slice %283 {offsets = [0, 256], sizes = [16, 128], strides = [1, 1]} : vector<16x512xf32> to vector<16x128xf32>
    %304 = math.tanh %303 : vector<16x128xf32>
    %305 = vector.extract_strided_slice %283 {offsets = [0, 384], sizes = [16, 128], strides = [1, 1]} : vector<16x512xf32> to vector<16x128xf32>
    %cst_87 = arith.constant 5.000000e-01 : f32
    %306 = vector.broadcast %cst_87 : f32 to vector<16x128xf32>
    %307 = arith.mulf %306, %305 : vector<16x128xf32>
    %308 = math.tanh %307 : vector<16x128xf32>
    %cst_88 = arith.constant 1.000000e+00 : f32
    %309 = vector.broadcast %cst_88 : f32 to vector<16x128xf32>
    %310 = arith.addf %308, %309 : vector<16x128xf32>
    %cst_89 = arith.constant 5.000000e-01 : f32
    %311 = vector.broadcast %cst_89 : f32 to vector<16x128xf32>
    %312 = arith.mulf %311, %310 : vector<16x128xf32>
    %313 = arith.mulf %302, %240 : vector<16x128xf32>
    %314 = arith.mulf %294, %304 : vector<16x128xf32>
    %315 = arith.addf %313, %314 : vector<16x128xf32>
    %316 = math.tanh %315 : vector<16x128xf32>
    %317 = arith.mulf %312, %316 : vector<16x128xf32>
    %318 = vector.extract_strided_slice %286 {offsets = [0, 0], sizes = [16, 128], strides = [1, 1]} : vector<16x512xf32> to vector<16x128xf32>
    %cst_90 = arith.constant 5.000000e-01 : f32
    %319 = vector.broadcast %cst_90 : f32 to vector<16x128xf32>
    %320 = arith.mulf %319, %318 : vector<16x128xf32>
    %321 = math.tanh %320 : vector<16x128xf32>
    %cst_91 = arith.constant 1.000000e+00 : f32
    %322 = vector.broadcast %cst_91 : f32 to vector<16x128xf32>
    %323 = arith.addf %321, %322 : vector<16x128xf32>
    %cst_92 = arith.constant 5.000000e-01 : f32
    %324 = vector.broadcast %cst_92 : f32 to vector<16x128xf32>
    %325 = arith.mulf %324, %323 : vector<16x128xf32>
    %326 = vector.extract_strided_slice %286 {offsets = [0, 128], sizes = [16, 128], strides = [1, 1]} : vector<16x512xf32> to vector<16x128xf32>
    %cst_93 = arith.constant 5.000000e-01 : f32
    %327 = vector.broadcast %cst_93 : f32 to vector<16x128xf32>
    %328 = arith.mulf %327, %326 : vector<16x128xf32>
    %329 = math.tanh %328 : vector<16x128xf32>
    %cst_94 = arith.constant 1.000000e+00 : f32
    %330 = vector.broadcast %cst_94 : f32 to vector<16x128xf32>
    %331 = arith.addf %329, %330 : vector<16x128xf32>
    %cst_95 = arith.constant 5.000000e-01 : f32
    %332 = vector.broadcast %cst_95 : f32 to vector<16x128xf32>
    %333 = arith.mulf %332, %331 : vector<16x128xf32>
    %334 = vector.extract_strided_slice %286 {offsets = [0, 256], sizes = [16, 128], strides = [1, 1]} : vector<16x512xf32> to vector<16x128xf32>
    %335 = math.tanh %334 : vector<16x128xf32>
    %336 = vector.extract_strided_slice %286 {offsets = [0, 384], sizes = [16, 128], strides = [1, 1]} : vector<16x512xf32> to vector<16x128xf32>
    %cst_96 = arith.constant 5.000000e-01 : f32
    %337 = vector.broadcast %cst_96 : f32 to vector<16x128xf32>
    %338 = arith.mulf %337, %336 : vector<16x128xf32>
    %339 = math.tanh %338 : vector<16x128xf32>
    %cst_97 = arith.constant 1.000000e+00 : f32
    %340 = vector.broadcast %cst_97 : f32 to vector<16x128xf32>
    %341 = arith.addf %339, %340 : vector<16x128xf32>
    %cst_98 = arith.constant 5.000000e-01 : f32
    %342 = vector.broadcast %cst_98 : f32 to vector<16x128xf32>
    %343 = arith.mulf %342, %341 : vector<16x128xf32>
    %344 = arith.mulf %333, %271 : vector<16x128xf32>
    %345 = arith.mulf %325, %335 : vector<16x128xf32>
    %346 = arith.addf %344, %345 : vector<16x128xf32>
    %347 = math.tanh %346 : vector<16x128xf32>
    %348 = arith.mulf %343, %347 : vector<16x128xf32>
    %c0_99 = arith.constant 0 : index
    %c0_100 = arith.constant 0 : index
    %349 = vector.load %arg25[%c0_99, %c0_100] : memref<16x256xf32, #tpu.memory_space<vmem>>, vector<16x128xf32>
    tpu.vector_store %arg25[%c0_99, %c0_100], %317 {strides = array<i32>} : memref<16x256xf32, #tpu.memory_space<vmem>>, vector<16x128xf32>,
    %c0_101 = arith.constant 0 : index
    %c128_102 = arith.constant 128 : index
    %350 = vector.load %arg25[%c0_101, %c128_102] : memref<16x256xf32, #tpu.memory_space<vmem>>, vector<16x128xf32>
    tpu.vector_store %arg25[%c0_101, %c128_102], %348 {strides = array<i32>} : memref<16x256xf32, #tpu.memory_space<vmem>>, vector<16x128xf32>,
    %c32_103 = arith.constant 32 : index
    %c0_104 = arith.constant 0 : index
    %351 = vector.load %arg23[%c32_103, %c0_104] : memref<48x256xf32, #tpu.memory_space<vmem>>, vector<16x128xf32>
    tpu.vector_store %arg23[%c32_103, %c0_104], %317 {strides = array<i32>} : memref<48x256xf32, #tpu.memory_space<vmem>>, vector<16x128xf32>,
    %c0_105 = arith.constant 0 : index
    %c128_106 = arith.constant 128 : index
    %352 = vector.load %arg23[%c0_105, %c128_106] : memref<48x256xf32, #tpu.memory_space<vmem>>, vector<16x128xf32>
    tpu.vector_store %arg23[%c0_105, %c128_106], %348 {strides = array<i32>} : memref<48x256xf32, #tpu.memory_space<vmem>>, vector<16x128xf32>,
    %c0_107 = arith.constant 0 : index
    %c0_108 = arith.constant 0 : index
    %353 = vector.load %arg23[%c0_107, %c0_108] : memref<48x256xf32, #tpu.memory_space<vmem>>, vector<48x256xf32>
    %c0_109 = arith.constant 0 : index
    %c0_110 = arith.constant 0 : index
    %354 = vector.load %arg7[%c0_109, %c0_110] : memref<256x1024xbf16, #tpu.memory_space<vmem>>, vector<256x1024xbf16>
    %355 = arith.truncf %353 : vector<48x256xf32> to vector<48x256xbf16>
    %cst_111 = arith.constant dense<0.000000e+00> : vector<48x1024xf32>
    %356 = tpu.matmul %355, %354, %cst_111 {dimension_numbers = #tpu.dot_dimension_numbers<[1], [0], [0], [1], [0, 0, 1, 1], [], []>} : vector<48x256xbf16>, vector<256x1024xbf16>, vector<48x1024xf32> -> vector<48x1024xf32>
    %c0_112 = arith.constant 0 : index
    %c0_113 = arith.constant 0 : index
    %357 = vector.load %arg9[%c0_112, %c0_113] : memref<1x1024xf32, #tpu.memory_space<vmem>>, vector<1x1024xf32>
    %358 = vector.broadcast %357 : vector<1x1024xf32> to vector<48x1024xf32>
    %359 = arith.addf %356, %358 : vector<48x1024xf32>
    %cst_114 = arith.constant 0.000000e+00 : f32
    %360 = vector.broadcast %cst_114 : f32 to vector<16x128xf32>
    %cst_115 = arith.constant 0.000000e+00 : f32
    %361 = vector.broadcast %cst_115 : f32 to vector<16x128xf32>
    %c0_116 = arith.constant 0 : index
    %c0_117 = arith.constant 0 : index
    %362 = vector.load %arg8[%c0_116, %c0_117] : memref<256x1024xbf16, #tpu.memory_space<vmem>>, vector<256x1024xbf16>
    %cst_118 = arith.constant 0.000000e+00 : f32
    %363 = vector.broadcast %cst_118 : f32 to vector<16x256xf32>
    %c0_119 = arith.constant 0 : index
    %c0_120 = arith.constant 0 : index
    %364 = vector.load %arg25[%c0_119, %c0_120] : memref<16x256xf32, #tpu.memory_space<vmem>>, vector<16x256xf32>
    tpu.vector_store %arg25[%c0_119, %c0_120], %363 {strides = array<i32>} : memref<16x256xf32, #tpu.memory_space<vmem>>, vector<16x256xf32>,
    %c0_121 = arith.constant 0 : index
    %c0_122 = arith.constant 0 : index
    %365 = vector.load %arg25[%c0_121, %c0_122] : memref<16x256xf32, #tpu.memory_space<vmem>>, vector<16x256xf32>
    %366 = arith.truncf %365 : vector<16x256xf32> to vector<16x256xbf16>
    %cst_123 = arith.constant dense<0.000000e+00> : vector<16x1024xf32>
    %367 = tpu.matmul %366, %362, %cst_123 {dimension_numbers = #tpu.dot_dimension_numbers<[1], [0], [0], [1], [0, 0, 1, 1], [], []>} : vector<16x256xbf16>, vector<256x1024xbf16>, vector<16x1024xf32> -> vector<16x1024xf32>
    %368 = vector.extract_strided_slice %359 {offsets = [0, 0], sizes = [16, 512], strides = [1, 1]} : vector<48x1024xf32> to vector<16x512xf32>
    %369 = vector.extract_strided_slice %367 {offsets = [0, 0], sizes = [16, 512], strides = [1, 1]} : vector<16x1024xf32> to vector<16x512xf32>
    %370 = arith.addf %368, %369 : vector<16x512xf32>
    %371 = vector.extract_strided_slice %359 {offsets = [32, 512], sizes = [16, 512], strides = [1, 1]} : vector<48x1024xf32> to vector<16x512xf32>
    %372 = vector.extract_strided_slice %367 {offsets = [0, 512], sizes = [16, 512], strides = [1, 1]} : vector<16x1024xf32> to vector<16x512xf32>
    %373 = arith.addf %371, %372 : vector<16x512xf32>
    %374 = vector.extract_strided_slice %370 {offsets = [0, 0], sizes = [16, 128], strides = [1, 1]} : vector<16x512xf32> to vector<16x128xf32>
    %cst_124 = arith.constant 5.000000e-01 : f32
    %375 = vector.broadcast %cst_124 : f32 to vector<16x128xf32>
    %376 = arith.mulf %375, %374 : vector<16x128xf32>
    %377 = math.tanh %376 : vector<16x128xf32>
    %cst_125 = arith.constant 1.000000e+00 : f32
    %378 = vector.broadcast %cst_125 : f32 to vector<16x128xf32>
    %379 = arith.addf %377, %378 : vector<16x128xf32>
    %cst_126 = arith.constant 5.000000e-01 : f32
    %380 = vector.broadcast %cst_126 : f32 to vector<16x128xf32>
    %381 = arith.mulf %380, %379 : vector<16x128xf32>
    %382 = vector.extract_strided_slice %370 {offsets = [0, 128], sizes = [16, 128], strides = [1, 1]} : vector<16x512xf32> to vector<16x128xf32>
    %cst_127 = arith.constant 5.000000e-01 : f32
    %383 = vector.broadcast %cst_127 : f32 to vector<16x128xf32>
    %384 = arith.mulf %383, %382 : vector<16x128xf32>
    %385 = math.tanh %384 : vector<16x128xf32>
    %cst_128 = arith.constant 1.000000e+00 : f32
    %386 = vector.broadcast %cst_128 : f32 to vector<16x128xf32>
    %387 = arith.addf %385, %386 : vector<16x128xf32>
    %cst_129 = arith.constant 5.000000e-01 : f32
    %388 = vector.broadcast %cst_129 : f32 to vector<16x128xf32>
    %389 = arith.mulf %388, %387 : vector<16x128xf32>
    %390 = vector.extract_strided_slice %370 {offsets = [0, 256], sizes = [16, 128], strides = [1, 1]} : vector<16x512xf32> to vector<16x128xf32>
    %391 = math.tanh %390 : vector<16x128xf32>
    %392 = vector.extract_strided_slice %370 {offsets = [0, 384], sizes = [16, 128], strides = [1, 1]} : vector<16x512xf32> to vector<16x128xf32>
    %cst_130 = arith.constant 5.000000e-01 : f32
    %393 = vector.broadcast %cst_130 : f32 to vector<16x128xf32>
    %394 = arith.mulf %393, %392 : vector<16x128xf32>
    %395 = math.tanh %394 : vector<16x128xf32>
    %cst_131 = arith.constant 1.000000e+00 : f32
    %396 = vector.broadcast %cst_131 : f32 to vector<16x128xf32>
    %397 = arith.addf %395, %396 : vector<16x128xf32>
    %cst_132 = arith.constant 5.000000e-01 : f32
    %398 = vector.broadcast %cst_132 : f32 to vector<16x128xf32>
    %399 = arith.mulf %398, %397 : vector<16x128xf32>
    %400 = arith.mulf %389, %360 : vector<16x128xf32>
    %401 = arith.mulf %381, %391 : vector<16x128xf32>
    %402 = arith.addf %400, %401 : vector<16x128xf32>
    %403 = math.tanh %402 : vector<16x128xf32>
    %404 = arith.mulf %399, %403 : vector<16x128xf32>
    %405 = vector.extract_strided_slice %373 {offsets = [0, 0], sizes = [16, 128], strides = [1, 1]} : vector<16x512xf32> to vector<16x128xf32>
    %cst_133 = arith.constant 5.000000e-01 : f32
    %406 = vector.broadcast %cst_133 : f32 to vector<16x128xf32>
    %407 = arith.mulf %406, %405 : vector<16x128xf32>
    %408 = math.tanh %407 : vector<16x128xf32>
    %cst_134 = arith.constant 1.000000e+00 : f32
    %409 = vector.broadcast %cst_134 : f32 to vector<16x128xf32>
    %410 = arith.addf %408, %409 : vector<16x128xf32>
    %cst_135 = arith.constant 5.000000e-01 : f32
    %411 = vector.broadcast %cst_135 : f32 to vector<16x128xf32>
    %412 = arith.mulf %411, %410 : vector<16x128xf32>
    %413 = vector.extract_strided_slice %373 {offsets = [0, 128], sizes = [16, 128], strides = [1, 1]} : vector<16x512xf32> to vector<16x128xf32>
    %cst_136 = arith.constant 5.000000e-01 : f32
    %414 = vector.broadcast %cst_136 : f32 to vector<16x128xf32>
    %415 = arith.mulf %414, %413 : vector<16x128xf32>
    %416 = math.tanh %415 : vector<16x128xf32>
    %cst_137 = arith.constant 1.000000e+00 : f32
    %417 = vector.broadcast %cst_137 : f32 to vector<16x128xf32>
    %418 = arith.addf %416, %417 : vector<16x128xf32>
    %cst_138 = arith.constant 5.000000e-01 : f32
    %419 = vector.broadcast %cst_138 : f32 to vector<16x128xf32>
    %420 = arith.mulf %419, %418 : vector<16x128xf32>
    %421 = vector.extract_strided_slice %373 {offsets = [0, 256], sizes = [16, 128], strides = [1, 1]} : vector<16x512xf32> to vector<16x128xf32>
    %422 = math.tanh %421 : vector<16x128xf32>
    %423 = vector.extract_strided_slice %373 {offsets = [0, 384], sizes = [16, 128], strides = [1, 1]} : vector<16x512xf32> to vector<16x128xf32>
    %cst_139 = arith.constant 5.000000e-01 : f32
    %424 = vector.broadcast %cst_139 : f32 to vector<16x128xf32>
    %425 = arith.mulf %424, %423 : vector<16x128xf32>
    %426 = math.tanh %425 : vector<16x128xf32>
    %cst_140 = arith.constant 1.000000e+00 : f32
    %427 = vector.broadcast %cst_140 : f32 to vector<16x128xf32>
    %428 = arith.addf %426, %427 : vector<16x128xf32>
    %cst_141 = arith.constant 5.000000e-01 : f32
    %429 = vector.broadcast %cst_141 : f32 to vector<16x128xf32>
    %430 = arith.mulf %429, %428 : vector<16x128xf32>
    %431 = arith.mulf %420, %361 : vector<16x128xf32>
    %432 = arith.mulf %412, %422 : vector<16x128xf32>
    %433 = arith.addf %431, %432 : vector<16x128xf32>
    %434 = math.tanh %433 : vector<16x128xf32>
    %435 = arith.mulf %430, %434 : vector<16x128xf32>
    %c0_142 = arith.constant 0 : index
    %c0_143 = arith.constant 0 : index
    %436 = vector.load %arg25[%c0_142, %c0_143] : memref<16x256xf32, #tpu.memory_space<vmem>>, vector<16x128xf32>
    tpu.vector_store %arg25[%c0_142, %c0_143], %404 {strides = array<i32>} : memref<16x256xf32, #tpu.memory_space<vmem>>, vector<16x128xf32>,
    %c0_144 = arith.constant 0 : index
    %c128_145 = arith.constant 128 : index
    %437 = vector.load %arg25[%c0_144, %c128_145] : memref<16x256xf32, #tpu.memory_space<vmem>>, vector<16x128xf32>
    tpu.vector_store %arg25[%c0_144, %c128_145], %435 {strides = array<i32>} : memref<16x256xf32, #tpu.memory_space<vmem>>, vector<16x128xf32>,
    %c0_146 = arith.constant 0 : index
    %c0_147 = arith.constant 0 : index
    %438 = vector.load %arg24[%c0_146, %c0_147] : memref<48x256xf32, #tpu.memory_space<vmem>>, vector<16x128xf32>
    tpu.vector_store %arg24[%c0_146, %c0_147], %404 {strides = array<i32>} : memref<48x256xf32, #tpu.memory_space<vmem>>, vector<16x128xf32>,
    %c32_148 = arith.constant 32 : index
    %c128_149 = arith.constant 128 : index
    %439 = vector.load %arg24[%c32_148, %c128_149] : memref<48x256xf32, #tpu.memory_space<vmem>>, vector<16x128xf32>
    tpu.vector_store %arg24[%c32_148, %c128_149], %435 {strides = array<i32>} : memref<48x256xf32, #tpu.memory_space<vmem>>, vector<16x128xf32>,
    %c0_150 = arith.constant 0 : index
    %c0_151 = arith.constant 0 : index
    %440 = vector.load %arg25[%c0_150, %c0_151] : memref<16x256xf32, #tpu.memory_space<vmem>>, vector<16x256xf32>
    %441 = arith.truncf %440 : vector<16x256xf32> to vector<16x256xbf16>
    %cst_152 = arith.constant dense<0.000000e+00> : vector<16x1024xf32>
    %442 = tpu.matmul %441, %362, %cst_152 {dimension_numbers = #tpu.dot_dimension_numbers<[1], [0], [0], [1], [0, 0, 1, 1], [], []>} : vector<16x256xbf16>, vector<256x1024xbf16>, vector<16x1024xf32> -> vector<16x1024xf32>
    %443 = vector.extract_strided_slice %359 {offsets = [16, 0], sizes = [16, 512], strides = [1, 1]} : vector<48x1024xf32> to vector<16x512xf32>
    %444 = vector.extract_strided_slice %442 {offsets = [0, 0], sizes = [16, 512], strides = [1, 1]} : vector<16x1024xf32> to vector<16x512xf32>
    %445 = arith.addf %443, %444 : vector<16x512xf32>
    %446 = vector.extract_strided_slice %359 {offsets = [16, 512], sizes = [16, 512], strides = [1, 1]} : vector<48x1024xf32> to vector<16x512xf32>
    %447 = vector.extract_strided_slice %442 {offsets = [0, 512], sizes = [16, 512], strides = [1, 1]} : vector<16x1024xf32> to vector<16x512xf32>
    %448 = arith.addf %446, %447 : vector<16x512xf32>
    %449 = vector.extract_strided_slice %445 {offsets = [0, 0], sizes = [16, 128], strides = [1, 1]} : vector<16x512xf32> to vector<16x128xf32>
    %cst_153 = arith.constant 5.000000e-01 : f32
    %450 = vector.broadcast %cst_153 : f32 to vector<16x128xf32>
    %451 = arith.mulf %450, %449 : vector<16x128xf32>
    %452 = math.tanh %451 : vector<16x128xf32>
    %cst_154 = arith.constant 1.000000e+00 : f32
    %453 = vector.broadcast %cst_154 : f32 to vector<16x128xf32>
    %454 = arith.addf %452, %453 : vector<16x128xf32>
    %cst_155 = arith.constant 5.000000e-01 : f32
    %455 = vector.broadcast %cst_155 : f32 to vector<16x128xf32>
    %456 = arith.mulf %455, %454 : vector<16x128xf32>
    %457 = vector.extract_strided_slice %445 {offsets = [0, 128], sizes = [16, 128], strides = [1, 1]} : vector<16x512xf32> to vector<16x128xf32>
    %cst_156 = arith.constant 5.000000e-01 : f32
    %458 = vector.broadcast %cst_156 : f32 to vector<16x128xf32>
    %459 = arith.mulf %458, %457 : vector<16x128xf32>
    %460 = math.tanh %459 : vector<16x128xf32>
    %cst_157 = arith.constant 1.000000e+00 : f32
    %461 = vector.broadcast %cst_157 : f32 to vector<16x128xf32>
    %462 = arith.addf %460, %461 : vector<16x128xf32>
    %cst_158 = arith.constant 5.000000e-01 : f32
    %463 = vector.broadcast %cst_158 : f32 to vector<16x128xf32>
    %464 = arith.mulf %463, %462 : vector<16x128xf32>
    %465 = vector.extract_strided_slice %445 {offsets = [0, 256], sizes = [16, 128], strides = [1, 1]} : vector<16x512xf32> to vector<16x128xf32>
    %466 = math.tanh %465 : vector<16x128xf32>
    %467 = vector.extract_strided_slice %445 {offsets = [0, 384], sizes = [16, 128], strides = [1, 1]} : vector<16x512xf32> to vector<16x128xf32>
    %cst_159 = arith.constant 5.000000e-01 : f32
    %468 = vector.broadcast %cst_159 : f32 to vector<16x128xf32>
    %469 = arith.mulf %468, %467 : vector<16x128xf32>
    %470 = math.tanh %469 : vector<16x128xf32>
    %cst_160 = arith.constant 1.000000e+00 : f32
    %471 = vector.broadcast %cst_160 : f32 to vector<16x128xf32>
    %472 = arith.addf %470, %471 : vector<16x128xf32>
    %cst_161 = arith.constant 5.000000e-01 : f32
    %473 = vector.broadcast %cst_161 : f32 to vector<16x128xf32>
    %474 = arith.mulf %473, %472 : vector<16x128xf32>
    %475 = arith.mulf %464, %402 : vector<16x128xf32>
    %476 = arith.mulf %456, %466 : vector<16x128xf32>
    %477 = arith.addf %475, %476 : vector<16x128xf32>
    %478 = math.tanh %477 : vector<16x128xf32>
    %479 = arith.mulf %474, %478 : vector<16x128xf32>
    %480 = vector.extract_strided_slice %448 {offsets = [0, 0], sizes = [16, 128], strides = [1, 1]} : vector<16x512xf32> to vector<16x128xf32>
    %cst_162 = arith.constant 5.000000e-01 : f32
    %481 = vector.broadcast %cst_162 : f32 to vector<16x128xf32>
    %482 = arith.mulf %481, %480 : vector<16x128xf32>
    %483 = math.tanh %482 : vector<16x128xf32>
    %cst_163 = arith.constant 1.000000e+00 : f32
    %484 = vector.broadcast %cst_163 : f32 to vector<16x128xf32>
    %485 = arith.addf %483, %484 : vector<16x128xf32>
    %cst_164 = arith.constant 5.000000e-01 : f32
    %486 = vector.broadcast %cst_164 : f32 to vector<16x128xf32>
    %487 = arith.mulf %486, %485 : vector<16x128xf32>
    %488 = vector.extract_strided_slice %448 {offsets = [0, 128], sizes = [16, 128], strides = [1, 1]} : vector<16x512xf32> to vector<16x128xf32>
    %cst_165 = arith.constant 5.000000e-01 : f32
    %489 = vector.broadcast %cst_165 : f32 to vector<16x128xf32>
    %490 = arith.mulf %489, %488 : vector<16x128xf32>
    %491 = math.tanh %490 : vector<16x128xf32>
    %cst_166 = arith.constant 1.000000e+00 : f32
    %492 = vector.broadcast %cst_166 : f32 to vector<16x128xf32>
    %493 = arith.addf %491, %492 : vector<16x128xf32>
    %cst_167 = arith.constant 5.000000e-01 : f32
    %494 = vector.broadcast %cst_167 : f32 to vector<16x128xf32>
    %495 = arith.mulf %494, %493 : vector<16x128xf32>
    %496 = vector.extract_strided_slice %448 {offsets = [0, 256], sizes = [16, 128], strides = [1, 1]} : vector<16x512xf32> to vector<16x128xf32>
    %497 = math.tanh %496 : vector<16x128xf32>
    %498 = vector.extract_strided_slice %448 {offsets = [0, 384], sizes = [16, 128], strides = [1, 1]} : vector<16x512xf32> to vector<16x128xf32>
    %cst_168 = arith.constant 5.000000e-01 : f32
    %499 = vector.broadcast %cst_168 : f32 to vector<16x128xf32>
    %500 = arith.mulf %499, %498 : vector<16x128xf32>
    %501 = math.tanh %500 : vector<16x128xf32>
    %cst_169 = arith.constant 1.000000e+00 : f32
    %502 = vector.broadcast %cst_169 : f32 to vector<16x128xf32>
    %503 = arith.addf %501, %502 : vector<16x128xf32>
    %cst_170 = arith.constant 5.000000e-01 : f32
    %504 = vector.broadcast %cst_170 : f32 to vector<16x128xf32>
    %505 = arith.mulf %504, %503 : vector<16x128xf32>
    %506 = arith.mulf %495, %433 : vector<16x128xf32>
    %507 = arith.mulf %487, %497 : vector<16x128xf32>
    %508 = arith.addf %506, %507 : vector<16x128xf32>
    %509 = math.tanh %508 : vector<16x128xf32>
    %510 = arith.mulf %505, %509 : vector<16x128xf32>
    %c0_171 = arith.constant 0 : index
    %c0_172 = arith.constant 0 : index
    %511 = vector.load %arg25[%c0_171, %c0_172] : memref<16x256xf32, #tpu.memory_space<vmem>>, vector<16x128xf32>
    tpu.vector_store %arg25[%c0_171, %c0_172], %479 {strides = array<i32>} : memref<16x256xf32, #tpu.memory_space<vmem>>, vector<16x128xf32>,
    %c0_173 = arith.constant 0 : index
    %c128_174 = arith.constant 128 : index
    %512 = vector.load %arg25[%c0_173, %c128_174] : memref<16x256xf32, #tpu.memory_space<vmem>>, vector<16x128xf32>
    tpu.vector_store %arg25[%c0_173, %c128_174], %510 {strides = array<i32>} : memref<16x256xf32, #tpu.memory_space<vmem>>, vector<16x128xf32>,
    %c16_175 = arith.constant 16 : index
    %c0_176 = arith.constant 0 : index
    %513 = vector.load %arg24[%c16_175, %c0_176] : memref<48x256xf32, #tpu.memory_space<vmem>>, vector<16x128xf32>
    tpu.vector_store %arg24[%c16_175, %c0_176], %479 {strides = array<i32>} : memref<48x256xf32, #tpu.memory_space<vmem>>, vector<16x128xf32>,
    %c16_177 = arith.constant 16 : index
    %c128_178 = arith.constant 128 : index
    %514 = vector.load %arg24[%c16_177, %c128_178] : memref<48x256xf32, #tpu.memory_space<vmem>>, vector<16x128xf32>
    tpu.vector_store %arg24[%c16_177, %c128_178], %510 {strides = array<i32>} : memref<48x256xf32, #tpu.memory_space<vmem>>, vector<16x128xf32>,
    %c0_179 = arith.constant 0 : index
    %c0_180 = arith.constant 0 : index
    %515 = vector.load %arg25[%c0_179, %c0_180] : memref<16x256xf32, #tpu.memory_space<vmem>>, vector<16x256xf32>
    %516 = arith.truncf %515 : vector<16x256xf32> to vector<16x256xbf16>
    %cst_181 = arith.constant dense<0.000000e+00> : vector<16x1024xf32>
    %517 = tpu.matmul %516, %362, %cst_181 {dimension_numbers = #tpu.dot_dimension_numbers<[1], [0], [0], [1], [0, 0, 1, 1], [], []>} : vector<16x256xbf16>, vector<256x1024xbf16>, vector<16x1024xf32> -> vector<16x1024xf32>
    %518 = vector.extract_strided_slice %359 {offsets = [32, 0], sizes = [16, 512], strides = [1, 1]} : vector<48x1024xf32> to vector<16x512xf32>
    %519 = vector.extract_strided_slice %517 {offsets = [0, 0], sizes = [16, 512], strides = [1, 1]} : vector<16x1024xf32> to vector<16x512xf32>
    %520 = arith.addf %518, %519 : vector<16x512xf32>
    %521 = vector.extract_strided_slice %359 {offsets = [0, 512], sizes = [16, 512], strides = [1, 1]} : vector<48x1024xf32> to vector<16x512xf32>
    %522 = vector.extract_strided_slice %517 {offsets = [0, 512], sizes = [16, 512], strides = [1, 1]} : vector<16x1024xf32> to vector<16x512xf32>
    %523 = arith.addf %521, %522 : vector<16x512xf32>
    %524 = vector.extract_strided_slice %520 {offsets = [0, 0], sizes = [16, 128], strides = [1, 1]} : vector<16x512xf32> to vector<16x128xf32>
    %cst_182 = arith.constant 5.000000e-01 : f32
    %525 = vector.broadcast %cst_182 : f32 to vector<16x128xf32>
    %526 = arith.mulf %525, %524 : vector<16x128xf32>
    %527 = math.tanh %526 : vector<16x128xf32>
    %cst_183 = arith.constant 1.000000e+00 : f32
    %528 = vector.broadcast %cst_183 : f32 to vector<16x128xf32>
    %529 = arith.addf %527, %528 : vector<16x128xf32>
    %cst_184 = arith.constant 5.000000e-01 : f32
    %530 = vector.broadcast %cst_184 : f32 to vector<16x128xf32>
    %531 = arith.mulf %530, %529 : vector<16x128xf32>
    %532 = vector.extract_strided_slice %520 {offsets = [0, 128], sizes = [16, 128], strides = [1, 1]} : vector<16x512xf32> to vector<16x128xf32>
    %cst_185 = arith.constant 5.000000e-01 : f32
    %533 = vector.broadcast %cst_185 : f32 to vector<16x128xf32>
    %534 = arith.mulf %533, %532 : vector<16x128xf32>
    %535 = math.tanh %534 : vector<16x128xf32>
    %cst_186 = arith.constant 1.000000e+00 : f32
    %536 = vector.broadcast %cst_186 : f32 to vector<16x128xf32>
    %537 = arith.addf %535, %536 : vector<16x128xf32>
    %cst_187 = arith.constant 5.000000e-01 : f32
    %538 = vector.broadcast %cst_187 : f32 to vector<16x128xf32>
    %539 = arith.mulf %538, %537 : vector<16x128xf32>
    %540 = vector.extract_strided_slice %520 {offsets = [0, 256], sizes = [16, 128], strides = [1, 1]} : vector<16x512xf32> to vector<16x128xf32>
    %541 = math.tanh %540 : vector<16x128xf32>
    %542 = vector.extract_strided_slice %520 {offsets = [0, 384], sizes = [16, 128], strides = [1, 1]} : vector<16x512xf32> to vector<16x128xf32>
    %cst_188 = arith.constant 5.000000e-01 : f32
    %543 = vector.broadcast %cst_188 : f32 to vector<16x128xf32>
    %544 = arith.mulf %543, %542 : vector<16x128xf32>
    %545 = math.tanh %544 : vector<16x128xf32>
    %cst_189 = arith.constant 1.000000e+00 : f32
    %546 = vector.broadcast %cst_189 : f32 to vector<16x128xf32>
    %547 = arith.addf %545, %546 : vector<16x128xf32>
    %cst_190 = arith.constant 5.000000e-01 : f32
    %548 = vector.broadcast %cst_190 : f32 to vector<16x128xf32>
    %549 = arith.mulf %548, %547 : vector<16x128xf32>
    %550 = arith.mulf %539, %477 : vector<16x128xf32>
    %551 = arith.mulf %531, %541 : vector<16x128xf32>
    %552 = arith.addf %550, %551 : vector<16x128xf32>
    %553 = math.tanh %552 : vector<16x128xf32>
    %554 = arith.mulf %549, %553 : vector<16x128xf32>
    %555 = vector.extract_strided_slice %523 {offsets = [0, 0], sizes = [16, 128], strides = [1, 1]} : vector<16x512xf32> to vector<16x128xf32>
    %cst_191 = arith.constant 5.000000e-01 : f32
    %556 = vector.broadcast %cst_191 : f32 to vector<16x128xf32>
    %557 = arith.mulf %556, %555 : vector<16x128xf32>
    %558 = math.tanh %557 : vector<16x128xf32>
    %cst_192 = arith.constant 1.000000e+00 : f32
    %559 = vector.broadcast %cst_192 : f32 to vector<16x128xf32>
    %560 = arith.addf %558, %559 : vector<16x128xf32>
    %cst_193 = arith.constant 5.000000e-01 : f32
    %561 = vector.broadcast %cst_193 : f32 to vector<16x128xf32>
    %562 = arith.mulf %561, %560 : vector<16x128xf32>
    %563 = vector.extract_strided_slice %523 {offsets = [0, 128], sizes = [16, 128], strides = [1, 1]} : vector<16x512xf32> to vector<16x128xf32>
    %cst_194 = arith.constant 5.000000e-01 : f32
    %564 = vector.broadcast %cst_194 : f32 to vector<16x128xf32>
    %565 = arith.mulf %564, %563 : vector<16x128xf32>
    %566 = math.tanh %565 : vector<16x128xf32>
    %cst_195 = arith.constant 1.000000e+00 : f32
    %567 = vector.broadcast %cst_195 : f32 to vector<16x128xf32>
    %568 = arith.addf %566, %567 : vector<16x128xf32>
    %cst_196 = arith.constant 5.000000e-01 : f32
    %569 = vector.broadcast %cst_196 : f32 to vector<16x128xf32>
    %570 = arith.mulf %569, %568 : vector<16x128xf32>
    %571 = vector.extract_strided_slice %523 {offsets = [0, 256], sizes = [16, 128], strides = [1, 1]} : vector<16x512xf32> to vector<16x128xf32>
    %572 = math.tanh %571 : vector<16x128xf32>
    %573 = vector.extract_strided_slice %523 {offsets = [0, 384], sizes = [16, 128], strides = [1, 1]} : vector<16x512xf32> to vector<16x128xf32>
    %cst_197 = arith.constant 5.000000e-01 : f32
    %574 = vector.broadcast %cst_197 : f32 to vector<16x128xf32>
    %575 = arith.mulf %574, %573 : vector<16x128xf32>
    %576 = math.tanh %575 : vector<16x128xf32>
    %cst_198 = arith.constant 1.000000e+00 : f32
    %577 = vector.broadcast %cst_198 : f32 to vector<16x128xf32>
    %578 = arith.addf %576, %577 : vector<16x128xf32>
    %cst_199 = arith.constant 5.000000e-01 : f32
    %579 = vector.broadcast %cst_199 : f32 to vector<16x128xf32>
    %580 = arith.mulf %579, %578 : vector<16x128xf32>
    %581 = arith.mulf %570, %508 : vector<16x128xf32>
    %582 = arith.mulf %562, %572 : vector<16x128xf32>
    %583 = arith.addf %581, %582 : vector<16x128xf32>
    %584 = math.tanh %583 : vector<16x128xf32>
    %585 = arith.mulf %580, %584 : vector<16x128xf32>
    %c0_200 = arith.constant 0 : index
    %c0_201 = arith.constant 0 : index
    %586 = vector.load %arg25[%c0_200, %c0_201] : memref<16x256xf32, #tpu.memory_space<vmem>>, vector<16x128xf32>
    tpu.vector_store %arg25[%c0_200, %c0_201], %554 {strides = array<i32>} : memref<16x256xf32, #tpu.memory_space<vmem>>, vector<16x128xf32>,
    %c0_202 = arith.constant 0 : index
    %c128_203 = arith.constant 128 : index
    %587 = vector.load %arg25[%c0_202, %c128_203] : memref<16x256xf32, #tpu.memory_space<vmem>>, vector<16x128xf32>
    tpu.vector_store %arg25[%c0_202, %c128_203], %585 {strides = array<i32>} : memref<16x256xf32, #tpu.memory_space<vmem>>, vector<16x128xf32>,
    %c32_204 = arith.constant 32 : index
    %c0_205 = arith.constant 0 : index
    %588 = vector.load %arg24[%c32_204, %c0_205] : memref<48x256xf32, #tpu.memory_space<vmem>>, vector<16x128xf32>
    tpu.vector_store %arg24[%c32_204, %c0_205], %554 {strides = array<i32>} : memref<48x256xf32, #tpu.memory_space<vmem>>, vector<16x128xf32>,
    %c0_206 = arith.constant 0 : index
    %c128_207 = arith.constant 128 : index
    %589 = vector.load %arg24[%c0_206, %c128_207] : memref<48x256xf32, #tpu.memory_space<vmem>>, vector<16x128xf32>
    tpu.vector_store %arg24[%c0_206, %c128_207], %585 {strides = array<i32>} : memref<48x256xf32, #tpu.memory_space<vmem>>, vector<16x128xf32>,
    %c0_208 = arith.constant 0 : index
    %c0_209 = arith.constant 0 : index
    %590 = vector.load %arg24[%c0_208, %c0_209] : memref<48x256xf32, #tpu.memory_space<vmem>>, vector<48x256xf32>
    %c0_210 = arith.constant 0 : index
    %c0_211 = arith.constant 0 : index
    %591 = vector.load %arg10[%c0_210, %c0_211] : memref<256x1024xbf16, #tpu.memory_space<vmem>>, vector<256x1024xbf16>
    %592 = arith.truncf %590 : vector<48x256xf32> to vector<48x256xbf16>
    %cst_212 = arith.constant dense<0.000000e+00> : vector<48x1024xf32>
    %593 = tpu.matmul %592, %591, %cst_212 {dimension_numbers = #tpu.dot_dimension_numbers<[1], [0], [0], [1], [0, 0, 1, 1], [], []>} : vector<48x256xbf16>, vector<256x1024xbf16>, vector<48x1024xf32> -> vector<48x1024xf32>
    %c0_213 = arith.constant 0 : index
    %c0_214 = arith.constant 0 : index
    %594 = vector.load %arg12[%c0_213, %c0_214] : memref<1x1024xf32, #tpu.memory_space<vmem>>, vector<1x1024xf32>
    %595 = vector.broadcast %594 : vector<1x1024xf32> to vector<48x1024xf32>
    %596 = arith.addf %593, %595 : vector<48x1024xf32>
    %cst_215 = arith.constant 0.000000e+00 : f32
    %597 = vector.broadcast %cst_215 : f32 to vector<16x128xf32>
    %cst_216 = arith.constant 0.000000e+00 : f32
    %598 = vector.broadcast %cst_216 : f32 to vector<16x128xf32>
    %c0_217 = arith.constant 0 : index
    %c0_218 = arith.constant 0 : index
    %599 = vector.load %arg11[%c0_217, %c0_218] : memref<256x1024xbf16, #tpu.memory_space<vmem>>, vector<256x1024xbf16>
    %cst_219 = arith.constant 0.000000e+00 : f32
    %600 = vector.broadcast %cst_219 : f32 to vector<16x256xf32>
    %c0_220 = arith.constant 0 : index
    %c0_221 = arith.constant 0 : index
    %601 = vector.load %arg25[%c0_220, %c0_221] : memref<16x256xf32, #tpu.memory_space<vmem>>, vector<16x256xf32>
    tpu.vector_store %arg25[%c0_220, %c0_221], %600 {strides = array<i32>} : memref<16x256xf32, #tpu.memory_space<vmem>>, vector<16x256xf32>,
    %c0_222 = arith.constant 0 : index
    %c0_223 = arith.constant 0 : index
    %602 = vector.load %arg25[%c0_222, %c0_223] : memref<16x256xf32, #tpu.memory_space<vmem>>, vector<16x256xf32>
    %603 = arith.truncf %602 : vector<16x256xf32> to vector<16x256xbf16>
    %cst_224 = arith.constant dense<0.000000e+00> : vector<16x1024xf32>
    %604 = tpu.matmul %603, %599, %cst_224 {dimension_numbers = #tpu.dot_dimension_numbers<[1], [0], [0], [1], [0, 0, 1, 1], [], []>} : vector<16x256xbf16>, vector<256x1024xbf16>, vector<16x1024xf32> -> vector<16x1024xf32>
    %605 = vector.extract_strided_slice %596 {offsets = [0, 0], sizes = [16, 512], strides = [1, 1]} : vector<48x1024xf32> to vector<16x512xf32>
    %606 = vector.extract_strided_slice %604 {offsets = [0, 0], sizes = [16, 512], strides = [1, 1]} : vector<16x1024xf32> to vector<16x512xf32>
    %607 = arith.addf %605, %606 : vector<16x512xf32>
    %608 = vector.extract_strided_slice %596 {offsets = [32, 512], sizes = [16, 512], strides = [1, 1]} : vector<48x1024xf32> to vector<16x512xf32>
    %609 = vector.extract_strided_slice %604 {offsets = [0, 512], sizes = [16, 512], strides = [1, 1]} : vector<16x1024xf32> to vector<16x512xf32>
    %610 = arith.addf %608, %609 : vector<16x512xf32>
    %611 = vector.extract_strided_slice %607 {offsets = [0, 0], sizes = [16, 128], strides = [1, 1]} : vector<16x512xf32> to vector<16x128xf32>
    %cst_225 = arith.constant 5.000000e-01 : f32
    %612 = vector.broadcast %cst_225 : f32 to vector<16x128xf32>
    %613 = arith.mulf %612, %611 : vector<16x128xf32>
    %614 = math.tanh %613 : vector<16x128xf32>
    %cst_226 = arith.constant 1.000000e+00 : f32
    %615 = vector.broadcast %cst_226 : f32 to vector<16x128xf32>
    %616 = arith.addf %614, %615 : vector<16x128xf32>
    %cst_227 = arith.constant 5.000000e-01 : f32
    %617 = vector.broadcast %cst_227 : f32 to vector<16x128xf32>
    %618 = arith.mulf %617, %616 : vector<16x128xf32>
    %619 = vector.extract_strided_slice %607 {offsets = [0, 128], sizes = [16, 128], strides = [1, 1]} : vector<16x512xf32> to vector<16x128xf32>
    %cst_228 = arith.constant 5.000000e-01 : f32
    %620 = vector.broadcast %cst_228 : f32 to vector<16x128xf32>
    %621 = arith.mulf %620, %619 : vector<16x128xf32>
    %622 = math.tanh %621 : vector<16x128xf32>
    %cst_229 = arith.constant 1.000000e+00 : f32
    %623 = vector.broadcast %cst_229 : f32 to vector<16x128xf32>
    %624 = arith.addf %622, %623 : vector<16x128xf32>
    %cst_230 = arith.constant 5.000000e-01 : f32
    %625 = vector.broadcast %cst_230 : f32 to vector<16x128xf32>
    %626 = arith.mulf %625, %624 : vector<16x128xf32>
    %627 = vector.extract_strided_slice %607 {offsets = [0, 256], sizes = [16, 128], strides = [1, 1]} : vector<16x512xf32> to vector<16x128xf32>
    %628 = math.tanh %627 : vector<16x128xf32>
    %629 = vector.extract_strided_slice %607 {offsets = [0, 384], sizes = [16, 128], strides = [1, 1]} : vector<16x512xf32> to vector<16x128xf32>
    %cst_231 = arith.constant 5.000000e-01 : f32
    %630 = vector.broadcast %cst_231 : f32 to vector<16x128xf32>
    %631 = arith.mulf %630, %629 : vector<16x128xf32>
    %632 = math.tanh %631 : vector<16x128xf32>
    %cst_232 = arith.constant 1.000000e+00 : f32
    %633 = vector.broadcast %cst_232 : f32 to vector<16x128xf32>
    %634 = arith.addf %632, %633 : vector<16x128xf32>
    %cst_233 = arith.constant 5.000000e-01 : f32
    %635 = vector.broadcast %cst_233 : f32 to vector<16x128xf32>
    %636 = arith.mulf %635, %634 : vector<16x128xf32>
    %637 = arith.mulf %626, %597 : vector<16x128xf32>
    %638 = arith.mulf %618, %628 : vector<16x128xf32>
    %639 = arith.addf %637, %638 : vector<16x128xf32>
    %640 = math.tanh %639 : vector<16x128xf32>
    %641 = arith.mulf %636, %640 : vector<16x128xf32>
    %642 = vector.extract_strided_slice %610 {offsets = [0, 0], sizes = [16, 128], strides = [1, 1]} : vector<16x512xf32> to vector<16x128xf32>
    %cst_234 = arith.constant 5.000000e-01 : f32
    %643 = vector.broadcast %cst_234 : f32 to vector<16x128xf32>
    %644 = arith.mulf %643, %642 : vector<16x128xf32>
    %645 = math.tanh %644 : vector<16x128xf32>
    %cst_235 = arith.constant 1.000000e+00 : f32
    %646 = vector.broadcast %cst_235 : f32 to vector<16x128xf32>
    %647 = arith.addf %645, %646 : vector<16x128xf32>
    %cst_236 = arith.constant 5.000000e-01 : f32
    %648 = vector.broadcast %cst_236 : f32 to vector<16x128xf32>
    %649 = arith.mulf %648, %647 : vector<16x128xf32>
    %650 = vector.extract_strided_slice %610 {offsets = [0, 128], sizes = [16, 128], strides = [1, 1]} : vector<16x512xf32> to vector<16x128xf32>
    %cst_237 = arith.constant 5.000000e-01 : f32
    %651 = vector.broadcast %cst_237 : f32 to vector<16x128xf32>
    %652 = arith.mulf %651, %650 : vector<16x128xf32>
    %653 = math.tanh %652 : vector<16x128xf32>
    %cst_238 = arith.constant 1.000000e+00 : f32
    %654 = vector.broadcast %cst_238 : f32 to vector<16x128xf32>
    %655 = arith.addf %653, %654 : vector<16x128xf32>
    %cst_239 = arith.constant 5.000000e-01 : f32
    %656 = vector.broadcast %cst_239 : f32 to vector<16x128xf32>
    %657 = arith.mulf %656, %655 : vector<16x128xf32>
    %658 = vector.extract_strided_slice %610 {offsets = [0, 256], sizes = [16, 128], strides = [1, 1]} : vector<16x512xf32> to vector<16x128xf32>
    %659 = math.tanh %658 : vector<16x128xf32>
    %660 = vector.extract_strided_slice %610 {offsets = [0, 384], sizes = [16, 128], strides = [1, 1]} : vector<16x512xf32> to vector<16x128xf32>
    %cst_240 = arith.constant 5.000000e-01 : f32
    %661 = vector.broadcast %cst_240 : f32 to vector<16x128xf32>
    %662 = arith.mulf %661, %660 : vector<16x128xf32>
    %663 = math.tanh %662 : vector<16x128xf32>
    %cst_241 = arith.constant 1.000000e+00 : f32
    %664 = vector.broadcast %cst_241 : f32 to vector<16x128xf32>
    %665 = arith.addf %663, %664 : vector<16x128xf32>
    %cst_242 = arith.constant 5.000000e-01 : f32
    %666 = vector.broadcast %cst_242 : f32 to vector<16x128xf32>
    %667 = arith.mulf %666, %665 : vector<16x128xf32>
    %668 = arith.mulf %657, %598 : vector<16x128xf32>
    %669 = arith.mulf %649, %659 : vector<16x128xf32>
    %670 = arith.addf %668, %669 : vector<16x128xf32>
    %671 = math.tanh %670 : vector<16x128xf32>
    %672 = arith.mulf %667, %671 : vector<16x128xf32>
    %c0_243 = arith.constant 0 : index
    %c0_244 = arith.constant 0 : index
    %673 = vector.load %arg25[%c0_243, %c0_244] : memref<16x256xf32, #tpu.memory_space<vmem>>, vector<16x128xf32>
    tpu.vector_store %arg25[%c0_243, %c0_244], %641 {strides = array<i32>} : memref<16x256xf32, #tpu.memory_space<vmem>>, vector<16x128xf32>,
    %c0_245 = arith.constant 0 : index
    %c128_246 = arith.constant 128 : index
    %674 = vector.load %arg25[%c0_245, %c128_246] : memref<16x256xf32, #tpu.memory_space<vmem>>, vector<16x128xf32>
    tpu.vector_store %arg25[%c0_245, %c128_246], %672 {strides = array<i32>} : memref<16x256xf32, #tpu.memory_space<vmem>>, vector<16x128xf32>,
    %c0_247 = arith.constant 0 : index
    %c0_248 = arith.constant 0 : index
    %675 = vector.load %arg23[%c0_247, %c0_248] : memref<48x256xf32, #tpu.memory_space<vmem>>, vector<16x128xf32>
    tpu.vector_store %arg23[%c0_247, %c0_248], %641 {strides = array<i32>} : memref<48x256xf32, #tpu.memory_space<vmem>>, vector<16x128xf32>,
    %c32_249 = arith.constant 32 : index
    %c128_250 = arith.constant 128 : index
    %676 = vector.load %arg23[%c32_249, %c128_250] : memref<48x256xf32, #tpu.memory_space<vmem>>, vector<16x128xf32>
    tpu.vector_store %arg23[%c32_249, %c128_250], %672 {strides = array<i32>} : memref<48x256xf32, #tpu.memory_space<vmem>>, vector<16x128xf32>,
    %c0_251 = arith.constant 0 : index
    %c0_252 = arith.constant 0 : index
    %677 = vector.load %arg25[%c0_251, %c0_252] : memref<16x256xf32, #tpu.memory_space<vmem>>, vector<16x256xf32>
    %678 = arith.truncf %677 : vector<16x256xf32> to vector<16x256xbf16>
    %cst_253 = arith.constant dense<0.000000e+00> : vector<16x1024xf32>
    %679 = tpu.matmul %678, %599, %cst_253 {dimension_numbers = #tpu.dot_dimension_numbers<[1], [0], [0], [1], [0, 0, 1, 1], [], []>} : vector<16x256xbf16>, vector<256x1024xbf16>, vector<16x1024xf32> -> vector<16x1024xf32>
    %680 = vector.extract_strided_slice %596 {offsets = [16, 0], sizes = [16, 512], strides = [1, 1]} : vector<48x1024xf32> to vector<16x512xf32>
    %681 = vector.extract_strided_slice %679 {offsets = [0, 0], sizes = [16, 512], strides = [1, 1]} : vector<16x1024xf32> to vector<16x512xf32>
    %682 = arith.addf %680, %681 : vector<16x512xf32>
    %683 = vector.extract_strided_slice %596 {offsets = [16, 512], sizes = [16, 512], strides = [1, 1]} : vector<48x1024xf32> to vector<16x512xf32>
    %684 = vector.extract_strided_slice %679 {offsets = [0, 512], sizes = [16, 512], strides = [1, 1]} : vector<16x1024xf32> to vector<16x512xf32>
    %685 = arith.addf %683, %684 : vector<16x512xf32>
    %686 = vector.extract_strided_slice %682 {offsets = [0, 0], sizes = [16, 128], strides = [1, 1]} : vector<16x512xf32> to vector<16x128xf32>
    %cst_254 = arith.constant 5.000000e-01 : f32
    %687 = vector.broadcast %cst_254 : f32 to vector<16x128xf32>
    %688 = arith.mulf %687, %686 : vector<16x128xf32>
    %689 = math.tanh %688 : vector<16x128xf32>
    %cst_255 = arith.constant 1.000000e+00 : f32
    %690 = vector.broadcast %cst_255 : f32 to vector<16x128xf32>
    %691 = arith.addf %689, %690 : vector<16x128xf32>
    %cst_256 = arith.constant 5.000000e-01 : f32
    %692 = vector.broadcast %cst_256 : f32 to vector<16x128xf32>
    %693 = arith.mulf %692, %691 : vector<16x128xf32>
    %694 = vector.extract_strided_slice %682 {offsets = [0, 128], sizes = [16, 128], strides = [1, 1]} : vector<16x512xf32> to vector<16x128xf32>
    %cst_257 = arith.constant 5.000000e-01 : f32
    %695 = vector.broadcast %cst_257 : f32 to vector<16x128xf32>
    %696 = arith.mulf %695, %694 : vector<16x128xf32>
    %697 = math.tanh %696 : vector<16x128xf32>
    %cst_258 = arith.constant 1.000000e+00 : f32
    %698 = vector.broadcast %cst_258 : f32 to vector<16x128xf32>
    %699 = arith.addf %697, %698 : vector<16x128xf32>
    %cst_259 = arith.constant 5.000000e-01 : f32
    %700 = vector.broadcast %cst_259 : f32 to vector<16x128xf32>
    %701 = arith.mulf %700, %699 : vector<16x128xf32>
    %702 = vector.extract_strided_slice %682 {offsets = [0, 256], sizes = [16, 128], strides = [1, 1]} : vector<16x512xf32> to vector<16x128xf32>
    %703 = math.tanh %702 : vector<16x128xf32>
    %704 = vector.extract_strided_slice %682 {offsets = [0, 384], sizes = [16, 128], strides = [1, 1]} : vector<16x512xf32> to vector<16x128xf32>
    %cst_260 = arith.constant 5.000000e-01 : f32
    %705 = vector.broadcast %cst_260 : f32 to vector<16x128xf32>
    %706 = arith.mulf %705, %704 : vector<16x128xf32>
    %707 = math.tanh %706 : vector<16x128xf32>
    %cst_261 = arith.constant 1.000000e+00 : f32
    %708 = vector.broadcast %cst_261 : f32 to vector<16x128xf32>
    %709 = arith.addf %707, %708 : vector<16x128xf32>
    %cst_262 = arith.constant 5.000000e-01 : f32
    %710 = vector.broadcast %cst_262 : f32 to vector<16x128xf32>
    %711 = arith.mulf %710, %709 : vector<16x128xf32>
    %712 = arith.mulf %701, %639 : vector<16x128xf32>
    %713 = arith.mulf %693, %703 : vector<16x128xf32>
    %714 = arith.addf %712, %713 : vector<16x128xf32>
    %715 = math.tanh %714 : vector<16x128xf32>
    %716 = arith.mulf %711, %715 : vector<16x128xf32>
    %717 = vector.extract_strided_slice %685 {offsets = [0, 0], sizes = [16, 128], strides = [1, 1]} : vector<16x512xf32> to vector<16x128xf32>
    %cst_263 = arith.constant 5.000000e-01 : f32
    %718 = vector.broadcast %cst_263 : f32 to vector<16x128xf32>
    %719 = arith.mulf %718, %717 : vector<16x128xf32>
    %720 = math.tanh %719 : vector<16x128xf32>
    %cst_264 = arith.constant 1.000000e+00 : f32
    %721 = vector.broadcast %cst_264 : f32 to vector<16x128xf32>
    %722 = arith.addf %720, %721 : vector<16x128xf32>
    %cst_265 = arith.constant 5.000000e-01 : f32
    %723 = vector.broadcast %cst_265 : f32 to vector<16x128xf32>
    %724 = arith.mulf %723, %722 : vector<16x128xf32>
    %725 = vector.extract_strided_slice %685 {offsets = [0, 128], sizes = [16, 128], strides = [1, 1]} : vector<16x512xf32> to vector<16x128xf32>
    %cst_266 = arith.constant 5.000000e-01 : f32
    %726 = vector.broadcast %cst_266 : f32 to vector<16x128xf32>
    %727 = arith.mulf %726, %725 : vector<16x128xf32>
    %728 = math.tanh %727 : vector<16x128xf32>
    %cst_267 = arith.constant 1.000000e+00 : f32
    %729 = vector.broadcast %cst_267 : f32 to vector<16x128xf32>
    %730 = arith.addf %728, %729 : vector<16x128xf32>
    %cst_268 = arith.constant 5.000000e-01 : f32
    %731 = vector.broadcast %cst_268 : f32 to vector<16x128xf32>
    %732 = arith.mulf %731, %730 : vector<16x128xf32>
    %733 = vector.extract_strided_slice %685 {offsets = [0, 256], sizes = [16, 128], strides = [1, 1]} : vector<16x512xf32> to vector<16x128xf32>
    %734 = math.tanh %733 : vector<16x128xf32>
    %735 = vector.extract_strided_slice %685 {offsets = [0, 384], sizes = [16, 128], strides = [1, 1]} : vector<16x512xf32> to vector<16x128xf32>
    %cst_269 = arith.constant 5.000000e-01 : f32
    %736 = vector.broadcast %cst_269 : f32 to vector<16x128xf32>
    %737 = arith.mulf %736, %735 : vector<16x128xf32>
    %738 = math.tanh %737 : vector<16x128xf32>
    %cst_270 = arith.constant 1.000000e+00 : f32
    %739 = vector.broadcast %cst_270 : f32 to vector<16x128xf32>
    %740 = arith.addf %738, %739 : vector<16x128xf32>
    %cst_271 = arith.constant 5.000000e-01 : f32
    %741 = vector.broadcast %cst_271 : f32 to vector<16x128xf32>
    %742 = arith.mulf %741, %740 : vector<16x128xf32>
    %743 = arith.mulf %732, %670 : vector<16x128xf32>
    %744 = arith.mulf %724, %734 : vector<16x128xf32>
    %745 = arith.addf %743, %744 : vector<16x128xf32>
    %746 = math.tanh %745 : vector<16x128xf32>
    %747 = arith.mulf %742, %746 : vector<16x128xf32>
    %c0_272 = arith.constant 0 : index
    %c0_273 = arith.constant 0 : index
    %748 = vector.load %arg25[%c0_272, %c0_273] : memref<16x256xf32, #tpu.memory_space<vmem>>, vector<16x128xf32>
    tpu.vector_store %arg25[%c0_272, %c0_273], %716 {strides = array<i32>} : memref<16x256xf32, #tpu.memory_space<vmem>>, vector<16x128xf32>,
    %c0_274 = arith.constant 0 : index
    %c128_275 = arith.constant 128 : index
    %749 = vector.load %arg25[%c0_274, %c128_275] : memref<16x256xf32, #tpu.memory_space<vmem>>, vector<16x128xf32>
    tpu.vector_store %arg25[%c0_274, %c128_275], %747 {strides = array<i32>} : memref<16x256xf32, #tpu.memory_space<vmem>>, vector<16x128xf32>,
    %c16_276 = arith.constant 16 : index
    %c0_277 = arith.constant 0 : index
    %750 = vector.load %arg23[%c16_276, %c0_277] : memref<48x256xf32, #tpu.memory_space<vmem>>, vector<16x128xf32>
    tpu.vector_store %arg23[%c16_276, %c0_277], %716 {strides = array<i32>} : memref<48x256xf32, #tpu.memory_space<vmem>>, vector<16x128xf32>,
    %c16_278 = arith.constant 16 : index
    %c128_279 = arith.constant 128 : index
    %751 = vector.load %arg23[%c16_278, %c128_279] : memref<48x256xf32, #tpu.memory_space<vmem>>, vector<16x128xf32>
    tpu.vector_store %arg23[%c16_278, %c128_279], %747 {strides = array<i32>} : memref<48x256xf32, #tpu.memory_space<vmem>>, vector<16x128xf32>,
    %c0_280 = arith.constant 0 : index
    %c0_281 = arith.constant 0 : index
    %752 = vector.load %arg25[%c0_280, %c0_281] : memref<16x256xf32, #tpu.memory_space<vmem>>, vector<16x256xf32>
    %753 = arith.truncf %752 : vector<16x256xf32> to vector<16x256xbf16>
    %cst_282 = arith.constant dense<0.000000e+00> : vector<16x1024xf32>
    %754 = tpu.matmul %753, %599, %cst_282 {dimension_numbers = #tpu.dot_dimension_numbers<[1], [0], [0], [1], [0, 0, 1, 1], [], []>} : vector<16x256xbf16>, vector<256x1024xbf16>, vector<16x1024xf32> -> vector<16x1024xf32>
    %755 = vector.extract_strided_slice %596 {offsets = [32, 0], sizes = [16, 512], strides = [1, 1]} : vector<48x1024xf32> to vector<16x512xf32>
    %756 = vector.extract_strided_slice %754 {offsets = [0, 0], sizes = [16, 512], strides = [1, 1]} : vector<16x1024xf32> to vector<16x512xf32>
    %757 = arith.addf %755, %756 : vector<16x512xf32>
    %758 = vector.extract_strided_slice %596 {offsets = [0, 512], sizes = [16, 512], strides = [1, 1]} : vector<48x1024xf32> to vector<16x512xf32>
    %759 = vector.extract_strided_slice %754 {offsets = [0, 512], sizes = [16, 512], strides = [1, 1]} : vector<16x1024xf32> to vector<16x512xf32>
    %760 = arith.addf %758, %759 : vector<16x512xf32>
    %761 = vector.extract_strided_slice %757 {offsets = [0, 0], sizes = [16, 128], strides = [1, 1]} : vector<16x512xf32> to vector<16x128xf32>
    %cst_283 = arith.constant 5.000000e-01 : f32
    %762 = vector.broadcast %cst_283 : f32 to vector<16x128xf32>
    %763 = arith.mulf %762, %761 : vector<16x128xf32>
    %764 = math.tanh %763 : vector<16x128xf32>
    %cst_284 = arith.constant 1.000000e+00 : f32
    %765 = vector.broadcast %cst_284 : f32 to vector<16x128xf32>
    %766 = arith.addf %764, %765 : vector<16x128xf32>
    %cst_285 = arith.constant 5.000000e-01 : f32
    %767 = vector.broadcast %cst_285 : f32 to vector<16x128xf32>
    %768 = arith.mulf %767, %766 : vector<16x128xf32>
    %769 = vector.extract_strided_slice %757 {offsets = [0, 128], sizes = [16, 128], strides = [1, 1]} : vector<16x512xf32> to vector<16x128xf32>
    %cst_286 = arith.constant 5.000000e-01 : f32
    %770 = vector.broadcast %cst_286 : f32 to vector<16x128xf32>
    %771 = arith.mulf %770, %769 : vector<16x128xf32>
    %772 = math.tanh %771 : vector<16x128xf32>
    %cst_287 = arith.constant 1.000000e+00 : f32
    %773 = vector.broadcast %cst_287 : f32 to vector<16x128xf32>
    %774 = arith.addf %772, %773 : vector<16x128xf32>
    %cst_288 = arith.constant 5.000000e-01 : f32
    %775 = vector.broadcast %cst_288 : f32 to vector<16x128xf32>
    %776 = arith.mulf %775, %774 : vector<16x128xf32>
    %777 = vector.extract_strided_slice %757 {offsets = [0, 256], sizes = [16, 128], strides = [1, 1]} : vector<16x512xf32> to vector<16x128xf32>
    %778 = math.tanh %777 : vector<16x128xf32>
    %779 = vector.extract_strided_slice %757 {offsets = [0, 384], sizes = [16, 128], strides = [1, 1]} : vector<16x512xf32> to vector<16x128xf32>
    %cst_289 = arith.constant 5.000000e-01 : f32
    %780 = vector.broadcast %cst_289 : f32 to vector<16x128xf32>
    %781 = arith.mulf %780, %779 : vector<16x128xf32>
    %782 = math.tanh %781 : vector<16x128xf32>
    %cst_290 = arith.constant 1.000000e+00 : f32
    %783 = vector.broadcast %cst_290 : f32 to vector<16x128xf32>
    %784 = arith.addf %782, %783 : vector<16x128xf32>
    %cst_291 = arith.constant 5.000000e-01 : f32
    %785 = vector.broadcast %cst_291 : f32 to vector<16x128xf32>
    %786 = arith.mulf %785, %784 : vector<16x128xf32>
    %787 = arith.mulf %776, %714 : vector<16x128xf32>
    %788 = arith.mulf %768, %778 : vector<16x128xf32>
    %789 = arith.addf %787, %788 : vector<16x128xf32>
    %790 = math.tanh %789 : vector<16x128xf32>
    %791 = arith.mulf %786, %790 : vector<16x128xf32>
    %792 = vector.extract_strided_slice %760 {offsets = [0, 0], sizes = [16, 128], strides = [1, 1]} : vector<16x512xf32> to vector<16x128xf32>
    %cst_292 = arith.constant 5.000000e-01 : f32
    %793 = vector.broadcast %cst_292 : f32 to vector<16x128xf32>
    %794 = arith.mulf %793, %792 : vector<16x128xf32>
    %795 = math.tanh %794 : vector<16x128xf32>
    %cst_293 = arith.constant 1.000000e+00 : f32
    %796 = vector.broadcast %cst_293 : f32 to vector<16x128xf32>
    %797 = arith.addf %795, %796 : vector<16x128xf32>
    %cst_294 = arith.constant 5.000000e-01 : f32
    %798 = vector.broadcast %cst_294 : f32 to vector<16x128xf32>
    %799 = arith.mulf %798, %797 : vector<16x128xf32>
    %800 = vector.extract_strided_slice %760 {offsets = [0, 128], sizes = [16, 128], strides = [1, 1]} : vector<16x512xf32> to vector<16x128xf32>
    %cst_295 = arith.constant 5.000000e-01 : f32
    %801 = vector.broadcast %cst_295 : f32 to vector<16x128xf32>
    %802 = arith.mulf %801, %800 : vector<16x128xf32>
    %803 = math.tanh %802 : vector<16x128xf32>
    %cst_296 = arith.constant 1.000000e+00 : f32
    %804 = vector.broadcast %cst_296 : f32 to vector<16x128xf32>
    %805 = arith.addf %803, %804 : vector<16x128xf32>
    %cst_297 = arith.constant 5.000000e-01 : f32
    %806 = vector.broadcast %cst_297 : f32 to vector<16x128xf32>
    %807 = arith.mulf %806, %805 : vector<16x128xf32>
    %808 = vector.extract_strided_slice %760 {offsets = [0, 256], sizes = [16, 128], strides = [1, 1]} : vector<16x512xf32> to vector<16x128xf32>
    %809 = math.tanh %808 : vector<16x128xf32>
    %810 = vector.extract_strided_slice %760 {offsets = [0, 384], sizes = [16, 128], strides = [1, 1]} : vector<16x512xf32> to vector<16x128xf32>
    %cst_298 = arith.constant 5.000000e-01 : f32
    %811 = vector.broadcast %cst_298 : f32 to vector<16x128xf32>
    %812 = arith.mulf %811, %810 : vector<16x128xf32>
    %813 = math.tanh %812 : vector<16x128xf32>
    %cst_299 = arith.constant 1.000000e+00 : f32
    %814 = vector.broadcast %cst_299 : f32 to vector<16x128xf32>
    %815 = arith.addf %813, %814 : vector<16x128xf32>
    %cst_300 = arith.constant 5.000000e-01 : f32
    %816 = vector.broadcast %cst_300 : f32 to vector<16x128xf32>
    %817 = arith.mulf %816, %815 : vector<16x128xf32>
    %818 = arith.mulf %807, %745 : vector<16x128xf32>
    %819 = arith.mulf %799, %809 : vector<16x128xf32>
    %820 = arith.addf %818, %819 : vector<16x128xf32>
    %821 = math.tanh %820 : vector<16x128xf32>
    %822 = arith.mulf %817, %821 : vector<16x128xf32>
    %c0_301 = arith.constant 0 : index
    %c0_302 = arith.constant 0 : index
    %823 = vector.load %arg25[%c0_301, %c0_302] : memref<16x256xf32, #tpu.memory_space<vmem>>, vector<16x128xf32>
    tpu.vector_store %arg25[%c0_301, %c0_302], %791 {strides = array<i32>} : memref<16x256xf32, #tpu.memory_space<vmem>>, vector<16x128xf32>,
    %c0_303 = arith.constant 0 : index
    %c128_304 = arith.constant 128 : index
    %824 = vector.load %arg25[%c0_303, %c128_304] : memref<16x256xf32, #tpu.memory_space<vmem>>, vector<16x128xf32>
    tpu.vector_store %arg25[%c0_303, %c128_304], %822 {strides = array<i32>} : memref<16x256xf32, #tpu.memory_space<vmem>>, vector<16x128xf32>,
    %c32_305 = arith.constant 32 : index
    %c0_306 = arith.constant 0 : index
    %825 = vector.load %arg23[%c32_305, %c0_306] : memref<48x256xf32, #tpu.memory_space<vmem>>, vector<16x128xf32>
    tpu.vector_store %arg23[%c32_305, %c0_306], %791 {strides = array<i32>} : memref<48x256xf32, #tpu.memory_space<vmem>>, vector<16x128xf32>,
    %c0_307 = arith.constant 0 : index
    %c128_308 = arith.constant 128 : index
    %826 = vector.load %arg23[%c0_307, %c128_308] : memref<48x256xf32, #tpu.memory_space<vmem>>, vector<16x128xf32>
    tpu.vector_store %arg23[%c0_307, %c128_308], %822 {strides = array<i32>} : memref<48x256xf32, #tpu.memory_space<vmem>>, vector<16x128xf32>,
    %c32_309 = arith.constant 32 : index
    %c0_310 = arith.constant 0 : index
    %827 = vector.load %arg23[%c32_309, %c0_310] : memref<48x256xf32, #tpu.memory_space<vmem>>, vector<16x256xf32>
    %c0_311 = arith.constant 0 : index
    %c0_312 = arith.constant 0 : index
    %828 = vector.load %arg13[%c0_311, %c0_312] : memref<256x128xbf16, #tpu.memory_space<vmem>>, vector<256x128xbf16>
    %829 = arith.truncf %827 : vector<16x256xf32> to vector<16x256xbf16>
    %cst_313 = arith.constant dense<0.000000e+00> : vector<16x128xf32>
    %830 = tpu.matmul %829, %828, %cst_313 {dimension_numbers = #tpu.dot_dimension_numbers<[1], [0], [0], [1], [0, 0, 1, 1], [], []>} : vector<16x256xbf16>, vector<256x128xbf16>, vector<16x128xf32> -> vector<16x128xf32>
    %c0_314 = arith.constant 0 : index
    %c0_315 = arith.constant 0 : index
    %831 = vector.load %arg14[%c0_314, %c0_315] : memref<1x128xf32, #tpu.memory_space<vmem>>, vector<1x128xf32>
    %832 = vector.broadcast %831 : vector<1x128xf32> to vector<16x128xf32>
    %833 = arith.addf %830, %832 : vector<16x128xf32>
    %c0_316 = arith.constant 0 : index
    %c0_317 = arith.constant 0 : index
    %834 = vector.load %arg16[%c0_316, %c0_317] : memref<1x128xf32, #tpu.memory_space<vmem>>, vector<1x128xf32>
    %835 = vector.extract_strided_slice %116 {offsets = [0, 0], sizes = [16, 128], strides = [1, 1]} : vector<48x128xf32> to vector<16x128xf32>
    %c0_318 = arith.constant 0 : index
    %c0_319 = arith.constant 0 : index
    %836 = vector.load %arg15[%c0_318, %c0_319] : memref<384x128xbf16, #tpu.memory_space<vmem>>, vector<128x128xbf16>
    %837 = arith.truncf %835 : vector<16x128xf32> to vector<16x128xbf16>
    %cst_320 = arith.constant dense<0.000000e+00> : vector<16x128xf32>
    %838 = tpu.matmul %837, %836, %cst_320 {dimension_numbers = #tpu.dot_dimension_numbers<[1], [0], [0], [1], [0, 0, 1, 1], [], []>} : vector<16x128xbf16>, vector<128x128xbf16>, vector<16x128xf32> -> vector<16x128xf32>
    %839 = vector.broadcast %834 : vector<1x128xf32> to vector<16x128xf32>
    %840 = arith.addf %839, %838 : vector<16x128xf32>
    %841 = vector.extract_strided_slice %116 {offsets = [16, 0], sizes = [16, 128], strides = [1, 1]} : vector<48x128xf32> to vector<16x128xf32>
    %c128_321 = arith.constant 128 : index
    %c0_322 = arith.constant 0 : index
    %842 = vector.load %arg15[%c128_321, %c0_322] : memref<384x128xbf16, #tpu.memory_space<vmem>>, vector<128x128xbf16>
    %843 = arith.truncf %841 : vector<16x128xf32> to vector<16x128xbf16>
    %cst_323 = arith.constant dense<0.000000e+00> : vector<16x128xf32>
    %844 = tpu.matmul %843, %842, %cst_323 {dimension_numbers = #tpu.dot_dimension_numbers<[1], [0], [0], [1], [0, 0, 1, 1], [], []>} : vector<16x128xbf16>, vector<128x128xbf16>, vector<16x128xf32> -> vector<16x128xf32>
    %845 = arith.addf %840, %844 : vector<16x128xf32>
    %846 = vector.extract_strided_slice %116 {offsets = [32, 0], sizes = [16, 128], strides = [1, 1]} : vector<48x128xf32> to vector<16x128xf32>
    %c256 = arith.constant 256 : index
    %c0_324 = arith.constant 0 : index
    %847 = vector.load %arg15[%c256, %c0_324] : memref<384x128xbf16, #tpu.memory_space<vmem>>, vector<128x128xbf16>
    %848 = arith.truncf %846 : vector<16x128xf32> to vector<16x128xbf16>
    %cst_325 = arith.constant dense<0.000000e+00> : vector<16x128xf32>
    %849 = tpu.matmul %848, %847, %cst_325 {dimension_numbers = #tpu.dot_dimension_numbers<[1], [0], [0], [1], [0, 0, 1, 1], [], []>} : vector<16x128xbf16>, vector<128x128xbf16>, vector<16x128xf32> -> vector<16x128xf32>
    %850 = arith.addf %845, %849 : vector<16x128xf32>
    %c0_326 = arith.constant 0 : index
    %c0_327 = arith.constant 0 : index
    %851 = vector.load %arg17[%c0_326, %c0_327] : memref<128x128xbf16, #tpu.memory_space<vmem>>, vector<128x128xbf16>
    %852 = arith.truncf %833 : vector<16x128xf32> to vector<16x128xbf16>
    %cst_328 = arith.constant dense<0.000000e+00> : vector<16x128xf32>
    %853 = tpu.matmul %852, %851, %cst_328 {dimension_numbers = #tpu.dot_dimension_numbers<[1], [0], [0], [1], [0, 0, 1, 1], [], []>} : vector<16x128xbf16>, vector<128x128xbf16>, vector<16x128xf32> -> vector<16x128xf32>
    %c0_329 = arith.constant 0 : index
    %c0_330 = arith.constant 0 : index
    %854 = vector.load %arg18[%c0_329, %c0_330] : memref<128x128xbf16, #tpu.memory_space<vmem>>, vector<128x128xbf16>
    %855 = arith.truncf %850 : vector<16x128xf32> to vector<16x128xbf16>
    %cst_331 = arith.constant dense<0.000000e+00> : vector<16x128xf32>
    %856 = tpu.matmul %855, %854, %cst_331 {dimension_numbers = #tpu.dot_dimension_numbers<[1], [0], [0], [1], [0, 0, 1, 1], [], []>} : vector<16x128xbf16>, vector<128x128xbf16>, vector<16x128xf32> -> vector<16x128xf32>
    %857 = arith.addf %853, %856 : vector<16x128xf32>
    %c0_332 = arith.constant 0 : index
    %c0_333 = arith.constant 0 : index
    %858 = vector.load %arg19[%c0_332, %c0_333] : memref<1x128xf32, #tpu.memory_space<vmem>>, vector<1x128xf32>
    %859 = vector.broadcast %858 : vector<1x128xf32> to vector<16x128xf32>
    %860 = arith.addf %857, %859 : vector<16x128xf32>
    %861 = math.tanh %860 : vector<16x128xf32>
    %c0_334 = arith.constant 0 : index
    %c0_335 = arith.constant 0 : index
    %862 = vector.load %arg20[%c0_334, %c0_335] : memref<1x128xf32, #tpu.memory_space<vmem>>, vector<1x128xf32>
    %863 = vector.broadcast %862 : vector<1x128xf32> to vector<16x128xf32>
    %864 = arith.mulf %861, %863 : vector<16x128xf32>
    %cst_336 = arith.constant dense<0.000000e+00> : vector<16xf32>
    %865 = vector.multi_reduction <add>, %864, %cst_336 [1] : vector<16x128xf32> to vector<16xf32>
    %866 = vector.shape_cast %865 : vector<16xf32> to vector<16x1xf32>
    %c0_337 = arith.constant 0 : index
    %c0_338 = arith.constant 0 : index
    %867 = vector.load %arg21[%c0_337, %c0_338] : memref<1x1xf32, #tpu.memory_space<vmem>>, vector<1x1xf32>
    %868 = vector.broadcast %867 : vector<1x1xf32> to vector<16x1xf32>
    %869 = arith.addf %866, %868 : vector<16x1xf32>
    %cst_339 = arith.constant 5.000000e-01 : f32
    %870 = vector.broadcast %cst_339 : f32 to vector<16x1xf32>
    %871 = arith.mulf %870, %869 : vector<16x1xf32>
    %872 = math.tanh %871 : vector<16x1xf32>
    %cst_340 = arith.constant 1.000000e+00 : f32
    %873 = vector.broadcast %cst_340 : f32 to vector<16x1xf32>
    %874 = arith.addf %872, %873 : vector<16x1xf32>
    %cst_341 = arith.constant 5.000000e-01 : f32
    %875 = vector.broadcast %cst_341 : f32 to vector<16x1xf32>
    %876 = arith.mulf %875, %874 : vector<16x1xf32>
    %c0_342 = arith.constant 0 : index
    %c0_343 = arith.constant 0 : index
    %877 = vector.load %arg22[%c0_342, %c0_343] : memref<16x1xf32, #tpu.memory_space<vmem>>, vector<16x1xf32>
    tpu.vector_store %arg22[%c0_342, %c0_343], %876 {strides = array<i32>} : memref<16x1xf32, #tpu.memory_space<vmem>>, vector<16x1xf32>,
    return
  }
}

</mosaic_0001>

<llo_original>
// kernel: tpu_custom_call.1
$region0: #{tpu_custom_call.1}
  #allocation0 [shape = 'u32[]', space=smem, size = 0x4, offset = 0x4, fixed_abs, tag = 'smem constant byte address 0x4 - core index']
  #allocation1 [shape = 'u32[144,128]{1,0:T(1,128)}', space=vmem, size = 0x12000, scoped, tag = 'internal scratch']
  #allocation2 [shape = 'f32[48,256]{1,0:T(8,128)}', space=vmem, size = 0xc000, scoped, tag = 'scratch operand']
  #allocation3 [shape = 'f32[48,256]{1,0:T(8,128)}', space=vmem, size = 0xc000, scoped, tag = 'scratch operand']
  #allocation4 [shape = 'f32[16,256]{1,0:T(8,128)}', space=vmem, size = 0x4000, scoped, tag = 'scratch operand']
  #allocation5 [shape = 'f32[1,1]{1,0:T(1,128)S(1)}', space=vmem, size = 0x200, scoped, tag = 'scoped memory for tpu_custom_call.1']
  %s0 = inlined_call_operand.vmem [shape: s32[48,16], index: 0, kind: input, shape index: {}]
  %s1 = inlined_call_operand.vmem [shape: bf16[128,128], index: 1, kind: input, shape index: {}]
  %s2 = inlined_call_operand.hbm [shape: bf16[128,128], index: 2, kind: input, shape index: {}]
  %s3 = inlined_call_operand.hbm [shape: f32[1,128], index: 3, kind: input, shape index: {}]
  %s4 = inlined_call_operand.hbm [shape: bf16[128,1024], index: 4, kind: input, shape index: {}]
  %s5 = inlined_call_operand.hbm [shape: bf16[256,1024], index: 5, kind: input, shape index: {}]
  %s6 = inlined_call_operand.hbm [shape: f32[1,1024], index: 6, kind: input, shape index: {}]
  %s7 = inlined_call_operand.hbm [shape: bf16[256,1024], index: 7, kind: input, shape index: {}]
  %s8 = inlined_call_operand.hbm [shape: bf16[256,1024], index: 8, kind: input, shape index: {}]
  %s9 = inlined_call_operand.hbm [shape: f32[1,1024], index: 9, kind: input, shape index: {}]
  %s10 = inlined_call_operand.hbm [shape: bf16[256,1024], index: 10, kind: input, shape index: {}]
  %s11 = inlined_call_operand.hbm [shape: bf16[256,1024], index: 11, kind: input, shape index: {}]
  %s12 = inlined_call_operand.hbm [shape: f32[1,1024], index: 12, kind: input, shape index: {}]
  %s13 = inlined_call_operand.hbm [shape: bf16[256,128], index: 13, kind: input, shape index: {}]
  %s14 = inlined_call_operand.hbm [shape: f32[1,128], index: 14, kind: input, shape index: {}]
  %s15 = inlined_call_operand.hbm [shape: bf16[384,128], index: 15, kind: input, shape index: {}]
  %s16 = inlined_call_operand.hbm [shape: f32[1,128], index: 16, kind: input, shape index: {}]
  %s17 = inlined_call_operand.vmem [shape: bf16[128,128], index: 17, kind: input, shape index: {}]
  %s18 = inlined_call_operand.hbm [shape: bf16[128,128], index: 18, kind: input, shape index: {}]
  %s19 = inlined_call_operand.vmem [shape: f32[1,128], index: 19, kind: input, shape index: {}]
  %s20 = inlined_call_operand.vmem [shape: f32[1,128], index: 20, kind: input, shape index: {}]
  %s21 = inlined_call_operand.<no memory space> [shape: f32[1,1], index: 21, kind: input, shape index: {}]
  %s22 = inlined_call_operand.vmem [shape: f32[16,1], index: 22, kind: output, shape index: {}]
  %s23 = sld [smem:[#allocation0]]
  $region162: #{tpu_custom_call.1} parent=0
    _
  %s25 = ssub.s32 1, %s23
  %s26 = scalar_select 0, %s25, %s23
  %v27 = vstv %s21
  %28 = vst [vmem:[#allocation5] sm:$0x1] %v27
  $region1: #{tpu_custom_call.1} parent=0
    #allocation6 [shape = 'u8[32768]{0}', space=vmem, size = 0x8000, scoped, tag = 'input window, operand 2, single buffered']
    #allocation7 [shape = 's32[1]{0}', space=sflag, size = 0x4, scoped, tag = 'scoped memory for tpu_custom_call.1']
    #allocation8 [shape = 'u8[512]{0}', space=vmem, size = 0x400, scoped, tag = 'input window, operand 3, single buffered']
    #allocation9 [shape = 's32[1]{0}', space=sflag, size = 0x4, scoped, tag = 'scoped memory for tpu_custom_call.1']
    #allocation10 [shape = 'u8[262144]{0}', space=vmem, size = 0x40000, scoped, tag = 'input window, operand 4, single buffered']
    #allocation11 [shape = 'u8[524288]{0}', space=vmem, size = 0x80000, scoped, tag = 'input window, operand 5, single buffered']
    #allocation12 [shape = 's32[1]{0}', space=sflag, size = 0x4, scoped, tag = 'scoped memory for tpu_custom_call.1']
    #allocation13 [shape = 'u8[4096]{0}', space=vmem, size = 0x1000, scoped, tag = 'input window, operand 6, single buffered']
    #allocation14 [shape = 'u8[524288]{0}', space=vmem, size = 0x80000, scoped, tag = 'input window, operand 7, single buffered']
    #allocation15 [shape = 's32[1]{0}', space=sflag, size = 0x4, scoped, tag = 'scoped memory for tpu_custom_call.1']
    #allocation16 [shape = 'u8[524288]{0}', space=vmem, size = 0x80000, scoped, tag = 'input window, operand 8, single buffered']
    #allocation17 [shape = 'u8[4096]{0}', space=vmem, size = 0x1000, scoped, tag = 'input window, operand 9, single buffered']
    #allocation18 [shape = 's32[1]{0}', space=sflag, size = 0x4, scoped, tag = 'scoped memory for tpu_custom_call.1']
    #allocation19 [shape = 'u8[524288]{0}', space=vmem, size = 0x80000, scoped, tag = 'input window, operand 10, single buffered']
    #allocation20 [shape = 'u8[524288]{0}', space=vmem, size = 0x80000, scoped, tag = 'input window, operand 11, single buffered']
    #allocation21 [shape = 's32[1]{0}', space=sflag, size = 0x4, scoped, tag = 'scoped memory for tpu_custom_call.1']
    #allocation22 [shape = 'u8[4096]{0}', space=vmem, size = 0x1000, scoped, tag = 'input window, operand 12, single buffered']
    #allocation23 [shape = 'u8[65536]{0}', space=vmem, size = 0x10000, scoped, tag = 'input window, operand 13, single buffered']
    #allocation24 [shape = 's32[1]{0}', space=sflag, size = 0x4, scoped, tag = 'scoped memory for tpu_custom_call.1']
    #allocation25 [shape = 'u8[512]{0}', space=vmem, size = 0x400, scoped, tag = 'input window, operand 14, single buffered']
    #allocation26 [shape = 'u8[98304]{0}', space=vmem, size = 0x18000, scoped, tag = 'input window, operand 15, single buffered']
    #allocation27 [shape = 's32[1]{0}', space=sflag, size = 0x4, scoped, tag = 'scoped memory for tpu_custom_call.1']
    #allocation28 [shape = 'u8[512]{0}', space=vmem, size = 0x400, scoped, tag = 'input window, operand 16, single buffered']
    #allocation29 [shape = 'u8[32768]{0}', space=vmem, size = 0x8000, scoped, tag = 'input window, operand 18, single buffered']
    #allocation30 [shape = 's32[1]{0}', space=sflag, size = 0x4, scoped, tag = 'scoped memory for tpu_custom_call.1']
    %29 = vsyncpa [#allocation7], 0
    %30 = vsyncpa [#allocation9], 0
    %31 = vsyncpa [#allocation12], 0
    %32 = vsyncpa [#allocation15], 0
    %33 = vsyncpa [#allocation18], 0
    %34 = vsyncpa [#allocation21], 0
    %35 = vsyncpa [#allocation24], 0
    %36 = vsyncpa [#allocation27], 0
    %37 = vsyncpa [#allocation30], 0
    // Predicated region
    $region2: #{tpu_custom_call.1} parent=1 // pred_check
      _
    $region3: #{tpu_custom_call.1} parent=1 // pred_check_branch
      %39 = sbr.rel (0) target = $region5
    $region4: #{tpu_custom_call.1} parent=1 // pred_region
      _
    $region5: #{tpu_custom_call.1} parent=1 // pred_fallthru
      _
    // Predicated region
    $region6: #{tpu_custom_call.1} parent=1 // pred_check
      _
    $region7: #{tpu_custom_call.1} parent=1 // pred_check_branch
      %41 = sbr.rel (0) target = $region9
    $region8: #{tpu_custom_call.1} parent=1 // pred_region
      _
    $region9: #{tpu_custom_call.1} parent=1 // pred_fallthru
      _
    // Predicated region
    $region10: #{tpu_custom_call.1} parent=1 // pred_check
      _
    $region11: #{tpu_custom_call.1} parent=1 // pred_check_branch
      %43 = sbr.rel (0) target = $region13
    $region12: #{tpu_custom_call.1} parent=1 // pred_region
      %s45 = ssub.s32 1024, 1024
      %46 = vsyncadd [#allocation7], %s45
      %s47 = sshll.u32 [#allocation6], 4
      %s48 = int_to_ptr.vmem [resolvable:$true] %s47
      %53 = dma.hbm_to_vmem [thread:$0]  %s2, 1024, %s48, [#allocation7], 64, 64, 4
    $region13: #{tpu_custom_call.1} parent=1 // pred_fallthru
      _
    // Predicated region
    $region14: #{tpu_custom_call.1} parent=1 // pred_check
      _
    $region15: #{tpu_custom_call.1} parent=1 // pred_check_branch
      %55 = sbr.rel (0) target = $region17
    $region16: #{tpu_custom_call.1} parent=1 // pred_region
      %s57 = ssub.s32 16, 16
      %58 = vsyncadd [#allocation9], %s57
      %s60 = sshll.u32 [#allocation8], 4
      %s61 = int_to_ptr.vmem [resolvable:$true] %s60
      %63 = dma.hbm_to_vmem [thread:$0]  %s3, 16, %s61, [#allocation9]
    $region17: #{tpu_custom_call.1} parent=1 // pred_fallthru
      _
    // Predicated region
    $region18: #{tpu_custom_call.1} parent=1 // pred_check
      _
    $region19: #{tpu_custom_call.1} parent=1 // pred_check_branch
      %65 = sbr.rel (0) target = $region21
    $region20: #{tpu_custom_call.1} parent=1 // pred_region
      %s67 = ssub.s32 8192, 8192
      %68 = vsyncadd [#allocation9], %s67
      %s69 = sshll.u32 [#allocation10], 4
      %s70 = int_to_ptr.vmem [resolvable:$true] %s69
      %75 = dma.hbm_to_vmem [thread:$0]  %s4, 8192, %s70, [#allocation9], 512, 512, 32
    $region21: #{tpu_custom_call.1} parent=1 // pred_fallthru
      _
    // Predicated region
    $region22: #{tpu_custom_call.1} parent=1 // pred_check
      _
    $region23: #{tpu_custom_call.1} parent=1 // pred_check_branch
      %77 = sbr.rel (0) target = $region25
    $region24: #{tpu_custom_call.1} parent=1 // pred_region
      %s79 = ssub.s32 16384, 16384
      %80 = vsyncadd [#allocation12], %s79
      %s81 = sshll.u32 [#allocation11], 4
      %s82 = int_to_ptr.vmem [resolvable:$true] %s81
      %87 = dma.hbm_to_vmem [thread:$0]  %s5, 16384, %s82, [#allocation12], 512, 512, 32
    $region25: #{tpu_custom_call.1} parent=1 // pred_fallthru
      _
    // Predicated region
    $region26: #{tpu_custom_call.1} parent=1 // pred_check
      _
    $region27: #{tpu_custom_call.1} parent=1 // pred_check_branch
      %89 = sbr.rel (0) target = $region29
    $region28: #{tpu_custom_call.1} parent=1 // pred_region
      %s91 = ssub.s32 128, 128
      %92 = vsyncadd [#allocation12], %s91
      %s94 = sshll.u32 [#allocation13], 4
      %s95 = int_to_ptr.vmem [resolvable:$true] %s94
      %97 = dma.hbm_to_vmem [thread:$0]  %s6, 128, %s95, [#allocation12]
    $region29: #{tpu_custom_call.1} parent=1 // pred_fallthru
      _
    // Predicated region
    $region30: #{tpu_custom_call.1} parent=1 // pred_check
      _
    $region31: #{tpu_custom_call.1} parent=1 // pred_check_branch
      %99 = sbr.rel (0) target = $region33
    $region32: #{tpu_custom_call.1} parent=1 // pred_region
      %s101 = ssub.s32 16384, 16384
      %102 = vsyncadd [#allocation15], %s101
      %s103 = sshll.u32 [#allocation14], 4
      %s104 = int_to_ptr.vmem [resolvable:$true] %s103
      %109 = dma.hbm_to_vmem [thread:$0]  %s7, 16384, %s104, [#allocation15], 512, 512, 32
    $region33: #{tpu_custom_call.1} parent=1 // pred_fallthru
      _
    // Predicated region
    $region34: #{tpu_custom_call.1} parent=1 // pred_check
      _
    $region35: #{tpu_custom_call.1} parent=1 // pred_check_branch
      %111 = sbr.rel (0) target = $region37
    $region36: #{tpu_custom_call.1} parent=1 // pred_region
      %s113 = ssub.s32 16384, 16384
      %114 = vsyncadd [#allocation15], %s113
      %s115 = sshll.u32 [#allocation16], 4
      %s116 = int_to_ptr.vmem [resolvable:$true] %s115
      %121 = dma.hbm_to_vmem [thread:$0]  %s8, 16384, %s116, [#allocation15], 512, 512, 32
    $region37: #{tpu_custom_call.1} parent=1 // pred_fallthru
      _
    // Predicated region
    $region38: #{tpu_custom_call.1} parent=1 // pred_check
      _
    $region39: #{tpu_custom_call.1} parent=1 // pred_check_branch
      %123 = sbr.rel (0) target = $region41
    $region40: #{tpu_custom_call.1} parent=1 // pred_region
      %s125 = ssub.s32 128, 128
      %126 = vsyncadd [#allocation18], %s125
      %s128 = sshll.u32 [#allocation17], 4
      %s129 = int_to_ptr.vmem [resolvable:$true] %s128
      %131 = dma.hbm_to_vmem [thread:$0]  %s9, 128, %s129, [#allocation18]
    $region41: #{tpu_custom_call.1} parent=1 // pred_fallthru
      _
    // Predicated region
    $region42: #{tpu_custom_call.1} parent=1 // pred_check
      _
    $region43: #{tpu_custom_call.1} parent=1 // pred_check_branch
      %133 = sbr.rel (0) target = $region45
    $region44: #{tpu_custom_call.1} parent=1 // pred_region
      %s135 = ssub.s32 16384, 16384
      %136 = vsyncadd [#allocation18], %s135
      %s137 = sshll.u32 [#allocation19], 4
      %s138 = int_to_ptr.vmem [resolvable:$true] %s137
      %143 = dma.hbm_to_vmem [thread:$0]  %s10, 16384, %s138, [#allocation18], 512, 512, 32
    $region45: #{tpu_custom_call.1} parent=1 // pred_fallthru
      _
    // Predicated region
    $region46: #{tpu_custom_call.1} parent=1 // pred_check
      _
    $region47: #{tpu_custom_call.1} parent=1 // pred_check_branch
      %145 = sbr.rel (0) target = $region49
    $region48: #{tpu_custom_call.1} parent=1 // pred_region
      %s147 = ssub.s32 16384, 16384
      %148 = vsyncadd [#allocation21], %s147
      %s149 = sshll.u32 [#allocation20], 4
      %s150 = int_to_ptr.vmem [resolvable:$true] %s149
      %155 = dma.hbm_to_vmem [thread:$0]  %s11, 16384, %s150, [#allocation21], 512, 512, 32
    $region49: #{tpu_custom_call.1} parent=1 // pred_fallthru
      _
    // Predicated region
    $region50: #{tpu_custom_call.1} parent=1 // pred_check
      _
    $region51: #{tpu_custom_call.1} parent=1 // pred_check_branch
      %157 = sbr.rel (0) target = $region53
    $region52: #{tpu_custom_call.1} parent=1 // pred_region
      %s159 = ssub.s32 128, 128
      %160 = vsyncadd [#allocation21], %s159
      %s162 = sshll.u32 [#allocation22], 4
      %s163 = int_to_ptr.vmem [resolvable:$true] %s162
      %165 = dma.hbm_to_vmem [thread:$0]  %s12, 128, %s163, [#allocation21]
    $region53: #{tpu_custom_call.1} parent=1 // pred_fallthru
      _
    // Predicated region
    $region54: #{tpu_custom_call.1} parent=1 // pred_check
      _
    $region55: #{tpu_custom_call.1} parent=1 // pred_check_branch
      %167 = sbr.rel (0) target = $region57
    $region56: #{tpu_custom_call.1} parent=1 // pred_region
      %s169 = ssub.s32 2048, 2048
      %170 = vsyncadd [#allocation24], %s169
      %s171 = sshll.u32 [#allocation23], 4
      %s172 = int_to_ptr.vmem [resolvable:$true] %s171
      %177 = dma.hbm_to_vmem [thread:$0]  %s13, 2048, %s172, [#allocation24], 64, 64, 4
    $region57: #{tpu_custom_call.1} parent=1 // pred_fallthru
      _
    // Predicated region
    $region58: #{tpu_custom_call.1} parent=1 // pred_check
      _
    $region59: #{tpu_custom_call.1} parent=1 // pred_check_branch
      %179 = sbr.rel (0) target = $region61
    $region60: #{tpu_custom_call.1} parent=1 // pred_region
      %s181 = ssub.s32 16, 16
      %182 = vsyncadd [#allocation24], %s181
      %s184 = sshll.u32 [#allocation25], 4
      %s185 = int_to_ptr.vmem [resolvable:$true] %s184
      %187 = dma.hbm_to_vmem [thread:$0]  %s14, 16, %s185, [#allocation24]
    $region61: #{tpu_custom_call.1} parent=1 // pred_fallthru
      _
    // Predicated region
    $region62: #{tpu_custom_call.1} parent=1 // pred_check
      _
    $region63: #{tpu_custom_call.1} parent=1 // pred_check_branch
      %189 = sbr.rel (0) target = $region65
    $region64: #{tpu_custom_call.1} parent=1 // pred_region
      %s191 = ssub.s32 3072, 3072
      %192 = vsyncadd [#allocation27], %s191
      %s193 = sshll.u32 [#allocation26], 4
      %s194 = int_to_ptr.vmem [resolvable:$true] %s193
      %199 = dma.hbm_to_vmem [thread:$0]  %s15, 3072, %s194, [#allocation27], 64, 64, 4
    $region65: #{tpu_custom_call.1} parent=1 // pred_fallthru
      _
    // Predicated region
    $region66: #{tpu_custom_call.1} parent=1 // pred_check
      _
    $region67: #{tpu_custom_call.1} parent=1 // pred_check_branch
      %201 = sbr.rel (0) target = $region69
    $region68: #{tpu_custom_call.1} parent=1 // pred_region
      %s203 = ssub.s32 16, 16
      %204 = vsyncadd [#allocation27], %s203
      %s206 = sshll.u32 [#allocation28], 4
      %s207 = int_to_ptr.vmem [resolvable:$true] %s206
      %209 = dma.hbm_to_vmem [thread:$0]  %s16, 16, %s207, [#allocation27]
    $region69: #{tpu_custom_call.1} parent=1 // pred_fallthru
      _
    // Predicated region
    $region70: #{tpu_custom_call.1} parent=1 // pred_check
      _
    $region71: #{tpu_custom_call.1} parent=1 // pred_check_branch
      %211 = sbr.rel (0) target = $region73
    $region72: #{tpu_custom_call.1} parent=1 // pred_region
      _
    $region73: #{tpu_custom_call.1} parent=1 // pred_fallthru
      _
    // Predicated region
    $region74: #{tpu_custom_call.1} parent=1 // pred_check
      _
    $region75: #{tpu_custom_call.1} parent=1 // pred_check_branch
      %213 = sbr.rel (0) target = $region77
    $region76: #{tpu_custom_call.1} parent=1 // pred_region
      %s215 = ssub.s32 1024, 1024
      %216 = vsyncadd [#allocation30], %s215
      %s217 = sshll.u32 [#allocation29], 4
      %s218 = int_to_ptr.vmem [resolvable:$true] %s217
      %223 = dma.hbm_to_vmem [thread:$0]  %s18, 1024, %s218, [#allocation30], 64, 64, 4
    $region77: #{tpu_custom_call.1} parent=1 // pred_fallthru
      _
    // Predicated region
    $region78: #{tpu_custom_call.1} parent=1 // pred_check
      _
    $region79: #{tpu_custom_call.1} parent=1 // pred_check_branch
      %225 = sbr.rel (0) target = $region81
    $region80: #{tpu_custom_call.1} parent=1 // pred_region
      _
    $region81: #{tpu_custom_call.1} parent=1 // pred_fallthru
      _
    // Predicated region
    $region82: #{tpu_custom_call.1} parent=1 // pred_check
      _
    $region83: #{tpu_custom_call.1} parent=1 // pred_check_branch
      %227 = sbr.rel (0) target = $region85
    $region84: #{tpu_custom_call.1} parent=1 // pred_region
      _
    $region85: #{tpu_custom_call.1} parent=1 // pred_fallthru
      _
    // Predicated region
    $region86: #{tpu_custom_call.1} parent=1 // pred_check
      _
    $region87: #{tpu_custom_call.1} parent=1 // pred_check_branch
      %229 = sbr.rel (0) target = $region89
    $region88: #{tpu_custom_call.1} parent=1 // pred_region
      _
    $region89: #{tpu_custom_call.1} parent=1 // pred_fallthru
      _
    // Predicated region
    $region90: #{tpu_custom_call.1} parent=1 // pred_check
      _
    $region91: #{tpu_custom_call.1} parent=1 // pred_check_branch
      %231 = sbr.rel (0) target = $region93
    $region92: #{tpu_custom_call.1} parent=1 // pred_region
      %232 = dma.done [#allocation7], 1024
    $region93: #{tpu_custom_call.1} parent=1 // pred_fallthru
      _
    // Predicated region
    $region94: #{tpu_custom_call.1} parent=1 // pred_check
      _
    $region95: #{tpu_custom_call.1} parent=1 // pred_check_branch
      %234 = sbr.rel (0) target = $region97
    $region96: #{tpu_custom_call.1} parent=1 // pred_region
      %235 = dma.done [#allocation9], 16
    $region97: #{tpu_custom_call.1} parent=1 // pred_fallthru
      _
    // Predicated region
    $region98: #{tpu_custom_call.1} parent=1 // pred_check
      _
    $region99: #{tpu_custom_call.1} parent=1 // pred_check_branch
      %237 = sbr.rel (0) target = $region101
    $region100: #{tpu_custom_call.1} parent=1 // pred_region
      %238 = dma.done [#allocation9], 8192
    $region101: #{tpu_custom_call.1} parent=1 // pred_fallthru
      _
    // Predicated region
    $region102: #{tpu_custom_call.1} parent=1 // pred_check
      _
    $region103: #{tpu_custom_call.1} parent=1 // pred_check_branch
      %240 = sbr.rel (0) target = $region105
    $region104: #{tpu_custom_call.1} parent=1 // pred_region
      %241 = dma.done [#allocation12], 16384
    $region105: #{tpu_custom_call.1} parent=1 // pred_fallthru
      _
    // Predicated region
    $region106: #{tpu_custom_call.1} parent=1 // pred_check
      _
    $region107: #{tpu_custom_call.1} parent=1 // pred_check_branch
      %243 = sbr.rel (0) target = $region109
    $region108: #{tpu_custom_call.1} parent=1 // pred_region
      %244 = dma.done [#allocation12], 128
    $region109: #{tpu_custom_call.1} parent=1 // pred_fallthru
      _
    // Predicated region
    $region110: #{tpu_custom_call.1} parent=1 // pred_check
      _
    $region111: #{tpu_custom_call.1} parent=1 // pred_check_branch
      %246 = sbr.rel (0) target = $region113
    $region112: #{tpu_custom_call.1} parent=1 // pred_region
      %247 = dma.done [#allocation15], 16384
    $region113: #{tpu_custom_call.1} parent=1 // pred_fallthru
      _
    // Predicated region
    $region114: #{tpu_custom_call.1} parent=1 // pred_check
      _
    $region115: #{tpu_custom_call.1} parent=1 // pred_check_branch
      %249 = sbr.rel (0) target = $region117
    $region116: #{tpu_custom_call.1} parent=1 // pred_region
      %250 = dma.done [#allocation15], 16384
    $region117: #{tpu_custom_call.1} parent=1 // pred_fallthru
      _
    // Predicated region
    $region118: #{tpu_custom_call.1} parent=1 // pred_check
      _
    $region119: #{tpu_custom_call.1} parent=1 // pred_check_branch
      %252 = sbr.rel (0) target = $region121
    $region120: #{tpu_custom_call.1} parent=1 // pred_region
      %253 = dma.done [#allocation18], 128
    $region121: #{tpu_custom_call.1} parent=1 // pred_fallthru
      _
    // Predicated region
    $region122: #{tpu_custom_call.1} parent=1 // pred_check
      _
    $region123: #{tpu_custom_call.1} parent=1 // pred_check_branch
      %255 = sbr.rel (0) target = $region125
    $region124: #{tpu_custom_call.1} parent=1 // pred_region
      %256 = dma.done [#allocation18], 16384
    $region125: #{tpu_custom_call.1} parent=1 // pred_fallthru
      _
    // Predicated region
    $region126: #{tpu_custom_call.1} parent=1 // pred_check
      _
    $region127: #{tpu_custom_call.1} parent=1 // pred_check_branch
      %258 = sbr.rel (0) target = $region129
    $region128: #{tpu_custom_call.1} parent=1 // pred_region
      %259 = dma.done [#allocation21], 16384
    $region129: #{tpu_custom_call.1} parent=1 // pred_fallthru
      _
    // Predicated region
    $region130: #{tpu_custom_call.1} parent=1 // pred_check
      _
    $region131: #{tpu_custom_call.1} parent=1 // pred_check_branch
      %261 = sbr.rel (0) target = $region133
    $region132: #{tpu_custom_call.1} parent=1 // pred_region
      %262 = dma.done [#allocation21], 128
    $region133: #{tpu_custom_call.1} parent=1 // pred_fallthru
      _
    // Predicated region
    $region134: #{tpu_custom_call.1} parent=1 // pred_check
      _
    $region135: #{tpu_custom_call.1} parent=1 // pred_check_branch
      %264 = sbr.rel (0) target = $region137
    $region136: #{tpu_custom_call.1} parent=1 // pred_region
      %265 = dma.done [#allocation24], 2048
    $region137: #{tpu_custom_call.1} parent=1 // pred_fallthru
      _
    // Predicated region
    $region138: #{tpu_custom_call.1} parent=1 // pred_check
      _
    $region139: #{tpu_custom_call.1} parent=1 // pred_check_branch
      %267 = sbr.rel (0) target = $region141
    $region140: #{tpu_custom_call.1} parent=1 // pred_region
      %268 = dma.done [#allocation24], 16
    $region141: #{tpu_custom_call.1} parent=1 // pred_fallthru
      _
    // Predicated region
    $region142: #{tpu_custom_call.1} parent=1 // pred_check
      _
    $region143: #{tpu_custom_call.1} parent=1 // pred_check_branch
      %270 = sbr.rel (0) target = $region145
    $region144: #{tpu_custom_call.1} parent=1 // pred_region
      %271 = dma.done [#allocation27], 3072
    $region145: #{tpu_custom_call.1} parent=1 // pred_fallthru
      _
    // Predicated region
    $region146: #{tpu_custom_call.1} parent=1 // pred_check
      _
    $region147: #{tpu_custom_call.1} parent=1 // pred_check_branch
      %273 = sbr.rel (0) target = $region149
    $region148: #{tpu_custom_call.1} parent=1 // pred_region
      %274 = dma.done [#allocation27], 16
    $region149: #{tpu_custom_call.1} parent=1 // pred_fallthru
      _
    // Predicated region
    $region150: #{tpu_custom_call.1} parent=1 // pred_check
      _
    $region151: #{tpu_custom_call.1} parent=1 // pred_check_branch
      %276 = sbr.rel (0) target = $region153
    $region152: #{tpu_custom_call.1} parent=1 // pred_region
      %277 = dma.done [#allocation30], 1024
    $region153: #{tpu_custom_call.1} parent=1 // pred_fallthru
      _
    %v279 = vld [vmem:[%s0] sm:$0xff]
    %v280 = vld [vmem:[%s0 + $0x8] sm:$0xff]
    %v281 = vld [vmem:[%s0 + $0x10] sm:$0xff]
    %v282 = vld [vmem:[%s0 + $0x18] sm:$0xff]
    %v283 = vld [vmem:[%s0 + $0x20] sm:$0xff]
    %v284 = vld [vmem:[%s0 + $0x28] sm:$0xff]
    %v285 = vlaneseq
    %v286 = vand.u32 %v285, 127
    %287 = vset.pattern.permute.xlu0 0
    %288 = vperm.xlu0 %287, %v279
    %v289 = vpop.permute.xlu0 %288
    %290 = vset.pattern.permute.xlu0 0
    %291 = vperm.xlu0 %290, %v280
    %v292 = vpop.permute.xlu0 %291
    %293 = vset.pattern.permute.xlu0 0
    %294 = vperm.xlu0 %293, %v281
    %v295 = vpop.permute.xlu0 %294
    %296 = vset.pattern.permute.xlu0 0
    %297 = vperm.xlu0 %296, %v282
    %v298 = vpop.permute.xlu0 %297
    %299 = vset.pattern.permute.xlu0 0
    %300 = vperm.xlu0 %299, %v283
    %v301 = vpop.permute.xlu0 %300
    %302 = vset.pattern.permute.xlu0 0
    %303 = vperm.xlu0 %302, %v284
    %v304 = vpop.permute.xlu0 %303
    %vm305 = vcmp.eq.s32.totalorder %v289, %v286
    %vm306 = vcmp.eq.s32.totalorder %v292, %v286
    %vm307 = vcmp.eq.s32.totalorder %v295, %v286
    %vm308 = vcmp.eq.s32.totalorder %v298, %v286
    %vm309 = vcmp.eq.s32.totalorder %v301, %v286
    %vm310 = vcmp.eq.s32.totalorder %v304, %v286
    %v311 = vsel %vm305, 1, 0
    %v312 = vsel %vm306, 1, 0
    %v313 = vsel %vm307, 1, 0
    %v314 = vsel %vm308, 1, 0
    %v315 = vsel %vm309, 1, 0
    %v316 = vsel %vm310, 1, 0
    %v317 = vcvt.s32.f32 %v311
    %v318 = vcvt.s32.f32 %v312
    %v319 = vcvt.s32.f32 %v313
    %v320 = vcvt.s32.f32 %v314
    %v321 = vcvt.s32.f32 %v315
    %v322 = vcvt.s32.f32 %v316
    %v323 = vadd.f32 %v317, 0.0
    %v324 = vadd.f32 %v318, 0.0
    %v325 = vadd.f32 %v319, 0.0
    %v326 = vadd.f32 %v320, 0.0
    %v327 = vadd.f32 %v321, 0.0
    %v328 = vadd.f32 %v322, 0.0
    %329 = vset.pattern.permute.xlu0 1
    %330 = vperm.xlu0 %329, %v279
    %v331 = vpop.permute.xlu0 %330
    %332 = vset.pattern.permute.xlu0 1
    %333 = vperm.xlu0 %332, %v280
    %v334 = vpop.permute.xlu0 %333
    %335 = vset.pattern.permute.xlu0 1
    %336 = vperm.xlu0 %335, %v281
    %v337 = vpop.permute.xlu0 %336
    %338 = vset.pattern.permute.xlu0 1
    %339 = vperm.xlu0 %338, %v282
    %v340 = vpop.permute.xlu0 %339
    %341 = vset.pattern.permute.xlu0 1
    %342 = vperm.xlu0 %341, %v283
    %v343 = vpop.permute.xlu0 %342
    %344 = vset.pattern.permute.xlu0 1
    %345 = vperm.xlu0 %344, %v284
    %v346 = vpop.permute.xlu0 %345
    %vm347 = vcmp.eq.s32.totalorder %v331, %v286
    %vm348 = vcmp.eq.s32.totalorder %v334, %v286
    %vm349 = vcmp.eq.s32.totalorder %v337, %v286
    %vm350 = vcmp.eq.s32.totalorder %v340, %v286
    %vm351 = vcmp.eq.s32.totalorder %v343, %v286
    %vm352 = vcmp.eq.s32.totalorder %v346, %v286
    %v353 = vsel %vm347, 1, 0
    %v354 = vsel %vm348, 1, 0
    %v355 = vsel %vm349, 1, 0
    %v356 = vsel %vm350, 1, 0
    %v357 = vsel %vm351, 1, 0
    %v358 = vsel %vm352, 1, 0
    %v359 = vcvt.s32.f32 %v353
    %v360 = vcvt.s32.f32 %v354
    %v361 = vcvt.s32.f32 %v355
    %v362 = vcvt.s32.f32 %v356
    %v363 = vcvt.s32.f32 %v357
    %v364 = vcvt.s32.f32 %v358
    %v365 = vadd.f32 %v323, %v359
    %v366 = vadd.f32 %v324, %v360
    %v367 = vadd.f32 %v325, %v361
    %v368 = vadd.f32 %v326, %v362
    %v369 = vadd.f32 %v327, %v363
    %v370 = vadd.f32 %v328, %v364
    %371 = vset.pattern.permute.xlu0 2
    %372 = vperm.xlu0 %371, %v279
    %v373 = vpop.permute.xlu0 %372
    %374 = vset.pattern.permute.xlu0 2
    %375 = vperm.xlu0 %374, %v280
    %v376 = vpop.permute.xlu0 %375
    %377 = vset.pattern.permute.xlu0 2
    %378 = vperm.xlu0 %377, %v281
    %v379 = vpop.permute.xlu0 %378
    %380 = vset.pattern.permute.xlu0 2
    %381 = vperm.xlu0 %380, %v282
    %v382 = vpop.permute.xlu0 %381
    %383 = vset.pattern.permute.xlu0 2
    %384 = vperm.xlu0 %383, %v283
    %v385 = vpop.permute.xlu0 %384
    %386 = vset.pattern.permute.xlu0 2
    %387 = vperm.xlu0 %386, %v284
    %v388 = vpop.permute.xlu0 %387
    %vm389 = vcmp.eq.s32.totalorder %v373, %v286
    %vm390 = vcmp.eq.s32.totalorder %v376, %v286
    %vm391 = vcmp.eq.s32.totalorder %v379, %v286
    %vm392 = vcmp.eq.s32.totalorder %v382, %v286
    %vm393 = vcmp.eq.s32.totalorder %v385, %v286
    %vm394 = vcmp.eq.s32.totalorder %v388, %v286
    %v395 = vsel %vm389, 1, 0
    %v396 = vsel %vm390, 1, 0
    %v397 = vsel %vm391, 1, 0
    %v398 = vsel %vm392, 1, 0
    %v399 = vsel %vm393, 1, 0
    %v400 = vsel %vm394, 1, 0
    %v401 = vcvt.s32.f32 %v395
    %v402 = vcvt.s32.f32 %v396
    %v403 = vcvt.s32.f32 %v397
    %v404 = vcvt.s32.f32 %v398
    %v405 = vcvt.s32.f32 %v399
    %v406 = vcvt.s32.f32 %v400
    %v407 = vadd.f32 %v365, %v401
    %v408 = vadd.f32 %v366, %v402
    %v409 = vadd.f32 %v367, %v403
    %v410 = vadd.f32 %v368, %v404
    %v411 = vadd.f32 %v369, %v405
    %v412 = vadd.f32 %v370, %v406
    %413 = vset.pattern.permute.xlu0 3
    %414 = vperm.xlu0 %413, %v279
    %v415 = vpop.permute.xlu0 %414
    %416 = vset.pattern.permute.xlu0 3
    %417 = vperm.xlu0 %416, %v280
    %v418 = vpop.permute.xlu0 %417
    %419 = vset.pattern.permute.xlu0 3
    %420 = vperm.xlu0 %419, %v281
    %v421 = vpop.permute.xlu0 %420
    %422 = vset.pattern.permute.xlu0 3
    %423 = vperm.xlu0 %422, %v282
    %v424 = vpop.permute.xlu0 %423
    %425 = vset.pattern.permute.xlu0 3
    %426 = vperm.xlu0 %425, %v283
    %v427 = vpop.permute.xlu0 %426
    %428 = vset.pattern.permute.xlu0 3
    %429 = vperm.xlu0 %428, %v284
    %v430 = vpop.permute.xlu0 %429
    %vm431 = vcmp.eq.s32.totalorder %v415, %v286
    %vm432 = vcmp.eq.s32.totalorder %v418, %v286
    %vm433 = vcmp.eq.s32.totalorder %v421, %v286
    %vm434 = vcmp.eq.s32.totalorder %v424, %v286
    %vm435 = vcmp.eq.s32.totalorder %v427, %v286
    %vm436 = vcmp.eq.s32.totalorder %v430, %v286
    %v437 = vsel %vm431, 1, 0
    %v438 = vsel %vm432, 1, 0
    %v439 = vsel %vm433, 1, 0
    %v440 = vsel %vm434, 1, 0
    %v441 = vsel %vm435, 1, 0
    %v442 = vsel %vm436, 1, 0
    %v443 = vcvt.s32.f32 %v437
    %v444 = vcvt.s32.f32 %v438
    %v445 = vcvt.s32.f32 %v439
    %v446 = vcvt.s32.f32 %v440
    %v447 = vcvt.s32.f32 %v441
    %v448 = vcvt.s32.f32 %v442
    %v449 = vadd.f32 %v407, %v443
    %v450 = vadd.f32 %v408, %v444
    %v451 = vadd.f32 %v409, %v445
    %v452 = vadd.f32 %v410, %v446
    %v453 = vadd.f32 %v411, %v447
    %v454 = vadd.f32 %v412, %v448
    %455 = vset.pattern.permute.xlu0 4
    %456 = vperm.xlu0 %455, %v279
    %v457 = vpop.permute.xlu0 %456
    %458 = vset.pattern.permute.xlu0 4
    %459 = vperm.xlu0 %458, %v280
    %v460 = vpop.permute.xlu0 %459
    %461 = vset.pattern.permute.xlu0 4
    %462 = vperm.xlu0 %461, %v281
    %v463 = vpop.permute.xlu0 %462
    %464 = vset.pattern.permute.xlu0 4
    %465 = vperm.xlu0 %464, %v282
    %v466 = vpop.permute.xlu0 %465
    %467 = vset.pattern.permute.xlu0 4
    %468 = vperm.xlu0 %467, %v283
    %v469 = vpop.permute.xlu0 %468
    %470 = vset.pattern.permute.xlu0 4
    %471 = vperm.xlu0 %470, %v284
    %v472 = vpop.permute.xlu0 %471
    %vm473 = vcmp.eq.s32.totalorder %v457, %v286
    %vm474 = vcmp.eq.s32.totalorder %v460, %v286
    %vm475 = vcmp.eq.s32.totalorder %v463, %v286
    %vm476 = vcmp.eq.s32.totalorder %v466, %v286
    %vm477 = vcmp.eq.s32.totalorder %v469, %v286
    %vm478 = vcmp.eq.s32.totalorder %v472, %v286
    %v479 = vsel %vm473, 1, 0
    %v480 = vsel %vm474, 1, 0
    %v481 = vsel %vm475, 1, 0
    %v482 = vsel %vm476, 1, 0
    %v483 = vsel %vm477, 1, 0
    %v484 = vsel %vm478, 1, 0
    %v485 = vcvt.s32.f32 %v479
    %v486 = vcvt.s32.f32 %v480
    %v487 = vcvt.s32.f32 %v481
    %v488 = vcvt.s32.f32 %v482
    %v489 = vcvt.s32.f32 %v483
    %v490 = vcvt.s32.f32 %v484
    %v491 = vadd.f32 %v449, %v485
    %v492 = vadd.f32 %v450, %v486
    %v493 = vadd.f32 %v451, %v487
    %v494 = vadd.f32 %v452, %v488
    %v495 = vadd.f32 %v453, %v489
    %v496 = vadd.f32 %v454, %v490
    %497 = vset.pattern.permute.xlu0 5
    %498 = vperm.xlu0 %497, %v279
    %v499 = vpop.permute.xlu0 %498
    %500 = vset.pattern.permute.xlu0 5
    %501 = vperm.xlu0 %500, %v280
    %v502 = vpop.permute.xlu0 %501
    %503 = vset.pattern.permute.xlu0 5
    %504 = vperm.xlu0 %503, %v281
    %v505 = vpop.permute.xlu0 %504
    %506 = vset.pattern.permute.xlu0 5
    %507 = vperm.xlu0 %506, %v282
    %v508 = vpop.permute.xlu0 %507
    %509 = vset.pattern.permute.xlu0 5
    %510 = vperm.xlu0 %509, %v283
    %v511 = vpop.permute.xlu0 %510
    %512 = vset.pattern.permute.xlu0 5
    %513 = vperm.xlu0 %512, %v284
    %v514 = vpop.permute.xlu0 %513
    %vm515 = vcmp.eq.s32.totalorder %v499, %v286
    %vm516 = vcmp.eq.s32.totalorder %v502, %v286
    %vm517 = vcmp.eq.s32.totalorder %v505, %v286
    %vm518 = vcmp.eq.s32.totalorder %v508, %v286
    %vm519 = vcmp.eq.s32.totalorder %v511, %v286
    %vm520 = vcmp.eq.s32.totalorder %v514, %v286
    %v521 = vsel %vm515, 1, 0
    %v522 = vsel %vm516, 1, 0
    %v523 = vsel %vm517, 1, 0
    %v524 = vsel %vm518, 1, 0
    %v525 = vsel %vm519, 1, 0
    %v526 = vsel %vm520, 1, 0
    %v527 = vcvt.s32.f32 %v521
    %v528 = vcvt.s32.f32 %v522
    %v529 = vcvt.s32.f32 %v523
    %v530 = vcvt.s32.f32 %v524
    %v531 = vcvt.s32.f32 %v525
    %v532 = vcvt.s32.f32 %v526
    %v533 = vadd.f32 %v491, %v527
    %v534 = vadd.f32 %v492, %v528
    %v535 = vadd.f32 %v493, %v529
    %v536 = vadd.f32 %v494, %v530
    %v537 = vadd.f32 %v495, %v531
    %v538 = vadd.f32 %v496, %v532
    %539 = vset.pattern.permute.xlu0 6
    %540 = vperm.xlu0 %539, %v279
    %v541 = vpop.permute.xlu0 %540
    %542 = vset.pattern.permute.xlu0 6
    %543 = vperm.xlu0 %542, %v280
    %v544 = vpop.permute.xlu0 %543
    %545 = vset.pattern.permute.xlu0 6
    %546 = vperm.xlu0 %545, %v281
    %v547 = vpop.permute.xlu0 %546
    %548 = vset.pattern.permute.xlu0 6
    %549 = vperm.xlu0 %548, %v282
    %v550 = vpop.permute.xlu0 %549
    %551 = vset.pattern.permute.xlu0 6
    %552 = vperm.xlu0 %551, %v283
    %v553 = vpop.permute.xlu0 %552
    %554 = vset.pattern.permute.xlu0 6
    %555 = vperm.xlu0 %554, %v284
    %v556 = vpop.permute.xlu0 %555
    %vm557 = vcmp.eq.s32.totalorder %v541, %v286
    %vm558 = vcmp.eq.s32.totalorder %v544, %v286
    %vm559 = vcmp.eq.s32.totalorder %v547, %v286
    %vm560 = vcmp.eq.s32.totalorder %v550, %v286
    %vm561 = vcmp.eq.s32.totalorder %v553, %v286
    %vm562 = vcmp.eq.s32.totalorder %v556, %v286
    %v563 = vsel %vm557, 1, 0
    %v564 = vsel %vm558, 1, 0
    %v565 = vsel %vm559, 1, 0
    %v566 = vsel %vm560, 1, 0
    %v567 = vsel %vm561, 1, 0
    %v568 = vsel %vm562, 1, 0
    %v569 = vcvt.s32.f32 %v563
    %v570 = vcvt.s32.f32 %v564
    %v571 = vcvt.s32.f32 %v565
    %v572 = vcvt.s32.f32 %v566
    %v573 = vcvt.s32.f32 %v567
    %v574 = vcvt.s32.f32 %v568
    %v575 = vadd.f32 %v533, %v569
    %v576 = vadd.f32 %v534, %v570
    %v577 = vadd.f32 %v535, %v571
    %v578 = vadd.f32 %v536, %v572
    %v579 = vadd.f32 %v537, %v573
    %v580 = vadd.f32 %v538, %v574
    %581 = vset.pattern.permute.xlu0 7
    %582 = vperm.xlu0 %581, %v279
    %v583 = vpop.permute.xlu0 %582
    %584 = vset.pattern.permute.xlu0 7
    %585 = vperm.xlu0 %584, %v280
    %v586 = vpop.permute.xlu0 %585
    %587 = vset.pattern.permute.xlu0 7
    %588 = vperm.xlu0 %587, %v281
    %v589 = vpop.permute.xlu0 %588
    %590 = vset.pattern.permute.xlu0 7
    %591 = vperm.xlu0 %590, %v282
    %v592 = vpop.permute.xlu0 %591
    %593 = vset.pattern.permute.xlu0 7
    %594 = vperm.xlu0 %593, %v283
    %v595 = vpop.permute.xlu0 %594
    %596 = vset.pattern.permute.xlu0 7
    %597 = vperm.xlu0 %596, %v284
    %v598 = vpop.permute.xlu0 %597
    %vm599 = vcmp.eq.s32.totalorder %v583, %v286
    %vm600 = vcmp.eq.s32.totalorder %v586, %v286
    %vm601 = vcmp.eq.s32.totalorder %v589, %v286
    %vm602 = vcmp.eq.s32.totalorder %v592, %v286
    %vm603 = vcmp.eq.s32.totalorder %v595, %v286
    %vm604 = vcmp.eq.s32.totalorder %v598, %v286
    %v605 = vsel %vm599, 1, 0
    %v606 = vsel %vm600, 1, 0
    %v607 = vsel %vm601, 1, 0
    %v608 = vsel %vm602, 1, 0
    %v609 = vsel %vm603, 1, 0
    %v610 = vsel %vm604, 1, 0
    %v611 = vcvt.s32.f32 %v605
    %v612 = vcvt.s32.f32 %v606
    %v613 = vcvt.s32.f32 %v607
    %v614 = vcvt.s32.f32 %v608
    %v615 = vcvt.s32.f32 %v609
    %v616 = vcvt.s32.f32 %v610
    %v617 = vadd.f32 %v575, %v611
    %v618 = vadd.f32 %v576, %v612
    %v619 = vadd.f32 %v577, %v613
    %v620 = vadd.f32 %v578, %v614
    %v621 = vadd.f32 %v579, %v615
    %v622 = vadd.f32 %v580, %v616
    %623 = vset.pattern.permute.xlu0 8
    %624 = vperm.xlu0 %623, %v279
    %v625 = vpop.permute.xlu0 %624
    %626 = vset.pattern.permute.xlu0 8
    %627 = vperm.xlu0 %626, %v280
    %v628 = vpop.permute.xlu0 %627
    %629 = vset.pattern.permute.xlu0 8
    %630 = vperm.xlu0 %629, %v281
    %v631 = vpop.permute.xlu0 %630
    %632 = vset.pattern.permute.xlu0 8
    %633 = vperm.xlu0 %632, %v282
    %v634 = vpop.permute.xlu0 %633
    %635 = vset.pattern.permute.xlu0 8
    %636 = vperm.xlu0 %635, %v283
    %v637 = vpop.permute.xlu0 %636
    %638 = vset.pattern.permute.xlu0 8
    %639 = vperm.xlu0 %638, %v284
    %v640 = vpop.permute.xlu0 %639
    %vm641 = vcmp.eq.s32.totalorder %v625, %v286
    %vm642 = vcmp.eq.s32.totalorder %v628, %v286
    %vm643 = vcmp.eq.s32.totalorder %v631, %v286
    %vm644 = vcmp.eq.s32.totalorder %v634, %v286
    %vm645 = vcmp.eq.s32.totalorder %v637, %v286
    %vm646 = vcmp.eq.s32.totalorder %v640, %v286
    %v647 = vsel %vm641, 1, 0
    %v648 = vsel %vm642, 1, 0
    %v649 = vsel %vm643, 1, 0
    %v650 = vsel %vm644, 1, 0
    %v651 = vsel %vm645, 1, 0
    %v652 = vsel %vm646, 1, 0
    %v653 = vcvt.s32.f32 %v647
    %v654 = vcvt.s32.f32 %v648
    %v655 = vcvt.s32.f32 %v649
    %v656 = vcvt.s32.f32 %v650
    %v657 = vcvt.s32.f32 %v651
    %v658 = vcvt.s32.f32 %v652
    %v659 = vadd.f32 %v617, %v653
    %v660 = vadd.f32 %v618, %v654
    %v661 = vadd.f32 %v619, %v655
    %v662 = vadd.f32 %v620, %v656
    %v663 = vadd.f32 %v621, %v657
    %v664 = vadd.f32 %v622, %v658
    %665 = vset.pattern.permute.xlu0 9
    %666 = vperm.xlu0 %665, %v279
    %v667 = vpop.permute.xlu0 %666
    %668 = vset.pattern.permute.xlu0 9
    %669 = vperm.xlu0 %668, %v280
    %v670 = vpop.permute.xlu0 %669
    %671 = vset.pattern.permute.xlu0 9
    %672 = vperm.xlu0 %671, %v281
    %v673 = vpop.permute.xlu0 %672
    %674 = vset.pattern.permute.xlu0 9
    %675 = vperm.xlu0 %674, %v282
    %v676 = vpop.permute.xlu0 %675
    %677 = vset.pattern.permute.xlu0 9
    %678 = vperm.xlu0 %677, %v283
    %v679 = vpop.permute.xlu0 %678
    %680 = vset.pattern.permute.xlu0 9
    %681 = vperm.xlu0 %680, %v284
    %v682 = vpop.permute.xlu0 %681
    %vm683 = vcmp.eq.s32.totalorder %v667, %v286
    %vm684 = vcmp.eq.s32.totalorder %v670, %v286
    %vm685 = vcmp.eq.s32.totalorder %v673, %v286
    %vm686 = vcmp.eq.s32.totalorder %v676, %v286
    %vm687 = vcmp.eq.s32.totalorder %v679, %v286
    %vm688 = vcmp.eq.s32.totalorder %v682, %v286
    %v689 = vsel %vm683, 1, 0
    %v690 = vsel %vm684, 1, 0
    %v691 = vsel %vm685, 1, 0
    %v692 = vsel %vm686, 1, 0
    %v693 = vsel %vm687, 1, 0
    %v694 = vsel %vm688, 1, 0
    %v695 = vcvt.s32.f32 %v689
    %v696 = vcvt.s32.f32 %v690
    %v697 = vcvt.s32.f32 %v691
    %v698 = vcvt.s32.f32 %v692
    %v699 = vcvt.s32.f32 %v693
    %v700 = vcvt.s32.f32 %v694
    %v701 = vadd.f32 %v659, %v695
    %v702 = vadd.f32 %v660, %v696
    %v703 = vadd.f32 %v661, %v697
    %v704 = vadd.f32 %v662, %v698
    %v705 = vadd.f32 %v663, %v699
    %v706 = vadd.f32 %v664, %v700
    %707 = vset.pattern.permute.xlu0 10
    %708 = vperm.xlu0 %707, %v279
    %v709 = vpop.permute.xlu0 %708
    %710 = vset.pattern.permute.xlu0 10
    %711 = vperm.xlu0 %710, %v280
    %v712 = vpop.permute.xlu0 %711
    %713 = vset.pattern.permute.xlu0 10
    %714 = vperm.xlu0 %713, %v281
    %v715 = vpop.permute.xlu0 %714
    %716 = vset.pattern.permute.xlu0 10
    %717 = vperm.xlu0 %716, %v282
    %v718 = vpop.permute.xlu0 %717
    %719 = vset.pattern.permute.xlu0 10
    %720 = vperm.xlu0 %719, %v283
    %v721 = vpop.permute.xlu0 %720
    %722 = vset.pattern.permute.xlu0 10
    %723 = vperm.xlu0 %722, %v284
    %v724 = vpop.permute.xlu0 %723
    %vm725 = vcmp.eq.s32.totalorder %v709, %v286
    %vm726 = vcmp.eq.s32.totalorder %v712, %v286
    %vm727 = vcmp.eq.s32.totalorder %v715, %v286
    %vm728 = vcmp.eq.s32.totalorder %v718, %v286
    %vm729 = vcmp.eq.s32.totalorder %v721, %v286
    %vm730 = vcmp.eq.s32.totalorder %v724, %v286
    %v731 = vsel %vm725, 1, 0
    %v732 = vsel %vm726, 1, 0
    %v733 = vsel %vm727, 1, 0
    %v734 = vsel %vm728, 1, 0
    %v735 = vsel %vm729, 1, 0
    %v736 = vsel %vm730, 1, 0
    %v737 = vcvt.s32.f32 %v731
    %v738 = vcvt.s32.f32 %v732
    %v739 = vcvt.s32.f32 %v733
    %v740 = vcvt.s32.f32 %v734
    %v741 = vcvt.s32.f32 %v735
    %v742 = vcvt.s32.f32 %v736
    %v743 = vadd.f32 %v701, %v737
    %v744 = vadd.f32 %v702, %v738
    %v745 = vadd.f32 %v703, %v739
    %v746 = vadd.f32 %v704, %v740
    %v747 = vadd.f32 %v705, %v741
    %v748 = vadd.f32 %v706, %v742
    %749 = vset.pattern.permute.xlu0 11
    %750 = vperm.xlu0 %749, %v279
    %v751 = vpop.permute.xlu0 %750
    %752 = vset.pattern.permute.xlu0 11
    %753 = vperm.xlu0 %752, %v280
    %v754 = vpop.permute.xlu0 %753
    %755 = vset.pattern.permute.xlu0 11
    %756 = vperm.xlu0 %755, %v281
    %v757 = vpop.permute.xlu0 %756
    %758 = vset.pattern.permute.xlu0 11
    %759 = vperm.xlu0 %758, %v282
    %v760 = vpop.permute.xlu0 %759
    %761 = vset.pattern.permute.xlu0 11
    %762 = vperm.xlu0 %761, %v283
    %v763 = vpop.permute.xlu0 %762
    %764 = vset.pattern.permute.xlu0 11
    %765 = vperm.xlu0 %764, %v284
    %v766 = vpop.permute.xlu0 %765
    %vm767 = vcmp.eq.s32.totalorder %v751, %v286
    %vm768 = vcmp.eq.s32.totalorder %v754, %v286
    %vm769 = vcmp.eq.s32.totalorder %v757, %v286
    %vm770 = vcmp.eq.s32.totalorder %v760, %v286
    %vm771 = vcmp.eq.s32.totalorder %v763, %v286
    %vm772 = vcmp.eq.s32.totalorder %v766, %v286
    %v773 = vsel %vm767, 1, 0
    %v774 = vsel %vm768, 1, 0
    %v775 = vsel %vm769, 1, 0
    %v776 = vsel %vm770, 1, 0
    %v777 = vsel %vm771, 1, 0
    %v778 = vsel %vm772, 1, 0
    %v779 = vcvt.s32.f32 %v773
    %v780 = vcvt.s32.f32 %v774
    %v781 = vcvt.s32.f32 %v775
    %v782 = vcvt.s32.f32 %v776
    %v783 = vcvt.s32.f32 %v777
    %v784 = vcvt.s32.f32 %v778
    %v785 = vadd.f32 %v743, %v779
    %v786 = vadd.f32 %v744, %v780
    %v787 = vadd.f32 %v745, %v781
    %v788 = vadd.f32 %v746, %v782
    %v789 = vadd.f32 %v747, %v783
    %v790 = vadd.f32 %v748, %v784
    %791 = vset.pattern.permute.xlu0 12
    %792 = vperm.xlu0 %791, %v279
    %v793 = vpop.permute.xlu0 %792
    %794 = vset.pattern.permute.xlu0 12
    %795 = vperm.xlu0 %794, %v280
    %v796 = vpop.permute.xlu0 %795
    %797 = vset.pattern.permute.xlu0 12
    %798 = vperm.xlu0 %797, %v281
    %v799 = vpop.permute.xlu0 %798
    %800 = vset.pattern.permute.xlu0 12
    %801 = vperm.xlu0 %800, %v282
    %v802 = vpop.permute.xlu0 %801
    %803 = vset.pattern.permute.xlu0 12
    %804 = vperm.xlu0 %803, %v283
    %v805 = vpop.permute.xlu0 %804
    %806 = vset.pattern.permute.xlu0 12
    %807 = vperm.xlu0 %806, %v284
    %v808 = vpop.permute.xlu0 %807
    %vm809 = vcmp.eq.s32.totalorder %v793, %v286
    %vm810 = vcmp.eq.s32.totalorder %v796, %v286
    %vm811 = vcmp.eq.s32.totalorder %v799, %v286
    %vm812 = vcmp.eq.s32.totalorder %v802, %v286
    %vm813 = vcmp.eq.s32.totalorder %v805, %v286
    %vm814 = vcmp.eq.s32.totalorder %v808, %v286
    %v815 = vsel %vm809, 1, 0
    %v816 = vsel %vm810, 1, 0
    %v817 = vsel %vm811, 1, 0
    %v818 = vsel %vm812, 1, 0
    %v819 = vsel %vm813, 1, 0
    %v820 = vsel %vm814, 1, 0
    %v821 = vcvt.s32.f32 %v815
    %v822 = vcvt.s32.f32 %v816
    %v823 = vcvt.s32.f32 %v817
    %v824 = vcvt.s32.f32 %v818
    %v825 = vcvt.s32.f32 %v819
    %v826 = vcvt.s32.f32 %v820
    %v827 = vadd.f32 %v785, %v821
    %v828 = vadd.f32 %v786, %v822
    %v829 = vadd.f32 %v787, %v823
    %v830 = vadd.f32 %v788, %v824
    %v831 = vadd.f32 %v789, %v825
    %v832 = vadd.f32 %v790, %v826
    %833 = vset.pattern.permute.xlu0 13
    %834 = vperm.xlu0 %833, %v279
    %v835 = vpop.permute.xlu0 %834
    %836 = vset.pattern.permute.xlu0 13
    %837 = vperm.xlu0 %836, %v280
    %v838 = vpop.permute.xlu0 %837
    %839 = vset.pattern.permute.xlu0 13
    %840 = vperm.xlu0 %839, %v281
    %v841 = vpop.permute.xlu0 %840
    %842 = vset.pattern.permute.xlu0 13
    %843 = vperm.xlu0 %842, %v282
    %v844 = vpop.permute.xlu0 %843
    %845 = vset.pattern.permute.xlu0 13
    %846 = vperm.xlu0 %845, %v283
    %v847 = vpop.permute.xlu0 %846
    %848 = vset.pattern.permute.xlu0 13
    %849 = vperm.xlu0 %848, %v284
    %v850 = vpop.permute.xlu0 %849
    %vm851 = vcmp.eq.s32.totalorder %v835, %v286
    %vm852 = vcmp.eq.s32.totalorder %v838, %v286
    %vm853 = vcmp.eq.s32.totalorder %v841, %v286
    %vm854 = vcmp.eq.s32.totalorder %v844, %v286
    %vm855 = vcmp.eq.s32.totalorder %v847, %v286
    %vm856 = vcmp.eq.s32.totalorder %v850, %v286
    %v857 = vsel %vm851, 1, 0
    %v858 = vsel %vm852, 1, 0
    %v859 = vsel %vm853, 1, 0
    %v860 = vsel %vm854, 1, 0
    %v861 = vsel %vm855, 1, 0
    %v862 = vsel %vm856, 1, 0
    %v863 = vcvt.s32.f32 %v857
    %v864 = vcvt.s32.f32 %v858
    %v865 = vcvt.s32.f32 %v859
    %v866 = vcvt.s32.f32 %v860
    %v867 = vcvt.s32.f32 %v861
    %v868 = vcvt.s32.f32 %v862
    %v869 = vadd.f32 %v827, %v863
    %v870 = vadd.f32 %v828, %v864
    %v871 = vadd.f32 %v829, %v865
    %v872 = vadd.f32 %v830, %v866
    %v873 = vadd.f32 %v831, %v867
    %v874 = vadd.f32 %v832, %v868
    %875 = vset.pattern.permute.xlu0 14
    %876 = vperm.xlu0 %875, %v279
    %v877 = vpop.permute.xlu0 %876
    %878 = vset.pattern.permute.xlu0 14
    %879 = vperm.xlu0 %878, %v280
    %v880 = vpop.permute.xlu0 %879
    %881 = vset.pattern.permute.xlu0 14
    %882 = vperm.xlu0 %881, %v281
    %v883 = vpop.permute.xlu0 %882
    %884 = vset.pattern.permute.xlu0 14
    %885 = vperm.xlu0 %884, %v282
    %v886 = vpop.permute.xlu0 %885
    %887 = vset.pattern.permute.xlu0 14
    %888 = vperm.xlu0 %887, %v283
    %v889 = vpop.permute.xlu0 %888
    %890 = vset.pattern.permute.xlu0 14
    %891 = vperm.xlu0 %890, %v284
    %v892 = vpop.permute.xlu0 %891
    %vm893 = vcmp.eq.s32.totalorder %v877, %v286
    %vm894 = vcmp.eq.s32.totalorder %v880, %v286
    %vm895 = vcmp.eq.s32.totalorder %v883, %v286
    %vm896 = vcmp.eq.s32.totalorder %v886, %v286
    %vm897 = vcmp.eq.s32.totalorder %v889, %v286
    %vm898 = vcmp.eq.s32.totalorder %v892, %v286
    %v899 = vsel %vm893, 1, 0
    %v900 = vsel %vm894, 1, 0
    %v901 = vsel %vm895, 1, 0
    %v902 = vsel %vm896, 1, 0
    %v903 = vsel %vm897, 1, 0
    %v904 = vsel %vm898, 1, 0
    %v905 = vcvt.s32.f32 %v899
    %v906 = vcvt.s32.f32 %v900
    %v907 = vcvt.s32.f32 %v901
    %v908 = vcvt.s32.f32 %v902
    %v909 = vcvt.s32.f32 %v903
    %v910 = vcvt.s32.f32 %v904
    %v911 = vadd.f32 %v869, %v905
    %v912 = vadd.f32 %v870, %v906
    %v913 = vadd.f32 %v871, %v907
    %v914 = vadd.f32 %v872, %v908
    %v915 = vadd.f32 %v873, %v909
    %v916 = vadd.f32 %v874, %v910
    %917 = vset.pattern.permute.xlu0 15
    %918 = vperm.xlu0 %917, %v279
    %v919 = vpop.permute.xlu0 %918
    %920 = vset.pattern.permute.xlu0 15
    %921 = vperm.xlu0 %920, %v280
    %v922 = vpop.permute.xlu0 %921
    %923 = vset.pattern.permute.xlu0 15
    %924 = vperm.xlu0 %923, %v281
    %v925 = vpop.permute.xlu0 %924
    %926 = vset.pattern.permute.xlu0 15
    %927 = vperm.xlu0 %926, %v282
    %v928 = vpop.permute.xlu0 %927
    %929 = vset.pattern.permute.xlu0 15
    %930 = vperm.xlu0 %929, %v283
    %v931 = vpop.permute.xlu0 %930
    %932 = vset.pattern.permute.xlu0 15
    %933 = vperm.xlu0 %932, %v284
    %v934 = vpop.permute.xlu0 %933
    %vm935 = vcmp.eq.s32.totalorder %v919, %v286
    %vm936 = vcmp.eq.s32.totalorder %v922, %v286
    %vm937 = vcmp.eq.s32.totalorder %v925, %v286
    %vm938 = vcmp.eq.s32.totalorder %v928, %v286
    %vm939 = vcmp.eq.s32.totalorder %v931, %v286
    %vm940 = vcmp.eq.s32.totalorder %v934, %v286
    %v941 = vsel %vm935, 1, 0
    %v942 = vsel %vm936, 1, 0
    %v943 = vsel %vm937, 1, 0
    %v944 = vsel %vm938, 1, 0
    %v945 = vsel %vm939, 1, 0
    %v946 = vsel %vm940, 1, 0
    %v947 = vcvt.s32.f32 %v941
    %v948 = vcvt.s32.f32 %v942
    %v949 = vcvt.s32.f32 %v943
    %v950 = vcvt.s32.f32 %v944
    %v951 = vcvt.s32.f32 %v945
    %v952 = vcvt.s32.f32 %v946
    %v953 = vadd.f32 %v911, %v947
    %v954 = vadd.f32 %v912, %v948
    %v955 = vadd.f32 %v913, %v949
    %v956 = vadd.f32 %v914, %v950
    %v957 = vadd.f32 %v915, %v951
    %v958 = vadd.f32 %v916, %v952
    %v959 = vsub.f32 16.0, %v953
    %v960 = vsub.f32 16.0, %v954
    %v961 = vsub.f32 16.0, %v955
    %v962 = vsub.f32 16.0, %v956
    %v963 = vsub.f32 16.0, %v957
    %v964 = vsub.f32 16.0, %v958
    %v965 = vmax.f32 %v959, 1.0
    %v966 = vmax.f32 %v960, 1.0
    %v967 = vmax.f32 %v961, 1.0
    %v968 = vmax.f32 %v962, 1.0
    %v969 = vmax.f32 %v963, 1.0
    %v970 = vmax.f32 %v964, 1.0
    %v971 = vld [vmem:[%s1] sm:$0xf]
    %v972 = vld [vmem:[%s1 + $0x4] sm:$0xf]
    %v973 = vld [vmem:[%s1 + $0x8] sm:$0xf]
    %v974 = vld [vmem:[%s1 + $0xc] sm:$0xf]
    %v975 = vld [vmem:[%s1 + $0x10] sm:$0xf]
    %v976 = vld [vmem:[%s1 + $0x14] sm:$0xf]
    %v977 = vld [vmem:[%s1 + $0x18] sm:$0xf]
    %v978 = vld [vmem:[%s1 + $0x1c] sm:$0xf]
    %v979 = vld [vmem:[%s1 + $0x20] sm:$0xf]
    %v980 = vld [vmem:[%s1 + $0x24] sm:$0xf]
    %v981 = vld [vmem:[%s1 + $0x28] sm:$0xf]
    %v982 = vld [vmem:[%s1 + $0x2c] sm:$0xf]
    %v983 = vld [vmem:[%s1 + $0x30] sm:$0xf]
    %v984 = vld [vmem:[%s1 + $0x34] sm:$0xf]
    %v985 = vld [vmem:[%s1 + $0x38] sm:$0xf]
    %v986 = vld [vmem:[%s1 + $0x3c] sm:$0xf]
    %v987 = vpack.c.bf16 %v954, %v953
    %v988 = vpack.c.bf16 %v956, %v955
    %v989 = vpack.c.bf16 %v958, %v957
    %v1006 = vunpack.c.l.b16 %v971
    %v1007 = vunpack.c.l.b16 %v972
    %v1008 = vunpack.c.l.b16 %v973
    %v1009 = vunpack.c.l.b16 %v974
    %v1010 = vunpack.c.l.b16 %v975
    %v1011 = vunpack.c.l.b16 %v976
    %v1012 = vunpack.c.l.b16 %v977
    %v1013 = vunpack.c.l.b16 %v978
    %v1014 = vunpack.c.l.b16 %v979
    %v1015 = vunpack.c.l.b16 %v980
    %v1016 = vunpack.c.l.b16 %v981
    %v1017 = vunpack.c.l.b16 %v982
    %v1018 = vunpack.c.l.b16 %v983
    %v1019 = vunpack.c.l.b16 %v984
    %v1020 = vunpack.c.l.b16 %v985
    %v1021 = vunpack.c.l.b16 %v986
    %v1022 = vpack.c.b16 %v1007, %v1006
    %v1023 = vpack.c.b16 %v1009, %v1008
    %v1024 = vpack.c.b16 %v1011, %v1010
    %v1025 = vpack.c.b16 %v1013, %v1012
    %v1026 = vpack.c.b16 %v1015, %v1014
    %v1027 = vpack.c.b16 %v1017, %v1016
    %v1028 = vpack.c.b16 %v1019, %v1018
    %v1029 = vpack.c.b16 %v1021, %v1020
    %1038 = vmatprep.subr.bf16.mxu0 0
    %1039 = vmatpush1.bf16.msra.mxu0 %v1022
    %1040 = vmatprep.subr.bf16.mxu0 0
    %1041 = vmatpush1.bf16.msra.mxu0 %v1023
    %1042 = vmatprep.subr.bf16.mxu0 0
    %1043 = vmatpush1.bf16.msra.mxu0 %v1024
    %1044 = vmatprep.subr.bf16.mxu0 0
    %1045 = vmatpush1.bf16.msra.mxu0 %v1025
    %1046 = vmatprep.subr.bf16.mxu0 0
    %1047 = vmatpush1.bf16.msra.mxu0 %v1026
    %1048 = vmatprep.subr.bf16.mxu0 0
    %1049 = vmatpush1.bf16.msra.mxu0 %v1027
    %1050 = vmatprep.subr.bf16.mxu0 0
    %1051 = vmatpush1.bf16.msra.mxu0 %v1028
    %1052 = vmatprep.subr.bf16.mxu0 0
    %1053 = vmatpush1.bf16.msra.mxu0 %v1029
    %1054 = vmatprep.subr.bf16.mxu0 0
    %1055 = vmatpush1.bf16.msra.mxu0 0
    %1056 = vmatprep.subr.bf16.mxu0 0
    %1057 = vmatpush1.bf16.msra.mxu0 0
    %1058 = vmatprep.subr.bf16.mxu0 0
    %1059 = vmatpush1.bf16.msra.mxu0 0
    %1060 = vmatprep.subr.bf16.mxu0 0
    %1061 = vmatpush1.bf16.msra.mxu0 0
    %1062 = vmatprep.subr.bf16.mxu0 0
    %1063 = vmatpush1.bf16.msra.mxu0 0
    %1064 = vmatprep.subr.bf16.mxu0 0
    %1065 = vmatpush1.bf16.msra.mxu0 0
    %1066 = vmatprep.subr.bf16.mxu0 0
    %1067 = vmatpush1.bf16.msra.mxu0 0
    %1068 = vmatprep.subr.bf16.mxu0 0
    %1069 = vmatpush1.bf16.msra.mxu0 0
    %1070 = vmatprep.mubr.bf16.mxu0 0
    %1071 = vmatmul.mubr.bf16.gmra.mrb[0].mxu0 %v987
    %v1072 = vpop.f32.mrb[0].mxu0
    %v1073 = vadd.f32 0.0, %v1072
    %v1074 = vpop.f32.mrb[0].mxu0
    %v1075 = vpop.f32.mrb[0].mxu0
    %v1076 = vadd.f32 0.0, %v1075
    %v1077 = vpop.f32.mrb[0].mxu0
    %1078 = vmatprep.mubr.bf16.mxu0 0
    %1079 = vmatmul.mubr.bf16.gmra.mrb[0].mxu0 %v988
    %v1080 = vpop.f32.mrb[0].mxu0
    %v1081 = vadd.f32 0.0, %v1080
    %v1082 = vpop.f32.mrb[0].mxu0
    %v1083 = vpop.f32.mrb[0].mxu0
    %v1084 = vadd.f32 0.0, %v1083
    %v1085 = vpop.f32.mrb[0].mxu0
    %1086 = vmatprep.mubr.bf16.mxu0 0
    %1087 = vmatmul.mubr.bf16.gmra.mrb[0].mxu0 %v989
    %v1088 = vpop.f32.mrb[0].mxu0
    %v1089 = vadd.f32 0.0, %v1088
    %v1090 = vpop.f32.mrb[0].mxu0
    %v1091 = vpop.f32.mrb[0].mxu0
    %v1092 = vadd.f32 0.0, %v1091
    %v1093 = vpop.f32.mrb[0].mxu0
    %1094 = vdwg.mxu0
    %v1095 = vrcp.pop %v965
    %v1096 = vrcp.pop %v966
    %v1097 = vrcp.pop %v967
    %v1098 = vrcp.pop %v968
    %v1099 = vrcp.pop %v969
    %v1100 = vrcp.pop %v970
    %1102 = vset.pattern.permute.xlu0 1
    %1103 = vperm.xlu0 %1102, %v1095
    %v1104 = vpop.permute.xlu0 %1103
    %1107 = vset.pattern.permute.xlu0 1
    %1108 = vperm.xlu0 %1107, %v1096
    %v1109 = vpop.permute.xlu0 %1108
    %1112 = vset.pattern.permute.xlu0 1
    %1113 = vperm.xlu0 %1112, %v1097
    %v1114 = vpop.permute.xlu0 %1113
    %1117 = vset.pattern.permute.xlu0 1
    %1118 = vperm.xlu0 %1117, %v1098
    %v1119 = vpop.permute.xlu0 %1118
    %1122 = vset.pattern.permute.xlu0 1
    %1123 = vperm.xlu0 %1122, %v1099
    %v1124 = vpop.permute.xlu0 %1123
    %1127 = vset.pattern.permute.xlu0 1
    %1128 = vperm.xlu0 %1127, %v1100
    %v1129 = vpop.permute.xlu0 %1128
    %v1131 = vmul.f32 %v1073, %v1104
    %v1132 = vmul.f32 %v1076, %v1109
    %v1133 = vmul.f32 %v1081, %v1114
    %v1134 = vmul.f32 %v1084, %v1119
    %v1135 = vmul.f32 %v1089, %v1124
    %v1136 = vmul.f32 %v1092, %v1129
    %v1137 = vld [vmem:[#allocation6] sm:$0xf]
    %v1138 = vld [vmem:[#allocation6 + $0x4] sm:$0xf]
    %v1139 = vld [vmem:[#allocation6 + $0x8] sm:$0xf]
    %v1140 = vld [vmem:[#allocation6 + $0xc] sm:$0xf]
    %v1141 = vld [vmem:[#allocation6 + $0x10] sm:$0xf]
    %v1142 = vld [vmem:[#allocation6 + $0x14] sm:$0xf]
    %v1143 = vld [vmem:[#allocation6 + $0x18] sm:$0xf]
    %v1144 = vld [vmem:[#allocation6 + $0x1c] sm:$0xf]
    %v1145 = vld [vmem:[#allocation6 + $0x20] sm:$0xf]
    %v1146 = vld [vmem:[#allocation6 + $0x24] sm:$0xf]
    %v1147 = vld [vmem:[#allocation6 + $0x28] sm:$0xf]
    %v1148 = vld [vmem:[#allocation6 + $0x2c] sm:$0xf]
    %v1149 = vld [vmem:[#allocation6 + $0x30] sm:$0xf]
    %v1150 = vld [vmem:[#allocation6 + $0x34] sm:$0xf]
    %v1151 = vld [vmem:[#allocation6 + $0x38] sm:$0xf]
    %v1152 = vld [vmem:[#allocation6 + $0x3c] sm:$0xf]
    %v1153 = vpack.c.bf16 %v1132, %v1131
    %v1154 = vpack.c.bf16 %v1134, %v1133
    %v1155 = vpack.c.bf16 %v1136, %v1135
    %v1156 = vld [vmem:[#allocation8] sm:$0x1]
    %v1158 = vlaneseq
    %v1159 = vshrl.u32 %v1158, 7
    %v1160 = vsub.s32 0, %v1159
    %v1161 = vrot.slane %v1156, %v1160
    %v1179 = vunpack.c.l.b16 %v1137
    %v1180 = vunpack.c.l.b16 %v1138
    %v1181 = vunpack.c.l.b16 %v1139
    %v1182 = vunpack.c.l.b16 %v1140
    %v1183 = vunpack.c.l.b16 %v1141
    %v1184 = vunpack.c.l.b16 %v1142
    %v1185 = vunpack.c.l.b16 %v1143
    %v1186 = vunpack.c.l.b16 %v1144
    %v1187 = vunpack.c.l.b16 %v1145
    %v1188 = vunpack.c.l.b16 %v1146
    %v1189 = vunpack.c.l.b16 %v1147
    %v1190 = vunpack.c.l.b16 %v1148
    %v1191 = vunpack.c.l.b16 %v1149
    %v1192 = vunpack.c.l.b16 %v1150
    %v1193 = vunpack.c.l.b16 %v1151
    %v1194 = vunpack.c.l.b16 %v1152
    %v1195 = vpack.c.b16 %v1180, %v1179
    %v1196 = vpack.c.b16 %v1182, %v1181
    %v1197 = vpack.c.b16 %v1184, %v1183
    %v1198 = vpack.c.b16 %v1186, %v1185
    %v1199 = vpack.c.b16 %v1188, %v1187
    %v1200 = vpack.c.b16 %v1190, %v1189
    %v1201 = vpack.c.b16 %v1192, %v1191
    %v1202 = vpack.c.b16 %v1194, %v1193
    %1211 = vmatprep.subr.bf16.mxu0 0
    %1212 = vmatpush1.bf16.msra.mxu0 %v1195
    %1213 = vmatprep.subr.bf16.mxu0 0
    %1214 = vmatpush1.bf16.msra.mxu0 %v1196
    %1215 = vmatprep.subr.bf16.mxu0 0
    %1216 = vmatpush1.bf16.msra.mxu0 %v1197
    %1217 = vmatprep.subr.bf16.mxu0 0
    %1218 = vmatpush1.bf16.msra.mxu0 %v1198
    %1219 = vmatprep.subr.bf16.mxu0 0
    %1220 = vmatpush1.bf16.msra.mxu0 %v1199
    %1221 = vmatprep.subr.bf16.mxu0 0
    %1222 = vmatpush1.bf16.msra.mxu0 %v1200
    %1223 = vmatprep.subr.bf16.mxu0 0
    %1224 = vmatpush1.bf16.msra.mxu0 %v1201
    %1225 = vmatprep.subr.bf16.mxu0 0
    %1226 = vmatpush1.bf16.msra.mxu0 %v1202
    %1227 = vmatprep.subr.bf16.mxu0 0
    %1228 = vmatpush1.bf16.msra.mxu0 0
    %1229 = vmatprep.subr.bf16.mxu0 0
    %1230 = vmatpush1.bf16.msra.mxu0 0
    %1231 = vmatprep.subr.bf16.mxu0 0
    %1232 = vmatpush1.bf16.msra.mxu0 0
    %1233 = vmatprep.subr.bf16.mxu0 0
    %1234 = vmatpush1.bf16.msra.mxu0 0
    %1235 = vmatprep.subr.bf16.mxu0 0
    %1236 = vmatpush1.bf16.msra.mxu0 0
    %1237 = vmatprep.subr.bf16.mxu0 0
    %1238 = vmatpush1.bf16.msra.mxu0 0
    %1239 = vmatprep.subr.bf16.mxu0 0
    %1240 = vmatpush1.bf16.msra.mxu0 0
    %1241 = vmatprep.subr.bf16.mxu0 0
    %1242 = vmatpush1.bf16.msra.mxu0 0
    %1243 = vmatprep.mubr.bf16.mxu0 0
    %1244 = vmatmul.mubr.bf16.gmra.mrb[0].mxu0 %v1153
    %v1245 = vpop.f32.mrb[0].mxu0
    %v1246 = vadd.f32 %v1161, %v1245
    %v1247 = vpop.f32.mrb[0].mxu0
    %v1248 = vpop.f32.mrb[0].mxu0
    %v1249 = vadd.f32 %v1161, %v1248
    %v1250 = vpop.f32.mrb[0].mxu0
    %1251 = vmatprep.mubr.bf16.mxu0 0
    %1252 = vmatmul.mubr.bf16.gmra.mrb[0].mxu0 %v1154
    %v1253 = vpop.f32.mrb[0].mxu0
    %v1254 = vadd.f32 %v1161, %v1253
    %v1255 = vpop.f32.mrb[0].mxu0
    %v1256 = vpop.f32.mrb[0].mxu0
    %v1257 = vadd.f32 %v1161, %v1256
    %v1258 = vpop.f32.mrb[0].mxu0
    %1259 = vmatprep.mubr.bf16.mxu0 0
    %1260 = vmatmul.mubr.bf16.gmra.mrb[0].mxu0 %v1155
    %v1261 = vpop.f32.mrb[0].mxu0
    %v1262 = vadd.f32 %v1161, %v1261
    %v1263 = vpop.f32.mrb[0].mxu0
    %v1264 = vpop.f32.mrb[0].mxu0
    %v1265 = vadd.f32 %v1161, %v1264
    %v1266 = vpop.f32.mrb[0].mxu0
    %1267 = vdwg.mxu0
    %v1268 = vtanh.pop %v1246
    %v1269 = vtanh.pop %v1249
    %v1270 = vtanh.pop %v1254
    %v1271 = vtanh.pop %v1257
    %v1272 = vtanh.pop %v1262
    %v1273 = vtanh.pop %v1265
    %v1274 = vld [vmem:[#allocation10] sm:$0xff]
    %v1275 = vld [vmem:[#allocation10 + $0x8] sm:$0xff]
    %v1276 = vld [vmem:[#allocation10 + $0x10] sm:$0xff]
    %v1277 = vld [vmem:[#allocation10 + $0x18] sm:$0xff]
    %v1278 = vld [vmem:[#allocation10 + $0x20] sm:$0xff]
    %v1279 = vld [vmem:[#allocation10 + $0x28] sm:$0xff]
    %v1280 = vld [vmem:[#allocation10 + $0x30] sm:$0xff]
    %v1281 = vld [vmem:[#allocation10 + $0x38] sm:$0xff]
    %v1282 = vld [vmem:[#allocation10 + $0x40] sm:$0xff]
    %v1283 = vld [vmem:[#allocation10 + $0x48] sm:$0xff]
    %v1284 = vld [vmem:[#allocation10 + $0x50] sm:$0xff]
    %v1285 = vld [vmem:[#allocation10 + $0x58] sm:$0xff]
    %v1286 = vld [vmem:[#allocation10 + $0x60] sm:$0xff]
    %v1287 = vld [vmem:[#allocation10 + $0x68] sm:$0xff]
    %v1288 = vld [vmem:[#allocation10 + $0x70] sm:$0xff]
    %v1289 = vld [vmem:[#allocation10 + $0x78] sm:$0xff]
    %v1290 = vld [vmem:[#allocation10 + $0x80] sm:$0xff]
    %v1291 = vld [vmem:[#allocation10 + $0x88] sm:$0xff]
    %v1292 = vld [vmem:[#allocation10 + $0x90] sm:$0xff]
    %v1293 = vld [vmem:[#allocation10 + $0x98] sm:$0xff]
    %v1294 = vld [vmem:[#allocation10 + $0xa0] sm:$0xff]
    %v1295 = vld [vmem:[#allocation10 + $0xa8] sm:$0xff]
    %v1296 = vld [vmem:[#allocation10 + $0xb0] sm:$0xff]
    %v1297 = vld [vmem:[#allocation10 + $0xb8] sm:$0xff]
    %v1298 = vld [vmem:[#allocation10 + $0xc0] sm:$0xff]
    %v1299 = vld [vmem:[#allocation10 + $0xc8] sm:$0xff]
    %v1300 = vld [vmem:[#allocation10 + $0xd0] sm:$0xff]
    %v1301 = vld [vmem:[#allocation10 + $0xd8] sm:$0xff]
    %v1302 = vld [vmem:[#allocation10 + $0xe0] sm:$0xff]
    %v1303 = vld [vmem:[#allocation10 + $0xe8] sm:$0xff]
    %v1304 = vld [vmem:[#allocation10 + $0xf0] sm:$0xff]
    %v1305 = vld [vmem:[#allocation10 + $0xf8] sm:$0xff]
    %v1306 = vld [vmem:[#allocation10 + $0x100] sm:$0xff]
    %v1307 = vld [vmem:[#allocation10 + $0x108] sm:$0xff]
    %v1308 = vld [vmem:[#allocation10 + $0x110] sm:$0xff]
    %v1309 = vld [vmem:[#allocation10 + $0x118] sm:$0xff]
    %v1310 = vld [vmem:[#allocation10 + $0x120] sm:$0xff]
    %v1311 = vld [vmem:[#allocation10 + $0x128] sm:$0xff]
    %v1312 = vld [vmem:[#allocation10 + $0x130] sm:$0xff]
    %v1313 = vld [vmem:[#allocation10 + $0x138] sm:$0xff]
    %v1314 = vld [vmem:[#allocation10 + $0x140] sm:$0xff]
    %v1315 = vld [vmem:[#allocation10 + $0x148] sm:$0xff]
    %v1316 = vld [vmem:[#allocation10 + $0x150] sm:$0xff]
    %v1317 = vld [vmem:[#allocation10 + $0x158] sm:$0xff]
    %v1318 = vld [vmem:[#allocation10 + $0x160] sm:$0xff]
    %v1319 = vld [vmem:[#allocation10 + $0x168] sm:$0xff]
    %v1320 = vld [vmem:[#allocation10 + $0x170] sm:$0xff]
    %v1321 = vld [vmem:[#allocation10 + $0x178] sm:$0xff]
    %v1322 = vld [vmem:[#allocation10 + $0x180] sm:$0xff]
    %v1323 = vld [vmem:[#allocation10 + $0x188] sm:$0xff]
    %v1324 = vld [vmem:[#allocation10 + $0x190] sm:$0xff]
    %v1325 = vld [vmem:[#allocation10 + $0x198] sm:$0xff]
    %v1326 = vld [vmem:[#allocation10 + $0x1a0] sm:$0xff]
    %v1327 = vld [vmem:[#allocation10 + $0x1a8] sm:$0xff]
    %v1328 = vld [vmem:[#allocation10 + $0x1b0] sm:$0xff]
    %v1329 = vld [vmem:[#allocation10 + $0x1b8] sm:$0xff]
    %v1330 = vld [vmem:[#allocation10 + $0x1c0] sm:$0xff]
    %v1331 = vld [vmem:[#allocation10 + $0x1c8] sm:$0xff]
    %v1332 = vld [vmem:[#allocation10 + $0x1d0] sm:$0xff]
    %v1333 = vld [vmem:[#allocation10 + $0x1d8] sm:$0xff]
    %v1334 = vld [vmem:[#allocation10 + $0x1e0] sm:$0xff]
    %v1335 = vld [vmem:[#allocation10 + $0x1e8] sm:$0xff]
    %v1336 = vld [vmem:[#allocation10 + $0x1f0] sm:$0xff]
    %v1337 = vld [vmem:[#allocation10 + $0x1f8] sm:$0xff]
    %v1338 = vpack.c.bf16 %v1269, %v1268
    %v1339 = vpack.c.bf16 %v1271, %v1270
    %v1340 = vpack.c.bf16 %v1273, %v1272
    %v1341 = vld [vmem:[#allocation13] sm:$0xff]
    %v1343 = vlaneseq
    %v1344 = vshrl.u32 %v1343, 7
    %v1345 = vsub.s32 0, %v1344
    %v1346 = vrot.slane %v1341, %v1345
    %v1347 = vlaneseq
    %v1348 = vshrl.u32 %v1347, 7
    %v1349 = vsub.s32 1, %v1348
    %v1350 = vrot.slane %v1341, %v1349
    %v1351 = vlaneseq
    %v1352 = vshrl.u32 %v1351, 7
    %v1353 = vsub.s32 2, %v1352
    %v1354 = vrot.slane %v1341, %v1353
    %v1355 = vlaneseq
    %v1356 = vshrl.u32 %v1355, 7
    %v1357 = vsub.s32 3, %v1356
    %v1358 = vrot.slane %v1341, %v1357
    %v1359 = vlaneseq
    %v1360 = vshrl.u32 %v1359, 7
    %v1361 = vsub.s32 4, %v1360
    %v1362 = vrot.slane %v1341, %v1361
    %v1363 = vlaneseq
    %v1364 = vshrl.u32 %v1363, 7
    %v1365 = vsub.s32 5, %v1364
    %v1366 = vrot.slane %v1341, %v1365
    %v1367 = vlaneseq
    %v1368 = vshrl.u32 %v1367, 7
    %v1369 = vsub.s32 6, %v1368
    %v1370 = vrot.slane %v1341, %v1369
    %v1371 = vlaneseq
    %v1372 = vshrl.u32 %v1371, 7
    %v1373 = vsub.s32 7, %v1372
    %v1374 = vrot.slane %v1341, %v1373
    %v1447 = vunpack.c.l.b16 %v1274
    %v1448 = vunpack.c.h.b16 %v1274
    %v1449 = vunpack.c.l.b16 %v1275
    %v1450 = vunpack.c.h.b16 %v1275
    %v1451 = vunpack.c.l.b16 %v1276
    %v1452 = vunpack.c.h.b16 %v1276
    %v1453 = vunpack.c.l.b16 %v1277
    %v1454 = vunpack.c.h.b16 %v1277
    %v1455 = vunpack.c.l.b16 %v1278
    %v1456 = vunpack.c.h.b16 %v1278
    %v1457 = vunpack.c.l.b16 %v1279
    %v1458 = vunpack.c.h.b16 %v1279
    %v1459 = vunpack.c.l.b16 %v1280
    %v1460 = vunpack.c.h.b16 %v1280
    %v1461 = vunpack.c.l.b16 %v1281
    %v1462 = vunpack.c.h.b16 %v1281
    %v1463 = vunpack.c.l.b16 %v1282
    %v1464 = vunpack.c.h.b16 %v1282
    %v1465 = vunpack.c.l.b16 %v1283
    %v1466 = vunpack.c.h.b16 %v1283
    %v1467 = vunpack.c.l.b16 %v1284
    %v1468 = vunpack.c.h.b16 %v1284
    %v1469 = vunpack.c.l.b16 %v1285
    %v1470 = vunpack.c.h.b16 %v1285
    %v1471 = vunpack.c.l.b16 %v1286
    %v1472 = vunpack.c.h.b16 %v1286
    %v1473 = vunpack.c.l.b16 %v1287
    %v1474 = vunpack.c.h.b16 %v1287
    %v1475 = vunpack.c.l.b16 %v1288
    %v1476 = vunpack.c.h.b16 %v1288
    %v1477 = vunpack.c.l.b16 %v1289
    %v1478 = vunpack.c.h.b16 %v1289
    %v1479 = vunpack.c.l.b16 %v1290
    %v1480 = vunpack.c.h.b16 %v1290
    %v1481 = vunpack.c.l.b16 %v1291
    %v1482 = vunpack.c.h.b16 %v1291
    %v1483 = vunpack.c.l.b16 %v1292
    %v1484 = vunpack.c.h.b16 %v1292
    %v1485 = vunpack.c.l.b16 %v1293
    %v1486 = vunpack.c.h.b16 %v1293
    %v1487 = vunpack.c.l.b16 %v1294
    %v1488 = vunpack.c.h.b16 %v1294
    %v1489 = vunpack.c.l.b16 %v1295
    %v1490 = vunpack.c.h.b16 %v1295
    %v1491 = vunpack.c.l.b16 %v1296
    %v1492 = vunpack.c.h.b16 %v1296
    %v1493 = vunpack.c.l.b16 %v1297
    %v1494 = vunpack.c.h.b16 %v1297
    %v1495 = vunpack.c.l.b16 %v1298
    %v1496 = vunpack.c.h.b16 %v1298
    %v1497 = vunpack.c.l.b16 %v1299
    %v1498 = vunpack.c.h.b16 %v1299
    %v1499 = vunpack.c.l.b16 %v1300
    %v1500 = vunpack.c.h.b16 %v1300
    %v1501 = vunpack.c.l.b16 %v1301
    %v1502 = vunpack.c.h.b16 %v1301
    %v1503 = vunpack.c.l.b16 %v1302
    %v1504 = vunpack.c.h.b16 %v1302
    %v1505 = vunpack.c.l.b16 %v1303
    %v1506 = vunpack.c.h.b16 %v1303
    %v1507 = vunpack.c.l.b16 %v1304
    %v1508 = vunpack.c.h.b16 %v1304
    %v1509 = vunpack.c.l.b16 %v1305
    %v1510 = vunpack.c.h.b16 %v1305
    %v1511 = vunpack.c.l.b16 %v1306
    %v1512 = vunpack.c.h.b16 %v1306
    %v1513 = vunpack.c.l.b16 %v1307
    %v1514 = vunpack.c.h.b16 %v1307
    %v1515 = vunpack.c.l.b16 %v1308
    %v1516 = vunpack.c.h.b16 %v1308
    %v1517 = vunpack.c.l.b16 %v1309
    %v1518 = vunpack.c.h.b16 %v1309
    %v1519 = vunpack.c.l.b16 %v1310
    %v1520 = vunpack.c.h.b16 %v1310
    %v1521 = vunpack.c.l.b16 %v1311
    %v1522 = vunpack.c.h.b16 %v1311
    %v1523 = vunpack.c.l.b16 %v1312
    %v1524 = vunpack.c.h.b16 %v1312
    %v1525 = vunpack.c.l.b16 %v1313
    %v1526 = vunpack.c.h.b16 %v1313
    %v1527 = vunpack.c.l.b16 %v1314
    %v1528 = vunpack.c.h.b16 %v1314
    %v1529 = vunpack.c.l.b16 %v1315
    %v1530 = vunpack.c.h.b16 %v1315
    %v1531 = vunpack.c.l.b16 %v1316
    %v1532 = vunpack.c.h.b16 %v1316
    %v1533 = vunpack.c.l.b16 %v1317
    %v1534 = vunpack.c.h.b16 %v1317
    %v1535 = vunpack.c.l.b16 %v1318
    %v1536 = vunpack.c.h.b16 %v1318
    %v1537 = vunpack.c.l.b16 %v1319
    %v1538 = vunpack.c.h.b16 %v1319
    %v1539 = vunpack.c.l.b16 %v1320
    %v1540 = vunpack.c.h.b16 %v1320
    %v1541 = vunpack.c.l.b16 %v1321
    %v1542 = vunpack.c.h.b16 %v1321
    %v1543 = vunpack.c.l.b16 %v1322
    %v1544 = vunpack.c.h.b16 %v1322
    %v1545 = vunpack.c.l.b16 %v1323
    %v1546 = vunpack.c.h.b16 %v1323
    %v1547 = vunpack.c.l.b16 %v1324
    %v1548 = vunpack.c.h.b16 %v1324
    %v1549 = vunpack.c.l.b16 %v1325
    %v1550 = vunpack.c.h.b16 %v1325
    %v1551 = vunpack.c.l.b16 %v1326
    %v1552 = vunpack.c.h.b16 %v1326
    %v1553 = vunpack.c.l.b16 %v1327
    %v1554 = vunpack.c.h.b16 %v1327
    %v1555 = vunpack.c.l.b16 %v1328
    %v1556 = vunpack.c.h.b16 %v1328
    %v1557 = vunpack.c.l.b16 %v1329
    %v1558 = vunpack.c.h.b16 %v1329
    %v1559 = vunpack.c.l.b16 %v1330
    %v1560 = vunpack.c.h.b16 %v1330
    %v1561 = vunpack.c.l.b16 %v1331
    %v1562 = vunpack.c.h.b16 %v1331
    %v1563 = vunpack.c.l.b16 %v1332
    %v1564 = vunpack.c.h.b16 %v1332
    %v1565 = vunpack.c.l.b16 %v1333
    %v1566 = vunpack.c.h.b16 %v1333
    %v1567 = vunpack.c.l.b16 %v1334
    %v1568 = vunpack.c.h.b16 %v1334
    %v1569 = vunpack.c.l.b16 %v1335
    %v1570 = vunpack.c.h.b16 %v1335
    %v1571 = vunpack.c.l.b16 %v1336
    %v1572 = vunpack.c.h.b16 %v1336
    %v1573 = vunpack.c.l.b16 %v1337
    %v1574 = vunpack.c.h.b16 %v1337
    %v1575 = vpack.c.b16 %v1455, %v1447
    %v1576 = vpack.c.b16 %v1456, %v1448
    %v1577 = vpack.c.b16 %v1457, %v1449
    %v1578 = vpack.c.b16 %v1458, %v1450
    %v1579 = vpack.c.b16 %v1459, %v1451
    %v1580 = vpack.c.b16 %v1460, %v1452
    %v1581 = vpack.c.b16 %v1461, %v1453
    %v1582 = vpack.c.b16 %v1462, %v1454
    %v1583 = vpack.c.b16 %v1471, %v1463
    %v1584 = vpack.c.b16 %v1472, %v1464
    %v1585 = vpack.c.b16 %v1473, %v1465
    %v1586 = vpack.c.b16 %v1474, %v1466
    %v1587 = vpack.c.b16 %v1475, %v1467
    %v1588 = vpack.c.b16 %v1476, %v1468
    %v1589 = vpack.c.b16 %v1477, %v1469
    %v1590 = vpack.c.b16 %v1478, %v1470
    %v1591 = vpack.c.b16 %v1487, %v1479
    %v1592 = vpack.c.b16 %v1488, %v1480
    %v1593 = vpack.c.b16 %v1489, %v1481
    %v1594 = vpack.c.b16 %v1490, %v1482
    %v1595 = vpack.c.b16 %v1491, %v1483
    %v1596 = vpack.c.b16 %v1492, %v1484
    %v1597 = vpack.c.b16 %v1493, %v1485
    %v1598 = vpack.c.b16 %v1494, %v1486
    %v1599 = vpack.c.b16 %v1503, %v1495
    %v1600 = vpack.c.b16 %v1504, %v1496
    %v1601 = vpack.c.b16 %v1505, %v1497
    %v1602 = vpack.c.b16 %v1506, %v1498
    %v1603 = vpack.c.b16 %v1507, %v1499
    %v1604 = vpack.c.b16 %v1508, %v1500
    %v1605 = vpack.c.b16 %v1509, %v1501
    %v1606 = vpack.c.b16 %v1510, %v1502
    %v1607 = vpack.c.b16 %v1519, %v1511
    %v1608 = vpack.c.b16 %v1520, %v1512
    %v1609 = vpack.c.b16 %v1521, %v1513
    %v1610 = vpack.c.b16 %v1522, %v1514
    %v1611 = vpack.c.b16 %v1523, %v1515
    %v1612 = vpack.c.b16 %v1524, %v1516
    %v1613 = vpack.c.b16 %v1525, %v1517
    %v1614 = vpack.c.b16 %v1526, %v1518
    %v1615 = vpack.c.b16 %v1535, %v1527
    %v1616 = vpack.c.b16 %v1536, %v1528
    %v1617 = vpack.c.b16 %v1537, %v1529
    %v1618 = vpack.c.b16 %v1538, %v1530
    %v1619 = vpack.c.b16 %v1539, %v1531
    %v1620 = vpack.c.b16 %v1540, %v1532
    %v1621 = vpack.c.b16 %v1541, %v1533
    %v1622 = vpack.c.b16 %v1542, %v1534
    %v1623 = vpack.c.b16 %v1551, %v1543
    %v1624 = vpack.c.b16 %v1552, %v1544
    %v1625 = vpack.c.b16 %v1553, %v1545
    %v1626 = vpack.c.b16 %v1554, %v1546
    %v1627 = vpack.c.b16 %v1555, %v1547
    %v1628 = vpack.c.b16 %v1556, %v1548
    %v1629 = vpack.c.b16 %v1557, %v1549
    %v1630 = vpack.c.b16 %v1558, %v1550
    %v1631 = vpack.c.b16 %v1567, %v1559
    %v1632 = vpack.c.b16 %v1568, %v1560
    %v1633 = vpack.c.b16 %v1569, %v1561
    %v1634 = vpack.c.b16 %v1570, %v1562
    %v1635 = vpack.c.b16 %v1571, %v1563
    %v1636 = vpack.c.b16 %v1572, %v1564
    %v1637 = vpack.c.b16 %v1573, %v1565
    %v1638 = vpack.c.b16 %v1574, %v1566
    %1703 = vmatprep.subr.bf16.mxu0 %v1576
    %1704 = vmatpush1.bf16.msra.mxu0 %v1575
    %1705 = vmatprep.subr.bf16.mxu0 %v1584
    %1706 = vmatpush1.bf16.msra.mxu0 %v1583
    %1707 = vmatprep.subr.bf16.mxu0 %v1592
    %1708 = vmatpush1.bf16.msra.mxu0 %v1591
    %1709 = vmatprep.subr.bf16.mxu0 %v1600
    %1710 = vmatpush1.bf16.msra.mxu0 %v1599
    %1711 = vmatprep.subr.bf16.mxu0 %v1608
    %1712 = vmatpush1.bf16.msra.mxu0 %v1607
    %1713 = vmatprep.subr.bf16.mxu0 %v1616
    %1714 = vmatpush1.bf16.msra.mxu0 %v1615
    %1715 = vmatprep.subr.bf16.mxu0 %v1624
    %1716 = vmatpush1.bf16.msra.mxu0 %v1623
    %1717 = vmatprep.subr.bf16.mxu0 %v1632
    %1718 = vmatpush1.bf16.msra.mxu0 %v1631
    %1719 = vmatprep.subr.bf16.mxu0 0
    %1720 = vmatpush1.bf16.msra.mxu0 0
    %1721 = vmatprep.subr.bf16.mxu0 0
    %1722 = vmatpush1.bf16.msra.mxu0 0
    %1723 = vmatprep.subr.bf16.mxu0 0
    %1724 = vmatpush1.bf16.msra.mxu0 0
    %1725 = vmatprep.subr.bf16.mxu0 0
    %1726 = vmatpush1.bf16.msra.mxu0 0
    %1727 = vmatprep.subr.bf16.mxu0 0
    %1728 = vmatpush1.bf16.msra.mxu0 0
    %1729 = vmatprep.subr.bf16.mxu0 0
    %1730 = vmatpush1.bf16.msra.mxu0 0
    %1731 = vmatprep.subr.bf16.mxu0 0
    %1732 = vmatpush1.bf16.msra.mxu0 0
    %1733 = vmatprep.subr.bf16.mxu0 0
    %1734 = vmatpush1.bf16.msra.mxu0 0
    %1735 = vmatprep.mubr.bf16.mxu0 0
    %1736 = vmatmul.mubr.bf16.gmra.mrb[0].mxu0 %v1338
    %v1737 = vpop.f32.mrb[0].mxu0
    %v1738 = vadd.f32 %v1346, %v1737
    %v1739 = vpop.f32.mrb[0].mxu0
    %v1740 = vadd.f32 %v1350, %v1739
    %v1741 = vpop.f32.mrb[0].mxu0
    %v1742 = vadd.f32 %v1346, %v1741
    %v1743 = vpop.f32.mrb[0].mxu0
    %v1744 = vadd.f32 %v1350, %v1743
    %1745 = vmatprep.mubr.bf16.mxu0 0
    %1746 = vmatmul.mubr.bf16.gmra.mrb[0].mxu0 %v1339
    %v1747 = vpop.f32.mrb[0].mxu0
    %v1748 = vadd.f32 %v1346, %v1747
    %v1749 = vpop.f32.mrb[0].mxu0
    %v1750 = vadd.f32 %v1350, %v1749
    %v1751 = vpop.f32.mrb[0].mxu0
    %v1752 = vadd.f32 %v1346, %v1751
    %v1753 = vpop.f32.mrb[0].mxu0
    %v1754 = vadd.f32 %v1350, %v1753
    %1755 = vmatprep.mubr.bf16.mxu0 0
    %1756 = vmatmul.mubr.bf16.gmra.mrb[0].mxu0 %v1340
    %v1757 = vpop.f32.mrb[0].mxu0
    %v1758 = vadd.f32 %v1346, %v1757
    %v1759 = vpop.f32.mrb[0].mxu0
    %v1760 = vadd.f32 %v1350, %v1759
    %v1761 = vpop.f32.mrb[0].mxu0
    %v1762 = vadd.f32 %v1346, %v1761
    %v1763 = vpop.f32.mrb[0].mxu0
    %v1764 = vadd.f32 %v1350, %v1763
    %1765 = vdwg.mxu0
    %1766 = vmatprep.subr.bf16.mxu0 %v1578
    %1767 = vmatpush1.bf16.msra.mxu0 %v1577
    %1768 = vmatprep.subr.bf16.mxu0 %v1586
    %1769 = vmatpush1.bf16.msra.mxu0 %v1585
    %1770 = vmatprep.subr.bf16.mxu0 %v1594
    %1771 = vmatpush1.bf16.msra.mxu0 %v1593
    %1772 = vmatprep.subr.bf16.mxu0 %v1602
    %1773 = vmatpush1.bf16.msra.mxu0 %v1601
    %1774 = vmatprep.subr.bf16.mxu0 %v1610
    %1775 = vmatpush1.bf16.msra.mxu0 %v1609
    %1776 = vmatprep.subr.bf16.mxu0 %v1618
    %1777 = vmatpush1.bf16.msra.mxu0 %v1617
    %1778 = vmatprep.subr.bf16.mxu0 %v1626
    %1779 = vmatpush1.bf16.msra.mxu0 %v1625
    %1780 = vmatprep.subr.bf16.mxu0 %v1634
    %1781 = vmatpush1.bf16.msra.mxu0 %v1633
    %1782 = vmatprep.subr.bf16.mxu0 0
    %1783 = vmatpush1.bf16.msra.mxu0 0
    %1784 = vmatprep.subr.bf16.mxu0 0
    %1785 = vmatpush1.bf16.msra.mxu0 0
    %1786 = vmatprep.subr.bf16.mxu0 0
    %1787 = vmatpush1.bf16.msra.mxu0 0
    %1788 = vmatprep.subr.bf16.mxu0 0
    %1789 = vmatpush1.bf16.msra.mxu0 0
    %1790 = vmatprep.subr.bf16.mxu0 0
    %1791 = vmatpush1.bf16.msra.mxu0 0
    %1792 = vmatprep.subr.bf16.mxu0 0
    %1793 = vmatpush1.bf16.msra.mxu0 0
    %1794 = vmatprep.subr.bf16.mxu0 0
    %1795 = vmatpush1.bf16.msra.mxu0 0
    %1796 = vmatprep.subr.bf16.mxu0 0
    %1797 = vmatpush1.bf16.msra.mxu0 0
    %1798 = vmatprep.mubr.bf16.mxu0 0
    %1799 = vmatmul.mubr.bf16.gmra.mrb[0].mxu0 %v1338
    %v1800 = vpop.f32.mrb[0].mxu0
    %v1801 = vadd.f32 %v1354, %v1800
    %v1802 = vpop.f32.mrb[0].mxu0
    %v1803 = vadd.f32 %v1358, %v1802
    %v1804 = vpop.f32.mrb[0].mxu0
    %v1805 = vadd.f32 %v1354, %v1804
    %v1806 = vpop.f32.mrb[0].mxu0
    %v1807 = vadd.f32 %v1358, %v1806
    %1808 = vmatprep.mubr.bf16.mxu0 0
    %1809 = vmatmul.mubr.bf16.gmra.mrb[0].mxu0 %v1339
    %v1810 = vpop.f32.mrb[0].mxu0
    %v1811 = vadd.f32 %v1354, %v1810
    %v1812 = vpop.f32.mrb[0].mxu0
    %v1813 = vadd.f32 %v1358, %v1812
    %v1814 = vpop.f32.mrb[0].mxu0
    %v1815 = vadd.f32 %v1354, %v1814
    %v1816 = vpop.f32.mrb[0].mxu0
    %v1817 = vadd.f32 %v1358, %v1816
    %1818 = vmatprep.mubr.bf16.mxu0 0
    %1819 = vmatmul.mubr.bf16.gmra.mrb[0].mxu0 %v1340
    %v1820 = vpop.f32.mrb[0].mxu0
    %v1821 = vadd.f32 %v1354, %v1820
    %v1822 = vpop.f32.mrb[0].mxu0
    %v1823 = vadd.f32 %v1358, %v1822
    %v1824 = vpop.f32.mrb[0].mxu0
    %v1825 = vadd.f32 %v1354, %v1824
    %v1826 = vpop.f32.mrb[0].mxu0
    %v1827 = vadd.f32 %v1358, %v1826
    %1828 = vdwg.mxu0
    %1829 = vmatprep.subr.bf16.mxu0 %v1580
    %1830 = vmatpush1.bf16.msra.mxu0 %v1579
    %1831 = vmatprep.subr.bf16.mxu0 %v1588
    %1832 = vmatpush1.bf16.msra.mxu0 %v1587
    %1833 = vmatprep.subr.bf16.mxu0 %v1596
    %1834 = vmatpush1.bf16.msra.mxu0 %v1595
    %1835 = vmatprep.subr.bf16.mxu0 %v1604
    %1836 = vmatpush1.bf16.msra.mxu0 %v1603
    %1837 = vmatprep.subr.bf16.mxu0 %v1612
    %1838 = vmatpush1.bf16.msra.mxu0 %v1611
    %1839 = vmatprep.subr.bf16.mxu0 %v1620
    %1840 = vmatpush1.bf16.msra.mxu0 %v1619
    %1841 = vmatprep.subr.bf16.mxu0 %v1628
    %1842 = vmatpush1.bf16.msra.mxu0 %v1627
    %1843 = vmatprep.subr.bf16.mxu0 %v1636
    %1844 = vmatpush1.bf16.msra.mxu0 %v1635
    %1845 = vmatprep.subr.bf16.mxu0 0
    %1846 = vmatpush1.bf16.msra.mxu0 0
    %1847 = vmatprep.subr.bf16.mxu0 0
    %1848 = vmatpush1.bf16.msra.mxu0 0
    %1849 = vmatprep.subr.bf16.mxu0 0
    %1850 = vmatpush1.bf16.msra.mxu0 0
    %1851 = vmatprep.subr.bf16.mxu0 0
    %1852 = vmatpush1.bf16.msra.mxu0 0
    %1853 = vmatprep.subr.bf16.mxu0 0
    %1854 = vmatpush1.bf16.msra.mxu0 0
    %1855 = vmatprep.subr.bf16.mxu0 0
    %1856 = vmatpush1.bf16.msra.mxu0 0
    %1857 = vmatprep.subr.bf16.mxu0 0
    %1858 = vmatpush1.bf16.msra.mxu0 0
    %1859 = vmatprep.subr.bf16.mxu0 0
    %1860 = vmatpush1.bf16.msra.mxu0 0
    %1861 = vmatprep.mubr.bf16.mxu0 0
    %1862 = vmatmul.mubr.bf16.gmra.mrb[0].mxu0 %v1338
    %v1863 = vpop.f32.mrb[0].mxu0
    %v1864 = vadd.f32 %v1362, %v1863
    %v1865 = vpop.f32.mrb[0].mxu0
    %v1866 = vadd.f32 %v1366, %v1865
    %v1867 = vpop.f32.mrb[0].mxu0
    %v1868 = vadd.f32 %v1362, %v1867
    %v1869 = vpop.f32.mrb[0].mxu0
    %v1870 = vadd.f32 %v1366, %v1869
    %1871 = vmatprep.mubr.bf16.mxu0 0
    %1872 = vmatmul.mubr.bf16.gmra.mrb[0].mxu0 %v1339
    %v1873 = vpop.f32.mrb[0].mxu0
    %v1874 = vadd.f32 %v1362, %v1873
    %v1875 = vpop.f32.mrb[0].mxu0
    %v1876 = vadd.f32 %v1366, %v1875
    %v1877 = vpop.f32.mrb[0].mxu0
    %v1878 = vadd.f32 %v1362, %v1877
    %v1879 = vpop.f32.mrb[0].mxu0
    %v1880 = vadd.f32 %v1366, %v1879
    %1881 = vmatprep.mubr.bf16.mxu0 0
    %1882 = vmatmul.mubr.bf16.gmra.mrb[0].mxu0 %v1340
    %v1883 = vpop.f32.mrb[0].mxu0
    %v1884 = vadd.f32 %v1362, %v1883
    %v1885 = vpop.f32.mrb[0].mxu0
    %v1886 = vadd.f32 %v1366, %v1885
    %v1887 = vpop.f32.mrb[0].mxu0
    %v1888 = vadd.f32 %v1362, %v1887
    %v1889 = vpop.f32.mrb[0].mxu0
    %v1890 = vadd.f32 %v1366, %v1889
    %1891 = vdwg.mxu0
    %1892 = vmatprep.subr.bf16.mxu0 %v1582
    %1893 = vmatpush1.bf16.msra.mxu0 %v1581
    %1894 = vmatprep.subr.bf16.mxu0 %v1590
    %1895 = vmatpush1.bf16.msra.mxu0 %v1589
    %1896 = vmatprep.subr.bf16.mxu0 %v1598
    %1897 = vmatpush1.bf16.msra.mxu0 %v1597
    %1898 = vmatprep.subr.bf16.mxu0 %v1606
    %1899 = vmatpush1.bf16.msra.mxu0 %v1605
    %1900 = vmatprep.subr.bf16.mxu0 %v1614
    %1901 = vmatpush1.bf16.msra.mxu0 %v1613
    %1902 = vmatprep.subr.bf16.mxu0 %v1622
    %1903 = vmatpush1.bf16.msra.mxu0 %v1621
    %1904 = vmatprep.subr.bf16.mxu0 %v1630
    %1905 = vmatpush1.bf16.msra.mxu0 %v1629
    %1906 = vmatprep.subr.bf16.mxu0 %v1638
    %1907 = vmatpush1.bf16.msra.mxu0 %v1637
    %1908 = vmatprep.subr.bf16.mxu0 0
    %1909 = vmatpush1.bf16.msra.mxu0 0
    %1910 = vmatprep.subr.bf16.mxu0 0
    %1911 = vmatpush1.bf16.msra.mxu0 0
    %1912 = vmatprep.subr.bf16.mxu0 0
    %1913 = vmatpush1.bf16.msra.mxu0 0
    %1914 = vmatprep.subr.bf16.mxu0 0
    %1915 = vmatpush1.bf16.msra.mxu0 0
    %1916 = vmatprep.subr.bf16.mxu0 0
    %1917 = vmatpush1.bf16.msra.mxu0 0
    %1918 = vmatprep.subr.bf16.mxu0 0
    %1919 = vmatpush1.bf16.msra.mxu0 0
    %1920 = vmatprep.subr.bf16.mxu0 0
    %1921 = vmatpush1.bf16.msra.mxu0 0
    %1922 = vmatprep.subr.bf16.mxu0 0
    %1923 = vmatpush1.bf16.msra.mxu0 0
    %1924 = vmatprep.mubr.bf16.mxu0 0
    %1925 = vmatmul.mubr.bf16.gmra.mrb[0].mxu0 %v1338
    %v1926 = vpop.f32.mrb[0].mxu0
    %v1927 = vadd.f32 %v1370, %v1926
    %v1928 = vpop.f32.mrb[0].mxu0
    %v1929 = vadd.f32 %v1374, %v1928
    %v1930 = vpop.f32.mrb[0].mxu0
    %v1931 = vadd.f32 %v1370, %v1930
    %v1932 = vpop.f32.mrb[0].mxu0
    %v1933 = vadd.f32 %v1374, %v1932
    %1934 = vmatprep.mubr.bf16.mxu0 0
    %1935 = vmatmul.mubr.bf16.gmra.mrb[0].mxu0 %v1339
    %v1936 = vpop.f32.mrb[0].mxu0
    %v1937 = vadd.f32 %v1370, %v1936
    %v1938 = vpop.f32.mrb[0].mxu0
    %v1939 = vadd.f32 %v1374, %v1938
    %v1940 = vpop.f32.mrb[0].mxu0
    %v1941 = vadd.f32 %v1370, %v1940
    %v1942 = vpop.f32.mrb[0].mxu0
    %v1943 = vadd.f32 %v1374, %v1942
    %1944 = vmatprep.mubr.bf16.mxu0 0
    %1945 = vmatmul.mubr.bf16.gmra.mrb[0].mxu0 %v1340
    %v1946 = vpop.f32.mrb[0].mxu0
    %v1947 = vadd.f32 %v1370, %v1946
    %v1948 = vpop.f32.mrb[0].mxu0
    %v1949 = vadd.f32 %v1374, %v1948
    %v1950 = vpop.f32.mrb[0].mxu0
    %v1951 = vadd.f32 %v1370, %v1950
    %v1952 = vpop.f32.mrb[0].mxu0
    %v1953 = vadd.f32 %v1374, %v1952
    %1954 = vdwg.mxu0
    %v1955 = vld [vmem:[#allocation11] sm:$0xff]
    %v1956 = vld [vmem:[#allocation11 + $0x8] sm:$0xff]
    %v1957 = vld [vmem:[#allocation11 + $0x10] sm:$0xff]
    %v1958 = vld [vmem:[#allocation11 + $0x18] sm:$0xff]
    %v1959 = vld [vmem:[#allocation11 + $0x20] sm:$0xff]
    %v1960 = vld [vmem:[#allocation11 + $0x28] sm:$0xff]
    %v1961 = vld [vmem:[#allocation11 + $0x30] sm:$0xff]
    %v1962 = vld [vmem:[#allocation11 + $0x38] sm:$0xff]
    %v1963 = vld [vmem:[#allocation11 + $0x40] sm:$0xff]
    %v1964 = vld [vmem:[#allocation11 + $0x48] sm:$0xff]
    %v1965 = vld [vmem:[#allocation11 + $0x50] sm:$0xff]
    %v1966 = vld [vmem:[#allocation11 + $0x58] sm:$0xff]
    %v1967 = vld [vmem:[#allocation11 + $0x60] sm:$0xff]
    %v1968 = vld [vmem:[#allocation11 + $0x68] sm:$0xff]
    %v1969 = vld [vmem:[#allocation11 + $0x70] sm:$0xff]
    %v1970 = vld [vmem:[#allocation11 + $0x78] sm:$0xff]
    %v1971 = vld [vmem:[#allocation11 + $0x80] sm:$0xff]
    %v1972 = vld [vmem:[#allocation11 + $0x88] sm:$0xff]
    %v1973 = vld [vmem:[#allocation11 + $0x90] sm:$0xff]
    %v1974 = vld [vmem:[#allocation11 + $0x98] sm:$0xff]
    %v1975 = vld [vmem:[#allocation11 + $0xa0] sm:$0xff]
    %v1976 = vld [vmem:[#allocation11 + $0xa8] sm:$0xff]
    %v1977 = vld [vmem:[#allocation11 + $0xb0] sm:$0xff]
    %v1978 = vld [vmem:[#allocation11 + $0xb8] sm:$0xff]
    %v1979 = vld [vmem:[#allocation11 + $0xc0] sm:$0xff]
    %v1980 = vld [vmem:[#allocation11 + $0xc8] sm:$0xff]
    %v1981 = vld [vmem:[#allocation11 + $0xd0] sm:$0xff]
    %v1982 = vld [vmem:[#allocation11 + $0xd8] sm:$0xff]
    %v1983 = vld [vmem:[#allocation11 + $0xe0] sm:$0xff]
    %v1984 = vld [vmem:[#allocation11 + $0xe8] sm:$0xff]
    %v1985 = vld [vmem:[#allocation11 + $0xf0] sm:$0xff]
    %v1986 = vld [vmem:[#allocation11 + $0xf8] sm:$0xff]
    %v1987 = vld [vmem:[#allocation11 + $0x100] sm:$0xff]
    %v1988 = vld [vmem:[#allocation11 + $0x108] sm:$0xff]
    %v1989 = vld [vmem:[#allocation11 + $0x110] sm:$0xff]
    %v1990 = vld [vmem:[#allocation11 + $0x118] sm:$0xff]
    %v1991 = vld [vmem:[#allocation11 + $0x120] sm:$0xff]
    %v1992 = vld [vmem:[#allocation11 + $0x128] sm:$0xff]
    %v1993 = vld [vmem:[#allocation11 + $0x130] sm:$0xff]
    %v1994 = vld [vmem:[#allocation11 + $0x138] sm:$0xff]
    %v1995 = vld [vmem:[#allocation11 + $0x140] sm:$0xff]
    %v1996 = vld [vmem:[#allocation11 + $0x148] sm:$0xff]
    %v1997 = vld [vmem:[#allocation11 + $0x150] sm:$0xff]
    %v1998 = vld [vmem:[#allocation11 + $0x158] sm:$0xff]
    %v1999 = vld [vmem:[#allocation11 + $0x160] sm:$0xff]
    %v2000 = vld [vmem:[#allocation11 + $0x168] sm:$0xff]
    %v2001 = vld [vmem:[#allocation11 + $0x170] sm:$0xff]
    %v2002 = vld [vmem:[#allocation11 + $0x178] sm:$0xff]
    %v2003 = vld [vmem:[#allocation11 + $0x180] sm:$0xff]
    %v2004 = vld [vmem:[#allocation11 + $0x188] sm:$0xff]
    %v2005 = vld [vmem:[#allocation11 + $0x190] sm:$0xff]
    %v2006 = vld [vmem:[#allocation11 + $0x198] sm:$0xff]
    %v2007 = vld [vmem:[#allocation11 + $0x1a0] sm:$0xff]
    %v2008 = vld [vmem:[#allocation11 + $0x1a8] sm:$0xff]
    %v2009 = vld [vmem:[#allocation11 + $0x1b0] sm:$0xff]
    %v2010 = vld [vmem:[#allocation11 + $0x1b8] sm:$0xff]
    %v2011 = vld [vmem:[#allocation11 + $0x1c0] sm:$0xff]
    %v2012 = vld [vmem:[#allocation11 + $0x1c8] sm:$0xff]
    %v2013 = vld [vmem:[#allocation11 + $0x1d0] sm:$0xff]
    %v2014 = vld [vmem:[#allocation11 + $0x1d8] sm:$0xff]
    %v2015 = vld [vmem:[#allocation11 + $0x1e0] sm:$0xff]
    %v2016 = vld [vmem:[#allocation11 + $0x1e8] sm:$0xff]
    %v2017 = vld [vmem:[#allocation11 + $0x1f0] sm:$0xff]
    %v2018 = vld [vmem:[#allocation11 + $0x1f8] sm:$0xff]
    %v2019 = vld [vmem:[#allocation11 + $0x200] sm:$0xff]
    %v2020 = vld [vmem:[#allocation11 + $0x208] sm:$0xff]
    %v2021 = vld [vmem:[#allocation11 + $0x210] sm:$0xff]
    %v2022 = vld [vmem:[#allocation11 + $0x218] sm:$0xff]
    %v2023 = vld [vmem:[#allocation11 + $0x220] sm:$0xff]
    %v2024 = vld [vmem:[#allocation11 + $0x228] sm:$0xff]
    %v2025 = vld [vmem:[#allocation11 + $0x230] sm:$0xff]
    %v2026 = vld [vmem:[#allocation11 + $0x238] sm:$0xff]
    %v2027 = vld [vmem:[#allocation11 + $0x240] sm:$0xff]
    %v2028 = vld [vmem:[#allocation11 + $0x248] sm:$0xff]
    %v2029 = vld [vmem:[#allocation11 + $0x250] sm:$0xff]
    %v2030 = vld [vmem:[#allocation11 + $0x258] sm:$0xff]
    %v2031 = vld [vmem:[#allocation11 + $0x260] sm:$0xff]
    %v2032 = vld [vmem:[#allocation11 + $0x268] sm:$0xff]
    %v2033 = vld [vmem:[#allocation11 + $0x270] sm:$0xff]
    %v2034 = vld [vmem:[#allocation11 + $0x278] sm:$0xff]
    %v2035 = vld [vmem:[#allocation11 + $0x280] sm:$0xff]
    %v2036 = vld [vmem:[#allocation11 + $0x288] sm:$0xff]
    %v2037 = vld [vmem:[#allocation11 + $0x290] sm:$0xff]
    %v2038 = vld [vmem:[#allocation11 + $0x298] sm:$0xff]
    %v2039 = vld [vmem:[#allocation11 + $0x2a0] sm:$0xff]
    %v2040 = vld [vmem:[#allocation11 + $0x2a8] sm:$0xff]
    %v2041 = vld [vmem:[#allocation11 + $0x2b0] sm:$0xff]
    %v2042 = vld [vmem:[#allocation11 + $0x2b8] sm:$0xff]
    %v2043 = vld [vmem:[#allocation11 + $0x2c0] sm:$0xff]
    %v2044 = vld [vmem:[#allocation11 + $0x2c8] sm:$0xff]
    %v2045 = vld [vmem:[#allocation11 + $0x2d0] sm:$0xff]
    %v2046 = vld [vmem:[#allocation11 + $0x2d8] sm:$0xff]
    %v2047 = vld [vmem:[#allocation11 + $0x2e0] sm:$0xff]
    %v2048 = vld [vmem:[#allocation11 + $0x2e8] sm:$0xff]
    %v2049 = vld [vmem:[#allocation11 + $0x2f0] sm:$0xff]
    %v2050 = vld [vmem:[#allocation11 + $0x2f8] sm:$0xff]
    %v2051 = vld [vmem:[#allocation11 + $0x300] sm:$0xff]
    %v2052 = vld [vmem:[#allocation11 + $0x308] sm:$0xff]
    %v2053 = vld [vmem:[#allocation11 + $0x310] sm:$0xff]
    %v2054 = vld [vmem:[#allocation11 + $0x318] sm:$0xff]
    %v2055 = vld [vmem:[#allocation11 + $0x320] sm:$0xff]
    %v2056 = vld [vmem:[#allocation11 + $0x328] sm:$0xff]
    %v2057 = vld [vmem:[#allocation11 + $0x330] sm:$0xff]
    %v2058 = vld [vmem:[#allocation11 + $0x338] sm:$0xff]
    %v2059 = vld [vmem:[#allocation11 + $0x340] sm:$0xff]
    %v2060 = vld [vmem:[#allocation11 + $0x348] sm:$0xff]
    %v2061 = vld [vmem:[#allocation11 + $0x350] sm:$0xff]
    %v2062 = vld [vmem:[#allocation11 + $0x358] sm:$0xff]
    %v2063 = vld [vmem:[#allocation11 + $0x360] sm:$0xff]
    %v2064 = vld [vmem:[#allocation11 + $0x368] sm:$0xff]
    %v2065 = vld [vmem:[#allocation11 + $0x370] sm:$0xff]
    %v2066 = vld [vmem:[#allocation11 + $0x378] sm:$0xff]
    %v2067 = vld [vmem:[#allocation11 + $0x380] sm:$0xff]
    %v2068 = vld [vmem:[#allocation11 + $0x388] sm:$0xff]
    %v2069 = vld [vmem:[#allocation11 + $0x390] sm:$0xff]
    %v2070 = vld [vmem:[#allocation11 + $0x398] sm:$0xff]
    %v2071 = vld [vmem:[#allocation11 + $0x3a0] sm:$0xff]
    %v2072 = vld [vmem:[#allocation11 + $0x3a8] sm:$0xff]
    %v2073 = vld [vmem:[#allocation11 + $0x3b0] sm:$0xff]
    %v2074 = vld [vmem:[#allocation11 + $0x3b8] sm:$0xff]
    %v2075 = vld [vmem:[#allocation11 + $0x3c0] sm:$0xff]
    %v2076 = vld [vmem:[#allocation11 + $0x3c8] sm:$0xff]
    %v2077 = vld [vmem:[#allocation11 + $0x3d0] sm:$0xff]
    %v2078 = vld [vmem:[#allocation11 + $0x3d8] sm:$0xff]
    %v2079 = vld [vmem:[#allocation11 + $0x3e0] sm:$0xff]
    %v2080 = vld [vmem:[#allocation11 + $0x3e8] sm:$0xff]
    %v2081 = vld [vmem:[#allocation11 + $0x3f0] sm:$0xff]
    %v2082 = vld [vmem:[#allocation11 + $0x3f8] sm:$0xff]
    %2083 = vst [vmem:[#allocation4] sm:$0xff] 0.0
    %2084 = vst [vmem:[#allocation4 + $0x8] sm:$0xff] 0.0
    %2085 = vst [vmem:[#allocation4 + $0x10] sm:$0xff] 0.0
    %2086 = vst [vmem:[#allocation4 + $0x18] sm:$0xff] 0.0
    %v2087 = vld [vmem:[#allocation4] sm:$0xff]
    %v2088 = vld [vmem:[#allocation4 + $0x8] sm:$0xff]
    %v2089 = vld [vmem:[#allocation4 + $0x10] sm:$0xff]
    %v2090 = vld [vmem:[#allocation4 + $0x18] sm:$0xff]
    %v2091 = vpack.c.bf16 %v2089, %v2087
    %v2092 = vpack.c.bf16 %v2090, %v2088
    %v2221 = vunpack.c.l.b16 %v1955
    %v2222 = vunpack.c.h.b16 %v1955
    %v2223 = vunpack.c.l.b16 %v1956
    %v2224 = vunpack.c.h.b16 %v1956
    %v2225 = vunpack.c.l.b16 %v1957
    %v2226 = vunpack.c.h.b16 %v1957
    %v2227 = vunpack.c.l.b16 %v1958
    %v2228 = vunpack.c.h.b16 %v1958
    %v2229 = vunpack.c.l.b16 %v1959
    %v2230 = vunpack.c.h.b16 %v1959
    %v2231 = vunpack.c.l.b16 %v1960
    %v2232 = vunpack.c.h.b16 %v1960
    %v2233 = vunpack.c.l.b16 %v1961
    %v2234 = vunpack.c.h.b16 %v1961
    %v2235 = vunpack.c.l.b16 %v1962
    %v2236 = vunpack.c.h.b16 %v1962
    %v2237 = vunpack.c.l.b16 %v1963
    %v2238 = vunpack.c.h.b16 %v1963
    %v2239 = vunpack.c.l.b16 %v1964
    %v2240 = vunpack.c.h.b16 %v1964
    %v2241 = vunpack.c.l.b16 %v1965
    %v2242 = vunpack.c.h.b16 %v1965
    %v2243 = vunpack.c.l.b16 %v1966
    %v2244 = vunpack.c.h.b16 %v1966
    %v2245 = vunpack.c.l.b16 %v1967
    %v2246 = vunpack.c.h.b16 %v1967
    %v2247 = vunpack.c.l.b16 %v1968
    %v2248 = vunpack.c.h.b16 %v1968
    %v2249 = vunpack.c.l.b16 %v1969
    %v2250 = vunpack.c.h.b16 %v1969
    %v2251 = vunpack.c.l.b16 %v1970
    %v2252 = vunpack.c.h.b16 %v1970
    %v2253 = vunpack.c.l.b16 %v1971
    %v2254 = vunpack.c.h.b16 %v1971
    %v2255 = vunpack.c.l.b16 %v1972
    %v2256 = vunpack.c.h.b16 %v1972
    %v2257 = vunpack.c.l.b16 %v1973
    %v2258 = vunpack.c.h.b16 %v1973
    %v2259 = vunpack.c.l.b16 %v1974
    %v2260 = vunpack.c.h.b16 %v1974
    %v2261 = vunpack.c.l.b16 %v1975
    %v2262 = vunpack.c.h.b16 %v1975
    %v2263 = vunpack.c.l.b16 %v1976
    %v2264 = vunpack.c.h.b16 %v1976
    %v2265 = vunpack.c.l.b16 %v1977
    %v2266 = vunpack.c.h.b16 %v1977
    %v2267 = vunpack.c.l.b16 %v1978
    %v2268 = vunpack.c.h.b16 %v1978
    %v2269 = vunpack.c.l.b16 %v1979
    %v2270 = vunpack.c.h.b16 %v1979
    %v2271 = vunpack.c.l.b16 %v1980
    %v2272 = vunpack.c.h.b16 %v1980
    %v2273 = vunpack.c.l.b16 %v1981
    %v2274 = vunpack.c.h.b16 %v1981
    %v2275 = vunpack.c.l.b16 %v1982
    %v2276 = vunpack.c.h.b16 %v1982
    %v2277 = vunpack.c.l.b16 %v1983
    %v2278 = vunpack.c.h.b16 %v1983
    %v2279 = vunpack.c.l.b16 %v1984
    %v2280 = vunpack.c.h.b16 %v1984
    %v2281 = vunpack.c.l.b16 %v1985
    %v2282 = vunpack.c.h.b16 %v1985
    %v2283 = vunpack.c.l.b16 %v1986
    %v2284 = vunpack.c.h.b16 %v1986
    %v2285 = vunpack.c.l.b16 %v1987
    %v2286 = vunpack.c.h.b16 %v1987
    %v2287 = vunpack.c.l.b16 %v1988
    %v2288 = vunpack.c.h.b16 %v1988
    %v2289 = vunpack.c.l.b16 %v1989
    %v2290 = vunpack.c.h.b16 %v1989
    %v2291 = vunpack.c.l.b16 %v1990
    %v2292 = vunpack.c.h.b16 %v1990
    %v2293 = vunpack.c.l.b16 %v1991
    %v2294 = vunpack.c.h.b16 %v1991
    %v2295 = vunpack.c.l.b16 %v1992
    %v2296 = vunpack.c.h.b16 %v1992
    %v2297 = vunpack.c.l.b16 %v1993
    %v2298 = vunpack.c.h.b16 %v1993
    %v2299 = vunpack.c.l.b16 %v1994
    %v2300 = vunpack.c.h.b16 %v1994
    %v2301 = vunpack.c.l.b16 %v1995
    %v2302 = vunpack.c.h.b16 %v1995
    %v2303 = vunpack.c.l.b16 %v1996
    %v2304 = vunpack.c.h.b16 %v1996
    %v2305 = vunpack.c.l.b16 %v1997
    %v2306 = vunpack.c.h.b16 %v1997
    %v2307 = vunpack.c.l.b16 %v1998
    %v2308 = vunpack.c.h.b16 %v1998
    %v2309 = vunpack.c.l.b16 %v1999
    %v2310 = vunpack.c.h.b16 %v1999
    %v2311 = vunpack.c.l.b16 %v2000
    %v2312 = vunpack.c.h.b16 %v2000
    %v2313 = vunpack.c.l.b16 %v2001
    %v2314 = vunpack.c.h.b16 %v2001
    %v2315 = vunpack.c.l.b16 %v2002
    %v2316 = vunpack.c.h.b16 %v2002
    %v2317 = vunpack.c.l.b16 %v2003
    %v2318 = vunpack.c.h.b16 %v2003
    %v2319 = vunpack.c.l.b16 %v2004
    %v2320 = vunpack.c.h.b16 %v2004
    %v2321 = vunpack.c.l.b16 %v2005
    %v2322 = vunpack.c.h.b16 %v2005
    %v2323 = vunpack.c.l.b16 %v2006
    %v2324 = vunpack.c.h.b16 %v2006
    %v2325 = vunpack.c.l.b16 %v2007
    %v2326 = vunpack.c.h.b16 %v2007
    %v2327 = vunpack.c.l.b16 %v2008
    %v2328 = vunpack.c.h.b16 %v2008
    %v2329 = vunpack.c.l.b16 %v2009
    %v2330 = vunpack.c.h.b16 %v2009
    %v2331 = vunpack.c.l.b16 %v2010
    %v2332 = vunpack.c.h.b16 %v2010
    %v2333 = vunpack.c.l.b16 %v2011
    %v2334 = vunpack.c.h.b16 %v2011
    %v2335 = vunpack.c.l.b16 %v2012
    %v2336 = vunpack.c.h.b16 %v2012
    %v2337 = vunpack.c.l.b16 %v2013
    %v2338 = vunpack.c.h.b16 %v2013
    %v2339 = vunpack.c.l.b16 %v2014
    %v2340 = vunpack.c.h.b16 %v2014
    %v2341 = vunpack.c.l.b16 %v2015
    %v2342 = vunpack.c.h.b16 %v2015
    %v2343 = vunpack.c.l.b16 %v2016
    %v2344 = vunpack.c.h.b16 %v2016
    %v2345 = vunpack.c.l.b16 %v2017
    %v2346 = vunpack.c.h.b16 %v2017
    %v2347 = vunpack.c.l.b16 %v2018
    %v2348 = vunpack.c.h.b16 %v2018
    %v2349 = vunpack.c.l.b16 %v2019
    %v2350 = vunpack.c.h.b16 %v2019
    %v2351 = vunpack.c.l.b16 %v2020
    %v2352 = vunpack.c.h.b16 %v2020
    %v2353 = vunpack.c.l.b16 %v2021
    %v2354 = vunpack.c.h.b16 %v2021
    %v2355 = vunpack.c.l.b16 %v2022
    %v2356 = vunpack.c.h.b16 %v2022
    %v2357 = vunpack.c.l.b16 %v2023
    %v2358 = vunpack.c.h.b16 %v2023
    %v2359 = vunpack.c.l.b16 %v2024
    %v2360 = vunpack.c.h.b16 %v2024
    %v2361 = vunpack.c.l.b16 %v2025
    %v2362 = vunpack.c.h.b16 %v2025
    %v2363 = vunpack.c.l.b16 %v2026
    %v2364 = vunpack.c.h.b16 %v2026
    %v2365 = vunpack.c.l.b16 %v2027
    %v2366 = vunpack.c.h.b16 %v2027
    %v2367 = vunpack.c.l.b16 %v2028
    %v2368 = vunpack.c.h.b16 %v2028
    %v2369 = vunpack.c.l.b16 %v2029
    %v2370 = vunpack.c.h.b16 %v2029
    %v2371 = vunpack.c.l.b16 %v2030
    %v2372 = vunpack.c.h.b16 %v2030
    %v2373 = vunpack.c.l.b16 %v2031
    %v2374 = vunpack.c.h.b16 %v2031
    %v2375 = vunpack.c.l.b16 %v2032
    %v2376 = vunpack.c.h.b16 %v2032
    %v2377 = vunpack.c.l.b16 %v2033
    %v2378 = vunpack.c.h.b16 %v2033
    %v2379 = vunpack.c.l.b16 %v2034
    %v2380 = vunpack.c.h.b16 %v2034
    %v2381 = vunpack.c.l.b16 %v2035
    %v2382 = vunpack.c.h.b16 %v2035
    %v2383 = vunpack.c.l.b16 %v2036
    %v2384 = vunpack.c.h.b16 %v2036
    %v2385 = vunpack.c.l.b16 %v2037
    %v2386 = vunpack.c.h.b16 %v2037
    %v2387 = vunpack.c.l.b16 %v2038
    %v2388 = vunpack.c.h.b16 %v2038
    %v2389 = vunpack.c.l.b16 %v2039
    %v2390 = vunpack.c.h.b16 %v2039
    %v2391 = vunpack.c.l.b16 %v2040
    %v2392 = vunpack.c.h.b16 %v2040
    %v2393 = vunpack.c.l.b16 %v2041
    %v2394 = vunpack.c.h.b16 %v2041
    %v2395 = vunpack.c.l.b16 %v2042
    %v2396 = vunpack.c.h.b16 %v2042
    %v2397 = vunpack.c.l.b16 %v2043
    %v2398 = vunpack.c.h.b16 %v2043
    %v2399 = vunpack.c.l.b16 %v2044
    %v2400 = vunpack.c.h.b16 %v2044
    %v2401 = vunpack.c.l.b16 %v2045
    %v2402 = vunpack.c.h.b16 %v2045
    %v2403 = vunpack.c.l.b16 %v2046
    %v2404 = vunpack.c.h.b16 %v2046
    %v2405 = vunpack.c.l.b16 %v2047
    %v2406 = vunpack.c.h.b16 %v2047
    %v2407 = vunpack.c.l.b16 %v2048
    %v2408 = vunpack.c.h.b16 %v2048
    %v2409 = vunpack.c.l.b16 %v2049
    %v2410 = vunpack.c.h.b16 %v2049
    %v2411 = vunpack.c.l.b16 %v2050
    %v2412 = vunpack.c.h.b16 %v2050
    %v2413 = vunpack.c.l.b16 %v2051
    %v2414 = vunpack.c.h.b16 %v2051
    %v2415 = vunpack.c.l.b16 %v2052
    %v2416 = vunpack.c.h.b16 %v2052
    %v2417 = vunpack.c.l.b16 %v2053
    %v2418 = vunpack.c.h.b16 %v2053
    %v2419 = vunpack.c.l.b16 %v2054
    %v2420 = vunpack.c.h.b16 %v2054
    %v2421 = vunpack.c.l.b16 %v2055
    %v2422 = vunpack.c.h.b16 %v2055
    %v2423 = vunpack.c.l.b16 %v2056
    %v2424 = vunpack.c.h.b16 %v2056
    %v2425 = vunpack.c.l.b16 %v2057
    %v2426 = vunpack.c.h.b16 %v2057
    %v2427 = vunpack.c.l.b16 %v2058
    %v2428 = vunpack.c.h.b16 %v2058
    %v2429 = vunpack.c.l.b16 %v2059
    %v2430 = vunpack.c.h.b16 %v2059
    %v2431 = vunpack.c.l.b16 %v2060
    %v2432 = vunpack.c.h.b16 %v2060
    %v2433 = vunpack.c.l.b16 %v2061
    %v2434 = vunpack.c.h.b16 %v2061
    %v2435 = vunpack.c.l.b16 %v2062
    %v2436 = vunpack.c.h.b16 %v2062
    %v2437 = vunpack.c.l.b16 %v2063
    %v2438 = vunpack.c.h.b16 %v2063
    %v2439 = vunpack.c.l.b16 %v2064
    %v2440 = vunpack.c.h.b16 %v2064
    %v2441 = vunpack.c.l.b16 %v2065
    %v2442 = vunpack.c.h.b16 %v2065
    %v2443 = vunpack.c.l.b16 %v2066
    %v2444 = vunpack.c.h.b16 %v2066
    %v2445 = vunpack.c.l.b16 %v2067
    %v2446 = vunpack.c.h.b16 %v2067
    %v2447 = vunpack.c.l.b16 %v2068
    %v2448 = vunpack.c.h.b16 %v2068
    %v2449 = vunpack.c.l.b16 %v2069
    %v2450 = vunpack.c.h.b16 %v2069
    %v2451 = vunpack.c.l.b16 %v2070
    %v2452 = vunpack.c.h.b16 %v2070
    %v2453 = vunpack.c.l.b16 %v2071
    %v2454 = vunpack.c.h.b16 %v2071
    %v2455 = vunpack.c.l.b16 %v2072
    %v2456 = vunpack.c.h.b16 %v2072
    %v2457 = vunpack.c.l.b16 %v2073
    %v2458 = vunpack.c.h.b16 %v2073
    %v2459 = vunpack.c.l.b16 %v2074
    %v2460 = vunpack.c.h.b16 %v2074
    %v2461 = vunpack.c.l.b16 %v2075
    %v2462 = vunpack.c.h.b16 %v2075
    %v2463 = vunpack.c.l.b16 %v2076
    %v2464 = vunpack.c.h.b16 %v2076
    %v2465 = vunpack.c.l.b16 %v2077
    %v2466 = vunpack.c.h.b16 %v2077
    %v2467 = vunpack.c.l.b16 %v2078
    %v2468 = vunpack.c.h.b16 %v2078
    %v2469 = vunpack.c.l.b16 %v2079
    %v2470 = vunpack.c.h.b16 %v2079
    %v2471 = vunpack.c.l.b16 %v2080
    %v2472 = vunpack.c.h.b16 %v2080
    %v2473 = vunpack.c.l.b16 %v2081
    %v2474 = vunpack.c.h.b16 %v2081
    %v2475 = vunpack.c.l.b16 %v2082
    %v2476 = vunpack.c.h.b16 %v2082
    %v2477 = vpack.c.b16 %v2229, %v2221
    %v2478 = vpack.c.b16 %v2230, %v2222
    %v2479 = vpack.c.b16 %v2231, %v2223
    %v2480 = vpack.c.b16 %v2232, %v2224
    %v2481 = vpack.c.b16 %v2233, %v2225
    %v2482 = vpack.c.b16 %v2234, %v2226
    %v2483 = vpack.c.b16 %v2235, %v2227
    %v2484 = vpack.c.b16 %v2236, %v2228
    %v2485 = vpack.c.b16 %v2245, %v2237
    %v2486 = vpack.c.b16 %v2246, %v2238
    %v2487 = vpack.c.b16 %v2247, %v2239
    %v2488 = vpack.c.b16 %v2248, %v2240
    %v2489 = vpack.c.b16 %v2249, %v2241
    %v2490 = vpack.c.b16 %v2250, %v2242
    %v2491 = vpack.c.b16 %v2251, %v2243
    %v2492 = vpack.c.b16 %v2252, %v2244
    %v2493 = vpack.c.b16 %v2261, %v2253
    %v2494 = vpack.c.b16 %v2262, %v2254
    %v2495 = vpack.c.b16 %v2263, %v2255
    %v2496 = vpack.c.b16 %v2264, %v2256
    %v2497 = vpack.c.b16 %v2265, %v2257
    %v2498 = vpack.c.b16 %v2266, %v2258
    %v2499 = vpack.c.b16 %v2267, %v2259
    %v2500 = vpack.c.b16 %v2268, %v2260
    %v2501 = vpack.c.b16 %v2277, %v2269
    %v2502 = vpack.c.b16 %v2278, %v2270
    %v2503 = vpack.c.b16 %v2279, %v2271
    %v2504 = vpack.c.b16 %v2280, %v2272
    %v2505 = vpack.c.b16 %v2281, %v2273
    %v2506 = vpack.c.b16 %v2282, %v2274
    %v2507 = vpack.c.b16 %v2283, %v2275
    %v2508 = vpack.c.b16 %v2284, %v2276
    %v2509 = vpack.c.b16 %v2293, %v2285
    %v2510 = vpack.c.b16 %v2294, %v2286
    %v2511 = vpack.c.b16 %v2295, %v2287
    %v2512 = vpack.c.b16 %v2296, %v2288
    %v2513 = vpack.c.b16 %v2297, %v2289
    %v2514 = vpack.c.b16 %v2298, %v2290
    %v2515 = vpack.c.b16 %v2299, %v2291
    %v2516 = vpack.c.b16 %v2300, %v2292
    %v2517 = vpack.c.b16 %v2309, %v2301
    %v2518 = vpack.c.b16 %v2310, %v2302
    %v2519 = vpack.c.b16 %v2311, %v2303
    %v2520 = vpack.c.b16 %v2312, %v2304
    %v2521 = vpack.c.b16 %v2313, %v2305
    %v2522 = vpack.c.b16 %v2314, %v2306
    %v2523 = vpack.c.b16 %v2315, %v2307
    %v2524 = vpack.c.b16 %v2316, %v2308
    %v2525 = vpack.c.b16 %v2325, %v2317
    %v2526 = vpack.c.b16 %v2326, %v2318
    %v2527 = vpack.c.b16 %v2327, %v2319
    %v2528 = vpack.c.b16 %v2328, %v2320
    %v2529 = vpack.c.b16 %v2329, %v2321
    %v2530 = vpack.c.b16 %v2330, %v2322
    %v2531 = vpack.c.b16 %v2331, %v2323
    %v2532 = vpack.c.b16 %v2332, %v2324
    %v2533 = vpack.c.b16 %v2341, %v2333
    %v2534 = vpack.c.b16 %v2342, %v2334
    %v2535 = vpack.c.b16 %v2343, %v2335
    %v2536 = vpack.c.b16 %v2344, %v2336
    %v2537 = vpack.c.b16 %v2345, %v2337
    %v2538 = vpack.c.b16 %v2346, %v2338
    %v2539 = vpack.c.b16 %v2347, %v2339
    %v2540 = vpack.c.b16 %v2348, %v2340
    %v2541 = vpack.c.b16 %v2357, %v2349
    %v2542 = vpack.c.b16 %v2358, %v2350
    %v2543 = vpack.c.b16 %v2359, %v2351
    %v2544 = vpack.c.b16 %v2360, %v2352
    %v2545 = vpack.c.b16 %v2361, %v2353
    %v2546 = vpack.c.b16 %v2362, %v2354
    %v2547 = vpack.c.b16 %v2363, %v2355
    %v2548 = vpack.c.b16 %v2364, %v2356
    %v2549 = vpack.c.b16 %v2373, %v2365
    %v2550 = vpack.c.b16 %v2374, %v2366
    %v2551 = vpack.c.b16 %v2375, %v2367
    %v2552 = vpack.c.b16 %v2376, %v2368
    %v2553 = vpack.c.b16 %v2377, %v2369
    %v2554 = vpack.c.b16 %v2378, %v2370
    %v2555 = vpack.c.b16 %v2379, %v2371
    %v2556 = vpack.c.b16 %v2380, %v2372
    %v2557 = vpack.c.b16 %v2389, %v2381
    %v2558 = vpack.c.b16 %v2390, %v2382
    %v2559 = vpack.c.b16 %v2391, %v2383
    %v2560 = vpack.c.b16 %v2392, %v2384
    %v2561 = vpack.c.b16 %v2393, %v2385
    %v2562 = vpack.c.b16 %v2394, %v2386
    %v2563 = vpack.c.b16 %v2395, %v2387
    %v2564 = vpack.c.b16 %v2396, %v2388
    %v2565 = vpack.c.b16 %v2405, %v2397
    %v2566 = vpack.c.b16 %v2406, %v2398
    %v2567 = vpack.c.b16 %v2407, %v2399
    %v2568 = vpack.c.b16 %v2408, %v2400
    %v2569 = vpack.c.b16 %v2409, %v2401
    %v2570 = vpack.c.b16 %v2410, %v2402
    %v2571 = vpack.c.b16 %v2411, %v2403
    %v2572 = vpack.c.b16 %v2412, %v2404
    %v2573 = vpack.c.b16 %v2421, %v2413
    %v2574 = vpack.c.b16 %v2422, %v2414
    %v2575 = vpack.c.b16 %v2423, %v2415
    %v2576 = vpack.c.b16 %v2424, %v2416
    %v2577 = vpack.c.b16 %v2425, %v2417
    %v2578 = vpack.c.b16 %v2426, %v2418
    %v2579 = vpack.c.b16 %v2427, %v2419
    %v2580 = vpack.c.b16 %v2428, %v2420
    %v2581 = vpack.c.b16 %v2437, %v2429
    %v2582 = vpack.c.b16 %v2438, %v2430
    %v2583 = vpack.c.b16 %v2439, %v2431
    %v2584 = vpack.c.b16 %v2440, %v2432
    %v2585 = vpack.c.b16 %v2441, %v2433
    %v2586 = vpack.c.b16 %v2442, %v2434
    %v2587 = vpack.c.b16 %v2443, %v2435
    %v2588 = vpack.c.b16 %v2444, %v2436
    %v2589 = vpack.c.b16 %v2453, %v2445
    %v2590 = vpack.c.b16 %v2454, %v2446
    %v2591 = vpack.c.b16 %v2455, %v2447
    %v2592 = vpack.c.b16 %v2456, %v2448
    %v2593 = vpack.c.b16 %v2457, %v2449
    %v2594 = vpack.c.b16 %v2458, %v2450
    %v2595 = vpack.c.b16 %v2459, %v2451
    %v2596 = vpack.c.b16 %v2460, %v2452
    %v2597 = vpack.c.b16 %v2469, %v2461
    %v2598 = vpack.c.b16 %v2470, %v2462
    %v2599 = vpack.c.b16 %v2471, %v2463
    %v2600 = vpack.c.b16 %v2472, %v2464
    %v2601 = vpack.c.b16 %v2473, %v2465
    %v2602 = vpack.c.b16 %v2474, %v2466
    %v2603 = vpack.c.b16 %v2475, %v2467
    %v2604 = vpack.c.b16 %v2476, %v2468
    %2733 = vmatprep.subr.bf16.mxu0 %v2478
    %2734 = vmatpush1.bf16.msra.mxu0 %v2477
    %2735 = vmatprep.subr.bf16.mxu0 %v2486
    %2736 = vmatpush1.bf16.msra.mxu0 %v2485
    %2737 = vmatprep.subr.bf16.mxu0 %v2494
    %2738 = vmatpush1.bf16.msra.mxu0 %v2493
    %2739 = vmatprep.subr.bf16.mxu0 %v2502
    %2740 = vmatpush1.bf16.msra.mxu0 %v2501
    %2741 = vmatprep.subr.bf16.mxu0 %v2510
    %2742 = vmatpush1.bf16.msra.mxu0 %v2509
    %2743 = vmatprep.subr.bf16.mxu0 %v2518
    %2744 = vmatpush1.bf16.msra.mxu0 %v2517
    %2745 = vmatprep.subr.bf16.mxu0 %v2526
    %2746 = vmatpush1.bf16.msra.mxu0 %v2525
    %2747 = vmatprep.subr.bf16.mxu0 %v2534
    %2748 = vmatpush1.bf16.msra.mxu0 %v2533
    %2749 = vmatprep.subr.bf16.mxu0 %v2542
    %2750 = vmatpush1.bf16.msra.mxu0 %v2541
    %2751 = vmatprep.subr.bf16.mxu0 %v2550
    %2752 = vmatpush1.bf16.msra.mxu0 %v2549
    %2753 = vmatprep.subr.bf16.mxu0 %v2558
    %2754 = vmatpush1.bf16.msra.mxu0 %v2557
    %2755 = vmatprep.subr.bf16.mxu0 %v2566
    %2756 = vmatpush1.bf16.msra.mxu0 %v2565
    %2757 = vmatprep.subr.bf16.mxu0 %v2574
    %2758 = vmatpush1.bf16.msra.mxu0 %v2573
    %2759 = vmatprep.subr.bf16.mxu0 %v2582
    %2760 = vmatpush1.bf16.msra.mxu0 %v2581
    %2761 = vmatprep.subr.bf16.mxu0 %v2590
    %2762 = vmatpush1.bf16.msra.mxu0 %v2589
    %2763 = vmatprep.subr.bf16.mxu0 %v2598
    %2764 = vmatpush1.bf16.msra.mxu0 %v2597
    %2765 = vmatprep.mubr.bf16.mxu0 %v2092
    %2766 = vmatmul.mubr.bf16.gmra.mrb[0].mxu0 %v2091
    %v2767 = vpop.f32.mrb[0].mxu0
    %v2768 = vadd.f32 0.0, %v2767
    %v2769 = vpop.f32.mrb[0].mxu0
    %v2770 = vadd.f32 0.0, %v2769
    %v2771 = vpop.f32.mrb[0].mxu0
    %v2772 = vadd.f32 0.0, %v2771
    %v2773 = vpop.f32.mrb[0].mxu0
    %v2774 = vadd.f32 0.0, %v2773
    %2775 = vdwg.mxu0
    %2776 = vmatprep.subr.bf16.mxu0 %v2480
    %2777 = vmatpush1.bf16.msra.mxu0 %v2479
    %2778 = vmatprep.subr.bf16.mxu0 %v2488
    %2779 = vmatpush1.bf16.msra.mxu0 %v2487
    %2780 = vmatprep.subr.bf16.mxu0 %v2496
    %2781 = vmatpush1.bf16.msra.mxu0 %v2495
    %2782 = vmatprep.subr.bf16.mxu0 %v2504
    %2783 = vmatpush1.bf16.msra.mxu0 %v2503
    %2784 = vmatprep.subr.bf16.mxu0 %v2512
    %2785 = vmatpush1.bf16.msra.mxu0 %v2511
    %2786 = vmatprep.subr.bf16.mxu0 %v2520
    %2787 = vmatpush1.bf16.msra.mxu0 %v2519
    %2788 = vmatprep.subr.bf16.mxu0 %v2528
    %2789 = vmatpush1.bf16.msra.mxu0 %v2527
    %2790 = vmatprep.subr.bf16.mxu0 %v2536
    %2791 = vmatpush1.bf16.msra.mxu0 %v2535
    %2792 = vmatprep.subr.bf16.mxu0 %v2544
    %2793 = vmatpush1.bf16.msra.mxu0 %v2543
    %2794 = vmatprep.subr.bf16.mxu0 %v2552
    %2795 = vmatpush1.bf16.msra.mxu0 %v2551
    %2796 = vmatprep.subr.bf16.mxu0 %v2560
    %2797 = vmatpush1.bf16.msra.mxu0 %v2559
    %2798 = vmatprep.subr.bf16.mxu0 %v2568
    %2799 = vmatpush1.bf16.msra.mxu0 %v2567
    %2800 = vmatprep.subr.bf16.mxu0 %v2576
    %2801 = vmatpush1.bf16.msra.mxu0 %v2575
    %2802 = vmatprep.subr.bf16.mxu0 %v2584
    %2803 = vmatpush1.bf16.msra.mxu0 %v2583
    %2804 = vmatprep.subr.bf16.mxu0 %v2592
    %2805 = vmatpush1.bf16.msra.mxu0 %v2591
    %2806 = vmatprep.subr.bf16.mxu0 %v2600
    %2807 = vmatpush1.bf16.msra.mxu0 %v2599
    %2808 = vmatprep.mubr.bf16.mxu0 %v2092
    %2809 = vmatmul.mubr.bf16.gmra.mrb[0].mxu0 %v2091
    %v2810 = vpop.f32.mrb[0].mxu0
    %v2811 = vadd.f32 0.0, %v2810
    %v2812 = vpop.f32.mrb[0].mxu0
    %v2813 = vadd.f32 0.0, %v2812
    %v2814 = vpop.f32.mrb[0].mxu0
    %v2815 = vadd.f32 0.0, %v2814
    %v2816 = vpop.f32.mrb[0].mxu0
    %v2817 = vadd.f32 0.0, %v2816
    %2818 = vdwg.mxu0
    %2819 = vmatprep.subr.bf16.mxu0 %v2482
    %2820 = vmatpush1.bf16.msra.mxu0 %v2481
    %2821 = vmatprep.subr.bf16.mxu0 %v2490
    %2822 = vmatpush1.bf16.msra.mxu0 %v2489
    %2823 = vmatprep.subr.bf16.mxu0 %v2498
    %2824 = vmatpush1.bf16.msra.mxu0 %v2497
    %2825 = vmatprep.subr.bf16.mxu0 %v2506
    %2826 = vmatpush1.bf16.msra.mxu0 %v2505
    %2827 = vmatprep.subr.bf16.mxu0 %v2514
    %2828 = vmatpush1.bf16.msra.mxu0 %v2513
    %2829 = vmatprep.subr.bf16.mxu0 %v2522
    %2830 = vmatpush1.bf16.msra.mxu0 %v2521
    %2831 = vmatprep.subr.bf16.mxu0 %v2530
    %2832 = vmatpush1.bf16.msra.mxu0 %v2529
    %2833 = vmatprep.subr.bf16.mxu0 %v2538
    %2834 = vmatpush1.bf16.msra.mxu0 %v2537
    %2835 = vmatprep.subr.bf16.mxu0 %v2546
    %2836 = vmatpush1.bf16.msra.mxu0 %v2545
    %2837 = vmatprep.subr.bf16.mxu0 %v2554
    %2838 = vmatpush1.bf16.msra.mxu0 %v2553
    %2839 = vmatprep.subr.bf16.mxu0 %v2562
    %2840 = vmatpush1.bf16.msra.mxu0 %v2561
    %2841 = vmatprep.subr.bf16.mxu0 %v2570
    %2842 = vmatpush1.bf16.msra.mxu0 %v2569
    %2843 = vmatprep.subr.bf16.mxu0 %v2578
    %2844 = vmatpush1.bf16.msra.mxu0 %v2577
    %2845 = vmatprep.subr.bf16.mxu0 %v2586
    %2846 = vmatpush1.bf16.msra.mxu0 %v2585
    %2847 = vmatprep.subr.bf16.mxu0 %v2594
    %2848 = vmatpush1.bf16.msra.mxu0 %v2593
    %2849 = vmatprep.subr.bf16.mxu0 %v2602
    %2850 = vmatpush1.bf16.msra.mxu0 %v2601
    %2851 = vmatprep.mubr.bf16.mxu0 %v2092
    %2852 = vmatmul.mubr.bf16.gmra.mrb[0].mxu0 %v2091
    %v2853 = vpop.f32.mrb[0].mxu0
    %v2854 = vadd.f32 0.0, %v2853
    %v2855 = vpop.f32.mrb[0].mxu0
    %v2856 = vadd.f32 0.0, %v2855
    %v2857 = vpop.f32.mrb[0].mxu0
    %v2858 = vadd.f32 0.0, %v2857
    %v2859 = vpop.f32.mrb[0].mxu0
    %v2860 = vadd.f32 0.0, %v2859
    %2861 = vdwg.mxu0
    %2862 = vmatprep.subr.bf16.mxu0 %v2484
    %2863 = vmatpush1.bf16.msra.mxu0 %v2483
    %2864 = vmatprep.subr.bf16.mxu0 %v2492
    %2865 = vmatpush1.bf16.msra.mxu0 %v2491
    %2866 = vmatprep.subr.bf16.mxu0 %v2500
    %2867 = vmatpush1.bf16.msra.mxu0 %v2499
    %2868 = vmatprep.subr.bf16.mxu0 %v2508
    %2869 = vmatpush1.bf16.msra.mxu0 %v2507
    %2870 = vmatprep.subr.bf16.mxu0 %v2516
    %2871 = vmatpush1.bf16.msra.mxu0 %v2515
    %2872 = vmatprep.subr.bf16.mxu0 %v2524
    %2873 = vmatpush1.bf16.msra.mxu0 %v2523
    %2874 = vmatprep.subr.bf16.mxu0 %v2532
    %2875 = vmatpush1.bf16.msra.mxu0 %v2531
    %2876 = vmatprep.subr.bf16.mxu0 %v2540
    %2877 = vmatpush1.bf16.msra.mxu0 %v2539
    %2878 = vmatprep.subr.bf16.mxu0 %v2548
    %2879 = vmatpush1.bf16.msra.mxu0 %v2547
    %2880 = vmatprep.subr.bf16.mxu0 %v2556
    %2881 = vmatpush1.bf16.msra.mxu0 %v2555
    %2882 = vmatprep.subr.bf16.mxu0 %v2564
    %2883 = vmatpush1.bf16.msra.mxu0 %v2563
    %2884 = vmatprep.subr.bf16.mxu0 %v2572
    %2885 = vmatpush1.bf16.msra.mxu0 %v2571
    %2886 = vmatprep.subr.bf16.mxu0 %v2580
    %2887 = vmatpush1.bf16.msra.mxu0 %v2579
    %2888 = vmatprep.subr.bf16.mxu0 %v2588
    %2889 = vmatpush1.bf16.msra.mxu0 %v2587
    %2890 = vmatprep.subr.bf16.mxu0 %v2596
    %2891 = vmatpush1.bf16.msra.mxu0 %v2595
    %2892 = vmatprep.subr.bf16.mxu0 %v2604
    %2893 = vmatpush1.bf16.msra.mxu0 %v2603
    %2894 = vmatprep.mubr.bf16.mxu0 %v2092
    %2895 = vmatmul.mubr.bf16.gmra.mrb[0].mxu0 %v2091
    %v2896 = vpop.f32.mrb[0].mxu0
    %v2897 = vadd.f32 0.0, %v2896
    %v2898 = vpop.f32.mrb[0].mxu0
    %v2899 = vadd.f32 0.0, %v2898
    %v2900 = vpop.f32.mrb[0].mxu0
    %v2901 = vadd.f32 0.0, %v2900
    %v2902 = vpop.f32.mrb[0].mxu0
    %v2903 = vadd.f32 0.0, %v2902
    %2904 = vdwg.mxu0
    %v2905 = vadd.f32 %v1738, %v2768
    %v2906 = vadd.f32 %v1740, %v2770
    %v2907 = vadd.f32 %v1801, %v2811
    %v2908 = vadd.f32 %v1803, %v2813
    %v2909 = vadd.f32 %v1742, %v2772
    %v2910 = vadd.f32 %v1744, %v2774
    %v2911 = vadd.f32 %v1805, %v2815
    %v2912 = vadd.f32 %v1807, %v2817
    %v2913 = vadd.f32 %v1884, %v2854
    %v2914 = vadd.f32 %v1886, %v2856
    %v2915 = vadd.f32 %v1947, %v2897
    %v2916 = vadd.f32 %v1949, %v2899
    %v2917 = vadd.f32 %v1888, %v2858
    %v2918 = vadd.f32 %v1890, %v2860
    %v2919 = vadd.f32 %v1951, %v2901
    %v2920 = vadd.f32 %v1953, %v2903
    %v2921 = vmul.f32 %v2905, 0.5
    %v2922 = vmul.f32 %v2909, 0.5
    %v2923 = vtanh.pop %v2921
    %v2924 = vtanh.pop %v2922
    %v2925 = vadd.f32 %v2923, 1.0
    %v2926 = vadd.f32 %v2924, 1.0
    %v2927 = vmul.f32 %v2925, 0.5
    %v2928 = vmul.f32 %v2926, 0.5
    %v2929 = vmul.f32 %v2906, 0.5
    %v2930 = vmul.f32 %v2910, 0.5
    %v2931 = vtanh.pop %v2929
    %v2932 = vtanh.pop %v2930
    %v2933 = vadd.f32 %v2931, 1.0
    %v2934 = vadd.f32 %v2932, 1.0
    %v2935 = vmul.f32 %v2933, 0.5
    %v2936 = vmul.f32 %v2934, 0.5
    %v2937 = vtanh.pop %v2907
    %v2938 = vtanh.pop %v2911
    %v2939 = vmul.f32 %v2908, 0.5
    %v2940 = vmul.f32 %v2912, 0.5
    %v2941 = vtanh.pop %v2939
    %v2942 = vtanh.pop %v2940
    %v2943 = vadd.f32 %v2941, 1.0
    %v2944 = vadd.f32 %v2942, 1.0
    %v2945 = vmul.f32 %v2943, 0.5
    %v2946 = vmul.f32 %v2944, 0.5
    %v2947 = vmul.f32 %v2935, 0.0
    %v2948 = vmul.f32 %v2936, 0.0
    %v2949 = vmul.f32 %v2927, %v2937
    %v2950 = vmul.f32 %v2928, %v2938
    %v2951 = vadd.f32 %v2947, %v2949
    %v2952 = vadd.f32 %v2948, %v2950
    %v2953 = vtanh.pop %v2951
    %v2954 = vtanh.pop %v2952
    %v2955 = vmul.f32 %v2945, %v2953
    %v2956 = vmul.f32 %v2946, %v2954
    %v2957 = vmul.f32 %v2913, 0.5
    %v2958 = vmul.f32 %v2917, 0.5
    %v2959 = vtanh.pop %v2957
    %v2960 = vtanh.pop %v2958
    %v2961 = vadd.f32 %v2959, 1.0
    %v2962 = vadd.f32 %v2960, 1.0
    %v2963 = vmul.f32 %v2961, 0.5
    %v2964 = vmul.f32 %v2962, 0.5
    %v2965 = vmul.f32 %v2914, 0.5
    %v2966 = vmul.f32 %v2918, 0.5
    %v2967 = vtanh.pop %v2965
    %v2968 = vtanh.pop %v2966
    %v2969 = vadd.f32 %v2967, 1.0
    %v2970 = vadd.f32 %v2968, 1.0
    %v2971 = vmul.f32 %v2969, 0.5
    %v2972 = vmul.f32 %v2970, 0.5
    %v2973 = vtanh.pop %v2915
    %v2974 = vtanh.pop %v2919
    %v2975 = vmul.f32 %v2916, 0.5
    %v2976 = vmul.f32 %v2920, 0.5
    %v2977 = vtanh.pop %v2975
    %v2978 = vtanh.pop %v2976
    %v2979 = vadd.f32 %v2977, 1.0
    %v2980 = vadd.f32 %v2978, 1.0
    %v2981 = vmul.f32 %v2979, 0.5
    %v2982 = vmul.f32 %v2980, 0.5
    %v2983 = vmul.f32 %v2971, 0.0
    %v2984 = vmul.f32 %v2972, 0.0
    %v2985 = vmul.f32 %v2963, %v2973
    %v2986 = vmul.f32 %v2964, %v2974
    %v2987 = vadd.f32 %v2983, %v2985
    %v2988 = vadd.f32 %v2984, %v2986
    %v2989 = vtanh.pop %v2987
    %v2990 = vtanh.pop %v2988
    %v2991 = vmul.f32 %v2981, %v2989
    %v2992 = vmul.f32 %v2982, %v2990
    %2993 = vst [vmem:[#allocation4] sm:$0xff] %v2955
    %2994 = vst [vmem:[#allocation4 + $0x10] sm:$0xff] %v2956
    %2995 = vst [vmem:[#allocation4 + $0x8] sm:$0xff] %v2991
    %2996 = vst [vmem:[#allocation4 + $0x18] sm:$0xff] %v2992
    %2997 = vst [vmem:[#allocation2] sm:$0xff] %v2955
    %2998 = vst [vmem:[#allocation2 + $0x10] sm:$0xff] %v2956
    %2999 = vst [vmem:[#allocation2 + $0x48] sm:$0xff] %v2991
    %3000 = vst [vmem:[#allocation2 + $0x58] sm:$0xff] %v2992
    %v3001 = vld [vmem:[#allocation4] sm:$0xff]
    %v3002 = vld [vmem:[#allocation4 + $0x8] sm:$0xff]
    %v3003 = vld [vmem:[#allocation4 + $0x10] sm:$0xff]
    %v3004 = vld [vmem:[#allocation4 + $0x18] sm:$0xff]
    %v3005 = vpack.c.bf16 %v3003, %v3001
    %v3006 = vpack.c.bf16 %v3004, %v3002
    %3007 = vmatprep.subr.bf16.mxu0 %v2478
    %3008 = vmatpush1.bf16.msra.mxu0 %v2477
    %3009 = vmatprep.subr.bf16.mxu0 %v2486
    %3010 = vmatpush1.bf16.msra.mxu0 %v2485
    %3011 = vmatprep.subr.bf16.mxu0 %v2494
    %3012 = vmatpush1.bf16.msra.mxu0 %v2493
    %3013 = vmatprep.subr.bf16.mxu0 %v2502
    %3014 = vmatpush1.bf16.msra.mxu0 %v2501
    %3015 = vmatprep.subr.bf16.mxu0 %v2510
    %3016 = vmatpush1.bf16.msra.mxu0 %v2509
    %3017 = vmatprep.subr.bf16.mxu0 %v2518
    %3018 = vmatpush1.bf16.msra.mxu0 %v2517
    %3019 = vmatprep.subr.bf16.mxu0 %v2526
    %3020 = vmatpush1.bf16.msra.mxu0 %v2525
    %3021 = vmatprep.subr.bf16.mxu0 %v2534
    %3022 = vmatpush1.bf16.msra.mxu0 %v2533
    %3023 = vmatprep.subr.bf16.mxu0 %v2542
    %3024 = vmatpush1.bf16.msra.mxu0 %v2541
    %3025 = vmatprep.subr.bf16.mxu0 %v2550
    %3026 = vmatpush1.bf16.msra.mxu0 %v2549
    %3027 = vmatprep.subr.bf16.mxu0 %v2558
    %3028 = vmatpush1.bf16.msra.mxu0 %v2557
    %3029 = vmatprep.subr.bf16.mxu0 %v2566
    %3030 = vmatpush1.bf16.msra.mxu0 %v2565
    %3031 = vmatprep.subr.bf16.mxu0 %v2574
    %3032 = vmatpush1.bf16.msra.mxu0 %v2573
    %3033 = vmatprep.subr.bf16.mxu0 %v2582
    %3034 = vmatpush1.bf16.msra.mxu0 %v2581
    %3035 = vmatprep.subr.bf16.mxu0 %v2590
    %3036 = vmatpush1.bf16.msra.mxu0 %v2589
    %3037 = vmatprep.subr.bf16.mxu0 %v2598
    %3038 = vmatpush1.bf16.msra.mxu0 %v2597
    %3039 = vmatprep.mubr.bf16.mxu0 %v3006
    %3040 = vmatmul.mubr.bf16.gmra.mrb[0].mxu0 %v3005
    %v3041 = vpop.f32.mrb[0].mxu0
    %v3042 = vadd.f32 0.0, %v3041
    %v3043 = vpop.f32.mrb[0].mxu0
    %v3044 = vadd.f32 0.0, %v3043
    %v3045 = vpop.f32.mrb[0].mxu0
    %v3046 = vadd.f32 0.0, %v3045
    %v3047 = vpop.f32.mrb[0].mxu0
    %v3048 = vadd.f32 0.0, %v3047
    %3049 = vdwg.mxu0
    %3050 = vmatprep.subr.bf16.mxu0 %v2480
    %3051 = vmatpush1.bf16.msra.mxu0 %v2479
    %3052 = vmatprep.subr.bf16.mxu0 %v2488
    %3053 = vmatpush1.bf16.msra.mxu0 %v2487
    %3054 = vmatprep.subr.bf16.mxu0 %v2496
    %3055 = vmatpush1.bf16.msra.mxu0 %v2495
    %3056 = vmatprep.subr.bf16.mxu0 %v2504
    %3057 = vmatpush1.bf16.msra.mxu0 %v2503
    %3058 = vmatprep.subr.bf16.mxu0 %v2512
    %3059 = vmatpush1.bf16.msra.mxu0 %v2511
    %3060 = vmatprep.subr.bf16.mxu0 %v2520
    %3061 = vmatpush1.bf16.msra.mxu0 %v2519
    %3062 = vmatprep.subr.bf16.mxu0 %v2528
    %3063 = vmatpush1.bf16.msra.mxu0 %v2527
    %3064 = vmatprep.subr.bf16.mxu0 %v2536
    %3065 = vmatpush1.bf16.msra.mxu0 %v2535
    %3066 = vmatprep.subr.bf16.mxu0 %v2544
    %3067 = vmatpush1.bf16.msra.mxu0 %v2543
    %3068 = vmatprep.subr.bf16.mxu0 %v2552
    %3069 = vmatpush1.bf16.msra.mxu0 %v2551
    %3070 = vmatprep.subr.bf16.mxu0 %v2560
    %3071 = vmatpush1.bf16.msra.mxu0 %v2559
    %3072 = vmatprep.subr.bf16.mxu0 %v2568
    %3073 = vmatpush1.bf16.msra.mxu0 %v2567
    %3074 = vmatprep.subr.bf16.mxu0 %v2576
    %3075 = vmatpush1.bf16.msra.mxu0 %v2575
    %3076 = vmatprep.subr.bf16.mxu0 %v2584
    %3077 = vmatpush1.bf16.msra.mxu0 %v2583
    %3078 = vmatprep.subr.bf16.mxu0 %v2592
    %3079 = vmatpush1.bf16.msra.mxu0 %v2591
    %3080 = vmatprep.subr.bf16.mxu0 %v2600
    %3081 = vmatpush1.bf16.msra.mxu0 %v2599
    %3082 = vmatprep.mubr.bf16.mxu0 %v3006
    %3083 = vmatmul.mubr.bf16.gmra.mrb[0].mxu0 %v3005
    %v3084 = vpop.f32.mrb[0].mxu0
    %v3085 = vadd.f32 0.0, %v3084
    %v3086 = vpop.f32.mrb[0].mxu0
    %v3087 = vadd.f32 0.0, %v3086
    %v3088 = vpop.f32.mrb[0].mxu0
    %v3089 = vadd.f32 0.0, %v3088
    %v3090 = vpop.f32.mrb[0].mxu0
    %v3091 = vadd.f32 0.0, %v3090
    %3092 = vdwg.mxu0
    %3093 = vmatprep.subr.bf16.mxu0 %v2482
    %3094 = vmatpush1.bf16.msra.mxu0 %v2481
    %3095 = vmatprep.subr.bf16.mxu0 %v2490
    %3096 = vmatpush1.bf16.msra.mxu0 %v2489
    %3097 = vmatprep.subr.bf16.mxu0 %v2498
    %3098 = vmatpush1.bf16.msra.mxu0 %v2497
    %3099 = vmatprep.subr.bf16.mxu0 %v2506
    %3100 = vmatpush1.bf16.msra.mxu0 %v2505
    %3101 = vmatprep.subr.bf16.mxu0 %v2514
    %3102 = vmatpush1.bf16.msra.mxu0 %v2513
    %3103 = vmatprep.subr.bf16.mxu0 %v2522
    %3104 = vmatpush1.bf16.msra.mxu0 %v2521
    %3105 = vmatprep.subr.bf16.mxu0 %v2530
    %3106 = vmatpush1.bf16.msra.mxu0 %v2529
    %3107 = vmatprep.subr.bf16.mxu0 %v2538
    %3108 = vmatpush1.bf16.msra.mxu0 %v2537
    %3109 = vmatprep.subr.bf16.mxu0 %v2546
    %3110 = vmatpush1.bf16.msra.mxu0 %v2545
    %3111 = vmatprep.subr.bf16.mxu0 %v2554
    %3112 = vmatpush1.bf16.msra.mxu0 %v2553
    %3113 = vmatprep.subr.bf16.mxu0 %v2562
    %3114 = vmatpush1.bf16.msra.mxu0 %v2561
    %3115 = vmatprep.subr.bf16.mxu0 %v2570
    %3116 = vmatpush1.bf16.msra.mxu0 %v2569
    %3117 = vmatprep.subr.bf16.mxu0 %v2578
    %3118 = vmatpush1.bf16.msra.mxu0 %v2577
    %3119 = vmatprep.subr.bf16.mxu0 %v2586
    %3120 = vmatpush1.bf16.msra.mxu0 %v2585
    %3121 = vmatprep.subr.bf16.mxu0 %v2594
    %3122 = vmatpush1.bf16.msra.mxu0 %v2593
    %3123 = vmatprep.subr.bf16.mxu0 %v2602
    %3124 = vmatpush1.bf16.msra.mxu0 %v2601
    %3125 = vmatprep.mubr.bf16.mxu0 %v3006
    %3126 = vmatmul.mubr.bf16.gmra.mrb[0].mxu0 %v3005
    %v3127 = vpop.f32.mrb[0].mxu0
    %v3128 = vadd.f32 0.0, %v3127
    %v3129 = vpop.f32.mrb[0].mxu0
    %v3130 = vadd.f32 0.0, %v3129
    %v3131 = vpop.f32.mrb[0].mxu0
    %v3132 = vadd.f32 0.0, %v3131
    %v3133 = vpop.f32.mrb[0].mxu0
    %v3134 = vadd.f32 0.0, %v3133
    %3135 = vdwg.mxu0
    %3136 = vmatprep.subr.bf16.mxu0 %v2484
    %3137 = vmatpush1.bf16.msra.mxu0 %v2483
    %3138 = vmatprep.subr.bf16.mxu0 %v2492
    %3139 = vmatpush1.bf16.msra.mxu0 %v2491
    %3140 = vmatprep.subr.bf16.mxu0 %v2500
    %3141 = vmatpush1.bf16.msra.mxu0 %v2499
    %3142 = vmatprep.subr.bf16.mxu0 %v2508
    %3143 = vmatpush1.bf16.msra.mxu0 %v2507
    %3144 = vmatprep.subr.bf16.mxu0 %v2516
    %3145 = vmatpush1.bf16.msra.mxu0 %v2515
    %3146 = vmatprep.subr.bf16.mxu0 %v2524
    %3147 = vmatpush1.bf16.msra.mxu0 %v2523
    %3148 = vmatprep.subr.bf16.mxu0 %v2532
    %3149 = vmatpush1.bf16.msra.mxu0 %v2531
    %3150 = vmatprep.subr.bf16.mxu0 %v2540
    %3151 = vmatpush1.bf16.msra.mxu0 %v2539
    %3152 = vmatprep.subr.bf16.mxu0 %v2548
    %3153 = vmatpush1.bf16.msra.mxu0 %v2547
    %3154 = vmatprep.subr.bf16.mxu0 %v2556
    %3155 = vmatpush1.bf16.msra.mxu0 %v2555
    %3156 = vmatprep.subr.bf16.mxu0 %v2564
    %3157 = vmatpush1.bf16.msra.mxu0 %v2563
    %3158 = vmatprep.subr.bf16.mxu0 %v2572
    %3159 = vmatpush1.bf16.msra.mxu0 %v2571
    %3160 = vmatprep.subr.bf16.mxu0 %v2580
    %3161 = vmatpush1.bf16.msra.mxu0 %v2579
    %3162 = vmatprep.subr.bf16.mxu0 %v2588
    %3163 = vmatpush1.bf16.msra.mxu0 %v2587
    %3164 = vmatprep.subr.bf16.mxu0 %v2596
    %3165 = vmatpush1.bf16.msra.mxu0 %v2595
    %3166 = vmatprep.subr.bf16.mxu0 %v2604
    %3167 = vmatpush1.bf16.msra.mxu0 %v2603
    %3168 = vmatprep.mubr.bf16.mxu0 %v3006
    %3169 = vmatmul.mubr.bf16.gmra.mrb[0].mxu0 %v3005
    %v3170 = vpop.f32.mrb[0].mxu0
    %v3171 = vadd.f32 0.0, %v3170
    %v3172 = vpop.f32.mrb[0].mxu0
    %v3173 = vadd.f32 0.0, %v3172
    %v3174 = vpop.f32.mrb[0].mxu0
    %v3175 = vadd.f32 0.0, %v3174
    %v3176 = vpop.f32.mrb[0].mxu0
    %v3177 = vadd.f32 0.0, %v3176
    %3178 = vdwg.mxu0
    %v3179 = vadd.f32 %v1748, %v3042
    %v3180 = vadd.f32 %v1750, %v3044
    %v3181 = vadd.f32 %v1811, %v3085
    %v3182 = vadd.f32 %v1813, %v3087
    %v3183 = vadd.f32 %v1752, %v3046
    %v3184 = vadd.f32 %v1754, %v3048
    %v3185 = vadd.f32 %v1815, %v3089
    %v3186 = vadd.f32 %v1817, %v3091
    %v3187 = vadd.f32 %v1874, %v3128
    %v3188 = vadd.f32 %v1876, %v3130
    %v3189 = vadd.f32 %v1937, %v3171
    %v3190 = vadd.f32 %v1939, %v3173
    %v3191 = vadd.f32 %v1878, %v3132
    %v3192 = vadd.f32 %v1880, %v3134
    %v3193 = vadd.f32 %v1941, %v3175
    %v3194 = vadd.f32 %v1943, %v3177
    %v3195 = vmul.f32 %v3179, 0.5
    %v3196 = vmul.f32 %v3183, 0.5
    %v3197 = vtanh.pop %v3195
    %v3198 = vtanh.pop %v3196
    %v3199 = vadd.f32 %v3197, 1.0
    %v3200 = vadd.f32 %v3198, 1.0
    %v3201 = vmul.f32 %v3199, 0.5
    %v3202 = vmul.f32 %v3200, 0.5
    %v3203 = vmul.f32 %v3180, 0.5
    %v3204 = vmul.f32 %v3184, 0.5
    %v3205 = vtanh.pop %v3203
    %v3206 = vtanh.pop %v3204
    %v3207 = vadd.f32 %v3205, 1.0
    %v3208 = vadd.f32 %v3206, 1.0
    %v3209 = vmul.f32 %v3207, 0.5
    %v3210 = vmul.f32 %v3208, 0.5
    %v3211 = vtanh.pop %v3181
    %v3212 = vtanh.pop %v3185
    %v3213 = vmul.f32 %v3182, 0.5
    %v3214 = vmul.f32 %v3186, 0.5
    %v3215 = vtanh.pop %v3213
    %v3216 = vtanh.pop %v3214
    %v3217 = vadd.f32 %v3215, 1.0
    %v3218 = vadd.f32 %v3216, 1.0
    %v3219 = vmul.f32 %v3217, 0.5
    %v3220 = vmul.f32 %v3218, 0.5
    %v3221 = vmul.f32 %v3209, %v2951
    %v3222 = vmul.f32 %v3210, %v2952
    %v3223 = vmul.f32 %v3201, %v3211
    %v3224 = vmul.f32 %v3202, %v3212
    %v3225 = vadd.f32 %v3221, %v3223
    %v3226 = vadd.f32 %v3222, %v3224
    %v3227 = vtanh.pop %v3225
    %v3228 = vtanh.pop %v3226
    %v3229 = vmul.f32 %v3219, %v3227
    %v3230 = vmul.f32 %v3220, %v3228
    %v3231 = vmul.f32 %v3187, 0.5
    %v3232 = vmul.f32 %v3191, 0.5
    %v3233 = vtanh.pop %v3231
    %v3234 = vtanh.pop %v3232
    %v3235 = vadd.f32 %v3233, 1.0
    %v3236 = vadd.f32 %v3234, 1.0
    %v3237 = vmul.f32 %v3235, 0.5
    %v3238 = vmul.f32 %v3236, 0.5
    %v3239 = vmul.f32 %v3188, 0.5
    %v3240 = vmul.f32 %v3192, 0.5
    %v3241 = vtanh.pop %v3239
    %v3242 = vtanh.pop %v3240
    %v3243 = vadd.f32 %v3241, 1.0
    %v3244 = vadd.f32 %v3242, 1.0
    %v3245 = vmul.f32 %v3243, 0.5
    %v3246 = vmul.f32 %v3244, 0.5
    %v3247 = vtanh.pop %v3189
    %v3248 = vtanh.pop %v3193
    %v3249 = vmul.f32 %v3190, 0.5
    %v3250 = vmul.f32 %v3194, 0.5
    %v3251 = vtanh.pop %v3249
    %v3252 = vtanh.pop %v3250
    %v3253 = vadd.f32 %v3251, 1.0
    %v3254 = vadd.f32 %v3252, 1.0
    %v3255 = vmul.f32 %v3253, 0.5
    %v3256 = vmul.f32 %v3254, 0.5
    %v3257 = vmul.f32 %v3245, %v2987
    %v3258 = vmul.f32 %v3246, %v2988
    %v3259 = vmul.f32 %v3237, %v3247
    %v3260 = vmul.f32 %v3238, %v3248
    %v3261 = vadd.f32 %v3257, %v3259
    %v3262 = vadd.f32 %v3258, %v3260
    %v3263 = vtanh.pop %v3261
    %v3264 = vtanh.pop %v3262
    %v3265 = vmul.f32 %v3255, %v3263
    %v3266 = vmul.f32 %v3256, %v3264
    %3267 = vst [vmem:[#allocation4] sm:$0xff] %v3229
    %3268 = vst [vmem:[#allocation4 + $0x10] sm:$0xff] %v3230
    %3269 = vst [vmem:[#allocation4 + $0x8] sm:$0xff] %v3265
    %3270 = vst [vmem:[#allocation4 + $0x18] sm:$0xff] %v3266
    %3271 = vst [vmem:[#allocation2 + $0x20] sm:$0xff] %v3229
    %3272 = vst [vmem:[#allocation2 + $0x30] sm:$0xff] %v3230
    %3273 = vst [vmem:[#allocation2 + $0x28] sm:$0xff] %v3265
    %3274 = vst [vmem:[#allocation2 + $0x38] sm:$0xff] %v3266
    %v3275 = vld [vmem:[#allocation4] sm:$0xff]
    %v3276 = vld [vmem:[#allocation4 + $0x8] sm:$0xff]
    %v3277 = vld [vmem:[#allocation4 + $0x10] sm:$0xff]
    %v3278 = vld [vmem:[#allocation4 + $0x18] sm:$0xff]
    %v3279 = vpack.c.bf16 %v3277, %v3275
    %v3280 = vpack.c.bf16 %v3278, %v3276
    %3281 = vmatprep.subr.bf16.mxu0 %v2478
    %3282 = vmatpush1.bf16.msra.mxu0 %v2477
    %3283 = vmatprep.subr.bf16.mxu0 %v2486
    %3284 = vmatpush1.bf16.msra.mxu0 %v2485
    %3285 = vmatprep.subr.bf16.mxu0 %v2494
    %3286 = vmatpush1.bf16.msra.mxu0 %v2493
    %3287 = vmatprep.subr.bf16.mxu0 %v2502
    %3288 = vmatpush1.bf16.msra.mxu0 %v2501
    %3289 = vmatprep.subr.bf16.mxu0 %v2510
    %3290 = vmatpush1.bf16.msra.mxu0 %v2509
    %3291 = vmatprep.subr.bf16.mxu0 %v2518
    %3292 = vmatpush1.bf16.msra.mxu0 %v2517
    %3293 = vmatprep.subr.bf16.mxu0 %v2526
    %3294 = vmatpush1.bf16.msra.mxu0 %v2525
    %3295 = vmatprep.subr.bf16.mxu0 %v2534
    %3296 = vmatpush1.bf16.msra.mxu0 %v2533
    %3297 = vmatprep.subr.bf16.mxu0 %v2542
    %3298 = vmatpush1.bf16.msra.mxu0 %v2541
    %3299 = vmatprep.subr.bf16.mxu0 %v2550
    %3300 = vmatpush1.bf16.msra.mxu0 %v2549
    %3301 = vmatprep.subr.bf16.mxu0 %v2558
    %3302 = vmatpush1.bf16.msra.mxu0 %v2557
    %3303 = vmatprep.subr.bf16.mxu0 %v2566
    %3304 = vmatpush1.bf16.msra.mxu0 %v2565
    %3305 = vmatprep.subr.bf16.mxu0 %v2574
    %3306 = vmatpush1.bf16.msra.mxu0 %v2573
    %3307 = vmatprep.subr.bf16.mxu0 %v2582
    %3308 = vmatpush1.bf16.msra.mxu0 %v2581
    %3309 = vmatprep.subr.bf16.mxu0 %v2590
    %3310 = vmatpush1.bf16.msra.mxu0 %v2589
    %3311 = vmatprep.subr.bf16.mxu0 %v2598
    %3312 = vmatpush1.bf16.msra.mxu0 %v2597
    %3313 = vmatprep.mubr.bf16.mxu0 %v3280
    %3314 = vmatmul.mubr.bf16.gmra.mrb[0].mxu0 %v3279
    %v3315 = vpop.f32.mrb[0].mxu0
    %v3316 = vadd.f32 0.0, %v3315
    %v3317 = vpop.f32.mrb[0].mxu0
    %v3318 = vadd.f32 0.0, %v3317
    %v3319 = vpop.f32.mrb[0].mxu0
    %v3320 = vadd.f32 0.0, %v3319
    %v3321 = vpop.f32.mrb[0].mxu0
    %v3322 = vadd.f32 0.0, %v3321
    %3323 = vdwg.mxu0
    %3324 = vmatprep.subr.bf16.mxu0 %v2480
    %3325 = vmatpush1.bf16.msra.mxu0 %v2479
    %3326 = vmatprep.subr.bf16.mxu0 %v2488
    %3327 = vmatpush1.bf16.msra.mxu0 %v2487
    %3328 = vmatprep.subr.bf16.mxu0 %v2496
    %3329 = vmatpush1.bf16.msra.mxu0 %v2495
    %3330 = vmatprep.subr.bf16.mxu0 %v2504
    %3331 = vmatpush1.bf16.msra.mxu0 %v2503
    %3332 = vmatprep.subr.bf16.mxu0 %v2512
    %3333 = vmatpush1.bf16.msra.mxu0 %v2511
    %3334 = vmatprep.subr.bf16.mxu0 %v2520
    %3335 = vmatpush1.bf16.msra.mxu0 %v2519
    %3336 = vmatprep.subr.bf16.mxu0 %v2528
    %3337 = vmatpush1.bf16.msra.mxu0 %v2527
    %3338 = vmatprep.subr.bf16.mxu0 %v2536
    %3339 = vmatpush1.bf16.msra.mxu0 %v2535
    %3340 = vmatprep.subr.bf16.mxu0 %v2544
    %3341 = vmatpush1.bf16.msra.mxu0 %v2543
    %3342 = vmatprep.subr.bf16.mxu0 %v2552
    %3343 = vmatpush1.bf16.msra.mxu0 %v2551
    %3344 = vmatprep.subr.bf16.mxu0 %v2560
    %3345 = vmatpush1.bf16.msra.mxu0 %v2559
    %3346 = vmatprep.subr.bf16.mxu0 %v2568
    %3347 = vmatpush1.bf16.msra.mxu0 %v2567
    %3348 = vmatprep.subr.bf16.mxu0 %v2576
    %3349 = vmatpush1.bf16.msra.mxu0 %v2575
    %3350 = vmatprep.subr.bf16.mxu0 %v2584
    %3351 = vmatpush1.bf16.msra.mxu0 %v2583
    %3352 = vmatprep.subr.bf16.mxu0 %v2592
    %3353 = vmatpush1.bf16.msra.mxu0 %v2591
    %3354 = vmatprep.subr.bf16.mxu0 %v2600
    %3355 = vmatpush1.bf16.msra.mxu0 %v2599
    %3356 = vmatprep.mubr.bf16.mxu0 %v3280
    %3357 = vmatmul.mubr.bf16.gmra.mrb[0].mxu0 %v3279
    %v3358 = vpop.f32.mrb[0].mxu0
    %v3359 = vadd.f32 0.0, %v3358
    %v3360 = vpop.f32.mrb[0].mxu0
    %v3361 = vadd.f32 0.0, %v3360
    %v3362 = vpop.f32.mrb[0].mxu0
    %v3363 = vadd.f32 0.0, %v3362
    %v3364 = vpop.f32.mrb[0].mxu0
    %v3365 = vadd.f32 0.0, %v3364
    %3366 = vdwg.mxu0
    %3367 = vmatprep.subr.bf16.mxu0 %v2482
    %3368 = vmatpush1.bf16.msra.mxu0 %v2481
    %3369 = vmatprep.subr.bf16.mxu0 %v2490
    %3370 = vmatpush1.bf16.msra.mxu0 %v2489
    %3371 = vmatprep.subr.bf16.mxu0 %v2498
    %3372 = vmatpush1.bf16.msra.mxu0 %v2497
    %3373 = vmatprep.subr.bf16.mxu0 %v2506
    %3374 = vmatpush1.bf16.msra.mxu0 %v2505
    %3375 = vmatprep.subr.bf16.mxu0 %v2514
    %3376 = vmatpush1.bf16.msra.mxu0 %v2513
    %3377 = vmatprep.subr.bf16.mxu0 %v2522
    %3378 = vmatpush1.bf16.msra.mxu0 %v2521
    %3379 = vmatprep.subr.bf16.mxu0 %v2530
    %3380 = vmatpush1.bf16.msra.mxu0 %v2529
    %3381 = vmatprep.subr.bf16.mxu0 %v2538
    %3382 = vmatpush1.bf16.msra.mxu0 %v2537
    %3383 = vmatprep.subr.bf16.mxu0 %v2546
    %3384 = vmatpush1.bf16.msra.mxu0 %v2545
    %3385 = vmatprep.subr.bf16.mxu0 %v2554
    %3386 = vmatpush1.bf16.msra.mxu0 %v2553
    %3387 = vmatprep.subr.bf16.mxu0 %v2562
    %3388 = vmatpush1.bf16.msra.mxu0 %v2561
    %3389 = vmatprep.subr.bf16.mxu0 %v2570
    %3390 = vmatpush1.bf16.msra.mxu0 %v2569
    %3391 = vmatprep.subr.bf16.mxu0 %v2578
    %3392 = vmatpush1.bf16.msra.mxu0 %v2577
    %3393 = vmatprep.subr.bf16.mxu0 %v2586
    %3394 = vmatpush1.bf16.msra.mxu0 %v2585
    %3395 = vmatprep.subr.bf16.mxu0 %v2594
    %3396 = vmatpush1.bf16.msra.mxu0 %v2593
    %3397 = vmatprep.subr.bf16.mxu0 %v2602
    %3398 = vmatpush1.bf16.msra.mxu0 %v2601
    %3399 = vmatprep.mubr.bf16.mxu0 %v3280
    %3400 = vmatmul.mubr.bf16.gmra.mrb[0].mxu0 %v3279
    %v3401 = vpop.f32.mrb[0].mxu0
    %v3402 = vadd.f32 0.0, %v3401
    %v3403 = vpop.f32.mrb[0].mxu0
    %v3404 = vadd.f32 0.0, %v3403
    %v3405 = vpop.f32.mrb[0].mxu0
    %v3406 = vadd.f32 0.0, %v3405
    %v3407 = vpop.f32.mrb[0].mxu0
    %v3408 = vadd.f32 0.0, %v3407
    %3409 = vdwg.mxu0
    %3410 = vmatprep.subr.bf16.mxu0 %v2484
    %3411 = vmatpush1.bf16.msra.mxu0 %v2483
    %3412 = vmatprep.subr.bf16.mxu0 %v2492
    %3413 = vmatpush1.bf16.msra.mxu0 %v2491
    %3414 = vmatprep.subr.bf16.mxu0 %v2500
    %3415 = vmatpush1.bf16.msra.mxu0 %v2499
    %3416 = vmatprep.subr.bf16.mxu0 %v2508
    %3417 = vmatpush1.bf16.msra.mxu0 %v2507
    %3418 = vmatprep.subr.bf16.mxu0 %v2516
    %3419 = vmatpush1.bf16.msra.mxu0 %v2515
    %3420 = vmatprep.subr.bf16.mxu0 %v2524
    %3421 = vmatpush1.bf16.msra.mxu0 %v2523
    %3422 = vmatprep.subr.bf16.mxu0 %v2532
    %3423 = vmatpush1.bf16.msra.mxu0 %v2531
    %3424 = vmatprep.subr.bf16.mxu0 %v2540
    %3425 = vmatpush1.bf16.msra.mxu0 %v2539
    %3426 = vmatprep.subr.bf16.mxu0 %v2548
    %3427 = vmatpush1.bf16.msra.mxu0 %v2547
    %3428 = vmatprep.subr.bf16.mxu0 %v2556
    %3429 = vmatpush1.bf16.msra.mxu0 %v2555
    %3430 = vmatprep.subr.bf16.mxu0 %v2564
    %3431 = vmatpush1.bf16.msra.mxu0 %v2563
    %3432 = vmatprep.subr.bf16.mxu0 %v2572
    %3433 = vmatpush1.bf16.msra.mxu0 %v2571
    %3434 = vmatprep.subr.bf16.mxu0 %v2580
    %3435 = vmatpush1.bf16.msra.mxu0 %v2579
    %3436 = vmatprep.subr.bf16.mxu0 %v2588
    %3437 = vmatpush1.bf16.msra.mxu0 %v2587
    %3438 = vmatprep.subr.bf16.mxu0 %v2596
    %3439 = vmatpush1.bf16.msra.mxu0 %v2595
    %3440 = vmatprep.subr.bf16.mxu0 %v2604
    %3441 = vmatpush1.bf16.msra.mxu0 %v2603
    %3442 = vmatprep.mubr.bf16.mxu0 %v3280
    %3443 = vmatmul.mubr.bf16.gmra.mrb[0].mxu0 %v3279
    %v3444 = vpop.f32.mrb[0].mxu0
    %v3445 = vadd.f32 0.0, %v3444
    %v3446 = vpop.f32.mrb[0].mxu0
    %v3447 = vadd.f32 0.0, %v3446
    %v3448 = vpop.f32.mrb[0].mxu0
    %v3449 = vadd.f32 0.0, %v3448
    %v3450 = vpop.f32.mrb[0].mxu0
    %v3451 = vadd.f32 0.0, %v3450
    %3452 = vdwg.mxu0
    %v3453 = vadd.f32 %v1758, %v3316
    %v3454 = vadd.f32 %v1760, %v3318
    %v3455 = vadd.f32 %v1821, %v3359
    %v3456 = vadd.f32 %v1823, %v3361
    %v3457 = vadd.f32 %v1762, %v3320
    %v3458 = vadd.f32 %v1764, %v3322
    %v3459 = vadd.f32 %v1825, %v3363
    %v3460 = vadd.f32 %v1827, %v3365
    %v3461 = vadd.f32 %v1864, %v3402
    %v3462 = vadd.f32 %v1866, %v3404
    %v3463 = vadd.f32 %v1927, %v3445
    %v3464 = vadd.f32 %v1929, %v3447
    %v3465 = vadd.f32 %v1868, %v3406
    %v3466 = vadd.f32 %v1870, %v3408
    %v3467 = vadd.f32 %v1931, %v3449
    %v3468 = vadd.f32 %v1933, %v3451
    %v3469 = vmul.f32 %v3453, 0.5
    %v3470 = vmul.f32 %v3457, 0.5
    %v3471 = vtanh.pop %v3469
    %v3472 = vtanh.pop %v3470
    %v3473 = vadd.f32 %v3471, 1.0
    %v3474 = vadd.f32 %v3472, 1.0
    %v3475 = vmul.f32 %v3473, 0.5
    %v3476 = vmul.f32 %v3474, 0.5
    %v3477 = vmul.f32 %v3454, 0.5
    %v3478 = vmul.f32 %v3458, 0.5
    %v3479 = vtanh.pop %v3477
    %v3480 = vtanh.pop %v3478
    %v3481 = vadd.f32 %v3479, 1.0
    %v3482 = vadd.f32 %v3480, 1.0
    %v3483 = vmul.f32 %v3481, 0.5
    %v3484 = vmul.f32 %v3482, 0.5
    %v3485 = vtanh.pop %v3455
    %v3486 = vtanh.pop %v3459
    %v3487 = vmul.f32 %v3456, 0.5
    %v3488 = vmul.f32 %v3460, 0.5
    %v3489 = vtanh.pop %v3487
    %v3490 = vtanh.pop %v3488
    %v3491 = vadd.f32 %v3489, 1.0
    %v3492 = vadd.f32 %v3490, 1.0
    %v3493 = vmul.f32 %v3491, 0.5
    %v3494 = vmul.f32 %v3492, 0.5
    %v3495 = vmul.f32 %v3483, %v3225
    %v3496 = vmul.f32 %v3484, %v3226
    %v3497 = vmul.f32 %v3475, %v3485
    %v3498 = vmul.f32 %v3476, %v3486
    %v3499 = vadd.f32 %v3495, %v3497
    %v3500 = vadd.f32 %v3496, %v3498
    %v3501 = vtanh.pop %v3499
    %v3502 = vtanh.pop %v3500
    %v3503 = vmul.f32 %v3493, %v3501
    %v3504 = vmul.f32 %v3494, %v3502
    %v3505 = vmul.f32 %v3461, 0.5
    %v3506 = vmul.f32 %v3465, 0.5
    %v3507 = vtanh.pop %v3505
    %v3508 = vtanh.pop %v3506
    %v3509 = vadd.f32 %v3507, 1.0
    %v3510 = vadd.f32 %v3508, 1.0
    %v3511 = vmul.f32 %v3509, 0.5
    %v3512 = vmul.f32 %v3510, 0.5
    %v3513 = vmul.f32 %v3462, 0.5
    %v3514 = vmul.f32 %v3466, 0.5
    %v3515 = vtanh.pop %v3513
    %v3516 = vtanh.pop %v3514
    %v3517 = vadd.f32 %v3515, 1.0
    %v3518 = vadd.f32 %v3516, 1.0
    %v3519 = vmul.f32 %v3517, 0.5
    %v3520 = vmul.f32 %v3518, 0.5
    %v3521 = vtanh.pop %v3463
    %v3522 = vtanh.pop %v3467
    %v3523 = vmul.f32 %v3464, 0.5
    %v3524 = vmul.f32 %v3468, 0.5
    %v3525 = vtanh.pop %v3523
    %v3526 = vtanh.pop %v3524
    %v3527 = vadd.f32 %v3525, 1.0
    %v3528 = vadd.f32 %v3526, 1.0
    %v3529 = vmul.f32 %v3527, 0.5
    %v3530 = vmul.f32 %v3528, 0.5
    %v3531 = vmul.f32 %v3519, %v3261
    %v3532 = vmul.f32 %v3520, %v3262
    %v3533 = vmul.f32 %v3511, %v3521
    %v3534 = vmul.f32 %v3512, %v3522
    %v3535 = vadd.f32 %v3531, %v3533
    %v3536 = vadd.f32 %v3532, %v3534
    %v3537 = vtanh.pop %v3535
    %v3538 = vtanh.pop %v3536
    %v3539 = vmul.f32 %v3529, %v3537
    %v3540 = vmul.f32 %v3530, %v3538
    %3541 = vst [vmem:[#allocation4] sm:$0xff] %v3503
    %3542 = vst [vmem:[#allocation4 + $0x10] sm:$0xff] %v3504
    %3543 = vst [vmem:[#allocation4 + $0x8] sm:$0xff] %v3539
    %3544 = vst [vmem:[#allocation4 + $0x18] sm:$0xff] %v3540
    %3545 = vst [vmem:[#allocation2 + $0x40] sm:$0xff] %v3503
    %3546 = vst [vmem:[#allocation2 + $0x50] sm:$0xff] %v3504
    %3547 = vst [vmem:[#allocation2 + $0x8] sm:$0xff] %v3539
    %3548 = vst [vmem:[#allocation2 + $0x18] sm:$0xff] %v3540
    %v3549 = vld [vmem:[#allocation2] sm:$0xff]
    %v3550 = vld [vmem:[#allocation2 + $0x8] sm:$0xff]
    %v3551 = vld [vmem:[#allocation2 + $0x10] sm:$0xff]
    %v3552 = vld [vmem:[#allocation2 + $0x18] sm:$0xff]
    %v3553 = vld [vmem:[#allocation2 + $0x20] sm:$0xff]
    %v3554 = vld [vmem:[#allocation2 + $0x28] sm:$0xff]
    %v3555 = vld [vmem:[#allocation2 + $0x30] sm:$0xff]
    %v3556 = vld [vmem:[#allocation2 + $0x38] sm:$0xff]
    %v3557 = vld [vmem:[#allocation2 + $0x40] sm:$0xff]
    %v3558 = vld [vmem:[#allocation2 + $0x48] sm:$0xff]
    %v3559 = vld [vmem:[#allocation2 + $0x50] sm:$0xff]
    %v3560 = vld [vmem:[#allocation2 + $0x58] sm:$0xff]
    %v3561 = vld [vmem:[#allocation14] sm:$0xff]
    %v3562 = vld [vmem:[#allocation14 + $0x8] sm:$0xff]
    %v3563 = vld [vmem:[#allocation14 + $0x10] sm:$0xff]
    %v3564 = vld [vmem:[#allocation14 + $0x18] sm:$0xff]
    %v3565 = vld [vmem:[#allocation14 + $0x20] sm:$0xff]
    %v3566 = vld [vmem:[#allocation14 + $0x28] sm:$0xff]
    %v3567 = vld [vmem:[#allocation14 + $0x30] sm:$0xff]
    %v3568 = vld [vmem:[#allocation14 + $0x38] sm:$0xff]
    %v3569 = vld [vmem:[#allocation14 + $0x40] sm:$0xff]
    %v3570 = vld [vmem:[#allocation14 + $0x48] sm:$0xff]
    %v3571 = vld [vmem:[#allocation14 + $0x50] sm:$0xff]
    %v3572 = vld [vmem:[#allocation14 + $0x58] sm:$0xff]
    %v3573 = vld [vmem:[#allocation14 + $0x60] sm:$0xff]
    %v3574 = vld [vmem:[#allocation14 + $0x68] sm:$0xff]
    %v3575 = vld [vmem:[#allocation14 + $0x70] sm:$0xff]
    %v3576 = vld [vmem:[#allocation14 + $0x78] sm:$0xff]
    %v3577 = vld [vmem:[#allocation14 + $0x80] sm:$0xff]
    %v3578 = vld [vmem:[#allocation14 + $0x88] sm:$0xff]
    %v3579 = vld [vmem:[#allocation14 + $0x90] sm:$0xff]
    %v3580 = vld [vmem:[#allocation14 + $0x98] sm:$0xff]
    %v3581 = vld [vmem:[#allocation14 + $0xa0] sm:$0xff]
    %v3582 = vld [vmem:[#allocation14 + $0xa8] sm:$0xff]
    %v3583 = vld [vmem:[#allocation14 + $0xb0] sm:$0xff]
    %v3584 = vld [vmem:[#allocation14 + $0xb8] sm:$0xff]
    %v3585 = vld [vmem:[#allocation14 + $0xc0] sm:$0xff]
    %v3586 = vld [vmem:[#allocation14 + $0xc8] sm:$0xff]
    %v3587 = vld [vmem:[#allocation14 + $0xd0] sm:$0xff]
    %v3588 = vld [vmem:[#allocation14 + $0xd8] sm:$0xff]
    %v3589 = vld [vmem:[#allocation14 + $0xe0] sm:$0xff]
    %v3590 = vld [vmem:[#allocation14 + $0xe8] sm:$0xff]
    %v3591 = vld [vmem:[#allocation14 + $0xf0] sm:$0xff]
    %v3592 = vld [vmem:[#allocation14 + $0xf8] sm:$0xff]
    %v3593 = vld [vmem:[#allocation14 + $0x100] sm:$0xff]
    %v3594 = vld [vmem:[#allocation14 + $0x108] sm:$0xff]
    %v3595 = vld [vmem:[#allocation14 + $0x110] sm:$0xff]
    %v3596 = vld [vmem:[#allocation14 + $0x118] sm:$0xff]
    %v3597 = vld [vmem:[#allocation14 + $0x120] sm:$0xff]
    %v3598 = vld [vmem:[#allocation14 + $0x128] sm:$0xff]
    %v3599 = vld [vmem:[#allocation14 + $0x130] sm:$0xff]
    %v3600 = vld [vmem:[#allocation14 + $0x138] sm:$0xff]
    %v3601 = vld [vmem:[#allocation14 + $0x140] sm:$0xff]
    %v3602 = vld [vmem:[#allocation14 + $0x148] sm:$0xff]
    %v3603 = vld [vmem:[#allocation14 + $0x150] sm:$0xff]
    %v3604 = vld [vmem:[#allocation14 + $0x158] sm:$0xff]
    %v3605 = vld [vmem:[#allocation14 + $0x160] sm:$0xff]
    %v3606 = vld [vmem:[#allocation14 + $0x168] sm:$0xff]
    %v3607 = vld [vmem:[#allocation14 + $0x170] sm:$0xff]
    %v3608 = vld [vmem:[#allocation14 + $0x178] sm:$0xff]
    %v3609 = vld [vmem:[#allocation14 + $0x180] sm:$0xff]
    %v3610 = vld [vmem:[#allocation14 + $0x188] sm:$0xff]
    %v3611 = vld [vmem:[#allocation14 + $0x190] sm:$0xff]
    %v3612 = vld [vmem:[#allocation14 + $0x198] sm:$0xff]
    %v3613 = vld [vmem:[#allocation14 + $0x1a0] sm:$0xff]
    %v3614 = vld [vmem:[#allocation14 + $0x1a8] sm:$0xff]
    %v3615 = vld [vmem:[#allocation14 + $0x1b0] sm:$0xff]
    %v3616 = vld [vmem:[#allocation14 + $0x1b8] sm:$0xff]
    %v3617 = vld [vmem:[#allocation14 + $0x1c0] sm:$0xff]
    %v3618 = vld [vmem:[#allocation14 + $0x1c8] sm:$0xff]
    %v3619 = vld [vmem:[#allocation14 + $0x1d0] sm:$0xff]
    %v3620 = vld [vmem:[#allocation14 + $0x1d8] sm:$0xff]
    %v3621 = vld [vmem:[#allocation14 + $0x1e0] sm:$0xff]
    %v3622 = vld [vmem:[#allocation14 + $0x1e8] sm:$0xff]
    %v3623 = vld [vmem:[#allocation14 + $0x1f0] sm:$0xff]
    %v3624 = vld [vmem:[#allocation14 + $0x1f8] sm:$0xff]
    %v3625 = vld [vmem:[#allocation14 + $0x200] sm:$0xff]
    %v3626 = vld [vmem:[#allocation14 + $0x208] sm:$0xff]
    %v3627 = vld [vmem:[#allocation14 + $0x210] sm:$0xff]
    %v3628 = vld [vmem:[#allocation14 + $0x218] sm:$0xff]
    %v3629 = vld [vmem:[#allocation14 + $0x220] sm:$0xff]
    %v3630 = vld [vmem:[#allocation14 + $0x228] sm:$0xff]
    %v3631 = vld [vmem:[#allocation14 + $0x230] sm:$0xff]
    %v3632 = vld [vmem:[#allocation14 + $0x238] sm:$0xff]
    %v3633 = vld [vmem:[#allocation14 + $0x240] sm:$0xff]
    %v3634 = vld [vmem:[#allocation14 + $0x248] sm:$0xff]
    %v3635 = vld [vmem:[#allocation14 + $0x250] sm:$0xff]
    %v3636 = vld [vmem:[#allocation14 + $0x258] sm:$0xff]
    %v3637 = vld [vmem:[#allocation14 + $0x260] sm:$0xff]
    %v3638 = vld [vmem:[#allocation14 + $0x268] sm:$0xff]
    %v3639 = vld [vmem:[#allocation14 + $0x270] sm:$0xff]
    %v3640 = vld [vmem:[#allocation14 + $0x278] sm:$0xff]
    %v3641 = vld [vmem:[#allocation14 + $0x280] sm:$0xff]
    %v3642 = vld [vmem:[#allocation14 + $0x288] sm:$0xff]
    %v3643 = vld [vmem:[#allocation14 + $0x290] sm:$0xff]
    %v3644 = vld [vmem:[#allocation14 + $0x298] sm:$0xff]
    %v3645 = vld [vmem:[#allocation14 + $0x2a0] sm:$0xff]
    %v3646 = vld [vmem:[#allocation14 + $0x2a8] sm:$0xff]
    %v3647 = vld [vmem:[#allocation14 + $0x2b0] sm:$0xff]
    %v3648 = vld [vmem:[#allocation14 + $0x2b8] sm:$0xff]
    %v3649 = vld [vmem:[#allocation14 + $0x2c0] sm:$0xff]
    %v3650 = vld [vmem:[#allocation14 + $0x2c8] sm:$0xff]
    %v3651 = vld [vmem:[#allocation14 + $0x2d0] sm:$0xff]
    %v3652 = vld [vmem:[#allocation14 + $0x2d8] sm:$0xff]
    %v3653 = vld [vmem:[#allocation14 + $0x2e0] sm:$0xff]
    %v3654 = vld [vmem:[#allocation14 + $0x2e8] sm:$0xff]
    %v3655 = vld [vmem:[#allocation14 + $0x2f0] sm:$0xff]
    %v3656 = vld [vmem:[#allocation14 + $0x2f8] sm:$0xff]
    %v3657 = vld [vmem:[#allocation14 + $0x300] sm:$0xff]
    %v3658 = vld [vmem:[#allocation14 + $0x308] sm:$0xff]
    %v3659 = vld [vmem:[#allocation14 + $0x310] sm:$0xff]
    %v3660 = vld [vmem:[#allocation14 + $0x318] sm:$0xff]
    %v3661 = vld [vmem:[#allocation14 + $0x320] sm:$0xff]
    %v3662 = vld [vmem:[#allocation14 + $0x328] sm:$0xff]
    %v3663 = vld [vmem:[#allocation14 + $0x330] sm:$0xff]
    %v3664 = vld [vmem:[#allocation14 + $0x338] sm:$0xff]
    %v3665 = vld [vmem:[#allocation14 + $0x340] sm:$0xff]
    %v3666 = vld [vmem:[#allocation14 + $0x348] sm:$0xff]
    %v3667 = vld [vmem:[#allocation14 + $0x350] sm:$0xff]
    %v3668 = vld [vmem:[#allocation14 + $0x358] sm:$0xff]
    %v3669 = vld [vmem:[#allocation14 + $0x360] sm:$0xff]
    %v3670 = vld [vmem:[#allocation14 + $0x368] sm:$0xff]
    %v3671 = vld [vmem:[#allocation14 + $0x370] sm:$0xff]
    %v3672 = vld [vmem:[#allocation14 + $0x378] sm:$0xff]
    %v3673 = vld [vmem:[#allocation14 + $0x380] sm:$0xff]
    %v3674 = vld [vmem:[#allocation14 + $0x388] sm:$0xff]
    %v3675 = vld [vmem:[#allocation14 + $0x390] sm:$0xff]
    %v3676 = vld [vmem:[#allocation14 + $0x398] sm:$0xff]
    %v3677 = vld [vmem:[#allocation14 + $0x3a0] sm:$0xff]
    %v3678 = vld [vmem:[#allocation14 + $0x3a8] sm:$0xff]
    %v3679 = vld [vmem:[#allocation14 + $0x3b0] sm:$0xff]
    %v3680 = vld [vmem:[#allocation14 + $0x3b8] sm:$0xff]
    %v3681 = vld [vmem:[#allocation14 + $0x3c0] sm:$0xff]
    %v3682 = vld [vmem:[#allocation14 + $0x3c8] sm:$0xff]
    %v3683 = vld [vmem:[#allocation14 + $0x3d0] sm:$0xff]
    %v3684 = vld [vmem:[#allocation14 + $0x3d8] sm:$0xff]
    %v3685 = vld [vmem:[#allocation14 + $0x3e0] sm:$0xff]
    %v3686 = vld [vmem:[#allocation14 + $0x3e8] sm:$0xff]
    %v3687 = vld [vmem:[#allocation14 + $0x3f0] sm:$0xff]
    %v3688 = vld [vmem:[#allocation14 + $0x3f8] sm:$0xff]
    %v3689 = vpack.c.bf16 %v3551, %v3549
    %v3690 = vpack.c.bf16 %v3552, %v3550
    %v3691 = vpack.c.bf16 %v3555, %v3553
    %v3692 = vpack.c.bf16 %v3556, %v3554
    %v3693 = vpack.c.bf16 %v3559, %v3557
    %v3694 = vpack.c.bf16 %v3560, %v3558
    %v3695 = vld [vmem:[#allocation17] sm:$0xff]
    %v3697 = vlaneseq
    %v3698 = vshrl.u32 %v3697, 7
    %v3699 = vsub.s32 0, %v3698
    %v3700 = vrot.slane %v3695, %v3699
    %v3701 = vlaneseq
    %v3702 = vshrl.u32 %v3701, 7
    %v3703 = vsub.s32 1, %v3702
    %v3704 = vrot.slane %v3695, %v3703
    %v3705 = vlaneseq
    %v3706 = vshrl.u32 %v3705, 7
    %v3707 = vsub.s32 2, %v3706
    %v3708 = vrot.slane %v3695, %v3707
    %v3709 = vlaneseq
    %v3710 = vshrl.u32 %v3709, 7
    %v3711 = vsub.s32 3, %v3710
    %v3712 = vrot.slane %v3695, %v3711
    %v3713 = vlaneseq
    %v3714 = vshrl.u32 %v3713, 7
    %v3715 = vsub.s32 4, %v3714
    %v3716 = vrot.slane %v3695, %v3715
    %v3717 = vlaneseq
    %v3718 = vshrl.u32 %v3717, 7
    %v3719 = vsub.s32 5, %v3718
    %v3720 = vrot.slane %v3695, %v3719
    %v3721 = vlaneseq
    %v3722 = vshrl.u32 %v3721, 7
    %v3723 = vsub.s32 6, %v3722
    %v3724 = vrot.slane %v3695, %v3723
    %v3725 = vlaneseq
    %v3726 = vshrl.u32 %v3725, 7
    %v3727 = vsub.s32 7, %v3726
    %v3728 = vrot.slane %v3695, %v3727
    %v3865 = vunpack.c.l.b16 %v3561
    %v3866 = vunpack.c.h.b16 %v3561
    %v3867 = vunpack.c.l.b16 %v3562
    %v3868 = vunpack.c.h.b16 %v3562
    %v3869 = vunpack.c.l.b16 %v3563
    %v3870 = vunpack.c.h.b16 %v3563
    %v3871 = vunpack.c.l.b16 %v3564
    %v3872 = vunpack.c.h.b16 %v3564
    %v3873 = vunpack.c.l.b16 %v3565
    %v3874 = vunpack.c.h.b16 %v3565
    %v3875 = vunpack.c.l.b16 %v3566
    %v3876 = vunpack.c.h.b16 %v3566
    %v3877 = vunpack.c.l.b16 %v3567
    %v3878 = vunpack.c.h.b16 %v3567
    %v3879 = vunpack.c.l.b16 %v3568
    %v3880 = vunpack.c.h.b16 %v3568
    %v3881 = vunpack.c.l.b16 %v3569
    %v3882 = vunpack.c.h.b16 %v3569
    %v3883 = vunpack.c.l.b16 %v3570
    %v3884 = vunpack.c.h.b16 %v3570
    %v3885 = vunpack.c.l.b16 %v3571
    %v3886 = vunpack.c.h.b16 %v3571
    %v3887 = vunpack.c.l.b16 %v3572
    %v3888 = vunpack.c.h.b16 %v3572
    %v3889 = vunpack.c.l.b16 %v3573
    %v3890 = vunpack.c.h.b16 %v3573
    %v3891 = vunpack.c.l.b16 %v3574
    %v3892 = vunpack.c.h.b16 %v3574
    %v3893 = vunpack.c.l.b16 %v3575
    %v3894 = vunpack.c.h.b16 %v3575
    %v3895 = vunpack.c.l.b16 %v3576
    %v3896 = vunpack.c.h.b16 %v3576
    %v3897 = vunpack.c.l.b16 %v3577
    %v3898 = vunpack.c.h.b16 %v3577
    %v3899 = vunpack.c.l.b16 %v3578
    %v3900 = vunpack.c.h.b16 %v3578
    %v3901 = vunpack.c.l.b16 %v3579
    %v3902 = vunpack.c.h.b16 %v3579
    %v3903 = vunpack.c.l.b16 %v3580
    %v3904 = vunpack.c.h.b16 %v3580
    %v3905 = vunpack.c.l.b16 %v3581
    %v3906 = vunpack.c.h.b16 %v3581
    %v3907 = vunpack.c.l.b16 %v3582
    %v3908 = vunpack.c.h.b16 %v3582
    %v3909 = vunpack.c.l.b16 %v3583
    %v3910 = vunpack.c.h.b16 %v3583
    %v3911 = vunpack.c.l.b16 %v3584
    %v3912 = vunpack.c.h.b16 %v3584
    %v3913 = vunpack.c.l.b16 %v3585
    %v3914 = vunpack.c.h.b16 %v3585
    %v3915 = vunpack.c.l.b16 %v3586
    %v3916 = vunpack.c.h.b16 %v3586
    %v3917 = vunpack.c.l.b16 %v3587
    %v3918 = vunpack.c.h.b16 %v3587
    %v3919 = vunpack.c.l.b16 %v3588
    %v3920 = vunpack.c.h.b16 %v3588
    %v3921 = vunpack.c.l.b16 %v3589
    %v3922 = vunpack.c.h.b16 %v3589
    %v3923 = vunpack.c.l.b16 %v3590
    %v3924 = vunpack.c.h.b16 %v3590
    %v3925 = vunpack.c.l.b16 %v3591
    %v3926 = vunpack.c.h.b16 %v3591
    %v3927 = vunpack.c.l.b16 %v3592
    %v3928 = vunpack.c.h.b16 %v3592
    %v3929 = vunpack.c.l.b16 %v3593
    %v3930 = vunpack.c.h.b16 %v3593
    %v3931 = vunpack.c.l.b16 %v3594
    %v3932 = vunpack.c.h.b16 %v3594
    %v3933 = vunpack.c.l.b16 %v3595
    %v3934 = vunpack.c.h.b16 %v3595
    %v3935 = vunpack.c.l.b16 %v3596
    %v3936 = vunpack.c.h.b16 %v3596
    %v3937 = vunpack.c.l.b16 %v3597
    %v3938 = vunpack.c.h.b16 %v3597
    %v3939 = vunpack.c.l.b16 %v3598
    %v3940 = vunpack.c.h.b16 %v3598
    %v3941 = vunpack.c.l.b16 %v3599
    %v3942 = vunpack.c.h.b16 %v3599
    %v3943 = vunpack.c.l.b16 %v3600
    %v3944 = vunpack.c.h.b16 %v3600
    %v3945 = vunpack.c.l.b16 %v3601
    %v3946 = vunpack.c.h.b16 %v3601
    %v3947 = vunpack.c.l.b16 %v3602
    %v3948 = vunpack.c.h.b16 %v3602
    %v3949 = vunpack.c.l.b16 %v3603
    %v3950 = vunpack.c.h.b16 %v3603
    %v3951 = vunpack.c.l.b16 %v3604
    %v3952 = vunpack.c.h.b16 %v3604
    %v3953 = vunpack.c.l.b16 %v3605
    %v3954 = vunpack.c.h.b16 %v3605
    %v3955 = vunpack.c.l.b16 %v3606
    %v3956 = vunpack.c.h.b16 %v3606
    %v3957 = vunpack.c.l.b16 %v3607
    %v3958 = vunpack.c.h.b16 %v3607
    %v3959 = vunpack.c.l.b16 %v3608
    %v3960 = vunpack.c.h.b16 %v3608
    %v3961 = vunpack.c.l.b16 %v3609
    %v3962 = vunpack.c.h.b16 %v3609
    %v3963 = vunpack.c.l.b16 %v3610
    %v3964 = vunpack.c.h.b16 %v3610
    %v3965 = vunpack.c.l.b16 %v3611
    %v3966 = vunpack.c.h.b16 %v3611
    %v3967 = vunpack.c.l.b16 %v3612
    %v3968 = vunpack.c.h.b16 %v3612
    %v3969 = vunpack.c.l.b16 %v3613
    %v3970 = vunpack.c.h.b16 %v3613
    %v3971 = vunpack.c.l.b16 %v3614
    %v3972 = vunpack.c.h.b16 %v3614
    %v3973 = vunpack.c.l.b16 %v3615
    %v3974 = vunpack.c.h.b16 %v3615
    %v3975 = vunpack.c.l.b16 %v3616
    %v3976 = vunpack.c.h.b16 %v3616
    %v3977 = vunpack.c.l.b16 %v3617
    %v3978 = vunpack.c.h.b16 %v3617
    %v3979 = vunpack.c.l.b16 %v3618
    %v3980 = vunpack.c.h.b16 %v3618
    %v3981 = vunpack.c.l.b16 %v3619
    %v3982 = vunpack.c.h.b16 %v3619
    %v3983 = vunpack.c.l.b16 %v3620
    %v3984 = vunpack.c.h.b16 %v3620
    %v3985 = vunpack.c.l.b16 %v3621
    %v3986 = vunpack.c.h.b16 %v3621
    %v3987 = vunpack.c.l.b16 %v3622
    %v3988 = vunpack.c.h.b16 %v3622
    %v3989 = vunpack.c.l.b16 %v3623
    %v3990 = vunpack.c.h.b16 %v3623
    %v3991 = vunpack.c.l.b16 %v3624
    %v3992 = vunpack.c.h.b16 %v3624
    %v3993 = vunpack.c.l.b16 %v3625
    %v3994 = vunpack.c.h.b16 %v3625
    %v3995 = vunpack.c.l.b16 %v3626
    %v3996 = vunpack.c.h.b16 %v3626
    %v3997 = vunpack.c.l.b16 %v3627
    %v3998 = vunpack.c.h.b16 %v3627
    %v3999 = vunpack.c.l.b16 %v3628
    %v4000 = vunpack.c.h.b16 %v3628
    %v4001 = vunpack.c.l.b16 %v3629
    %v4002 = vunpack.c.h.b16 %v3629
    %v4003 = vunpack.c.l.b16 %v3630
    %v4004 = vunpack.c.h.b16 %v3630
    %v4005 = vunpack.c.l.b16 %v3631
    %v4006 = vunpack.c.h.b16 %v3631
    %v4007 = vunpack.c.l.b16 %v3632
    %v4008 = vunpack.c.h.b16 %v3632
    %v4009 = vunpack.c.l.b16 %v3633
    %v4010 = vunpack.c.h.b16 %v3633
    %v4011 = vunpack.c.l.b16 %v3634
    %v4012 = vunpack.c.h.b16 %v3634
    %v4013 = vunpack.c.l.b16 %v3635
    %v4014 = vunpack.c.h.b16 %v3635
    %v4015 = vunpack.c.l.b16 %v3636
    %v4016 = vunpack.c.h.b16 %v3636
    %v4017 = vunpack.c.l.b16 %v3637
    %v4018 = vunpack.c.h.b16 %v3637
    %v4019 = vunpack.c.l.b16 %v3638
    %v4020 = vunpack.c.h.b16 %v3638
    %v4021 = vunpack.c.l.b16 %v3639
    %v4022 = vunpack.c.h.b16 %v3639
    %v4023 = vunpack.c.l.b16 %v3640
    %v4024 = vunpack.c.h.b16 %v3640
    %v4025 = vunpack.c.l.b16 %v3641
    %v4026 = vunpack.c.h.b16 %v3641
    %v4027 = vunpack.c.l.b16 %v3642
    %v4028 = vunpack.c.h.b16 %v3642
    %v4029 = vunpack.c.l.b16 %v3643
    %v4030 = vunpack.c.h.b16 %v3643
    %v4031 = vunpack.c.l.b16 %v3644
    %v4032 = vunpack.c.h.b16 %v3644
    %v4033 = vunpack.c.l.b16 %v3645
    %v4034 = vunpack.c.h.b16 %v3645
    %v4035 = vunpack.c.l.b16 %v3646
    %v4036 = vunpack.c.h.b16 %v3646
    %v4037 = vunpack.c.l.b16 %v3647
    %v4038 = vunpack.c.h.b16 %v3647
    %v4039 = vunpack.c.l.b16 %v3648
    %v4040 = vunpack.c.h.b16 %v3648
    %v4041 = vunpack.c.l.b16 %v3649
    %v4042 = vunpack.c.h.b16 %v3649
    %v4043 = vunpack.c.l.b16 %v3650
    %v4044 = vunpack.c.h.b16 %v3650
    %v4045 = vunpack.c.l.b16 %v3651
    %v4046 = vunpack.c.h.b16 %v3651
    %v4047 = vunpack.c.l.b16 %v3652
    %v4048 = vunpack.c.h.b16 %v3652
    %v4049 = vunpack.c.l.b16 %v3653
    %v4050 = vunpack.c.h.b16 %v3653
    %v4051 = vunpack.c.l.b16 %v3654
    %v4052 = vunpack.c.h.b16 %v3654
    %v4053 = vunpack.c.l.b16 %v3655
    %v4054 = vunpack.c.h.b16 %v3655
    %v4055 = vunpack.c.l.b16 %v3656
    %v4056 = vunpack.c.h.b16 %v3656
    %v4057 = vunpack.c.l.b16 %v3657
    %v4058 = vunpack.c.h.b16 %v3657
    %v4059 = vunpack.c.l.b16 %v3658
    %v4060 = vunpack.c.h.b16 %v3658
    %v4061 = vunpack.c.l.b16 %v3659
    %v4062 = vunpack.c.h.b16 %v3659
    %v4063 = vunpack.c.l.b16 %v3660
    %v4064 = vunpack.c.h.b16 %v3660
    %v4065 = vunpack.c.l.b16 %v3661
    %v4066 = vunpack.c.h.b16 %v3661
    %v4067 = vunpack.c.l.b16 %v3662
    %v4068 = vunpack.c.h.b16 %v3662
    %v4069 = vunpack.c.l.b16 %v3663
    %v4070 = vunpack.c.h.b16 %v3663
    %v4071 = vunpack.c.l.b16 %v3664
    %v4072 = vunpack.c.h.b16 %v3664
    %v4073 = vunpack.c.l.b16 %v3665
    %v4074 = vunpack.c.h.b16 %v3665
    %v4075 = vunpack.c.l.b16 %v3666
    %v4076 = vunpack.c.h.b16 %v3666
    %v4077 = vunpack.c.l.b16 %v3667
    %v4078 = vunpack.c.h.b16 %v3667
    %v4079 = vunpack.c.l.b16 %v3668
    %v4080 = vunpack.c.h.b16 %v3668
    %v4081 = vunpack.c.l.b16 %v3669
    %v4082 = vunpack.c.h.b16 %v3669
    %v4083 = vunpack.c.l.b16 %v3670
    %v4084 = vunpack.c.h.b16 %v3670
    %v4085 = vunpack.c.l.b16 %v3671
    %v4086 = vunpack.c.h.b16 %v3671
    %v4087 = vunpack.c.l.b16 %v3672
    %v4088 = vunpack.c.h.b16 %v3672
    %v4089 = vunpack.c.l.b16 %v3673
    %v4090 = vunpack.c.h.b16 %v3673
    %v4091 = vunpack.c.l.b16 %v3674
    %v4092 = vunpack.c.h.b16 %v3674
    %v4093 = vunpack.c.l.b16 %v3675
    %v4094 = vunpack.c.h.b16 %v3675
    %v4095 = vunpack.c.l.b16 %v3676
    %v4096 = vunpack.c.h.b16 %v3676
    %v4097 = vunpack.c.l.b16 %v3677
    %v4098 = vunpack.c.h.b16 %v3677
    %v4099 = vunpack.c.l.b16 %v3678
    %v4100 = vunpack.c.h.b16 %v3678
    %v4101 = vunpack.c.l.b16 %v3679
    %v4102 = vunpack.c.h.b16 %v3679
    %v4103 = vunpack.c.l.b16 %v3680
    %v4104 = vunpack.c.h.b16 %v3680
    %v4105 = vunpack.c.l.b16 %v3681
    %v4106 = vunpack.c.h.b16 %v3681
    %v4107 = vunpack.c.l.b16 %v3682
    %v4108 = vunpack.c.h.b16 %v3682
    %v4109 = vunpack.c.l.b16 %v3683
    %v4110 = vunpack.c.h.b16 %v3683
    %v4111 = vunpack.c.l.b16 %v3684
    %v4112 = vunpack.c.h.b16 %v3684
    %v4113 = vunpack.c.l.b16 %v3685
    %v4114 = vunpack.c.h.b16 %v3685
    %v4115 = vunpack.c.l.b16 %v3686
    %v4116 = vunpack.c.h.b16 %v3686
    %v4117 = vunpack.c.l.b16 %v3687
    %v4118 = vunpack.c.h.b16 %v3687
    %v4119 = vunpack.c.l.b16 %v3688
    %v4120 = vunpack.c.h.b16 %v3688
    %v4121 = vpack.c.b16 %v3873, %v3865
    %v4122 = vpack.c.b16 %v3874, %v3866
    %v4123 = vpack.c.b16 %v3875, %v3867
    %v4124 = vpack.c.b16 %v3876, %v3868
    %v4125 = vpack.c.b16 %v3877, %v3869
    %v4126 = vpack.c.b16 %v3878, %v3870
    %v4127 = vpack.c.b16 %v3879, %v3871
    %v4128 = vpack.c.b16 %v3880, %v3872
    %v4129 = vpack.c.b16 %v3889, %v3881
    %v4130 = vpack.c.b16 %v3890, %v3882
    %v4131 = vpack.c.b16 %v3891, %v3883
    %v4132 = vpack.c.b16 %v3892, %v3884
    %v4133 = vpack.c.b16 %v3893, %v3885
    %v4134 = vpack.c.b16 %v3894, %v3886
    %v4135 = vpack.c.b16 %v3895, %v3887
    %v4136 = vpack.c.b16 %v3896, %v3888
    %v4137 = vpack.c.b16 %v3905, %v3897
    %v4138 = vpack.c.b16 %v3906, %v3898
    %v4139 = vpack.c.b16 %v3907, %v3899
    %v4140 = vpack.c.b16 %v3908, %v3900
    %v4141 = vpack.c.b16 %v3909, %v3901
    %v4142 = vpack.c.b16 %v3910, %v3902
    %v4143 = vpack.c.b16 %v3911, %v3903
    %v4144 = vpack.c.b16 %v3912, %v3904
    %v4145 = vpack.c.b16 %v3921, %v3913
    %v4146 = vpack.c.b16 %v3922, %v3914
    %v4147 = vpack.c.b16 %v3923, %v3915
    %v4148 = vpack.c.b16 %v3924, %v3916
    %v4149 = vpack.c.b16 %v3925, %v3917
    %v4150 = vpack.c.b16 %v3926, %v3918
    %v4151 = vpack.c.b16 %v3927, %v3919
    %v4152 = vpack.c.b16 %v3928, %v3920
    %v4153 = vpack.c.b16 %v3937, %v3929
    %v4154 = vpack.c.b16 %v3938, %v3930
    %v4155 = vpack.c.b16 %v3939, %v3931
    %v4156 = vpack.c.b16 %v3940, %v3932
    %v4157 = vpack.c.b16 %v3941, %v3933
    %v4158 = vpack.c.b16 %v3942, %v3934
    %v4159 = vpack.c.b16 %v3943, %v3935
    %v4160 = vpack.c.b16 %v3944, %v3936
    %v4161 = vpack.c.b16 %v3953, %v3945
    %v4162 = vpack.c.b16 %v3954, %v3946
    %v4163 = vpack.c.b16 %v3955, %v3947
    %v4164 = vpack.c.b16 %v3956, %v3948
    %v4165 = vpack.c.b16 %v3957, %v3949
    %v4166 = vpack.c.b16 %v3958, %v3950
    %v4167 = vpack.c.b16 %v3959, %v3951
    %v4168 = vpack.c.b16 %v3960, %v3952
    %v4169 = vpack.c.b16 %v3969, %v3961
    %v4170 = vpack.c.b16 %v3970, %v3962
    %v4171 = vpack.c.b16 %v3971, %v3963
    %v4172 = vpack.c.b16 %v3972, %v3964
    %v4173 = vpack.c.b16 %v3973, %v3965
    %v4174 = vpack.c.b16 %v3974, %v3966
    %v4175 = vpack.c.b16 %v3975, %v3967
    %v4176 = vpack.c.b16 %v3976, %v3968
    %v4177 = vpack.c.b16 %v3985, %v3977
    %v4178 = vpack.c.b16 %v3986, %v3978
    %v4179 = vpack.c.b16 %v3987, %v3979
    %v4180 = vpack.c.b16 %v3988, %v3980
    %v4181 = vpack.c.b16 %v3989, %v3981
    %v4182 = vpack.c.b16 %v3990, %v3982
    %v4183 = vpack.c.b16 %v3991, %v3983
    %v4184 = vpack.c.b16 %v3992, %v3984
    %v4185 = vpack.c.b16 %v4001, %v3993
    %v4186 = vpack.c.b16 %v4002, %v3994
    %v4187 = vpack.c.b16 %v4003, %v3995
    %v4188 = vpack.c.b16 %v4004, %v3996
    %v4189 = vpack.c.b16 %v4005, %v3997
    %v4190 = vpack.c.b16 %v4006, %v3998
    %v4191 = vpack.c.b16 %v4007, %v3999
    %v4192 = vpack.c.b16 %v4008, %v4000
    %v4193 = vpack.c.b16 %v4017, %v4009
    %v4194 = vpack.c.b16 %v4018, %v4010
    %v4195 = vpack.c.b16 %v4019, %v4011
    %v4196 = vpack.c.b16 %v4020, %v4012
    %v4197 = vpack.c.b16 %v4021, %v4013
    %v4198 = vpack.c.b16 %v4022, %v4014
    %v4199 = vpack.c.b16 %v4023, %v4015
    %v4200 = vpack.c.b16 %v4024, %v4016
    %v4201 = vpack.c.b16 %v4033, %v4025
    %v4202 = vpack.c.b16 %v4034, %v4026
    %v4203 = vpack.c.b16 %v4035, %v4027
    %v4204 = vpack.c.b16 %v4036, %v4028
    %v4205 = vpack.c.b16 %v4037, %v4029
    %v4206 = vpack.c.b16 %v4038, %v4030
    %v4207 = vpack.c.b16 %v4039, %v4031
    %v4208 = vpack.c.b16 %v4040, %v4032
    %v4209 = vpack.c.b16 %v4049, %v4041
    %v4210 = vpack.c.b16 %v4050, %v4042
    %v4211 = vpack.c.b16 %v4051, %v4043
    %v4212 = vpack.c.b16 %v4052, %v4044
    %v4213 = vpack.c.b16 %v4053, %v4045
    %v4214 = vpack.c.b16 %v4054, %v4046
    %v4215 = vpack.c.b16 %v4055, %v4047
    %v4216 = vpack.c.b16 %v4056, %v4048
    %v4217 = vpack.c.b16 %v4065, %v4057
    %v4218 = vpack.c.b16 %v4066, %v4058
    %v4219 = vpack.c.b16 %v4067, %v4059
    %v4220 = vpack.c.b16 %v4068, %v4060
    %v4221 = vpack.c.b16 %v4069, %v4061
    %v4222 = vpack.c.b16 %v4070, %v4062
    %v4223 = vpack.c.b16 %v4071, %v4063
    %v4224 = vpack.c.b16 %v4072, %v4064
    %v4225 = vpack.c.b16 %v4081, %v4073
    %v4226 = vpack.c.b16 %v4082, %v4074
    %v4227 = vpack.c.b16 %v4083, %v4075
    %v4228 = vpack.c.b16 %v4084, %v4076
    %v4229 = vpack.c.b16 %v4085, %v4077
    %v4230 = vpack.c.b16 %v4086, %v4078
    %v4231 = vpack.c.b16 %v4087, %v4079
    %v4232 = vpack.c.b16 %v4088, %v4080
    %v4233 = vpack.c.b16 %v4097, %v4089
    %v4234 = vpack.c.b16 %v4098, %v4090
    %v4235 = vpack.c.b16 %v4099, %v4091
    %v4236 = vpack.c.b16 %v4100, %v4092
    %v4237 = vpack.c.b16 %v4101, %v4093
    %v4238 = vpack.c.b16 %v4102, %v4094
    %v4239 = vpack.c.b16 %v4103, %v4095
    %v4240 = vpack.c.b16 %v4104, %v4096
    %v4241 = vpack.c.b16 %v4113, %v4105
    %v4242 = vpack.c.b16 %v4114, %v4106
    %v4243 = vpack.c.b16 %v4115, %v4107
    %v4244 = vpack.c.b16 %v4116, %v4108
    %v4245 = vpack.c.b16 %v4117, %v4109
    %v4246 = vpack.c.b16 %v4118, %v4110
    %v4247 = vpack.c.b16 %v4119, %v4111
    %v4248 = vpack.c.b16 %v4120, %v4112
    %4377 = vmatprep.subr.bf16.mxu0 %v4122
    %4378 = vmatpush1.bf16.msra.mxu0 %v4121
    %4379 = vmatprep.subr.bf16.mxu0 %v4130
    %4380 = vmatpush1.bf16.msra.mxu0 %v4129
    %4381 = vmatprep.subr.bf16.mxu0 %v4138
    %4382 = vmatpush1.bf16.msra.mxu0 %v4137
    %4383 = vmatprep.subr.bf16.mxu0 %v4146
    %4384 = vmatpush1.bf16.msra.mxu0 %v4145
    %4385 = vmatprep.subr.bf16.mxu0 %v4154
    %4386 = vmatpush1.bf16.msra.mxu0 %v4153
    %4387 = vmatprep.subr.bf16.mxu0 %v4162
    %4388 = vmatpush1.bf16.msra.mxu0 %v4161
    %4389 = vmatprep.subr.bf16.mxu0 %v4170
    %4390 = vmatpush1.bf16.msra.mxu0 %v4169
    %4391 = vmatprep.subr.bf16.mxu0 %v4178
    %4392 = vmatpush1.bf16.msra.mxu0 %v4177
    %4393 = vmatprep.subr.bf16.mxu0 %v4186
    %4394 = vmatpush1.bf16.msra.mxu0 %v4185
    %4395 = vmatprep.subr.bf16.mxu0 %v4194
    %4396 = vmatpush1.bf16.msra.mxu0 %v4193
    %4397 = vmatprep.subr.bf16.mxu0 %v4202
    %4398 = vmatpush1.bf16.msra.mxu0 %v4201
    %4399 = vmatprep.subr.bf16.mxu0 %v4210
    %4400 = vmatpush1.bf16.msra.mxu0 %v4209
    %4401 = vmatprep.subr.bf16.mxu0 %v4218
    %4402 = vmatpush1.bf16.msra.mxu0 %v4217
    %4403 = vmatprep.subr.bf16.mxu0 %v4226
    %4404 = vmatpush1.bf16.msra.mxu0 %v4225
    %4405 = vmatprep.subr.bf16.mxu0 %v4234
    %4406 = vmatpush1.bf16.msra.mxu0 %v4233
    %4407 = vmatprep.subr.bf16.mxu0 %v4242
    %4408 = vmatpush1.bf16.msra.mxu0 %v4241
    %4409 = vmatprep.mubr.bf16.mxu0 %v3690
    %4410 = vmatmul.mubr.bf16.gmra.mrb[0].mxu0 %v3689
    %v4411 = vpop.f32.mrb[0].mxu0
    %v4412 = vadd.f32 %v3700, %v4411
    %v4413 = vpop.f32.mrb[0].mxu0
    %v4414 = vadd.f32 %v3704, %v4413
    %v4415 = vpop.f32.mrb[0].mxu0
    %v4416 = vadd.f32 %v3700, %v4415
    %v4417 = vpop.f32.mrb[0].mxu0
    %v4418 = vadd.f32 %v3704, %v4417
    %4419 = vmatprep.mubr.bf16.mxu0 %v3692
    %4420 = vmatmul.mubr.bf16.gmra.mrb[0].mxu0 %v3691
    %v4421 = vpop.f32.mrb[0].mxu0
    %v4422 = vadd.f32 %v3700, %v4421
    %v4423 = vpop.f32.mrb[0].mxu0
    %v4424 = vadd.f32 %v3704, %v4423
    %v4425 = vpop.f32.mrb[0].mxu0
    %v4426 = vadd.f32 %v3700, %v4425
    %v4427 = vpop.f32.mrb[0].mxu0
    %v4428 = vadd.f32 %v3704, %v4427
    %4429 = vmatprep.mubr.bf16.mxu0 %v3694
    %4430 = vmatmul.mubr.bf16.gmra.mrb[0].mxu0 %v3693
    %v4431 = vpop.f32.mrb[0].mxu0
    %v4432 = vadd.f32 %v3700, %v4431
    %v4433 = vpop.f32.mrb[0].mxu0
    %v4434 = vadd.f32 %v3704, %v4433
    %v4435 = vpop.f32.mrb[0].mxu0
    %v4436 = vadd.f32 %v3700, %v4435
    %v4437 = vpop.f32.mrb[0].mxu0
    %v4438 = vadd.f32 %v3704, %v4437
    %4439 = vdwg.mxu0
    %4440 = vmatprep.subr.bf16.mxu0 %v4124
    %4441 = vmatpush1.bf16.msra.mxu0 %v4123
    %4442 = vmatprep.subr.bf16.mxu0 %v4132
    %4443 = vmatpush1.bf16.msra.mxu0 %v4131
    %4444 = vmatprep.subr.bf16.mxu0 %v4140
    %4445 = vmatpush1.bf16.msra.mxu0 %v4139
    %4446 = vmatprep.subr.bf16.mxu0 %v4148
    %4447 = vmatpush1.bf16.msra.mxu0 %v4147
    %4448 = vmatprep.subr.bf16.mxu0 %v4156
    %4449 = vmatpush1.bf16.msra.mxu0 %v4155
    %4450 = vmatprep.subr.bf16.mxu0 %v4164
    %4451 = vmatpush1.bf16.msra.mxu0 %v4163
    %4452 = vmatprep.subr.bf16.mxu0 %v4172
    %4453 = vmatpush1.bf16.msra.mxu0 %v4171
    %4454 = vmatprep.subr.bf16.mxu0 %v4180
    %4455 = vmatpush1.bf16.msra.mxu0 %v4179
    %4456 = vmatprep.subr.bf16.mxu0 %v4188
    %4457 = vmatpush1.bf16.msra.mxu0 %v4187
    %4458 = vmatprep.subr.bf16.mxu0 %v4196
    %4459 = vmatpush1.bf16.msra.mxu0 %v4195
    %4460 = vmatprep.subr.bf16.mxu0 %v4204
    %4461 = vmatpush1.bf16.msra.mxu0 %v4203
    %4462 = vmatprep.subr.bf16.mxu0 %v4212
    %4463 = vmatpush1.bf16.msra.mxu0 %v4211
    %4464 = vmatprep.subr.bf16.mxu0 %v4220
    %4465 = vmatpush1.bf16.msra.mxu0 %v4219
    %4466 = vmatprep.subr.bf16.mxu0 %v4228
    %4467 = vmatpush1.bf16.msra.mxu0 %v4227
    %4468 = vmatprep.subr.bf16.mxu0 %v4236
    %4469 = vmatpush1.bf16.msra.mxu0 %v4235
    %4470 = vmatprep.subr.bf16.mxu0 %v4244
    %4471 = vmatpush1.bf16.msra.mxu0 %v4243
    %4472 = vmatprep.mubr.bf16.mxu0 %v3690
    %4473 = vmatmul.mubr.bf16.gmra.mrb[0].mxu0 %v3689
    %v4474 = vpop.f32.mrb[0].mxu0
    %v4475 = vadd.f32 %v3708, %v4474
    %v4476 = vpop.f32.mrb[0].mxu0
    %v4477 = vadd.f32 %v3712, %v4476
    %v4478 = vpop.f32.mrb[0].mxu0
    %v4479 = vadd.f32 %v3708, %v4478
    %v4480 = vpop.f32.mrb[0].mxu0
    %v4481 = vadd.f32 %v3712, %v4480
    %4482 = vmatprep.mubr.bf16.mxu0 %v3692
    %4483 = vmatmul.mubr.bf16.gmra.mrb[0].mxu0 %v3691
    %v4484 = vpop.f32.mrb[0].mxu0
    %v4485 = vadd.f32 %v3708, %v4484
    %v4486 = vpop.f32.mrb[0].mxu0
    %v4487 = vadd.f32 %v3712, %v4486
    %v4488 = vpop.f32.mrb[0].mxu0
    %v4489 = vadd.f32 %v3708, %v4488
    %v4490 = vpop.f32.mrb[0].mxu0
    %v4491 = vadd.f32 %v3712, %v4490
    %4492 = vmatprep.mubr.bf16.mxu0 %v3694
    %4493 = vmatmul.mubr.bf16.gmra.mrb[0].mxu0 %v3693
    %v4494 = vpop.f32.mrb[0].mxu0
    %v4495 = vadd.f32 %v3708, %v4494
    %v4496 = vpop.f32.mrb[0].mxu0
    %v4497 = vadd.f32 %v3712, %v4496
    %v4498 = vpop.f32.mrb[0].mxu0
    %v4499 = vadd.f32 %v3708, %v4498
    %v4500 = vpop.f32.mrb[0].mxu0
    %v4501 = vadd.f32 %v3712, %v4500
    %4502 = vdwg.mxu0
    %4503 = vmatprep.subr.bf16.mxu0 %v4126
    %4504 = vmatpush1.bf16.msra.mxu0 %v4125
    %4505 = vmatprep.subr.bf16.mxu0 %v4134
    %4506 = vmatpush1.bf16.msra.mxu0 %v4133
    %4507 = vmatprep.subr.bf16.mxu0 %v4142
    %4508 = vmatpush1.bf16.msra.mxu0 %v4141
    %4509 = vmatprep.subr.bf16.mxu0 %v4150
    %4510 = vmatpush1.bf16.msra.mxu0 %v4149
    %4511 = vmatprep.subr.bf16.mxu0 %v4158
    %4512 = vmatpush1.bf16.msra.mxu0 %v4157
    %4513 = vmatprep.subr.bf16.mxu0 %v4166
    %4514 = vmatpush1.bf16.msra.mxu0 %v4165
    %4515 = vmatprep.subr.bf16.mxu0 %v4174
    %4516 = vmatpush1.bf16.msra.mxu0 %v4173
    %4517 = vmatprep.subr.bf16.mxu0 %v4182
    %4518 = vmatpush1.bf16.msra.mxu0 %v4181
    %4519 = vmatprep.subr.bf16.mxu0 %v4190
    %4520 = vmatpush1.bf16.msra.mxu0 %v4189
    %4521 = vmatprep.subr.bf16.mxu0 %v4198
    %4522 = vmatpush1.bf16.msra.mxu0 %v4197
    %4523 = vmatprep.subr.bf16.mxu0 %v4206
    %4524 = vmatpush1.bf16.msra.mxu0 %v4205
    %4525 = vmatprep.subr.bf16.mxu0 %v4214
    %4526 = vmatpush1.bf16.msra.mxu0 %v4213
    %4527 = vmatprep.subr.bf16.mxu0 %v4222
    %4528 = vmatpush1.bf16.msra.mxu0 %v4221
    %4529 = vmatprep.subr.bf16.mxu0 %v4230
    %4530 = vmatpush1.bf16.msra.mxu0 %v4229
    %4531 = vmatprep.subr.bf16.mxu0 %v4238
    %4532 = vmatpush1.bf16.msra.mxu0 %v4237
    %4533 = vmatprep.subr.bf16.mxu0 %v4246
    %4534 = vmatpush1.bf16.msra.mxu0 %v4245
    %4535 = vmatprep.mubr.bf16.mxu0 %v3690
    %4536 = vmatmul.mubr.bf16.gmra.mrb[0].mxu0 %v3689
    %v4537 = vpop.f32.mrb[0].mxu0
    %v4538 = vadd.f32 %v3716, %v4537
    %v4539 = vpop.f32.mrb[0].mxu0
    %v4540 = vadd.f32 %v3720, %v4539
    %v4541 = vpop.f32.mrb[0].mxu0
    %v4542 = vadd.f32 %v3716, %v4541
    %v4543 = vpop.f32.mrb[0].mxu0
    %v4544 = vadd.f32 %v3720, %v4543
    %4545 = vmatprep.mubr.bf16.mxu0 %v3692
    %4546 = vmatmul.mubr.bf16.gmra.mrb[0].mxu0 %v3691
    %v4547 = vpop.f32.mrb[0].mxu0
    %v4548 = vadd.f32 %v3716, %v4547
    %v4549 = vpop.f32.mrb[0].mxu0
    %v4550 = vadd.f32 %v3720, %v4549
    %v4551 = vpop.f32.mrb[0].mxu0
    %v4552 = vadd.f32 %v3716, %v4551
    %v4553 = vpop.f32.mrb[0].mxu0
    %v4554 = vadd.f32 %v3720, %v4553
    %4555 = vmatprep.mubr.bf16.mxu0 %v3694
    %4556 = vmatmul.mubr.bf16.gmra.mrb[0].mxu0 %v3693
    %v4557 = vpop.f32.mrb[0].mxu0
    %v4558 = vadd.f32 %v3716, %v4557
    %v4559 = vpop.f32.mrb[0].mxu0
    %v4560 = vadd.f32 %v3720, %v4559
    %v4561 = vpop.f32.mrb[0].mxu0
    %v4562 = vadd.f32 %v3716, %v4561
    %v4563 = vpop.f32.mrb[0].mxu0
    %v4564 = vadd.f32 %v3720, %v4563
    %4565 = vdwg.mxu0
    %4566 = vmatprep.subr.bf16.mxu0 %v4128
    %4567 = vmatpush1.bf16.msra.mxu0 %v4127
    %4568 = vmatprep.subr.bf16.mxu0 %v4136
    %4569 = vmatpush1.bf16.msra.mxu0 %v4135
    %4570 = vmatprep.subr.bf16.mxu0 %v4144
    %4571 = vmatpush1.bf16.msra.mxu0 %v4143
    %4572 = vmatprep.subr.bf16.mxu0 %v4152
    %4573 = vmatpush1.bf16.msra.mxu0 %v4151
    %4574 = vmatprep.subr.bf16.mxu0 %v4160
    %4575 = vmatpush1.bf16.msra.mxu0 %v4159
    %4576 = vmatprep.subr.bf16.mxu0 %v4168
    %4577 = vmatpush1.bf16.msra.mxu0 %v4167
    %4578 = vmatprep.subr.bf16.mxu0 %v4176
    %4579 = vmatpush1.bf16.msra.mxu0 %v4175
    %4580 = vmatprep.subr.bf16.mxu0 %v4184
    %4581 = vmatpush1.bf16.msra.mxu0 %v4183
    %4582 = vmatprep.subr.bf16.mxu0 %v4192
    %4583 = vmatpush1.bf16.msra.mxu0 %v4191
    %4584 = vmatprep.subr.bf16.mxu0 %v4200
    %4585 = vmatpush1.bf16.msra.mxu0 %v4199
    %4586 = vmatprep.subr.bf16.mxu0 %v4208
    %4587 = vmatpush1.bf16.msra.mxu0 %v4207
    %4588 = vmatprep.subr.bf16.mxu0 %v4216
    %4589 = vmatpush1.bf16.msra.mxu0 %v4215
    %4590 = vmatprep.subr.bf16.mxu0 %v4224
    %4591 = vmatpush1.bf16.msra.mxu0 %v4223
    %4592 = vmatprep.subr.bf16.mxu0 %v4232
    %4593 = vmatpush1.bf16.msra.mxu0 %v4231
    %4594 = vmatprep.subr.bf16.mxu0 %v4240
    %4595 = vmatpush1.bf16.msra.mxu0 %v4239
    %4596 = vmatprep.subr.bf16.mxu0 %v4248
    %4597 = vmatpush1.bf16.msra.mxu0 %v4247
    %4598 = vmatprep.mubr.bf16.mxu0 %v3690
    %4599 = vmatmul.mubr.bf16.gmra.mrb[0].mxu0 %v3689
    %v4600 = vpop.f32.mrb[0].mxu0
    %v4601 = vadd.f32 %v3724, %v4600
    %v4602 = vpop.f32.mrb[0].mxu0
    %v4603 = vadd.f32 %v3728, %v4602
    %v4604 = vpop.f32.mrb[0].mxu0
    %v4605 = vadd.f32 %v3724, %v4604
    %v4606 = vpop.f32.mrb[0].mxu0
    %v4607 = vadd.f32 %v3728, %v4606
    %4608 = vmatprep.mubr.bf16.mxu0 %v3692
    %4609 = vmatmul.mubr.bf16.gmra.mrb[0].mxu0 %v3691
    %v4610 = vpop.f32.mrb[0].mxu0
    %v4611 = vadd.f32 %v3724, %v4610
    %v4612 = vpop.f32.mrb[0].mxu0
    %v4613 = vadd.f32 %v3728, %v4612
    %v4614 = vpop.f32.mrb[0].mxu0
    %v4615 = vadd.f32 %v3724, %v4614
    %v4616 = vpop.f32.mrb[0].mxu0
    %v4617 = vadd.f32 %v3728, %v4616
    %4618 = vmatprep.mubr.bf16.mxu0 %v3694
    %4619 = vmatmul.mubr.bf16.gmra.mrb[0].mxu0 %v3693
    %v4620 = vpop.f32.mrb[0].mxu0
    %v4621 = vadd.f32 %v3724, %v4620
    %v4622 = vpop.f32.mrb[0].mxu0
    %v4623 = vadd.f32 %v3728, %v4622
    %v4624 = vpop.f32.mrb[0].mxu0
    %v4625 = vadd.f32 %v3724, %v4624
    %v4626 = vpop.f32.mrb[0].mxu0
    %v4627 = vadd.f32 %v3728, %v4626
    %4628 = vdwg.mxu0
    %v4629 = vld [vmem:[#allocation16] sm:$0xff]
    %v4630 = vld [vmem:[#allocation16 + $0x8] sm:$0xff]
    %v4631 = vld [vmem:[#allocation16 + $0x10] sm:$0xff]
    %v4632 = vld [vmem:[#allocation16 + $0x18] sm:$0xff]
    %v4633 = vld [vmem:[#allocation16 + $0x20] sm:$0xff]
    %v4634 = vld [vmem:[#allocation16 + $0x28] sm:$0xff]
    %v4635 = vld [vmem:[#allocation16 + $0x30] sm:$0xff]
    %v4636 = vld [vmem:[#allocation16 + $0x38] sm:$0xff]
    %v4637 = vld [vmem:[#allocation16 + $0x40] sm:$0xff]
    %v4638 = vld [vmem:[#allocation16 + $0x48] sm:$0xff]
    %v4639 = vld [vmem:[#allocation16 + $0x50] sm:$0xff]
    %v4640 = vld [vmem:[#allocation16 + $0x58] sm:$0xff]
    %v4641 = vld [vmem:[#allocation16 + $0x60] sm:$0xff]
    %v4642 = vld [vmem:[#allocation16 + $0x68] sm:$0xff]
    %v4643 = vld [vmem:[#allocation16 + $0x70] sm:$0xff]
    %v4644 = vld [vmem:[#allocation16 + $0x78] sm:$0xff]
    %v4645 = vld [vmem:[#allocation16 + $0x80] sm:$0xff]
    %v4646 = vld [vmem:[#allocation16 + $0x88] sm:$0xff]
    %v4647 = vld [vmem:[#allocation16 + $0x90] sm:$0xff]
    %v4648 = vld [vmem:[#allocation16 + $0x98] sm:$0xff]
    %v4649 = vld [vmem:[#allocation16 + $0xa0] sm:$0xff]
    %v4650 = vld [vmem:[#allocation16 + $0xa8] sm:$0xff]
    %v4651 = vld [vmem:[#allocation16 + $0xb0] sm:$0xff]
    %v4652 = vld [vmem:[#allocation16 + $0xb8] sm:$0xff]
    %v4653 = vld [vmem:[#allocation16 + $0xc0] sm:$0xff]
    %v4654 = vld [vmem:[#allocation16 + $0xc8] sm:$0xff]
    %v4655 = vld [vmem:[#allocation16 + $0xd0] sm:$0xff]
    %v4656 = vld [vmem:[#allocation16 + $0xd8] sm:$0xff]
    %v4657 = vld [vmem:[#allocation16 + $0xe0] sm:$0xff]
    %v4658 = vld [vmem:[#allocation16 + $0xe8] sm:$0xff]
    %v4659 = vld [vmem:[#allocation16 + $0xf0] sm:$0xff]
    %v4660 = vld [vmem:[#allocation16 + $0xf8] sm:$0xff]
    %v4661 = vld [vmem:[#allocation16 + $0x100] sm:$0xff]
    %v4662 = vld [vmem:[#allocation16 + $0x108] sm:$0xff]
    %v4663 = vld [vmem:[#allocation16 + $0x110] sm:$0xff]
    %v4664 = vld [vmem:[#allocation16 + $0x118] sm:$0xff]
    %v4665 = vld [vmem:[#allocation16 + $0x120] sm:$0xff]
    %v4666 = vld [vmem:[#allocation16 + $0x128] sm:$0xff]
    %v4667 = vld [vmem:[#allocation16 + $0x130] sm:$0xff]
    %v4668 = vld [vmem:[#allocation16 + $0x138] sm:$0xff]
    %v4669 = vld [vmem:[#allocation16 + $0x140] sm:$0xff]
    %v4670 = vld [vmem:[#allocation16 + $0x148] sm:$0xff]
    %v4671 = vld [vmem:[#allocation16 + $0x150] sm:$0xff]
    %v4672 = vld [vmem:[#allocation16 + $0x158] sm:$0xff]
    %v4673 = vld [vmem:[#allocation16 + $0x160] sm:$0xff]
    %v4674 = vld [vmem:[#allocation16 + $0x168] sm:$0xff]
    %v4675 = vld [vmem:[#allocation16 + $0x170] sm:$0xff]
    %v4676 = vld [vmem:[#allocation16 + $0x178] sm:$0xff]
    %v4677 = vld [vmem:[#allocation16 + $0x180] sm:$0xff]
    %v4678 = vld [vmem:[#allocation16 + $0x188] sm:$0xff]
    %v4679 = vld [vmem:[#allocation16 + $0x190] sm:$0xff]
    %v4680 = vld [vmem:[#allocation16 + $0x198] sm:$0xff]
    %v4681 = vld [vmem:[#allocation16 + $0x1a0] sm:$0xff]
    %v4682 = vld [vmem:[#allocation16 + $0x1a8] sm:$0xff]
    %v4683 = vld [vmem:[#allocation16 + $0x1b0] sm:$0xff]
    %v4684 = vld [vmem:[#allocation16 + $0x1b8] sm:$0xff]
    %v4685 = vld [vmem:[#allocation16 + $0x1c0] sm:$0xff]
    %v4686 = vld [vmem:[#allocation16 + $0x1c8] sm:$0xff]
    %v4687 = vld [vmem:[#allocation16 + $0x1d0] sm:$0xff]
    %v4688 = vld [vmem:[#allocation16 + $0x1d8] sm:$0xff]
    %v4689 = vld [vmem:[#allocation16 + $0x1e0] sm:$0xff]
    %v4690 = vld [vmem:[#allocation16 + $0x1e8] sm:$0xff]
    %v4691 = vld [vmem:[#allocation16 + $0x1f0] sm:$0xff]
    %v4692 = vld [vmem:[#allocation16 + $0x1f8] sm:$0xff]
    %v4693 = vld [vmem:[#allocation16 + $0x200] sm:$0xff]
    %v4694 = vld [vmem:[#allocation16 + $0x208] sm:$0xff]
    %v4695 = vld [vmem:[#allocation16 + $0x210] sm:$0xff]
    %v4696 = vld [vmem:[#allocation16 + $0x218] sm:$0xff]
    %v4697 = vld [vmem:[#allocation16 + $0x220] sm:$0xff]
    %v4698 = vld [vmem:[#allocation16 + $0x228] sm:$0xff]
    %v4699 = vld [vmem:[#allocation16 + $0x230] sm:$0xff]
    %v4700 = vld [vmem:[#allocation16 + $0x238] sm:$0xff]
    %v4701 = vld [vmem:[#allocation16 + $0x240] sm:$0xff]
    %v4702 = vld [vmem:[#allocation16 + $0x248] sm:$0xff]
    %v4703 = vld [vmem:[#allocation16 + $0x250] sm:$0xff]
    %v4704 = vld [vmem:[#allocation16 + $0x258] sm:$0xff]
    %v4705 = vld [vmem:[#allocation16 + $0x260] sm:$0xff]
    %v4706 = vld [vmem:[#allocation16 + $0x268] sm:$0xff]
    %v4707 = vld [vmem:[#allocation16 + $0x270] sm:$0xff]
    %v4708 = vld [vmem:[#allocation16 + $0x278] sm:$0xff]
    %v4709 = vld [vmem:[#allocation16 + $0x280] sm:$0xff]
    %v4710 = vld [vmem:[#allocation16 + $0x288] sm:$0xff]
    %v4711 = vld [vmem:[#allocation16 + $0x290] sm:$0xff]
    %v4712 = vld [vmem:[#allocation16 + $0x298] sm:$0xff]
    %v4713 = vld [vmem:[#allocation16 + $0x2a0] sm:$0xff]
    %v4714 = vld [vmem:[#allocation16 + $0x2a8] sm:$0xff]
    %v4715 = vld [vmem:[#allocation16 + $0x2b0] sm:$0xff]
    %v4716 = vld [vmem:[#allocation16 + $0x2b8] sm:$0xff]
    %v4717 = vld [vmem:[#allocation16 + $0x2c0] sm:$0xff]
    %v4718 = vld [vmem:[#allocation16 + $0x2c8] sm:$0xff]
    %v4719 = vld [vmem:[#allocation16 + $0x2d0] sm:$0xff]
    %v4720 = vld [vmem:[#allocation16 + $0x2d8] sm:$0xff]
    %v4721 = vld [vmem:[#allocation16 + $0x2e0] sm:$0xff]
    %v4722 = vld [vmem:[#allocation16 + $0x2e8] sm:$0xff]
    %v4723 = vld [vmem:[#allocation16 + $0x2f0] sm:$0xff]
    %v4724 = vld [vmem:[#allocation16 + $0x2f8] sm:$0xff]
    %v4725 = vld [vmem:[#allocation16 + $0x300] sm:$0xff]
    %v4726 = vld [vmem:[#allocation16 + $0x308] sm:$0xff]
    %v4727 = vld [vmem:[#allocation16 + $0x310] sm:$0xff]
    %v4728 = vld [vmem:[#allocation16 + $0x318] sm:$0xff]
    %v4729 = vld [vmem:[#allocation16 + $0x320] sm:$0xff]
    %v4730 = vld [vmem:[#allocation16 + $0x328] sm:$0xff]
    %v4731 = vld [vmem:[#allocation16 + $0x330] sm:$0xff]
    %v4732 = vld [vmem:[#allocation16 + $0x338] sm:$0xff]
    %v4733 = vld [vmem:[#allocation16 + $0x340] sm:$0xff]
    %v4734 = vld [vmem:[#allocation16 + $0x348] sm:$0xff]
    %v4735 = vld [vmem:[#allocation16 + $0x350] sm:$0xff]
    %v4736 = vld [vmem:[#allocation16 + $0x358] sm:$0xff]
    %v4737 = vld [vmem:[#allocation16 + $0x360] sm:$0xff]
    %v4738 = vld [vmem:[#allocation16 + $0x368] sm:$0xff]
    %v4739 = vld [vmem:[#allocation16 + $0x370] sm:$0xff]
    %v4740 = vld [vmem:[#allocation16 + $0x378] sm:$0xff]
    %v4741 = vld [vmem:[#allocation16 + $0x380] sm:$0xff]
    %v4742 = vld [vmem:[#allocation16 + $0x388] sm:$0xff]
    %v4743 = vld [vmem:[#allocation16 + $0x390] sm:$0xff]
    %v4744 = vld [vmem:[#allocation16 + $0x398] sm:$0xff]
    %v4745 = vld [vmem:[#allocation16 + $0x3a0] sm:$0xff]
    %v4746 = vld [vmem:[#allocation16 + $0x3a8] sm:$0xff]
    %v4747 = vld [vmem:[#allocation16 + $0x3b0] sm:$0xff]
    %v4748 = vld [vmem:[#allocation16 + $0x3b8] sm:$0xff]
    %v4749 = vld [vmem:[#allocation16 + $0x3c0] sm:$0xff]
    %v4750 = vld [vmem:[#allocation16 + $0x3c8] sm:$0xff]
    %v4751 = vld [vmem:[#allocation16 + $0x3d0] sm:$0xff]
    %v4752 = vld [vmem:[#allocation16 + $0x3d8] sm:$0xff]
    %v4753 = vld [vmem:[#allocation16 + $0x3e0] sm:$0xff]
    %v4754 = vld [vmem:[#allocation16 + $0x3e8] sm:$0xff]
    %v4755 = vld [vmem:[#allocation16 + $0x3f0] sm:$0xff]
    %v4756 = vld [vmem:[#allocation16 + $0x3f8] sm:$0xff]
    %4757 = vst [vmem:[#allocation4] sm:$0xff] 0.0
    %4758 = vst [vmem:[#allocation4 + $0x8] sm:$0xff] 0.0
    %4759 = vst [vmem:[#allocation4 + $0x10] sm:$0xff] 0.0
    %4760 = vst [vmem:[#allocation4 + $0x18] sm:$0xff] 0.0
    %v4761 = vld [vmem:[#allocation4] sm:$0xff]
    %v4762 = vld [vmem:[#allocation4 + $0x8] sm:$0xff]
    %v4763 = vld [vmem:[#allocation4 + $0x10] sm:$0xff]
    %v4764 = vld [vmem:[#allocation4 + $0x18] sm:$0xff]
    %v4765 = vpack.c.bf16 %v4763, %v4761
    %v4766 = vpack.c.bf16 %v4764, %v4762
    %v4895 = vunpack.c.l.b16 %v4629
    %v4896 = vunpack.c.h.b16 %v4629
    %v4897 = vunpack.c.l.b16 %v4630
    %v4898 = vunpack.c.h.b16 %v4630
    %v4899 = vunpack.c.l.b16 %v4631
    %v4900 = vunpack.c.h.b16 %v4631
    %v4901 = vunpack.c.l.b16 %v4632
    %v4902 = vunpack.c.h.b16 %v4632
    %v4903 = vunpack.c.l.b16 %v4633
    %v4904 = vunpack.c.h.b16 %v4633
    %v4905 = vunpack.c.l.b16 %v4634
    %v4906 = vunpack.c.h.b16 %v4634
    %v4907 = vunpack.c.l.b16 %v4635
    %v4908 = vunpack.c.h.b16 %v4635
    %v4909 = vunpack.c.l.b16 %v4636
    %v4910 = vunpack.c.h.b16 %v4636
    %v4911 = vunpack.c.l.b16 %v4637
    %v4912 = vunpack.c.h.b16 %v4637
    %v4913 = vunpack.c.l.b16 %v4638
    %v4914 = vunpack.c.h.b16 %v4638
    %v4915 = vunpack.c.l.b16 %v4639
    %v4916 = vunpack.c.h.b16 %v4639
    %v4917 = vunpack.c.l.b16 %v4640
    %v4918 = vunpack.c.h.b16 %v4640
    %v4919 = vunpack.c.l.b16 %v4641
    %v4920 = vunpack.c.h.b16 %v4641
    %v4921 = vunpack.c.l.b16 %v4642
    %v4922 = vunpack.c.h.b16 %v4642
    %v4923 = vunpack.c.l.b16 %v4643
    %v4924 = vunpack.c.h.b16 %v4643
    %v4925 = vunpack.c.l.b16 %v4644
    %v4926 = vunpack.c.h.b16 %v4644
    %v4927 = vunpack.c.l.b16 %v4645
    %v4928 = vunpack.c.h.b16 %v4645
    %v4929 = vunpack.c.l.b16 %v4646
    %v4930 = vunpack.c.h.b16 %v4646
    %v4931 = vunpack.c.l.b16 %v4647
    %v4932 = vunpack.c.h.b16 %v4647
    %v4933 = vunpack.c.l.b16 %v4648
    %v4934 = vunpack.c.h.b16 %v4648
    %v4935 = vunpack.c.l.b16 %v4649
    %v4936 = vunpack.c.h.b16 %v4649
    %v4937 = vunpack.c.l.b16 %v4650
    %v4938 = vunpack.c.h.b16 %v4650
    %v4939 = vunpack.c.l.b16 %v4651
    %v4940 = vunpack.c.h.b16 %v4651
    %v4941 = vunpack.c.l.b16 %v4652
    %v4942 = vunpack.c.h.b16 %v4652
    %v4943 = vunpack.c.l.b16 %v4653
    %v4944 = vunpack.c.h.b16 %v4653
    %v4945 = vunpack.c.l.b16 %v4654
    %v4946 = vunpack.c.h.b16 %v4654
    %v4947 = vunpack.c.l.b16 %v4655
    %v4948 = vunpack.c.h.b16 %v4655
    %v4949 = vunpack.c.l.b16 %v4656
    %v4950 = vunpack.c.h.b16 %v4656
    %v4951 = vunpack.c.l.b16 %v4657
    %v4952 = vunpack.c.h.b16 %v4657
    %v4953 = vunpack.c.l.b16 %v4658
    %v4954 = vunpack.c.h.b16 %v4658
    %v4955 = vunpack.c.l.b16 %v4659
    %v4956 = vunpack.c.h.b16 %v4659
    %v4957 = vunpack.c.l.b16 %v4660
    %v4958 = vunpack.c.h.b16 %v4660
    %v4959 = vunpack.c.l.b16 %v4661
    %v4960 = vunpack.c.h.b16 %v4661
    %v4961 = vunpack.c.l.b16 %v4662
    %v4962 = vunpack.c.h.b16 %v4662
    %v4963 = vunpack.c.l.b16 %v4663
    %v4964 = vunpack.c.h.b16 %v4663
    %v4965 = vunpack.c.l.b16 %v4664
    %v4966 = vunpack.c.h.b16 %v4664
    %v4967 = vunpack.c.l.b16 %v4665
    %v4968 = vunpack.c.h.b16 %v4665
    %v4969 = vunpack.c.l.b16 %v4666
    %v4970 = vunpack.c.h.b16 %v4666
    %v4971 = vunpack.c.l.b16 %v4667
    %v4972 = vunpack.c.h.b16 %v4667
    %v4973 = vunpack.c.l.b16 %v4668
    %v4974 = vunpack.c.h.b16 %v4668
    %v4975 = vunpack.c.l.b16 %v4669
    %v4976 = vunpack.c.h.b16 %v4669
    %v4977 = vunpack.c.l.b16 %v4670
    %v4978 = vunpack.c.h.b16 %v4670
    %v4979 = vunpack.c.l.b16 %v4671
    %v4980 = vunpack.c.h.b16 %v4671
    %v4981 = vunpack.c.l.b16 %v4672
    %v4982 = vunpack.c.h.b16 %v4672
    %v4983 = vunpack.c.l.b16 %v4673
    %v4984 = vunpack.c.h.b16 %v4673
    %v4985 = vunpack.c.l.b16 %v4674
    %v4986 = vunpack.c.h.b16 %v4674
    %v4987 = vunpack.c.l.b16 %v4675
    %v4988 = vunpack.c.h.b16 %v4675
    %v4989 = vunpack.c.l.b16 %v4676
    %v4990 = vunpack.c.h.b16 %v4676
    %v4991 = vunpack.c.l.b16 %v4677
    %v4992 = vunpack.c.h.b16 %v4677
    %v4993 = vunpack.c.l.b16 %v4678
    %v4994 = vunpack.c.h.b16 %v4678
    %v4995 = vunpack.c.l.b16 %v4679
    %v4996 = vunpack.c.h.b16 %v4679
    %v4997 = vunpack.c.l.b16 %v4680
    %v4998 = vunpack.c.h.b16 %v4680
    %v4999 = vunpack.c.l.b16 %v4681
    %v5000 = vunpack.c.h.b16 %v4681
    %v5001 = vunpack.c.l.b16 %v4682
    %v5002 = vunpack.c.h.b16 %v4682
    %v5003 = vunpack.c.l.b16 %v4683
    %v5004 = vunpack.c.h.b16 %v4683
    %v5005 = vunpack.c.l.b16 %v4684
    %v5006 = vunpack.c.h.b16 %v4684
    %v5007 = vunpack.c.l.b16 %v4685
    %v5008 = vunpack.c.h.b16 %v4685
    %v5009 = vunpack.c.l.b16 %v4686
    %v5010 = vunpack.c.h.b16 %v4686
    %v5011 = vunpack.c.l.b16 %v4687
    %v5012 = vunpack.c.h.b16 %v4687
    %v5013 = vunpack.c.l.b16 %v4688
    %v5014 = vunpack.c.h.b16 %v4688
    %v5015 = vunpack.c.l.b16 %v4689
    %v5016 = vunpack.c.h.b16 %v4689
    %v5017 = vunpack.c.l.b16 %v4690
    %v5018 = vunpack.c.h.b16 %v4690
    %v5019 = vunpack.c.l.b16 %v4691
    %v5020 = vunpack.c.h.b16 %v4691
    %v5021 = vunpack.c.l.b16 %v4692
    %v5022 = vunpack.c.h.b16 %v4692
    %v5023 = vunpack.c.l.b16 %v4693
    %v5024 = vunpack.c.h.b16 %v4693
    %v5025 = vunpack.c.l.b16 %v4694
    %v5026 = vunpack.c.h.b16 %v4694
    %v5027 = vunpack.c.l.b16 %v4695
    %v5028 = vunpack.c.h.b16 %v4695
    %v5029 = vunpack.c.l.b16 %v4696
    %v5030 = vunpack.c.h.b16 %v4696
    %v5031 = vunpack.c.l.b16 %v4697
    %v5032 = vunpack.c.h.b16 %v4697
    %v5033 = vunpack.c.l.b16 %v4698
    %v5034 = vunpack.c.h.b16 %v4698
    %v5035 = vunpack.c.l.b16 %v4699
    %v5036 = vunpack.c.h.b16 %v4699
    %v5037 = vunpack.c.l.b16 %v4700
    %v5038 = vunpack.c.h.b16 %v4700
    %v5039 = vunpack.c.l.b16 %v4701
    %v5040 = vunpack.c.h.b16 %v4701
    %v5041 = vunpack.c.l.b16 %v4702
    %v5042 = vunpack.c.h.b16 %v4702
    %v5043 = vunpack.c.l.b16 %v4703
    %v5044 = vunpack.c.h.b16 %v4703
    %v5045 = vunpack.c.l.b16 %v4704
    %v5046 = vunpack.c.h.b16 %v4704
    %v5047 = vunpack.c.l.b16 %v4705
    %v5048 = vunpack.c.h.b16 %v4705
    %v5049 = vunpack.c.l.b16 %v4706
    %v5050 = vunpack.c.h.b16 %v4706
    %v5051 = vunpack.c.l.b16 %v4707
    %v5052 = vunpack.c.h.b16 %v4707
    %v5053 = vunpack.c.l.b16 %v4708
    %v5054 = vunpack.c.h.b16 %v4708
    %v5055 = vunpack.c.l.b16 %v4709
    %v5056 = vunpack.c.h.b16 %v4709
    %v5057 = vunpack.c.l.b16 %v4710
    %v5058 = vunpack.c.h.b16 %v4710
    %v5059 = vunpack.c.l.b16 %v4711
    %v5060 = vunpack.c.h.b16 %v4711
    %v5061 = vunpack.c.l.b16 %v4712
    %v5062 = vunpack.c.h.b16 %v4712
    %v5063 = vunpack.c.l.b16 %v4713
    %v5064 = vunpack.c.h.b16 %v4713
    %v5065 = vunpack.c.l.b16 %v4714
    %v5066 = vunpack.c.h.b16 %v4714
    %v5067 = vunpack.c.l.b16 %v4715
    %v5068 = vunpack.c.h.b16 %v4715
    %v5069 = vunpack.c.l.b16 %v4716
    %v5070 = vunpack.c.h.b16 %v4716
    %v5071 = vunpack.c.l.b16 %v4717
    %v5072 = vunpack.c.h.b16 %v4717
    %v5073 = vunpack.c.l.b16 %v4718
    %v5074 = vunpack.c.h.b16 %v4718
    %v5075 = vunpack.c.l.b16 %v4719
    %v5076 = vunpack.c.h.b16 %v4719
    %v5077 = vunpack.c.l.b16 %v4720
    %v5078 = vunpack.c.h.b16 %v4720
    %v5079 = vunpack.c.l.b16 %v4721
    %v5080 = vunpack.c.h.b16 %v4721
    %v5081 = vunpack.c.l.b16 %v4722
    %v5082 = vunpack.c.h.b16 %v4722
    %v5083 = vunpack.c.l.b16 %v4723
    %v5084 = vunpack.c.h.b16 %v4723
    %v5085 = vunpack.c.l.b16 %v4724
    %v5086 = vunpack.c.h.b16 %v4724
    %v5087 = vunpack.c.l.b16 %v4725
    %v5088 = vunpack.c.h.b16 %v4725
    %v5089 = vunpack.c.l.b16 %v4726
    %v5090 = vunpack.c.h.b16 %v4726
    %v5091 = vunpack.c.l.b16 %v4727
    %v5092 = vunpack.c.h.b16 %v4727
    %v5093 = vunpack.c.l.b16 %v4728
    %v5094 = vunpack.c.h.b16 %v4728
    %v5095 = vunpack.c.l.b16 %v4729
    %v5096 = vunpack.c.h.b16 %v4729
    %v5097 = vunpack.c.l.b16 %v4730
    %v5098 = vunpack.c.h.b16 %v4730
    %v5099 = vunpack.c.l.b16 %v4731
    %v5100 = vunpack.c.h.b16 %v4731
    %v5101 = vunpack.c.l.b16 %v4732
    %v5102 = vunpack.c.h.b16 %v4732
    %v5103 = vunpack.c.l.b16 %v4733
    %v5104 = vunpack.c.h.b16 %v4733
    %v5105 = vunpack.c.l.b16 %v4734
    %v5106 = vunpack.c.h.b16 %v4734
    %v5107 = vunpack.c.l.b16 %v4735
    %v5108 = vunpack.c.h.b16 %v4735
    %v5109 = vunpack.c.l.b16 %v4736
    %v5110 = vunpack.c.h.b16 %v4736
    %v5111 = vunpack.c.l.b16 %v4737
    %v5112 = vunpack.c.h.b16 %v4737
    %v5113 = vunpack.c.l.b16 %v4738
    %v5114 = vunpack.c.h.b16 %v4738
    %v5115 = vunpack.c.l.b16 %v4739
    %v5116 = vunpack.c.h.b16 %v4739
    %v5117 = vunpack.c.l.b16 %v4740
    %v5118 = vunpack.c.h.b16 %v4740
    %v5119 = vunpack.c.l.b16 %v4741
    %v5120 = vunpack.c.h.b16 %v4741
    %v5121 = vunpack.c.l.b16 %v4742
    %v5122 = vunpack.c.h.b16 %v4742
    %v5123 = vunpack.c.l.b16 %v4743
    %v5124 = vunpack.c.h.b16 %v4743
    %v5125 = vunpack.c.l.b16 %v4744
    %v5126 = vunpack.c.h.b16 %v4744
    %v5127 = vunpack.c.l.b16 %v4745
    %v5128 = vunpack.c.h.b16 %v4745
    %v5129 = vunpack.c.l.b16 %v4746
    %v5130 = vunpack.c.h.b16 %v4746
    %v5131 = vunpack.c.l.b16 %v4747
    %v5132 = vunpack.c.h.b16 %v4747
    %v5133 = vunpack.c.l.b16 %v4748
    %v5134 = vunpack.c.h.b16 %v4748
    %v5135 = vunpack.c.l.b16 %v4749
    %v5136 = vunpack.c.h.b16 %v4749
    %v5137 = vunpack.c.l.b16 %v4750
    %v5138 = vunpack.c.h.b16 %v4750
    %v5139 = vunpack.c.l.b16 %v4751
    %v5140 = vunpack.c.h.b16 %v4751
    %v5141 = vunpack.c.l.b16 %v4752
    %v5142 = vunpack.c.h.b16 %v4752
    %v5143 = vunpack.c.l.b16 %v4753
    %v5144 = vunpack.c.h.b16 %v4753
    %v5145 = vunpack.c.l.b16 %v4754
    %v5146 = vunpack.c.h.b16 %v4754
    %v5147 = vunpack.c.l.b16 %v4755
    %v5148 = vunpack.c.h.b16 %v4755
    %v5149 = vunpack.c.l.b16 %v4756
    %v5150 = vunpack.c.h.b16 %v4756
    %v5151 = vpack.c.b16 %v4903, %v4895
    %v5152 = vpack.c.b16 %v4904, %v4896
    %v5153 = vpack.c.b16 %v4905, %v4897
    %v5154 = vpack.c.b16 %v4906, %v4898
    %v5155 = vpack.c.b16 %v4907, %v4899
    %v5156 = vpack.c.b16 %v4908, %v4900
    %v5157 = vpack.c.b16 %v4909, %v4901
    %v5158 = vpack.c.b16 %v4910, %v4902
    %v5159 = vpack.c.b16 %v4919, %v4911
    %v5160 = vpack.c.b16 %v4920, %v4912
    %v5161 = vpack.c.b16 %v4921, %v4913
    %v5162 = vpack.c.b16 %v4922, %v4914
    %v5163 = vpack.c.b16 %v4923, %v4915
    %v5164 = vpack.c.b16 %v4924, %v4916
    %v5165 = vpack.c.b16 %v4925, %v4917
    %v5166 = vpack.c.b16 %v4926, %v4918
    %v5167 = vpack.c.b16 %v4935, %v4927
    %v5168 = vpack.c.b16 %v4936, %v4928
    %v5169 = vpack.c.b16 %v4937, %v4929
    %v5170 = vpack.c.b16 %v4938, %v4930
    %v5171 = vpack.c.b16 %v4939, %v4931
    %v5172 = vpack.c.b16 %v4940, %v4932
    %v5173 = vpack.c.b16 %v4941, %v4933
    %v5174 = vpack.c.b16 %v4942, %v4934
    %v5175 = vpack.c.b16 %v4951, %v4943
    %v5176 = vpack.c.b16 %v4952, %v4944
    %v5177 = vpack.c.b16 %v4953, %v4945
    %v5178 = vpack.c.b16 %v4954, %v4946
    %v5179 = vpack.c.b16 %v4955, %v4947
    %v5180 = vpack.c.b16 %v4956, %v4948
    %v5181 = vpack.c.b16 %v4957, %v4949
    %v5182 = vpack.c.b16 %v4958, %v4950
    %v5183 = vpack.c.b16 %v4967, %v4959
    %v5184 = vpack.c.b16 %v4968, %v4960
    %v5185 = vpack.c.b16 %v4969, %v4961
    %v5186 = vpack.c.b16 %v4970, %v4962
    %v5187 = vpack.c.b16 %v4971, %v4963
    %v5188 = vpack.c.b16 %v4972, %v4964
    %v5189 = vpack.c.b16 %v4973, %v4965
    %v5190 = vpack.c.b16 %v4974, %v4966
    %v5191 = vpack.c.b16 %v4983, %v4975
    %v5192 = vpack.c.b16 %v4984, %v4976
    %v5193 = vpack.c.b16 %v4985, %v4977
    %v5194 = vpack.c.b16 %v4986, %v4978
    %v5195 = vpack.c.b16 %v4987, %v4979
    %v5196 = vpack.c.b16 %v4988, %v4980
    %v5197 = vpack.c.b16 %v4989, %v4981
    %v5198 = vpack.c.b16 %v4990, %v4982
    %v5199 = vpack.c.b16 %v4999, %v4991
    %v5200 = vpack.c.b16 %v5000, %v4992
    %v5201 = vpack.c.b16 %v5001, %v4993
    %v5202 = vpack.c.b16 %v5002, %v4994
    %v5203 = vpack.c.b16 %v5003, %v4995
    %v5204 = vpack.c.b16 %v5004, %v4996
    %v5205 = vpack.c.b16 %v5005, %v4997
    %v5206 = vpack.c.b16 %v5006, %v4998
    %v5207 = vpack.c.b16 %v5015, %v5007
    %v5208 = vpack.c.b16 %v5016, %v5008
    %v5209 = vpack.c.b16 %v5017, %v5009
    %v5210 = vpack.c.b16 %v5018, %v5010
    %v5211 = vpack.c.b16 %v5019, %v5011
    %v5212 = vpack.c.b16 %v5020, %v5012
    %v5213 = vpack.c.b16 %v5021, %v5013
    %v5214 = vpack.c.b16 %v5022, %v5014
    %v5215 = vpack.c.b16 %v5031, %v5023
    %v5216 = vpack.c.b16 %v5032, %v5024
    %v5217 = vpack.c.b16 %v5033, %v5025
    %v5218 = vpack.c.b16 %v5034, %v5026
    %v5219 = vpack.c.b16 %v5035, %v5027
    %v5220 = vpack.c.b16 %v5036, %v5028
    %v5221 = vpack.c.b16 %v5037, %v5029
    %v5222 = vpack.c.b16 %v5038, %v5030
    %v5223 = vpack.c.b16 %v5047, %v5039
    %v5224 = vpack.c.b16 %v5048, %v5040
    %v5225 = vpack.c.b16 %v5049, %v5041
    %v5226 = vpack.c.b16 %v5050, %v5042
    %v5227 = vpack.c.b16 %v5051, %v5043
    %v5228 = vpack.c.b16 %v5052, %v5044
    %v5229 = vpack.c.b16 %v5053, %v5045
    %v5230 = vpack.c.b16 %v5054, %v5046
    %v5231 = vpack.c.b16 %v5063, %v5055
    %v5232 = vpack.c.b16 %v5064, %v5056
    %v5233 = vpack.c.b16 %v5065, %v5057
    %v5234 = vpack.c.b16 %v5066, %v5058
    %v5235 = vpack.c.b16 %v5067, %v5059
    %v5236 = vpack.c.b16 %v5068, %v5060
    %v5237 = vpack.c.b16 %v5069, %v5061
    %v5238 = vpack.c.b16 %v5070, %v5062
    %v5239 = vpack.c.b16 %v5079, %v5071
    %v5240 = vpack.c.b16 %v5080, %v5072
    %v5241 = vpack.c.b16 %v5081, %v5073
    %v5242 = vpack.c.b16 %v5082, %v5074
    %v5243 = vpack.c.b16 %v5083, %v5075
    %v5244 = vpack.c.b16 %v5084, %v5076
    %v5245 = vpack.c.b16 %v5085, %v5077
    %v5246 = vpack.c.b16 %v5086, %v5078
    %v5247 = vpack.c.b16 %v5095, %v5087
    %v5248 = vpack.c.b16 %v5096, %v5088
    %v5249 = vpack.c.b16 %v5097, %v5089
    %v5250 = vpack.c.b16 %v5098, %v5090
    %v5251 = vpack.c.b16 %v5099, %v5091
    %v5252 = vpack.c.b16 %v5100, %v5092
    %v5253 = vpack.c.b16 %v5101, %v5093
    %v5254 = vpack.c.b16 %v5102, %v5094
    %v5255 = vpack.c.b16 %v5111, %v5103
    %v5256 = vpack.c.b16 %v5112, %v5104
    %v5257 = vpack.c.b16 %v5113, %v5105
    %v5258 = vpack.c.b16 %v5114, %v5106
    %v5259 = vpack.c.b16 %v5115, %v5107
    %v5260 = vpack.c.b16 %v5116, %v5108
    %v5261 = vpack.c.b16 %v5117, %v5109
    %v5262 = vpack.c.b16 %v5118, %v5110
    %v5263 = vpack.c.b16 %v5127, %v5119
    %v5264 = vpack.c.b16 %v5128, %v5120
    %v5265 = vpack.c.b16 %v5129, %v5121
    %v5266 = vpack.c.b16 %v5130, %v5122
    %v5267 = vpack.c.b16 %v5131, %v5123
    %v5268 = vpack.c.b16 %v5132, %v5124
    %v5269 = vpack.c.b16 %v5133, %v5125
    %v5270 = vpack.c.b16 %v5134, %v5126
    %v5271 = vpack.c.b16 %v5143, %v5135
    %v5272 = vpack.c.b16 %v5144, %v5136
    %v5273 = vpack.c.b16 %v5145, %v5137
    %v5274 = vpack.c.b16 %v5146, %v5138
    %v5275 = vpack.c.b16 %v5147, %v5139
    %v5276 = vpack.c.b16 %v5148, %v5140
    %v5277 = vpack.c.b16 %v5149, %v5141
    %v5278 = vpack.c.b16 %v5150, %v5142
    %5407 = vmatprep.subr.bf16.mxu0 %v5152
    %5408 = vmatpush1.bf16.msra.mxu0 %v5151
    %5409 = vmatprep.subr.bf16.mxu0 %v5160
    %5410 = vmatpush1.bf16.msra.mxu0 %v5159
    %5411 = vmatprep.subr.bf16.mxu0 %v5168
    %5412 = vmatpush1.bf16.msra.mxu0 %v5167
    %5413 = vmatprep.subr.bf16.mxu0 %v5176
    %5414 = vmatpush1.bf16.msra.mxu0 %v5175
    %5415 = vmatprep.subr.bf16.mxu0 %v5184
    %5416 = vmatpush1.bf16.msra.mxu0 %v5183
    %5417 = vmatprep.subr.bf16.mxu0 %v5192
    %5418 = vmatpush1.bf16.msra.mxu0 %v5191
    %5419 = vmatprep.subr.bf16.mxu0 %v5200
    %5420 = vmatpush1.bf16.msra.mxu0 %v5199
    %5421 = vmatprep.subr.bf16.mxu0 %v5208
    %5422 = vmatpush1.bf16.msra.mxu0 %v5207
    %5423 = vmatprep.subr.bf16.mxu0 %v5216
    %5424 = vmatpush1.bf16.msra.mxu0 %v5215
    %5425 = vmatprep.subr.bf16.mxu0 %v5224
    %5426 = vmatpush1.bf16.msra.mxu0 %v5223
    %5427 = vmatprep.subr.bf16.mxu0 %v5232
    %5428 = vmatpush1.bf16.msra.mxu0 %v5231
    %5429 = vmatprep.subr.bf16.mxu0 %v5240
    %5430 = vmatpush1.bf16.msra.mxu0 %v5239
    %5431 = vmatprep.subr.bf16.mxu0 %v5248
    %5432 = vmatpush1.bf16.msra.mxu0 %v5247
    %5433 = vmatprep.subr.bf16.mxu0 %v5256
    %5434 = vmatpush1.bf16.msra.mxu0 %v5255
    %5435 = vmatprep.subr.bf16.mxu0 %v5264
    %5436 = vmatpush1.bf16.msra.mxu0 %v5263
    %5437 = vmatprep.subr.bf16.mxu0 %v5272
    %5438 = vmatpush1.bf16.msra.mxu0 %v5271
    %5439 = vmatprep.mubr.bf16.mxu0 %v4766
    %5440 = vmatmul.mubr.bf16.gmra.mrb[0].mxu0 %v4765
    %v5441 = vpop.f32.mrb[0].mxu0
    %v5442 = vadd.f32 0.0, %v5441
    %v5443 = vpop.f32.mrb[0].mxu0
    %v5444 = vadd.f32 0.0, %v5443
    %v5445 = vpop.f32.mrb[0].mxu0
    %v5446 = vadd.f32 0.0, %v5445
    %v5447 = vpop.f32.mrb[0].mxu0
    %v5448 = vadd.f32 0.0, %v5447
    %5449 = vdwg.mxu0
    %5450 = vmatprep.subr.bf16.mxu0 %v5154
    %5451 = vmatpush1.bf16.msra.mxu0 %v5153
    %5452 = vmatprep.subr.bf16.mxu0 %v5162
    %5453 = vmatpush1.bf16.msra.mxu0 %v5161
    %5454 = vmatprep.subr.bf16.mxu0 %v5170
    %5455 = vmatpush1.bf16.msra.mxu0 %v5169
    %5456 = vmatprep.subr.bf16.mxu0 %v5178
    %5457 = vmatpush1.bf16.msra.mxu0 %v5177
    %5458 = vmatprep.subr.bf16.mxu0 %v5186
    %5459 = vmatpush1.bf16.msra.mxu0 %v5185
    %5460 = vmatprep.subr.bf16.mxu0 %v5194
    %5461 = vmatpush1.bf16.msra.mxu0 %v5193
    %5462 = vmatprep.subr.bf16.mxu0 %v5202
    %5463 = vmatpush1.bf16.msra.mxu0 %v5201
    %5464 = vmatprep.subr.bf16.mxu0 %v5210
    %5465 = vmatpush1.bf16.msra.mxu0 %v5209
    %5466 = vmatprep.subr.bf16.mxu0 %v5218
    %5467 = vmatpush1.bf16.msra.mxu0 %v5217
    %5468 = vmatprep.subr.bf16.mxu0 %v5226
    %5469 = vmatpush1.bf16.msra.mxu0 %v5225
    %5470 = vmatprep.subr.bf16.mxu0 %v5234
    %5471 = vmatpush1.bf16.msra.mxu0 %v5233
    %5472 = vmatprep.subr.bf16.mxu0 %v5242
    %5473 = vmatpush1.bf16.msra.mxu0 %v5241
    %5474 = vmatprep.subr.bf16.mxu0 %v5250
    %5475 = vmatpush1.bf16.msra.mxu0 %v5249
    %5476 = vmatprep.subr.bf16.mxu0 %v5258
    %5477 = vmatpush1.bf16.msra.mxu0 %v5257
    %5478 = vmatprep.subr.bf16.mxu0 %v5266
    %5479 = vmatpush1.bf16.msra.mxu0 %v5265
    %5480 = vmatprep.subr.bf16.mxu0 %v5274
    %5481 = vmatpush1.bf16.msra.mxu0 %v5273
    %5482 = vmatprep.mubr.bf16.mxu0 %v4766
    %5483 = vmatmul.mubr.bf16.gmra.mrb[0].mxu0 %v4765
    %v5484 = vpop.f32.mrb[0].mxu0
    %v5485 = vadd.f32 0.0, %v5484
    %v5486 = vpop.f32.mrb[0].mxu0
    %v5487 = vadd.f32 0.0, %v5486
    %v5488 = vpop.f32.mrb[0].mxu0
    %v5489 = vadd.f32 0.0, %v5488
    %v5490 = vpop.f32.mrb[0].mxu0
    %v5491 = vadd.f32 0.0, %v5490
    %5492 = vdwg.mxu0
    %5493 = vmatprep.subr.bf16.mxu0 %v5156
    %5494 = vmatpush1.bf16.msra.mxu0 %v5155
    %5495 = vmatprep.subr.bf16.mxu0 %v5164
    %5496 = vmatpush1.bf16.msra.mxu0 %v5163
    %5497 = vmatprep.subr.bf16.mxu0 %v5172
    %5498 = vmatpush1.bf16.msra.mxu0 %v5171
    %5499 = vmatprep.subr.bf16.mxu0 %v5180
    %5500 = vmatpush1.bf16.msra.mxu0 %v5179
    %5501 = vmatprep.subr.bf16.mxu0 %v5188
    %5502 = vmatpush1.bf16.msra.mxu0 %v5187
    %5503 = vmatprep.subr.bf16.mxu0 %v5196
    %5504 = vmatpush1.bf16.msra.mxu0 %v5195
    %5505 = vmatprep.subr.bf16.mxu0 %v5204
    %5506 = vmatpush1.bf16.msra.mxu0 %v5203
    %5507 = vmatprep.subr.bf16.mxu0 %v5212
    %5508 = vmatpush1.bf16.msra.mxu0 %v5211
    %5509 = vmatprep.subr.bf16.mxu0 %v5220
    %5510 = vmatpush1.bf16.msra.mxu0 %v5219
    %5511 = vmatprep.subr.bf16.mxu0 %v5228
    %5512 = vmatpush1.bf16.msra.mxu0 %v5227
    %5513 = vmatprep.subr.bf16.mxu0 %v5236
    %5514 = vmatpush1.bf16.msra.mxu0 %v5235
    %5515 = vmatprep.subr.bf16.mxu0 %v5244
    %5516 = vmatpush1.bf16.msra.mxu0 %v5243
    %5517 = vmatprep.subr.bf16.mxu0 %v5252
    %5518 = vmatpush1.bf16.msra.mxu0 %v5251
    %5519 = vmatprep.subr.bf16.mxu0 %v5260
    %5520 = vmatpush1.bf16.msra.mxu0 %v5259
    %5521 = vmatprep.subr.bf16.mxu0 %v5268
    %5522 = vmatpush1.bf16.msra.mxu0 %v5267
    %5523 = vmatprep.subr.bf16.mxu0 %v5276
    %5524 = vmatpush1.bf16.msra.mxu0 %v5275
    %5525 = vmatprep.mubr.bf16.mxu0 %v4766
    %5526 = vmatmul.mubr.bf16.gmra.mrb[0].mxu0 %v4765
    %v5527 = vpop.f32.mrb[0].mxu0
    %v5528 = vadd.f32 0.0, %v5527
    %v5529 = vpop.f32.mrb[0].mxu0
    %v5530 = vadd.f32 0.0, %v5529
    %v5531 = vpop.f32.mrb[0].mxu0
    %v5532 = vadd.f32 0.0, %v5531
    %v5533 = vpop.f32.mrb[0].mxu0
    %v5534 = vadd.f32 0.0, %v5533
    %5535 = vdwg.mxu0
    %5536 = vmatprep.subr.bf16.mxu0 %v5158
    %5537 = vmatpush1.bf16.msra.mxu0 %v5157
    %5538 = vmatprep.subr.bf16.mxu0 %v5166
    %5539 = vmatpush1.bf16.msra.mxu0 %v5165
    %5540 = vmatprep.subr.bf16.mxu0 %v5174
    %5541 = vmatpush1.bf16.msra.mxu0 %v5173
    %5542 = vmatprep.subr.bf16.mxu0 %v5182
    %5543 = vmatpush1.bf16.msra.mxu0 %v5181
    %5544 = vmatprep.subr.bf16.mxu0 %v5190
    %5545 = vmatpush1.bf16.msra.mxu0 %v5189
    %5546 = vmatprep.subr.bf16.mxu0 %v5198
    %5547 = vmatpush1.bf16.msra.mxu0 %v5197
    %5548 = vmatprep.subr.bf16.mxu0 %v5206
    %5549 = vmatpush1.bf16.msra.mxu0 %v5205
    %5550 = vmatprep.subr.bf16.mxu0 %v5214
    %5551 = vmatpush1.bf16.msra.mxu0 %v5213
    %5552 = vmatprep.subr.bf16.mxu0 %v5222
    %5553 = vmatpush1.bf16.msra.mxu0 %v5221
    %5554 = vmatprep.subr.bf16.mxu0 %v5230
    %5555 = vmatpush1.bf16.msra.mxu0 %v5229
    %5556 = vmatprep.subr.bf16.mxu0 %v5238
    %5557 = vmatpush1.bf16.msra.mxu0 %v5237
    %5558 = vmatprep.subr.bf16.mxu0 %v5246
    %5559 = vmatpush1.bf16.msra.mxu0 %v5245
    %5560 = vmatprep.subr.bf16.mxu0 %v5254
    %5561 = vmatpush1.bf16.msra.mxu0 %v5253
    %5562 = vmatprep.subr.bf16.mxu0 %v5262
    %5563 = vmatpush1.bf16.msra.mxu0 %v5261
    %5564 = vmatprep.subr.bf16.mxu0 %v5270
    %5565 = vmatpush1.bf16.msra.mxu0 %v5269
    %5566 = vmatprep.subr.bf16.mxu0 %v5278
    %5567 = vmatpush1.bf16.msra.mxu0 %v5277
    %5568 = vmatprep.mubr.bf16.mxu0 %v4766
    %5569 = vmatmul.mubr.bf16.gmra.mrb[0].mxu0 %v4765
    %v5570 = vpop.f32.mrb[0].mxu0
    %v5571 = vadd.f32 0.0, %v5570
    %v5572 = vpop.f32.mrb[0].mxu0
    %v5573 = vadd.f32 0.0, %v5572
    %v5574 = vpop.f32.mrb[0].mxu0
    %v5575 = vadd.f32 0.0, %v5574
    %v5576 = vpop.f32.mrb[0].mxu0
    %v5577 = vadd.f32 0.0, %v5576
    %5578 = vdwg.mxu0
    %v5579 = vadd.f32 %v4412, %v5442
    %v5580 = vadd.f32 %v4414, %v5444
    %v5581 = vadd.f32 %v4475, %v5485
    %v5582 = vadd.f32 %v4477, %v5487
    %v5583 = vadd.f32 %v4416, %v5446
    %v5584 = vadd.f32 %v4418, %v5448
    %v5585 = vadd.f32 %v4479, %v5489
    %v5586 = vadd.f32 %v4481, %v5491
    %v5587 = vadd.f32 %v4558, %v5528
    %v5588 = vadd.f32 %v4560, %v5530
    %v5589 = vadd.f32 %v4621, %v5571
    %v5590 = vadd.f32 %v4623, %v5573
    %v5591 = vadd.f32 %v4562, %v5532
    %v5592 = vadd.f32 %v4564, %v5534
    %v5593 = vadd.f32 %v4625, %v5575
    %v5594 = vadd.f32 %v4627, %v5577
    %v5595 = vmul.f32 %v5579, 0.5
    %v5596 = vmul.f32 %v5583, 0.5
    %v5597 = vtanh.pop %v5595
    %v5598 = vtanh.pop %v5596
    %v5599 = vadd.f32 %v5597, 1.0
    %v5600 = vadd.f32 %v5598, 1.0
    %v5601 = vmul.f32 %v5599, 0.5
    %v5602 = vmul.f32 %v5600, 0.5
    %v5603 = vmul.f32 %v5580, 0.5
    %v5604 = vmul.f32 %v5584, 0.5
    %v5605 = vtanh.pop %v5603
    %v5606 = vtanh.pop %v5604
    %v5607 = vadd.f32 %v5605, 1.0
    %v5608 = vadd.f32 %v5606, 1.0
    %v5609 = vmul.f32 %v5607, 0.5
    %v5610 = vmul.f32 %v5608, 0.5
    %v5611 = vtanh.pop %v5581
    %v5612 = vtanh.pop %v5585
    %v5613 = vmul.f32 %v5582, 0.5
    %v5614 = vmul.f32 %v5586, 0.5
    %v5615 = vtanh.pop %v5613
    %v5616 = vtanh.pop %v5614
    %v5617 = vadd.f32 %v5615, 1.0
    %v5618 = vadd.f32 %v5616, 1.0
    %v5619 = vmul.f32 %v5617, 0.5
    %v5620 = vmul.f32 %v5618, 0.5
    %v5621 = vmul.f32 %v5609, 0.0
    %v5622 = vmul.f32 %v5610, 0.0
    %v5623 = vmul.f32 %v5601, %v5611
    %v5624 = vmul.f32 %v5602, %v5612
    %v5625 = vadd.f32 %v5621, %v5623
    %v5626 = vadd.f32 %v5622, %v5624
    %v5627 = vtanh.pop %v5625
    %v5628 = vtanh.pop %v5626
    %v5629 = vmul.f32 %v5619, %v5627
    %v5630 = vmul.f32 %v5620, %v5628
    %v5631 = vmul.f32 %v5587, 0.5
    %v5632 = vmul.f32 %v5591, 0.5
    %v5633 = vtanh.pop %v5631
    %v5634 = vtanh.pop %v5632
    %v5635 = vadd.f32 %v5633, 1.0
    %v5636 = vadd.f32 %v5634, 1.0
    %v5637 = vmul.f32 %v5635, 0.5
    %v5638 = vmul.f32 %v5636, 0.5
    %v5639 = vmul.f32 %v5588, 0.5
    %v5640 = vmul.f32 %v5592, 0.5
    %v5641 = vtanh.pop %v5639
    %v5642 = vtanh.pop %v5640
    %v5643 = vadd.f32 %v5641, 1.0
    %v5644 = vadd.f32 %v5642, 1.0
    %v5645 = vmul.f32 %v5643, 0.5
    %v5646 = vmul.f32 %v5644, 0.5
    %v5647 = vtanh.pop %v5589
    %v5648 = vtanh.pop %v5593
    %v5649 = vmul.f32 %v5590, 0.5
    %v5650 = vmul.f32 %v5594, 0.5
    %v5651 = vtanh.pop %v5649
    %v5652 = vtanh.pop %v5650
    %v5653 = vadd.f32 %v5651, 1.0
    %v5654 = vadd.f32 %v5652, 1.0
    %v5655 = vmul.f32 %v5653, 0.5
    %v5656 = vmul.f32 %v5654, 0.5
    %v5657 = vmul.f32 %v5645, 0.0
    %v5658 = vmul.f32 %v5646, 0.0
    %v5659 = vmul.f32 %v5637, %v5647
    %v5660 = vmul.f32 %v5638, %v5648
    %v5661 = vadd.f32 %v5657, %v5659
    %v5662 = vadd.f32 %v5658, %v5660
    %v5663 = vtanh.pop %v5661
    %v5664 = vtanh.pop %v5662
    %v5665 = vmul.f32 %v5655, %v5663
    %v5666 = vmul.f32 %v5656, %v5664
    %5667 = vst [vmem:[#allocation4] sm:$0xff] %v5629
    %5668 = vst [vmem:[#allocation4 + $0x10] sm:$0xff] %v5630
    %5669 = vst [vmem:[#allocation4 + $0x8] sm:$0xff] %v5665
    %5670 = vst [vmem:[#allocation4 + $0x18] sm:$0xff] %v5666
    %5671 = vst [vmem:[#allocation3] sm:$0xff] %v5629
    %5672 = vst [vmem:[#allocation3 + $0x10] sm:$0xff] %v5630
    %5673 = vst [vmem:[#allocation3 + $0x48] sm:$0xff] %v5665
    %5674 = vst [vmem:[#allocation3 + $0x58] sm:$0xff] %v5666
    %v5675 = vld [vmem:[#allocation4] sm:$0xff]
    %v5676 = vld [vmem:[#allocation4 + $0x8] sm:$0xff]
    %v5677 = vld [vmem:[#allocation4 + $0x10] sm:$0xff]
    %v5678 = vld [vmem:[#allocation4 + $0x18] sm:$0xff]
    %v5679 = vpack.c.bf16 %v5677, %v5675
    %v5680 = vpack.c.bf16 %v5678, %v5676
    %5681 = vmatprep.subr.bf16.mxu0 %v5152
    %5682 = vmatpush1.bf16.msra.mxu0 %v5151
    %5683 = vmatprep.subr.bf16.mxu0 %v5160
    %5684 = vmatpush1.bf16.msra.mxu0 %v5159
    %5685 = vmatprep.subr.bf16.mxu0 %v5168
    %5686 = vmatpush1.bf16.msra.mxu0 %v5167
    %5687 = vmatprep.subr.bf16.mxu0 %v5176
    %5688 = vmatpush1.bf16.msra.mxu0 %v5175
    %5689 = vmatprep.subr.bf16.mxu0 %v5184
    %5690 = vmatpush1.bf16.msra.mxu0 %v5183
    %5691 = vmatprep.subr.bf16.mxu0 %v5192
    %5692 = vmatpush1.bf16.msra.mxu0 %v5191
    %5693 = vmatprep.subr.bf16.mxu0 %v5200
    %5694 = vmatpush1.bf16.msra.mxu0 %v5199
    %5695 = vmatprep.subr.bf16.mxu0 %v5208
    %5696 = vmatpush1.bf16.msra.mxu0 %v5207
    %5697 = vmatprep.subr.bf16.mxu0 %v5216
    %5698 = vmatpush1.bf16.msra.mxu0 %v5215
    %5699 = vmatprep.subr.bf16.mxu0 %v5224
    %5700 = vmatpush1.bf16.msra.mxu0 %v5223
    %5701 = vmatprep.subr.bf16.mxu0 %v5232
    %5702 = vmatpush1.bf16.msra.mxu0 %v5231
    %5703 = vmatprep.subr.bf16.mxu0 %v5240
    %5704 = vmatpush1.bf16.msra.mxu0 %v5239
    %5705 = vmatprep.subr.bf16.mxu0 %v5248
    %5706 = vmatpush1.bf16.msra.mxu0 %v5247
    %5707 = vmatprep.subr.bf16.mxu0 %v5256
    %5708 = vmatpush1.bf16.msra.mxu0 %v5255
    %5709 = vmatprep.subr.bf16.mxu0 %v5264
    %5710 = vmatpush1.bf16.msra.mxu0 %v5263
    %5711 = vmatprep.subr.bf16.mxu0 %v5272
    %5712 = vmatpush1.bf16.msra.mxu0 %v5271
    %5713 = vmatprep.mubr.bf16.mxu0 %v5680
    %5714 = vmatmul.mubr.bf16.gmra.mrb[0].mxu0 %v5679
    %v5715 = vpop.f32.mrb[0].mxu0
    %v5716 = vadd.f32 0.0, %v5715
    %v5717 = vpop.f32.mrb[0].mxu0
    %v5718 = vadd.f32 0.0, %v5717
    %v5719 = vpop.f32.mrb[0].mxu0
    %v5720 = vadd.f32 0.0, %v5719
    %v5721 = vpop.f32.mrb[0].mxu0
    %v5722 = vadd.f32 0.0, %v5721
    %5723 = vdwg.mxu0
    %5724 = vmatprep.subr.bf16.mxu0 %v5154
    %5725 = vmatpush1.bf16.msra.mxu0 %v5153
    %5726 = vmatprep.subr.bf16.mxu0 %v5162
    %5727 = vmatpush1.bf16.msra.mxu0 %v5161
    %5728 = vmatprep.subr.bf16.mxu0 %v5170
    %5729 = vmatpush1.bf16.msra.mxu0 %v5169
    %5730 = vmatprep.subr.bf16.mxu0 %v5178
    %5731 = vmatpush1.bf16.msra.mxu0 %v5177
    %5732 = vmatprep.subr.bf16.mxu0 %v5186
    %5733 = vmatpush1.bf16.msra.mxu0 %v5185
    %5734 = vmatprep.subr.bf16.mxu0 %v5194
    %5735 = vmatpush1.bf16.msra.mxu0 %v5193
    %5736 = vmatprep.subr.bf16.mxu0 %v5202
    %5737 = vmatpush1.bf16.msra.mxu0 %v5201
    %5738 = vmatprep.subr.bf16.mxu0 %v5210
    %5739 = vmatpush1.bf16.msra.mxu0 %v5209
    %5740 = vmatprep.subr.bf16.mxu0 %v5218
    %5741 = vmatpush1.bf16.msra.mxu0 %v5217
    %5742 = vmatprep.subr.bf16.mxu0 %v5226
    %5743 = vmatpush1.bf16.msra.mxu0 %v5225
    %5744 = vmatprep.subr.bf16.mxu0 %v5234
    %5745 = vmatpush1.bf16.msra.mxu0 %v5233
    %5746 = vmatprep.subr.bf16.mxu0 %v5242
    %5747 = vmatpush1.bf16.msra.mxu0 %v5241
    %5748 = vmatprep.subr.bf16.mxu0 %v5250
    %5749 = vmatpush1.bf16.msra.mxu0 %v5249
    %5750 = vmatprep.subr.bf16.mxu0 %v5258
    %5751 = vmatpush1.bf16.msra.mxu0 %v5257
    %5752 = vmatprep.subr.bf16.mxu0 %v5266
    %5753 = vmatpush1.bf16.msra.mxu0 %v5265
    %5754 = vmatprep.subr.bf16.mxu0 %v5274
    %5755 = vmatpush1.bf16.msra.mxu0 %v5273
    %5756 = vmatprep.mubr.bf16.mxu0 %v5680
    %5757 = vmatmul.mubr.bf16.gmra.mrb[0].mxu0 %v5679
    %v5758 = vpop.f32.mrb[0].mxu0
    %v5759 = vadd.f32 0.0, %v5758
    %v5760 = vpop.f32.mrb[0].mxu0
    %v5761 = vadd.f32 0.0, %v5760
    %v5762 = vpop.f32.mrb[0].mxu0
    %v5763 = vadd.f32 0.0, %v5762
    %v5764 = vpop.f32.mrb[0].mxu0
    %v5765 = vadd.f32 0.0, %v5764
    %5766 = vdwg.mxu0
    %5767 = vmatprep.subr.bf16.mxu0 %v5156
    %5768 = vmatpush1.bf16.msra.mxu0 %v5155
    %5769 = vmatprep.subr.bf16.mxu0 %v5164
    %5770 = vmatpush1.bf16.msra.mxu0 %v5163
    %5771 = vmatprep.subr.bf16.mxu0 %v5172
    %5772 = vmatpush1.bf16.msra.mxu0 %v5171
    %5773 = vmatprep.subr.bf16.mxu0 %v5180
    %5774 = vmatpush1.bf16.msra.mxu0 %v5179
    %5775 = vmatprep.subr.bf16.mxu0 %v5188
    %5776 = vmatpush1.bf16.msra.mxu0 %v5187
    %5777 = vmatprep.subr.bf16.mxu0 %v5196
    %5778 = vmatpush1.bf16.msra.mxu0 %v5195
    %5779 = vmatprep.subr.bf16.mxu0 %v5204
    %5780 = vmatpush1.bf16.msra.mxu0 %v5203
    %5781 = vmatprep.subr.bf16.mxu0 %v5212
    %5782 = vmatpush1.bf16.msra.mxu0 %v5211
    %5783 = vmatprep.subr.bf16.mxu0 %v5220
    %5784 = vmatpush1.bf16.msra.mxu0 %v5219
    %5785 = vmatprep.subr.bf16.mxu0 %v5228
    %5786 = vmatpush1.bf16.msra.mxu0 %v5227
    %5787 = vmatprep.subr.bf16.mxu0 %v5236
    %5788 = vmatpush1.bf16.msra.mxu0 %v5235
    %5789 = vmatprep.subr.bf16.mxu0 %v5244
    %5790 = vmatpush1.bf16.msra.mxu0 %v5243
    %5791 = vmatprep.subr.bf16.mxu0 %v5252
    %5792 = vmatpush1.bf16.msra.mxu0 %v5251
    %5793 = vmatprep.subr.bf16.mxu0 %v5260
    %5794 = vmatpush1.bf16.msra.mxu0 %v5259
    %5795 = vmatprep.subr.bf16.mxu0 %v5268
    %5796 = vmatpush1.bf16.msra.mxu0 %v5267
    %5797 = vmatprep.subr.bf16.mxu0 %v5276
    %5798 = vmatpush1.bf16.msra.mxu0 %v5275
    %5799 = vmatprep.mubr.bf16.mxu0 %v5680
    %5800 = vmatmul.mubr.bf16.gmra.mrb[0].mxu0 %v5679
    %v5801 = vpop.f32.mrb[0].mxu0
    %v5802 = vadd.f32 0.0, %v5801
    %v5803 = vpop.f32.mrb[0].mxu0
    %v5804 = vadd.f32 0.0, %v5803
    %v5805 = vpop.f32.mrb[0].mxu0
    %v5806 = vadd.f32 0.0, %v5805
    %v5807 = vpop.f32.mrb[0].mxu0
    %v5808 = vadd.f32 0.0, %v5807
    %5809 = vdwg.mxu0
    %5810 = vmatprep.subr.bf16.mxu0 %v5158
    %5811 = vmatpush1.bf16.msra.mxu0 %v5157
    %5812 = vmatprep.subr.bf16.mxu0 %v5166
    %5813 = vmatpush1.bf16.msra.mxu0 %v5165
    %5814 = vmatprep.subr.bf16.mxu0 %v5174
    %5815 = vmatpush1.bf16.msra.mxu0 %v5173
    %5816 = vmatprep.subr.bf16.mxu0 %v5182
    %5817 = vmatpush1.bf16.msra.mxu0 %v5181
    %5818 = vmatprep.subr.bf16.mxu0 %v5190
    %5819 = vmatpush1.bf16.msra.mxu0 %v5189
    %5820 = vmatprep.subr.bf16.mxu0 %v5198
    %5821 = vmatpush1.bf16.msra.mxu0 %v5197
    %5822 = vmatprep.subr.bf16.mxu0 %v5206
    %5823 = vmatpush1.bf16.msra.mxu0 %v5205
    %5824 = vmatprep.subr.bf16.mxu0 %v5214
    %5825 = vmatpush1.bf16.msra.mxu0 %v5213
    %5826 = vmatprep.subr.bf16.mxu0 %v5222
    %5827 = vmatpush1.bf16.msra.mxu0 %v5221
    %5828 = vmatprep.subr.bf16.mxu0 %v5230
    %5829 = vmatpush1.bf16.msra.mxu0 %v5229
    %5830 = vmatprep.subr.bf16.mxu0 %v5238
    %5831 = vmatpush1.bf16.msra.mxu0 %v5237
    %5832 = vmatprep.subr.bf16.mxu0 %v5246
    %5833 = vmatpush1.bf16.msra.mxu0 %v5245
    %5834 = vmatprep.subr.bf16.mxu0 %v5254
    %5835 = vmatpush1.bf16.msra.mxu0 %v5253
    %5836 = vmatprep.subr.bf16.mxu0 %v5262
    %5837 = vmatpush1.bf16.msra.mxu0 %v5261
    %5838 = vmatprep.subr.bf16.mxu0 %v5270
    %5839 = vmatpush1.bf16.msra.mxu0 %v5269
    %5840 = vmatprep.subr.bf16.mxu0 %v5278
    %5841 = vmatpush1.bf16.msra.mxu0 %v5277
    %5842 = vmatprep.mubr.bf16.mxu0 %v5680
    %5843 = vmatmul.mubr.bf16.gmra.mrb[0].mxu0 %v5679
    %v5844 = vpop.f32.mrb[0].mxu0
    %v5845 = vadd.f32 0.0, %v5844
    %v5846 = vpop.f32.mrb[0].mxu0
    %v5847 = vadd.f32 0.0, %v5846
    %v5848 = vpop.f32.mrb[0].mxu0
    %v5849 = vadd.f32 0.0, %v5848
    %v5850 = vpop.f32.mrb[0].mxu0
    %v5851 = vadd.f32 0.0, %v5850
    %5852 = vdwg.mxu0
    %v5853 = vadd.f32 %v4422, %v5716
    %v5854 = vadd.f32 %v4424, %v5718
    %v5855 = vadd.f32 %v4485, %v5759
    %v5856 = vadd.f32 %v4487, %v5761
    %v5857 = vadd.f32 %v4426, %v5720
    %v5858 = vadd.f32 %v4428, %v5722
    %v5859 = vadd.f32 %v4489, %v5763
    %v5860 = vadd.f32 %v4491, %v5765
    %v5861 = vadd.f32 %v4548, %v5802
    %v5862 = vadd.f32 %v4550, %v5804
    %v5863 = vadd.f32 %v4611, %v5845
    %v5864 = vadd.f32 %v4613, %v5847
    %v5865 = vadd.f32 %v4552, %v5806
    %v5866 = vadd.f32 %v4554, %v5808
    %v5867 = vadd.f32 %v4615, %v5849
    %v5868 = vadd.f32 %v4617, %v5851
    %v5869 = vmul.f32 %v5853, 0.5
    %v5870 = vmul.f32 %v5857, 0.5
    %v5871 = vtanh.pop %v5869
    %v5872 = vtanh.pop %v5870
    %v5873 = vadd.f32 %v5871, 1.0
    %v5874 = vadd.f32 %v5872, 1.0
    %v5875 = vmul.f32 %v5873, 0.5
    %v5876 = vmul.f32 %v5874, 0.5
    %v5877 = vmul.f32 %v5854, 0.5
    %v5878 = vmul.f32 %v5858, 0.5
    %v5879 = vtanh.pop %v5877
    %v5880 = vtanh.pop %v5878
    %v5881 = vadd.f32 %v5879, 1.0
    %v5882 = vadd.f32 %v5880, 1.0
    %v5883 = vmul.f32 %v5881, 0.5
    %v5884 = vmul.f32 %v5882, 0.5
    %v5885 = vtanh.pop %v5855
    %v5886 = vtanh.pop %v5859
    %v5887 = vmul.f32 %v5856, 0.5
    %v5888 = vmul.f32 %v5860, 0.5
    %v5889 = vtanh.pop %v5887
    %v5890 = vtanh.pop %v5888
    %v5891 = vadd.f32 %v5889, 1.0
    %v5892 = vadd.f32 %v5890, 1.0
    %v5893 = vmul.f32 %v5891, 0.5
    %v5894 = vmul.f32 %v5892, 0.5
    %v5895 = vmul.f32 %v5883, %v5625
    %v5896 = vmul.f32 %v5884, %v5626
    %v5897 = vmul.f32 %v5875, %v5885
    %v5898 = vmul.f32 %v5876, %v5886
    %v5899 = vadd.f32 %v5895, %v5897
    %v5900 = vadd.f32 %v5896, %v5898
    %v5901 = vtanh.pop %v5899
    %v5902 = vtanh.pop %v5900
    %v5903 = vmul.f32 %v5893, %v5901
    %v5904 = vmul.f32 %v5894, %v5902
    %v5905 = vmul.f32 %v5861, 0.5
    %v5906 = vmul.f32 %v5865, 0.5
    %v5907 = vtanh.pop %v5905
    %v5908 = vtanh.pop %v5906
    %v5909 = vadd.f32 %v5907, 1.0
    %v5910 = vadd.f32 %v5908, 1.0
    %v5911 = vmul.f32 %v5909, 0.5
    %v5912 = vmul.f32 %v5910, 0.5
    %v5913 = vmul.f32 %v5862, 0.5
    %v5914 = vmul.f32 %v5866, 0.5
    %v5915 = vtanh.pop %v5913
    %v5916 = vtanh.pop %v5914
    %v5917 = vadd.f32 %v5915, 1.0
    %v5918 = vadd.f32 %v5916, 1.0
    %v5919 = vmul.f32 %v5917, 0.5
    %v5920 = vmul.f32 %v5918, 0.5
    %v5921 = vtanh.pop %v5863
    %v5922 = vtanh.pop %v5867
    %v5923 = vmul.f32 %v5864, 0.5
    %v5924 = vmul.f32 %v5868, 0.5
    %v5925 = vtanh.pop %v5923
    %v5926 = vtanh.pop %v5924
    %v5927 = vadd.f32 %v5925, 1.0
    %v5928 = vadd.f32 %v5926, 1.0
    %v5929 = vmul.f32 %v5927, 0.5
    %v5930 = vmul.f32 %v5928, 0.5
    %v5931 = vmul.f32 %v5919, %v5661
    %v5932 = vmul.f32 %v5920, %v5662
    %v5933 = vmul.f32 %v5911, %v5921
    %v5934 = vmul.f32 %v5912, %v5922
    %v5935 = vadd.f32 %v5931, %v5933
    %v5936 = vadd.f32 %v5932, %v5934
    %v5937 = vtanh.pop %v5935
    %v5938 = vtanh.pop %v5936
    %v5939 = vmul.f32 %v5929, %v5937
    %v5940 = vmul.f32 %v5930, %v5938
    %5941 = vst [vmem:[#allocation4] sm:$0xff] %v5903
    %5942 = vst [vmem:[#allocation4 + $0x10] sm:$0xff] %v5904
    %5943 = vst [vmem:[#allocation4 + $0x8] sm:$0xff] %v5939
    %5944 = vst [vmem:[#allocation4 + $0x18] sm:$0xff] %v5940
    %5945 = vst [vmem:[#allocation3 + $0x20] sm:$0xff] %v5903
    %5946 = vst [vmem:[#allocation3 + $0x30] sm:$0xff] %v5904
    %5947 = vst [vmem:[#allocation3 + $0x28] sm:$0xff] %v5939
    %5948 = vst [vmem:[#allocation3 + $0x38] sm:$0xff] %v5940
    %v5949 = vld [vmem:[#allocation4] sm:$0xff]
    %v5950 = vld [vmem:[#allocation4 + $0x8] sm:$0xff]
    %v5951 = vld [vmem:[#allocation4 + $0x10] sm:$0xff]
    %v5952 = vld [vmem:[#allocation4 + $0x18] sm:$0xff]
    %v5953 = vpack.c.bf16 %v5951, %v5949
    %v5954 = vpack.c.bf16 %v5952, %v5950
    %5955 = vmatprep.subr.bf16.mxu0 %v5152
    %5956 = vmatpush1.bf16.msra.mxu0 %v5151
    %5957 = vmatprep.subr.bf16.mxu0 %v5160
    %5958 = vmatpush1.bf16.msra.mxu0 %v5159
    %5959 = vmatprep.subr.bf16.mxu0 %v5168
    %5960 = vmatpush1.bf16.msra.mxu0 %v5167
    %5961 = vmatprep.subr.bf16.mxu0 %v5176
    %5962 = vmatpush1.bf16.msra.mxu0 %v5175
    %5963 = vmatprep.subr.bf16.mxu0 %v5184
    %5964 = vmatpush1.bf16.msra.mxu0 %v5183
    %5965 = vmatprep.subr.bf16.mxu0 %v5192
    %5966 = vmatpush1.bf16.msra.mxu0 %v5191
    %5967 = vmatprep.subr.bf16.mxu0 %v5200
    %5968 = vmatpush1.bf16.msra.mxu0 %v5199
    %5969 = vmatprep.subr.bf16.mxu0 %v5208
    %5970 = vmatpush1.bf16.msra.mxu0 %v5207
    %5971 = vmatprep.subr.bf16.mxu0 %v5216
    %5972 = vmatpush1.bf16.msra.mxu0 %v5215
    %5973 = vmatprep.subr.bf16.mxu0 %v5224
    %5974 = vmatpush1.bf16.msra.mxu0 %v5223
    %5975 = vmatprep.subr.bf16.mxu0 %v5232
    %5976 = vmatpush1.bf16.msra.mxu0 %v5231
    %5977 = vmatprep.subr.bf16.mxu0 %v5240
    %5978 = vmatpush1.bf16.msra.mxu0 %v5239
    %5979 = vmatprep.subr.bf16.mxu0 %v5248
    %5980 = vmatpush1.bf16.msra.mxu0 %v5247
    %5981 = vmatprep.subr.bf16.mxu0 %v5256
    %5982 = vmatpush1.bf16.msra.mxu0 %v5255
    %5983 = vmatprep.subr.bf16.mxu0 %v5264
    %5984 = vmatpush1.bf16.msra.mxu0 %v5263
    %5985 = vmatprep.subr.bf16.mxu0 %v5272
    %5986 = vmatpush1.bf16.msra.mxu0 %v5271
    %5987 = vmatprep.mubr.bf16.mxu0 %v5954
    %5988 = vmatmul.mubr.bf16.gmra.mrb[0].mxu0 %v5953
    %v5989 = vpop.f32.mrb[0].mxu0
    %v5990 = vadd.f32 0.0, %v5989
    %v5991 = vpop.f32.mrb[0].mxu0
    %v5992 = vadd.f32 0.0, %v5991
    %v5993 = vpop.f32.mrb[0].mxu0
    %v5994 = vadd.f32 0.0, %v5993
    %v5995 = vpop.f32.mrb[0].mxu0
    %v5996 = vadd.f32 0.0, %v5995
    %5997 = vdwg.mxu0
    %5998 = vmatprep.subr.bf16.mxu0 %v5154
    %5999 = vmatpush1.bf16.msra.mxu0 %v5153
    %6000 = vmatprep.subr.bf16.mxu0 %v5162
    %6001 = vmatpush1.bf16.msra.mxu0 %v5161
    %6002 = vmatprep.subr.bf16.mxu0 %v5170
    %6003 = vmatpush1.bf16.msra.mxu0 %v5169
    %6004 = vmatprep.subr.bf16.mxu0 %v5178
    %6005 = vmatpush1.bf16.msra.mxu0 %v5177
    %6006 = vmatprep.subr.bf16.mxu0 %v5186
    %6007 = vmatpush1.bf16.msra.mxu0 %v5185
    %6008 = vmatprep.subr.bf16.mxu0 %v5194
    %6009 = vmatpush1.bf16.msra.mxu0 %v5193
    %6010 = vmatprep.subr.bf16.mxu0 %v5202
    %6011 = vmatpush1.bf16.msra.mxu0 %v5201
    %6012 = vmatprep.subr.bf16.mxu0 %v5210
    %6013 = vmatpush1.bf16.msra.mxu0 %v5209
    %6014 = vmatprep.subr.bf16.mxu0 %v5218
    %6015 = vmatpush1.bf16.msra.mxu0 %v5217
    %6016 = vmatprep.subr.bf16.mxu0 %v5226
    %6017 = vmatpush1.bf16.msra.mxu0 %v5225
    %6018 = vmatprep.subr.bf16.mxu0 %v5234
    %6019 = vmatpush1.bf16.msra.mxu0 %v5233
    %6020 = vmatprep.subr.bf16.mxu0 %v5242
    %6021 = vmatpush1.bf16.msra.mxu0 %v5241
    %6022 = vmatprep.subr.bf16.mxu0 %v5250
    %6023 = vmatpush1.bf16.msra.mxu0 %v5249
    %6024 = vmatprep.subr.bf16.mxu0 %v5258
    %6025 = vmatpush1.bf16.msra.mxu0 %v5257
    %6026 = vmatprep.subr.bf16.mxu0 %v5266
    %6027 = vmatpush1.bf16.msra.mxu0 %v5265
    %6028 = vmatprep.subr.bf16.mxu0 %v5274
    %6029 = vmatpush1.bf16.msra.mxu0 %v5273
    %6030 = vmatprep.mubr.bf16.mxu0 %v5954
    %6031 = vmatmul.mubr.bf16.gmra.mrb[0].mxu0 %v5953
    %v6032 = vpop.f32.mrb[0].mxu0
    %v6033 = vadd.f32 0.0, %v6032
    %v6034 = vpop.f32.mrb[0].mxu0
    %v6035 = vadd.f32 0.0, %v6034
    %v6036 = vpop.f32.mrb[0].mxu0
    %v6037 = vadd.f32 0.0, %v6036
    %v6038 = vpop.f32.mrb[0].mxu0
    %v6039 = vadd.f32 0.0, %v6038
    %6040 = vdwg.mxu0
    %6041 = vmatprep.subr.bf16.mxu0 %v5156
    %6042 = vmatpush1.bf16.msra.mxu0 %v5155
    %6043 = vmatprep.subr.bf16.mxu0 %v5164
    %6044 = vmatpush1.bf16.msra.mxu0 %v5163
    %6045 = vmatprep.subr.bf16.mxu0 %v5172
    %6046 = vmatpush1.bf16.msra.mxu0 %v5171
    %6047 = vmatprep.subr.bf16.mxu0 %v5180
    %6048 = vmatpush1.bf16.msra.mxu0 %v5179
    %6049 = vmatprep.subr.bf16.mxu0 %v5188
    %6050 = vmatpush1.bf16.msra.mxu0 %v5187
    %6051 = vmatprep.subr.bf16.mxu0 %v5196
    %6052 = vmatpush1.bf16.msra.mxu0 %v5195
    %6053 = vmatprep.subr.bf16.mxu0 %v5204
    %6054 = vmatpush1.bf16.msra.mxu0 %v5203
    %6055 = vmatprep.subr.bf16.mxu0 %v5212
    %6056 = vmatpush1.bf16.msra.mxu0 %v5211
    %6057 = vmatprep.subr.bf16.mxu0 %v5220
    %6058 = vmatpush1.bf16.msra.mxu0 %v5219
    %6059 = vmatprep.subr.bf16.mxu0 %v5228
    %6060 = vmatpush1.bf16.msra.mxu0 %v5227
    %6061 = vmatprep.subr.bf16.mxu0 %v5236
    %6062 = vmatpush1.bf16.msra.mxu0 %v5235
    %6063 = vmatprep.subr.bf16.mxu0 %v5244
    %6064 = vmatpush1.bf16.msra.mxu0 %v5243
    %6065 = vmatprep.subr.bf16.mxu0 %v5252
    %6066 = vmatpush1.bf16.msra.mxu0 %v5251
    %6067 = vmatprep.subr.bf16.mxu0 %v5260
    %6068 = vmatpush1.bf16.msra.mxu0 %v5259
    %6069 = vmatprep.subr.bf16.mxu0 %v5268
    %6070 = vmatpush1.bf16.msra.mxu0 %v5267
    %6071 = vmatprep.subr.bf16.mxu0 %v5276
    %6072 = vmatpush1.bf16.msra.mxu0 %v5275
    %6073 = vmatprep.mubr.bf16.mxu0 %v5954
    %6074 = vmatmul.mubr.bf16.gmra.mrb[0].mxu0 %v5953
    %v6075 = vpop.f32.mrb[0].mxu0
    %v6076 = vadd.f32 0.0, %v6075
    %v6077 = vpop.f32.mrb[0].mxu0
    %v6078 = vadd.f32 0.0, %v6077
    %v6079 = vpop.f32.mrb[0].mxu0
    %v6080 = vadd.f32 0.0, %v6079
    %v6081 = vpop.f32.mrb[0].mxu0
    %v6082 = vadd.f32 0.0, %v6081
    %6083 = vdwg.mxu0
    %6084 = vmatprep.subr.bf16.mxu0 %v5158
    %6085 = vmatpush1.bf16.msra.mxu0 %v5157
    %6086 = vmatprep.subr.bf16.mxu0 %v5166
    %6087 = vmatpush1.bf16.msra.mxu0 %v5165
    %6088 = vmatprep.subr.bf16.mxu0 %v5174
    %6089 = vmatpush1.bf16.msra.mxu0 %v5173
    %6090 = vmatprep.subr.bf16.mxu0 %v5182
    %6091 = vmatpush1.bf16.msra.mxu0 %v5181
    %6092 = vmatprep.subr.bf16.mxu0 %v5190
    %6093 = vmatpush1.bf16.msra.mxu0 %v5189
    %6094 = vmatprep.subr.bf16.mxu0 %v5198
    %6095 = vmatpush1.bf16.msra.mxu0 %v5197
    %6096 = vmatprep.subr.bf16.mxu0 %v5206
    %6097 = vmatpush1.bf16.msra.mxu0 %v5205
    %6098 = vmatprep.subr.bf16.mxu0 %v5214
    %6099 = vmatpush1.bf16.msra.mxu0 %v5213
    %6100 = vmatprep.subr.bf16.mxu0 %v5222
    %6101 = vmatpush1.bf16.msra.mxu0 %v5221
    %6102 = vmatprep.subr.bf16.mxu0 %v5230
    %6103 = vmatpush1.bf16.msra.mxu0 %v5229
    %6104 = vmatprep.subr.bf16.mxu0 %v5238
    %6105 = vmatpush1.bf16.msra.mxu0 %v5237
    %6106 = vmatprep.subr.bf16.mxu0 %v5246
    %6107 = vmatpush1.bf16.msra.mxu0 %v5245
    %6108 = vmatprep.subr.bf16.mxu0 %v5254
    %6109 = vmatpush1.bf16.msra.mxu0 %v5253
    %6110 = vmatprep.subr.bf16.mxu0 %v5262
    %6111 = vmatpush1.bf16.msra.mxu0 %v5261
    %6112 = vmatprep.subr.bf16.mxu0 %v5270
    %6113 = vmatpush1.bf16.msra.mxu0 %v5269
    %6114 = vmatprep.subr.bf16.mxu0 %v5278
    %6115 = vmatpush1.bf16.msra.mxu0 %v5277
    %6116 = vmatprep.mubr.bf16.mxu0 %v5954
    %6117 = vmatmul.mubr.bf16.gmra.mrb[0].mxu0 %v5953
    %v6118 = vpop.f32.mrb[0].mxu0
    %v6119 = vadd.f32 0.0, %v6118
    %v6120 = vpop.f32.mrb[0].mxu0
    %v6121 = vadd.f32 0.0, %v6120
    %v6122 = vpop.f32.mrb[0].mxu0
    %v6123 = vadd.f32 0.0, %v6122
    %v6124 = vpop.f32.mrb[0].mxu0
    %v6125 = vadd.f32 0.0, %v6124
    %6126 = vdwg.mxu0
    %v6127 = vadd.f32 %v4432, %v5990
    %v6128 = vadd.f32 %v4434, %v5992
    %v6129 = vadd.f32 %v4495, %v6033
    %v6130 = vadd.f32 %v4497, %v6035
    %v6131 = vadd.f32 %v4436, %v5994
    %v6132 = vadd.f32 %v4438, %v5996
    %v6133 = vadd.f32 %v4499, %v6037
    %v6134 = vadd.f32 %v4501, %v6039
    %v6135 = vadd.f32 %v4538, %v6076
    %v6136 = vadd.f32 %v4540, %v6078
    %v6137 = vadd.f32 %v4601, %v6119
    %v6138 = vadd.f32 %v4603, %v6121
    %v6139 = vadd.f32 %v4542, %v6080
    %v6140 = vadd.f32 %v4544, %v6082
    %v6141 = vadd.f32 %v4605, %v6123
    %v6142 = vadd.f32 %v4607, %v6125
    %v6143 = vmul.f32 %v6127, 0.5
    %v6144 = vmul.f32 %v6131, 0.5
    %v6145 = vtanh.pop %v6143
    %v6146 = vtanh.pop %v6144
    %v6147 = vadd.f32 %v6145, 1.0
    %v6148 = vadd.f32 %v6146, 1.0
    %v6149 = vmul.f32 %v6147, 0.5
    %v6150 = vmul.f32 %v6148, 0.5
    %v6151 = vmul.f32 %v6128, 0.5
    %v6152 = vmul.f32 %v6132, 0.5
    %v6153 = vtanh.pop %v6151
    %v6154 = vtanh.pop %v6152
    %v6155 = vadd.f32 %v6153, 1.0
    %v6156 = vadd.f32 %v6154, 1.0
    %v6157 = vmul.f32 %v6155, 0.5
    %v6158 = vmul.f32 %v6156, 0.5
    %v6159 = vtanh.pop %v6129
    %v6160 = vtanh.pop %v6133
    %v6161 = vmul.f32 %v6130, 0.5
    %v6162 = vmul.f32 %v6134, 0.5
    %v6163 = vtanh.pop %v6161
    %v6164 = vtanh.pop %v6162
    %v6165 = vadd.f32 %v6163, 1.0
    %v6166 = vadd.f32 %v6164, 1.0
    %v6167 = vmul.f32 %v6165, 0.5
    %v6168 = vmul.f32 %v6166, 0.5
    %v6169 = vmul.f32 %v6157, %v5899
    %v6170 = vmul.f32 %v6158, %v5900
    %v6171 = vmul.f32 %v6149, %v6159
    %v6172 = vmul.f32 %v6150, %v6160
    %v6173 = vadd.f32 %v6169, %v6171
    %v6174 = vadd.f32 %v6170, %v6172
    %v6175 = vtanh.pop %v6173
    %v6176 = vtanh.pop %v6174
    %v6177 = vmul.f32 %v6167, %v6175
    %v6178 = vmul.f32 %v6168, %v6176
    %v6179 = vmul.f32 %v6135, 0.5
    %v6180 = vmul.f32 %v6139, 0.5
    %v6181 = vtanh.pop %v6179
    %v6182 = vtanh.pop %v6180
    %v6183 = vadd.f32 %v6181, 1.0
    %v6184 = vadd.f32 %v6182, 1.0
    %v6185 = vmul.f32 %v6183, 0.5
    %v6186 = vmul.f32 %v6184, 0.5
    %v6187 = vmul.f32 %v6136, 0.5
    %v6188 = vmul.f32 %v6140, 0.5
    %v6189 = vtanh.pop %v6187
    %v6190 = vtanh.pop %v6188
    %v6191 = vadd.f32 %v6189, 1.0
    %v6192 = vadd.f32 %v6190, 1.0
    %v6193 = vmul.f32 %v6191, 0.5
    %v6194 = vmul.f32 %v6192, 0.5
    %v6195 = vtanh.pop %v6137
    %v6196 = vtanh.pop %v6141
    %v6197 = vmul.f32 %v6138, 0.5
    %v6198 = vmul.f32 %v6142, 0.5
    %v6199 = vtanh.pop %v6197
    %v6200 = vtanh.pop %v6198
    %v6201 = vadd.f32 %v6199, 1.0
    %v6202 = vadd.f32 %v6200, 1.0
    %v6203 = vmul.f32 %v6201, 0.5
    %v6204 = vmul.f32 %v6202, 0.5
    %v6205 = vmul.f32 %v6193, %v5935
    %v6206 = vmul.f32 %v6194, %v5936
    %v6207 = vmul.f32 %v6185, %v6195
    %v6208 = vmul.f32 %v6186, %v6196
    %v6209 = vadd.f32 %v6205, %v6207
    %v6210 = vadd.f32 %v6206, %v6208
    %v6211 = vtanh.pop %v6209
    %v6212 = vtanh.pop %v6210
    %v6213 = vmul.f32 %v6203, %v6211
    %v6214 = vmul.f32 %v6204, %v6212
    %6215 = vst [vmem:[#allocation4] sm:$0xff] %v6177
    %6216 = vst [vmem:[#allocation4 + $0x10] sm:$0xff] %v6178
    %6217 = vst [vmem:[#allocation4 + $0x8] sm:$0xff] %v6213
    %6218 = vst [vmem:[#allocation4 + $0x18] sm:$0xff] %v6214
    %6219 = vst [vmem:[#allocation3 + $0x40] sm:$0xff] %v6177
    %6220 = vst [vmem:[#allocation3 + $0x50] sm:$0xff] %v6178
    %6221 = vst [vmem:[#allocation3 + $0x8] sm:$0xff] %v6213
    %6222 = vst [vmem:[#allocation3 + $0x18] sm:$0xff] %v6214
    %v6223 = vld [vmem:[#allocation3] sm:$0xff]
    %v6224 = vld [vmem:[#allocation3 + $0x8] sm:$0xff]
    %v6225 = vld [vmem:[#allocation3 + $0x10] sm:$0xff]
    %v6226 = vld [vmem:[#allocation3 + $0x18] sm:$0xff]
    %v6227 = vld [vmem:[#allocation3 + $0x20] sm:$0xff]
    %v6228 = vld [vmem:[#allocation3 + $0x28] sm:$0xff]
    %v6229 = vld [vmem:[#allocation3 + $0x30] sm:$0xff]
    %v6230 = vld [vmem:[#allocation3 + $0x38] sm:$0xff]
    %v6231 = vld [vmem:[#allocation3 + $0x40] sm:$0xff]
    %v6232 = vld [vmem:[#allocation3 + $0x48] sm:$0xff]
    %v6233 = vld [vmem:[#allocation3 + $0x50] sm:$0xff]
    %v6234 = vld [vmem:[#allocation3 + $0x58] sm:$0xff]
    %v6235 = vld [vmem:[#allocation19] sm:$0xff]
    %v6236 = vld [vmem:[#allocation19 + $0x8] sm:$0xff]
    %v6237 = vld [vmem:[#allocation19 + $0x10] sm:$0xff]
    %v6238 = vld [vmem:[#allocation19 + $0x18] sm:$0xff]
    %v6239 = vld [vmem:[#allocation19 + $0x20] sm:$0xff]
    %v6240 = vld [vmem:[#allocation19 + $0x28] sm:$0xff]
    %v6241 = vld [vmem:[#allocation19 + $0x30] sm:$0xff]
    %v6242 = vld [vmem:[#allocation19 + $0x38] sm:$0xff]
    %v6243 = vld [vmem:[#allocation19 + $0x40] sm:$0xff]
    %v6244 = vld [vmem:[#allocation19 + $0x48] sm:$0xff]
    %v6245 = vld [vmem:[#allocation19 + $0x50] sm:$0xff]
    %v6246 = vld [vmem:[#allocation19 + $0x58] sm:$0xff]
    %v6247 = vld [vmem:[#allocation19 + $0x60] sm:$0xff]
    %v6248 = vld [vmem:[#allocation19 + $0x68] sm:$0xff]
    %v6249 = vld [vmem:[#allocation19 + $0x70] sm:$0xff]
    %v6250 = vld [vmem:[#allocation19 + $0x78] sm:$0xff]
    %v6251 = vld [vmem:[#allocation19 + $0x80] sm:$0xff]
    %v6252 = vld [vmem:[#allocation19 + $0x88] sm:$0xff]
    %v6253 = vld [vmem:[#allocation19 + $0x90] sm:$0xff]
    %v6254 = vld [vmem:[#allocation19 + $0x98] sm:$0xff]
    %v6255 = vld [vmem:[#allocation19 + $0xa0] sm:$0xff]
    %v6256 = vld [vmem:[#allocation19 + $0xa8] sm:$0xff]
    %v6257 = vld [vmem:[#allocation19 + $0xb0] sm:$0xff]
    %v6258 = vld [vmem:[#allocation19 + $0xb8] sm:$0xff]
    %v6259 = vld [vmem:[#allocation19 + $0xc0] sm:$0xff]
    %v6260 = vld [vmem:[#allocation19 + $0xc8] sm:$0xff]
    %v6261 = vld [vmem:[#allocation19 + $0xd0] sm:$0xff]
    %v6262 = vld [vmem:[#allocation19 + $0xd8] sm:$0xff]
    %v6263 = vld [vmem:[#allocation19 + $0xe0] sm:$0xff]
    %v6264 = vld [vmem:[#allocation19 + $0xe8] sm:$0xff]
    %v6265 = vld [vmem:[#allocation19 + $0xf0] sm:$0xff]
    %v6266 = vld [vmem:[#allocation19 + $0xf8] sm:$0xff]
    %v6267 = vld [vmem:[#allocation19 + $0x100] sm:$0xff]
    %v6268 = vld [vmem:[#allocation19 + $0x108] sm:$0xff]
    %v6269 = vld [vmem:[#allocation19 + $0x110] sm:$0xff]
    %v6270 = vld [vmem:[#allocation19 + $0x118] sm:$0xff]
    %v6271 = vld [vmem:[#allocation19 + $0x120] sm:$0xff]
    %v6272 = vld [vmem:[#allocation19 + $0x128] sm:$0xff]
    %v6273 = vld [vmem:[#allocation19 + $0x130] sm:$0xff]
    %v6274 = vld [vmem:[#allocation19 + $0x138] sm:$0xff]
    %v6275 = vld [vmem:[#allocation19 + $0x140] sm:$0xff]
    %v6276 = vld [vmem:[#allocation19 + $0x148] sm:$0xff]
    %v6277 = vld [vmem:[#allocation19 + $0x150] sm:$0xff]
    %v6278 = vld [vmem:[#allocation19 + $0x158] sm:$0xff]
    %v6279 = vld [vmem:[#allocation19 + $0x160] sm:$0xff]
    %v6280 = vld [vmem:[#allocation19 + $0x168] sm:$0xff]
    %v6281 = vld [vmem:[#allocation19 + $0x170] sm:$0xff]
    %v6282 = vld [vmem:[#allocation19 + $0x178] sm:$0xff]
    %v6283 = vld [vmem:[#allocation19 + $0x180] sm:$0xff]
    %v6284 = vld [vmem:[#allocation19 + $0x188] sm:$0xff]
    %v6285 = vld [vmem:[#allocation19 + $0x190] sm:$0xff]
    %v6286 = vld [vmem:[#allocation19 + $0x198] sm:$0xff]
    %v6287 = vld [vmem:[#allocation19 + $0x1a0] sm:$0xff]
    %v6288 = vld [vmem:[#allocation19 + $0x1a8] sm:$0xff]
    %v6289 = vld [vmem:[#allocation19 + $0x1b0] sm:$0xff]
    %v6290 = vld [vmem:[#allocation19 + $0x1b8] sm:$0xff]
    %v6291 = vld [vmem:[#allocation19 + $0x1c0] sm:$0xff]
    %v6292 = vld [vmem:[#allocation19 + $0x1c8] sm:$0xff]
    %v6293 = vld [vmem:[#allocation19 + $0x1d0] sm:$0xff]
    %v6294 = vld [vmem:[#allocation19 + $0x1d8] sm:$0xff]
    %v6295 = vld [vmem:[#allocation19 + $0x1e0] sm:$0xff]
    %v6296 = vld [vmem:[#allocation19 + $0x1e8] sm:$0xff]
    %v6297 = vld [vmem:[#allocation19 + $0x1f0] sm:$0xff]
    %v6298 = vld [vmem:[#allocation19 + $0x1f8] sm:$0xff]
    %v6299 = vld [vmem:[#allocation19 + $0x200] sm:$0xff]
    %v6300 = vld [vmem:[#allocation19 + $0x208] sm:$0xff]
    %v6301 = vld [vmem:[#allocation19 + $0x210] sm:$0xff]
    %v6302 = vld [vmem:[#allocation19 + $0x218] sm:$0xff]
    %v6303 = vld [vmem:[#allocation19 + $0x220] sm:$0xff]
    %v6304 = vld [vmem:[#allocation19 + $0x228] sm:$0xff]
    %v6305 = vld [vmem:[#allocation19 + $0x230] sm:$0xff]
    %v6306 = vld [vmem:[#allocation19 + $0x238] sm:$0xff]
    %v6307 = vld [vmem:[#allocation19 + $0x240] sm:$0xff]
    %v6308 = vld [vmem:[#allocation19 + $0x248] sm:$0xff]
    %v6309 = vld [vmem:[#allocation19 + $0x250] sm:$0xff]
    %v6310 = vld [vmem:[#allocation19 + $0x258] sm:$0xff]
    %v6311 = vld [vmem:[#allocation19 + $0x260] sm:$0xff]
    %v6312 = vld [vmem:[#allocation19 + $0x268] sm:$0xff]
    %v6313 = vld [vmem:[#allocation19 + $0x270] sm:$0xff]
    %v6314 = vld [vmem:[#allocation19 + $0x278] sm:$0xff]
    %v6315 = vld [vmem:[#allocation19 + $0x280] sm:$0xff]
    %v6316 = vld [vmem:[#allocation19 + $0x288] sm:$0xff]
    %v6317 = vld [vmem:[#allocation19 + $0x290] sm:$0xff]
    %v6318 = vld [vmem:[#allocation19 + $0x298] sm:$0xff]
    %v6319 = vld [vmem:[#allocation19 + $0x2a0] sm:$0xff]
    %v6320 = vld [vmem:[#allocation19 + $0x2a8] sm:$0xff]
    %v6321 = vld [vmem:[#allocation19 + $0x2b0] sm:$0xff]
    %v6322 = vld [vmem:[#allocation19 + $0x2b8] sm:$0xff]
    %v6323 = vld [vmem:[#allocation19 + $0x2c0] sm:$0xff]
    %v6324 = vld [vmem:[#allocation19 + $0x2c8] sm:$0xff]
    %v6325 = vld [vmem:[#allocation19 + $0x2d0] sm:$0xff]
    %v6326 = vld [vmem:[#allocation19 + $0x2d8] sm:$0xff]
    %v6327 = vld [vmem:[#allocation19 + $0x2e0] sm:$0xff]
    %v6328 = vld [vmem:[#allocation19 + $0x2e8] sm:$0xff]
    %v6329 = vld [vmem:[#allocation19 + $0x2f0] sm:$0xff]
    %v6330 = vld [vmem:[#allocation19 + $0x2f8] sm:$0xff]
    %v6331 = vld [vmem:[#allocation19 + $0x300] sm:$0xff]
    %v6332 = vld [vmem:[#allocation19 + $0x308] sm:$0xff]
    %v6333 = vld [vmem:[#allocation19 + $0x310] sm:$0xff]
    %v6334 = vld [vmem:[#allocation19 + $0x318] sm:$0xff]
    %v6335 = vld [vmem:[#allocation19 + $0x320] sm:$0xff]
    %v6336 = vld [vmem:[#allocation19 + $0x328] sm:$0xff]
    %v6337 = vld [vmem:[#allocation19 + $0x330] sm:$0xff]
    %v6338 = vld [vmem:[#allocation19 + $0x338] sm:$0xff]
    %v6339 = vld [vmem:[#allocation19 + $0x340] sm:$0xff]
    %v6340 = vld [vmem:[#allocation19 + $0x348] sm:$0xff]
    %v6341 = vld [vmem:[#allocation19 + $0x350] sm:$0xff]
    %v6342 = vld [vmem:[#allocation19 + $0x358] sm:$0xff]
    %v6343 = vld [vmem:[#allocation19 + $0x360] sm:$0xff]
    %v6344 = vld [vmem:[#allocation19 + $0x368] sm:$0xff]
    %v6345 = vld [vmem:[#allocation19 + $0x370] sm:$0xff]
    %v6346 = vld [vmem:[#allocation19 + $0x378] sm:$0xff]
    %v6347 = vld [vmem:[#allocation19 + $0x380] sm:$0xff]
    %v6348 = vld [vmem:[#allocation19 + $0x388] sm:$0xff]
    %v6349 = vld [vmem:[#allocation19 + $0x390] sm:$0xff]
    %v6350 = vld [vmem:[#allocation19 + $0x398] sm:$0xff]
    %v6351 = vld [vmem:[#allocation19 + $0x3a0] sm:$0xff]
    %v6352 = vld [vmem:[#allocation19 + $0x3a8] sm:$0xff]
    %v6353 = vld [vmem:[#allocation19 + $0x3b0] sm:$0xff]
    %v6354 = vld [vmem:[#allocation19 + $0x3b8] sm:$0xff]
    %v6355 = vld [vmem:[#allocation19 + $0x3c0] sm:$0xff]
    %v6356 = vld [vmem:[#allocation19 + $0x3c8] sm:$0xff]
    %v6357 = vld [vmem:[#allocation19 + $0x3d0] sm:$0xff]
    %v6358 = vld [vmem:[#allocation19 + $0x3d8] sm:$0xff]
    %v6359 = vld [vmem:[#allocation19 + $0x3e0] sm:$0xff]
    %v6360 = vld [vmem:[#allocation19 + $0x3e8] sm:$0xff]
    %v6361 = vld [vmem:[#allocation19 + $0x3f0] sm:$0xff]
    %v6362 = vld [vmem:[#allocation19 + $0x3f8] sm:$0xff]
    %v6363 = vpack.c.bf16 %v6225, %v6223
    %v6364 = vpack.c.bf16 %v6226, %v6224
    %v6365 = vpack.c.bf16 %v6229, %v6227
    %v6366 = vpack.c.bf16 %v6230, %v6228
    %v6367 = vpack.c.bf16 %v6233, %v6231
    %v6368 = vpack.c.bf16 %v6234, %v6232
    %v6369 = vld [vmem:[#allocation22] sm:$0xff]
    %v6371 = vlaneseq
    %v6372 = vshrl.u32 %v6371, 7
    %v6373 = vsub.s32 0, %v6372
    %v6374 = vrot.slane %v6369, %v6373
    %v6375 = vlaneseq
    %v6376 = vshrl.u32 %v6375, 7
    %v6377 = vsub.s32 1, %v6376
    %v6378 = vrot.slane %v6369, %v6377
    %v6379 = vlaneseq
    %v6380 = vshrl.u32 %v6379, 7
    %v6381 = vsub.s32 2, %v6380
    %v6382 = vrot.slane %v6369, %v6381
    %v6383 = vlaneseq
    %v6384 = vshrl.u32 %v6383, 7
    %v6385 = vsub.s32 3, %v6384
    %v6386 = vrot.slane %v6369, %v6385
    %v6387 = vlaneseq
    %v6388 = vshrl.u32 %v6387, 7
    %v6389 = vsub.s32 4, %v6388
    %v6390 = vrot.slane %v6369, %v6389
    %v6391 = vlaneseq
    %v6392 = vshrl.u32 %v6391, 7
    %v6393 = vsub.s32 5, %v6392
    %v6394 = vrot.slane %v6369, %v6393
    %v6395 = vlaneseq
    %v6396 = vshrl.u32 %v6395, 7
    %v6397 = vsub.s32 6, %v6396
    %v6398 = vrot.slane %v6369, %v6397
    %v6399 = vlaneseq
    %v6400 = vshrl.u32 %v6399, 7
    %v6401 = vsub.s32 7, %v6400
    %v6402 = vrot.slane %v6369, %v6401
    %v6539 = vunpack.c.l.b16 %v6235
    %v6540 = vunpack.c.h.b16 %v6235
    %v6541 = vunpack.c.l.b16 %v6236
    %v6542 = vunpack.c.h.b16 %v6236
    %v6543 = vunpack.c.l.b16 %v6237
    %v6544 = vunpack.c.h.b16 %v6237
    %v6545 = vunpack.c.l.b16 %v6238
    %v6546 = vunpack.c.h.b16 %v6238
    %v6547 = vunpack.c.l.b16 %v6239
    %v6548 = vunpack.c.h.b16 %v6239
    %v6549 = vunpack.c.l.b16 %v6240
    %v6550 = vunpack.c.h.b16 %v6240
    %v6551 = vunpack.c.l.b16 %v6241
    %v6552 = vunpack.c.h.b16 %v6241
    %v6553 = vunpack.c.l.b16 %v6242
    %v6554 = vunpack.c.h.b16 %v6242
    %v6555 = vunpack.c.l.b16 %v6243
    %v6556 = vunpack.c.h.b16 %v6243
    %v6557 = vunpack.c.l.b16 %v6244
    %v6558 = vunpack.c.h.b16 %v6244
    %v6559 = vunpack.c.l.b16 %v6245
    %v6560 = vunpack.c.h.b16 %v6245
    %v6561 = vunpack.c.l.b16 %v6246
    %v6562 = vunpack.c.h.b16 %v6246
    %v6563 = vunpack.c.l.b16 %v6247
    %v6564 = vunpack.c.h.b16 %v6247
    %v6565 = vunpack.c.l.b16 %v6248
    %v6566 = vunpack.c.h.b16 %v6248
    %v6567 = vunpack.c.l.b16 %v6249
    %v6568 = vunpack.c.h.b16 %v6249
    %v6569 = vunpack.c.l.b16 %v6250
    %v6570 = vunpack.c.h.b16 %v6250
    %v6571 = vunpack.c.l.b16 %v6251
    %v6572 = vunpack.c.h.b16 %v6251
    %v6573 = vunpack.c.l.b16 %v6252
    %v6574 = vunpack.c.h.b16 %v6252
    %v6575 = vunpack.c.l.b16 %v6253
    %v6576 = vunpack.c.h.b16 %v6253
    %v6577 = vunpack.c.l.b16 %v6254
    %v6578 = vunpack.c.h.b16 %v6254
    %v6579 = vunpack.c.l.b16 %v6255
    %v6580 = vunpack.c.h.b16 %v6255
    %v6581 = vunpack.c.l.b16 %v6256
    %v6582 = vunpack.c.h.b16 %v6256
    %v6583 = vunpack.c.l.b16 %v6257
    %v6584 = vunpack.c.h.b16 %v6257
    %v6585 = vunpack.c.l.b16 %v6258
    %v6586 = vunpack.c.h.b16 %v6258
    %v6587 = vunpack.c.l.b16 %v6259
    %v6588 = vunpack.c.h.b16 %v6259
    %v6589 = vunpack.c.l.b16 %v6260
    %v6590 = vunpack.c.h.b16 %v6260
    %v6591 = vunpack.c.l.b16 %v6261
    %v6592 = vunpack.c.h.b16 %v6261
    %v6593 = vunpack.c.l.b16 %v6262
    %v6594 = vunpack.c.h.b16 %v6262
    %v6595 = vunpack.c.l.b16 %v6263
    %v6596 = vunpack.c.h.b16 %v6263
    %v6597 = vunpack.c.l.b16 %v6264
    %v6598 = vunpack.c.h.b16 %v6264
    %v6599 = vunpack.c.l.b16 %v6265
    %v6600 = vunpack.c.h.b16 %v6265
    %v6601 = vunpack.c.l.b16 %v6266
    %v6602 = vunpack.c.h.b16 %v6266
    %v6603 = vunpack.c.l.b16 %v6267
    %v6604 = vunpack.c.h.b16 %v6267
    %v6605 = vunpack.c.l.b16 %v6268
    %v6606 = vunpack.c.h.b16 %v6268
    %v6607 = vunpack.c.l.b16 %v6269
    %v6608 = vunpack.c.h.b16 %v6269
    %v6609 = vunpack.c.l.b16 %v6270
    %v6610 = vunpack.c.h.b16 %v6270
    %v6611 = vunpack.c.l.b16 %v6271
    %v6612 = vunpack.c.h.b16 %v6271
    %v6613 = vunpack.c.l.b16 %v6272
    %v6614 = vunpack.c.h.b16 %v6272
    %v6615 = vunpack.c.l.b16 %v6273
    %v6616 = vunpack.c.h.b16 %v6273
    %v6617 = vunpack.c.l.b16 %v6274
    %v6618 = vunpack.c.h.b16 %v6274
    %v6619 = vunpack.c.l.b16 %v6275
    %v6620 = vunpack.c.h.b16 %v6275
    %v6621 = vunpack.c.l.b16 %v6276
    %v6622 = vunpack.c.h.b16 %v6276
    %v6623 = vunpack.c.l.b16 %v6277
    %v6624 = vunpack.c.h.b16 %v6277
    %v6625 = vunpack.c.l.b16 %v6278
    %v6626 = vunpack.c.h.b16 %v6278
    %v6627 = vunpack.c.l.b16 %v6279
    %v6628 = vunpack.c.h.b16 %v6279
    %v6629 = vunpack.c.l.b16 %v6280
    %v6630 = vunpack.c.h.b16 %v6280
    %v6631 = vunpack.c.l.b16 %v6281
    %v6632 = vunpack.c.h.b16 %v6281
    %v6633 = vunpack.c.l.b16 %v6282
    %v6634 = vunpack.c.h.b16 %v6282
    %v6635 = vunpack.c.l.b16 %v6283
    %v6636 = vunpack.c.h.b16 %v6283
    %v6637 = vunpack.c.l.b16 %v6284
    %v6638 = vunpack.c.h.b16 %v6284
    %v6639 = vunpack.c.l.b16 %v6285
    %v6640 = vunpack.c.h.b16 %v6285
    %v6641 = vunpack.c.l.b16 %v6286
    %v6642 = vunpack.c.h.b16 %v6286
    %v6643 = vunpack.c.l.b16 %v6287
    %v6644 = vunpack.c.h.b16 %v6287
    %v6645 = vunpack.c.l.b16 %v6288
    %v6646 = vunpack.c.h.b16 %v6288
    %v6647 = vunpack.c.l.b16 %v6289
    %v6648 = vunpack.c.h.b16 %v6289
    %v6649 = vunpack.c.l.b16 %v6290
    %v6650 = vunpack.c.h.b16 %v6290
    %v6651 = vunpack.c.l.b16 %v6291
    %v6652 = vunpack.c.h.b16 %v6291
    %v6653 = vunpack.c.l.b16 %v6292
    %v6654 = vunpack.c.h.b16 %v6292
    %v6655 = vunpack.c.l.b16 %v6293
    %v6656 = vunpack.c.h.b16 %v6293
    %v6657 = vunpack.c.l.b16 %v6294
    %v6658 = vunpack.c.h.b16 %v6294
    %v6659 = vunpack.c.l.b16 %v6295
    %v6660 = vunpack.c.h.b16 %v6295
    %v6661 = vunpack.c.l.b16 %v6296
    %v6662 = vunpack.c.h.b16 %v6296
    %v6663 = vunpack.c.l.b16 %v6297
    %v6664 = vunpack.c.h.b16 %v6297
    %v6665 = vunpack.c.l.b16 %v6298
    %v6666 = vunpack.c.h.b16 %v6298
    %v6667 = vunpack.c.l.b16 %v6299
    %v6668 = vunpack.c.h.b16 %v6299
    %v6669 = vunpack.c.l.b16 %v6300
    %v6670 = vunpack.c.h.b16 %v6300
    %v6671 = vunpack.c.l.b16 %v6301
    %v6672 = vunpack.c.h.b16 %v6301
    %v6673 = vunpack.c.l.b16 %v6302
    %v6674 = vunpack.c.h.b16 %v6302
    %v6675 = vunpack.c.l.b16 %v6303
    %v6676 = vunpack.c.h.b16 %v6303
    %v6677 = vunpack.c.l.b16 %v6304
    %v6678 = vunpack.c.h.b16 %v6304
    %v6679 = vunpack.c.l.b16 %v6305
    %v6680 = vunpack.c.h.b16 %v6305
    %v6681 = vunpack.c.l.b16 %v6306
    %v6682 = vunpack.c.h.b16 %v6306
    %v6683 = vunpack.c.l.b16 %v6307
    %v6684 = vunpack.c.h.b16 %v6307
    %v6685 = vunpack.c.l.b16 %v6308
    %v6686 = vunpack.c.h.b16 %v6308
    %v6687 = vunpack.c.l.b16 %v6309
    %v6688 = vunpack.c.h.b16 %v6309
    %v6689 = vunpack.c.l.b16 %v6310
    %v6690 = vunpack.c.h.b16 %v6310
    %v6691 = vunpack.c.l.b16 %v6311
    %v6692 = vunpack.c.h.b16 %v6311
    %v6693 = vunpack.c.l.b16 %v6312
    %v6694 = vunpack.c.h.b16 %v6312
    %v6695 = vunpack.c.l.b16 %v6313
    %v6696 = vunpack.c.h.b16 %v6313
    %v6697 = vunpack.c.l.b16 %v6314
    %v6698 = vunpack.c.h.b16 %v6314
    %v6699 = vunpack.c.l.b16 %v6315
    %v6700 = vunpack.c.h.b16 %v6315
    %v6701 = vunpack.c.l.b16 %v6316
    %v6702 = vunpack.c.h.b16 %v6316
    %v6703 = vunpack.c.l.b16 %v6317
    %v6704 = vunpack.c.h.b16 %v6317
    %v6705 = vunpack.c.l.b16 %v6318
    %v6706 = vunpack.c.h.b16 %v6318
    %v6707 = vunpack.c.l.b16 %v6319
    %v6708 = vunpack.c.h.b16 %v6319
    %v6709 = vunpack.c.l.b16 %v6320
    %v6710 = vunpack.c.h.b16 %v6320
    %v6711 = vunpack.c.l.b16 %v6321
    %v6712 = vunpack.c.h.b16 %v6321
    %v6713 = vunpack.c.l.b16 %v6322
    %v6714 = vunpack.c.h.b16 %v6322
    %v6715 = vunpack.c.l.b16 %v6323
    %v6716 = vunpack.c.h.b16 %v6323
    %v6717 = vunpack.c.l.b16 %v6324
    %v6718 = vunpack.c.h.b16 %v6324
    %v6719 = vunpack.c.l.b16 %v6325
    %v6720 = vunpack.c.h.b16 %v6325
    %v6721 = vunpack.c.l.b16 %v6326
    %v6722 = vunpack.c.h.b16 %v6326
    %v6723 = vunpack.c.l.b16 %v6327
    %v6724 = vunpack.c.h.b16 %v6327
    %v6725 = vunpack.c.l.b16 %v6328
    %v6726 = vunpack.c.h.b16 %v6328
    %v6727 = vunpack.c.l.b16 %v6329
    %v6728 = vunpack.c.h.b16 %v6329
    %v6729 = vunpack.c.l.b16 %v6330
    %v6730 = vunpack.c.h.b16 %v6330
    %v6731 = vunpack.c.l.b16 %v6331
    %v6732 = vunpack.c.h.b16 %v6331
    %v6733 = vunpack.c.l.b16 %v6332
    %v6734 = vunpack.c.h.b16 %v6332
    %v6735 = vunpack.c.l.b16 %v6333
    %v6736 = vunpack.c.h.b16 %v6333
    %v6737 = vunpack.c.l.b16 %v6334
    %v6738 = vunpack.c.h.b16 %v6334
    %v6739 = vunpack.c.l.b16 %v6335
    %v6740 = vunpack.c.h.b16 %v6335
    %v6741 = vunpack.c.l.b16 %v6336
    %v6742 = vunpack.c.h.b16 %v6336
    %v6743 = vunpack.c.l.b16 %v6337
    %v6744 = vunpack.c.h.b16 %v6337
    %v6745 = vunpack.c.l.b16 %v6338
    %v6746 = vunpack.c.h.b16 %v6338
    %v6747 = vunpack.c.l.b16 %v6339
    %v6748 = vunpack.c.h.b16 %v6339
    %v6749 = vunpack.c.l.b16 %v6340
    %v6750 = vunpack.c.h.b16 %v6340
    %v6751 = vunpack.c.l.b16 %v6341
    %v6752 = vunpack.c.h.b16 %v6341
    %v6753 = vunpack.c.l.b16 %v6342
    %v6754 = vunpack.c.h.b16 %v6342
    %v6755 = vunpack.c.l.b16 %v6343
    %v6756 = vunpack.c.h.b16 %v6343
    %v6757 = vunpack.c.l.b16 %v6344
    %v6758 = vunpack.c.h.b16 %v6344
    %v6759 = vunpack.c.l.b16 %v6345
    %v6760 = vunpack.c.h.b16 %v6345
    %v6761 = vunpack.c.l.b16 %v6346
    %v6762 = vunpack.c.h.b16 %v6346
    %v6763 = vunpack.c.l.b16 %v6347
    %v6764 = vunpack.c.h.b16 %v6347
    %v6765 = vunpack.c.l.b16 %v6348
    %v6766 = vunpack.c.h.b16 %v6348
    %v6767 = vunpack.c.l.b16 %v6349
    %v6768 = vunpack.c.h.b16 %v6349
    %v6769 = vunpack.c.l.b16 %v6350
    %v6770 = vunpack.c.h.b16 %v6350
    %v6771 = vunpack.c.l.b16 %v6351
    %v6772 = vunpack.c.h.b16 %v6351
    %v6773 = vunpack.c.l.b16 %v6352
    %v6774 = vunpack.c.h.b16 %v6352
    %v6775 = vunpack.c.l.b16 %v6353
    %v6776 = vunpack.c.h.b16 %v6353
    %v6777 = vunpack.c.l.b16 %v6354
    %v6778 = vunpack.c.h.b16 %v6354
    %v6779 = vunpack.c.l.b16 %v6355
    %v6780 = vunpack.c.h.b16 %v6355
    %v6781 = vunpack.c.l.b16 %v6356
    %v6782 = vunpack.c.h.b16 %v6356
    %v6783 = vunpack.c.l.b16 %v6357
    %v6784 = vunpack.c.h.b16 %v6357
    %v6785 = vunpack.c.l.b16 %v6358
    %v6786 = vunpack.c.h.b16 %v6358
    %v6787 = vunpack.c.l.b16 %v6359
    %v6788 = vunpack.c.h.b16 %v6359
    %v6789 = vunpack.c.l.b16 %v6360
    %v6790 = vunpack.c.h.b16 %v6360
    %v6791 = vunpack.c.l.b16 %v6361
    %v6792 = vunpack.c.h.b16 %v6361
    %v6793 = vunpack.c.l.b16 %v6362
    %v6794 = vunpack.c.h.b16 %v6362
    %v6795 = vpack.c.b16 %v6547, %v6539
    %v6796 = vpack.c.b16 %v6548, %v6540
    %v6797 = vpack.c.b16 %v6549, %v6541
    %v6798 = vpack.c.b16 %v6550, %v6542
    %v6799 = vpack.c.b16 %v6551, %v6543
    %v6800 = vpack.c.b16 %v6552, %v6544
    %v6801 = vpack.c.b16 %v6553, %v6545
    %v6802 = vpack.c.b16 %v6554, %v6546
    %v6803 = vpack.c.b16 %v6563, %v6555
    %v6804 = vpack.c.b16 %v6564, %v6556
    %v6805 = vpack.c.b16 %v6565, %v6557
    %v6806 = vpack.c.b16 %v6566, %v6558
    %v6807 = vpack.c.b16 %v6567, %v6559
    %v6808 = vpack.c.b16 %v6568, %v6560
    %v6809 = vpack.c.b16 %v6569, %v6561
    %v6810 = vpack.c.b16 %v6570, %v6562
    %v6811 = vpack.c.b16 %v6579, %v6571
    %v6812 = vpack.c.b16 %v6580, %v6572
    %v6813 = vpack.c.b16 %v6581, %v6573
    %v6814 = vpack.c.b16 %v6582, %v6574
    %v6815 = vpack.c.b16 %v6583, %v6575
    %v6816 = vpack.c.b16 %v6584, %v6576
    %v6817 = vpack.c.b16 %v6585, %v6577
    %v6818 = vpack.c.b16 %v6586, %v6578
    %v6819 = vpack.c.b16 %v6595, %v6587
    %v6820 = vpack.c.b16 %v6596, %v6588
    %v6821 = vpack.c.b16 %v6597, %v6589
    %v6822 = vpack.c.b16 %v6598, %v6590
    %v6823 = vpack.c.b16 %v6599, %v6591
    %v6824 = vpack.c.b16 %v6600, %v6592
    %v6825 = vpack.c.b16 %v6601, %v6593
    %v6826 = vpack.c.b16 %v6602, %v6594
    %v6827 = vpack.c.b16 %v6611, %v6603
    %v6828 = vpack.c.b16 %v6612, %v6604
    %v6829 = vpack.c.b16 %v6613, %v6605
    %v6830 = vpack.c.b16 %v6614, %v6606
    %v6831 = vpack.c.b16 %v6615, %v6607
    %v6832 = vpack.c.b16 %v6616, %v6608
    %v6833 = vpack.c.b16 %v6617, %v6609
    %v6834 = vpack.c.b16 %v6618, %v6610
    %v6835 = vpack.c.b16 %v6627, %v6619
    %v6836 = vpack.c.b16 %v6628, %v6620
    %v6837 = vpack.c.b16 %v6629, %v6621
    %v6838 = vpack.c.b16 %v6630, %v6622
    %v6839 = vpack.c.b16 %v6631, %v6623
    %v6840 = vpack.c.b16 %v6632, %v6624
    %v6841 = vpack.c.b16 %v6633, %v6625
    %v6842 = vpack.c.b16 %v6634, %v6626
    %v6843 = vpack.c.b16 %v6643, %v6635
    %v6844 = vpack.c.b16 %v6644, %v6636
    %v6845 = vpack.c.b16 %v6645, %v6637
    %v6846 = vpack.c.b16 %v6646, %v6638
    %v6847 = vpack.c.b16 %v6647, %v6639
    %v6848 = vpack.c.b16 %v6648, %v6640
    %v6849 = vpack.c.b16 %v6649, %v6641
    %v6850 = vpack.c.b16 %v6650, %v6642
    %v6851 = vpack.c.b16 %v6659, %v6651
    %v6852 = vpack.c.b16 %v6660, %v6652
    %v6853 = vpack.c.b16 %v6661, %v6653
    %v6854 = vpack.c.b16 %v6662, %v6654
    %v6855 = vpack.c.b16 %v6663, %v6655
    %v6856 = vpack.c.b16 %v6664, %v6656
    %v6857 = vpack.c.b16 %v6665, %v6657
    %v6858 = vpack.c.b16 %v6666, %v6658
    %v6859 = vpack.c.b16 %v6675, %v6667
    %v6860 = vpack.c.b16 %v6676, %v6668
    %v6861 = vpack.c.b16 %v6677, %v6669
    %v6862 = vpack.c.b16 %v6678, %v6670
    %v6863 = vpack.c.b16 %v6679, %v6671
    %v6864 = vpack.c.b16 %v6680, %v6672
    %v6865 = vpack.c.b16 %v6681, %v6673
    %v6866 = vpack.c.b16 %v6682, %v6674
    %v6867 = vpack.c.b16 %v6691, %v6683
    %v6868 = vpack.c.b16 %v6692, %v6684
    %v6869 = vpack.c.b16 %v6693, %v6685
    %v6870 = vpack.c.b16 %v6694, %v6686
    %v6871 = vpack.c.b16 %v6695, %v6687
    %v6872 = vpack.c.b16 %v6696, %v6688
    %v6873 = vpack.c.b16 %v6697, %v6689
    %v6874 = vpack.c.b16 %v6698, %v6690
    %v6875 = vpack.c.b16 %v6707, %v6699
    %v6876 = vpack.c.b16 %v6708, %v6700
    %v6877 = vpack.c.b16 %v6709, %v6701
    %v6878 = vpack.c.b16 %v6710, %v6702
    %v6879 = vpack.c.b16 %v6711, %v6703
    %v6880 = vpack.c.b16 %v6712, %v6704
    %v6881 = vpack.c.b16 %v6713, %v6705
    %v6882 = vpack.c.b16 %v6714, %v6706
    %v6883 = vpack.c.b16 %v6723, %v6715
    %v6884 = vpack.c.b16 %v6724, %v6716
    %v6885 = vpack.c.b16 %v6725, %v6717
    %v6886 = vpack.c.b16 %v6726, %v6718
    %v6887 = vpack.c.b16 %v6727, %v6719
    %v6888 = vpack.c.b16 %v6728, %v6720
    %v6889 = vpack.c.b16 %v6729, %v6721
    %v6890 = vpack.c.b16 %v6730, %v6722
    %v6891 = vpack.c.b16 %v6739, %v6731
    %v6892 = vpack.c.b16 %v6740, %v6732
    %v6893 = vpack.c.b16 %v6741, %v6733
    %v6894 = vpack.c.b16 %v6742, %v6734
    %v6895 = vpack.c.b16 %v6743, %v6735
    %v6896 = vpack.c.b16 %v6744, %v6736
    %v6897 = vpack.c.b16 %v6745, %v6737
    %v6898 = vpack.c.b16 %v6746, %v6738
    %v6899 = vpack.c.b16 %v6755, %v6747
    %v6900 = vpack.c.b16 %v6756, %v6748
    %v6901 = vpack.c.b16 %v6757, %v6749
    %v6902 = vpack.c.b16 %v6758, %v6750
    %v6903 = vpack.c.b16 %v6759, %v6751
    %v6904 = vpack.c.b16 %v6760, %v6752
    %v6905 = vpack.c.b16 %v6761, %v6753
    %v6906 = vpack.c.b16 %v6762, %v6754
    %v6907 = vpack.c.b16 %v6771, %v6763
    %v6908 = vpack.c.b16 %v6772, %v6764
    %v6909 = vpack.c.b16 %v6773, %v6765
    %v6910 = vpack.c.b16 %v6774, %v6766
    %v6911 = vpack.c.b16 %v6775, %v6767
    %v6912 = vpack.c.b16 %v6776, %v6768
    %v6913 = vpack.c.b16 %v6777, %v6769
    %v6914 = vpack.c.b16 %v6778, %v6770
    %v6915 = vpack.c.b16 %v6787, %v6779
    %v6916 = vpack.c.b16 %v6788, %v6780
    %v6917 = vpack.c.b16 %v6789, %v6781
    %v6918 = vpack.c.b16 %v6790, %v6782
    %v6919 = vpack.c.b16 %v6791, %v6783
    %v6920 = vpack.c.b16 %v6792, %v6784
    %v6921 = vpack.c.b16 %v6793, %v6785
    %v6922 = vpack.c.b16 %v6794, %v6786
    %7051 = vmatprep.subr.bf16.mxu0 %v6796
    %7052 = vmatpush1.bf16.msra.mxu0 %v6795
    %7053 = vmatprep.subr.bf16.mxu0 %v6804
    %7054 = vmatpush1.bf16.msra.mxu0 %v6803
    %7055 = vmatprep.subr.bf16.mxu0 %v6812
    %7056 = vmatpush1.bf16.msra.mxu0 %v6811
    %7057 = vmatprep.subr.bf16.mxu0 %v6820
    %7058 = vmatpush1.bf16.msra.mxu0 %v6819
    %7059 = vmatprep.subr.bf16.mxu0 %v6828
    %7060 = vmatpush1.bf16.msra.mxu0 %v6827
    %7061 = vmatprep.subr.bf16.mxu0 %v6836
    %7062 = vmatpush1.bf16.msra.mxu0 %v6835
    %7063 = vmatprep.subr.bf16.mxu0 %v6844
    %7064 = vmatpush1.bf16.msra.mxu0 %v6843
    %7065 = vmatprep.subr.bf16.mxu0 %v6852
    %7066 = vmatpush1.bf16.msra.mxu0 %v6851
    %7067 = vmatprep.subr.bf16.mxu0 %v6860
    %7068 = vmatpush1.bf16.msra.mxu0 %v6859
    %7069 = vmatprep.subr.bf16.mxu0 %v6868
    %7070 = vmatpush1.bf16.msra.mxu0 %v6867
    %7071 = vmatprep.subr.bf16.mxu0 %v6876
    %7072 = vmatpush1.bf16.msra.mxu0 %v6875
    %7073 = vmatprep.subr.bf16.mxu0 %v6884
    %7074 = vmatpush1.bf16.msra.mxu0 %v6883
    %7075 = vmatprep.subr.bf16.mxu0 %v6892
    %7076 = vmatpush1.bf16.msra.mxu0 %v6891
    %7077 = vmatprep.subr.bf16.mxu0 %v6900
    %7078 = vmatpush1.bf16.msra.mxu0 %v6899
    %7079 = vmatprep.subr.bf16.mxu0 %v6908
    %7080 = vmatpush1.bf16.msra.mxu0 %v6907
    %7081 = vmatprep.subr.bf16.mxu0 %v6916
    %7082 = vmatpush1.bf16.msra.mxu0 %v6915
    %7083 = vmatprep.mubr.bf16.mxu0 %v6364
    %7084 = vmatmul.mubr.bf16.gmra.mrb[0].mxu0 %v6363
    %v7085 = vpop.f32.mrb[0].mxu0
    %v7086 = vadd.f32 %v6374, %v7085
    %v7087 = vpop.f32.mrb[0].mxu0
    %v7088 = vadd.f32 %v6378, %v7087
    %v7089 = vpop.f32.mrb[0].mxu0
    %v7090 = vadd.f32 %v6374, %v7089
    %v7091 = vpop.f32.mrb[0].mxu0
    %v7092 = vadd.f32 %v6378, %v7091
    %7093 = vmatprep.mubr.bf16.mxu0 %v6366
    %7094 = vmatmul.mubr.bf16.gmra.mrb[0].mxu0 %v6365
    %v7095 = vpop.f32.mrb[0].mxu0
    %v7096 = vadd.f32 %v6374, %v7095
    %v7097 = vpop.f32.mrb[0].mxu0
    %v7098 = vadd.f32 %v6378, %v7097
    %v7099 = vpop.f32.mrb[0].mxu0
    %v7100 = vadd.f32 %v6374, %v7099
    %v7101 = vpop.f32.mrb[0].mxu0
    %v7102 = vadd.f32 %v6378, %v7101
    %7103 = vmatprep.mubr.bf16.mxu0 %v6368
    %7104 = vmatmul.mubr.bf16.gmra.mrb[0].mxu0 %v6367
    %v7105 = vpop.f32.mrb[0].mxu0
    %v7106 = vadd.f32 %v6374, %v7105
    %v7107 = vpop.f32.mrb[0].mxu0
    %v7108 = vadd.f32 %v6378, %v7107
    %v7109 = vpop.f32.mrb[0].mxu0
    %v7110 = vadd.f32 %v6374, %v7109
    %v7111 = vpop.f32.mrb[0].mxu0
    %v7112 = vadd.f32 %v6378, %v7111
    %7113 = vdwg.mxu0
    %7114 = vmatprep.subr.bf16.mxu0 %v6798
    %7115 = vmatpush1.bf16.msra.mxu0 %v6797
    %7116 = vmatprep.subr.bf16.mxu0 %v6806
    %7117 = vmatpush1.bf16.msra.mxu0 %v6805
    %7118 = vmatprep.subr.bf16.mxu0 %v6814
    %7119 = vmatpush1.bf16.msra.mxu0 %v6813
    %7120 = vmatprep.subr.bf16.mxu0 %v6822
    %7121 = vmatpush1.bf16.msra.mxu0 %v6821
    %7122 = vmatprep.subr.bf16.mxu0 %v6830
    %7123 = vmatpush1.bf16.msra.mxu0 %v6829
    %7124 = vmatprep.subr.bf16.mxu0 %v6838
    %7125 = vmatpush1.bf16.msra.mxu0 %v6837
    %7126 = vmatprep.subr.bf16.mxu0 %v6846
    %7127 = vmatpush1.bf16.msra.mxu0 %v6845
    %7128 = vmatprep.subr.bf16.mxu0 %v6854
    %7129 = vmatpush1.bf16.msra.mxu0 %v6853
    %7130 = vmatprep.subr.bf16.mxu0 %v6862
    %7131 = vmatpush1.bf16.msra.mxu0 %v6861
    %7132 = vmatprep.subr.bf16.mxu0 %v6870
    %7133 = vmatpush1.bf16.msra.mxu0 %v6869
    %7134 = vmatprep.subr.bf16.mxu0 %v6878
    %7135 = vmatpush1.bf16.msra.mxu0 %v6877
    %7136 = vmatprep.subr.bf16.mxu0 %v6886
    %7137 = vmatpush1.bf16.msra.mxu0 %v6885
    %7138 = vmatprep.subr.bf16.mxu0 %v6894
    %7139 = vmatpush1.bf16.msra.mxu0 %v6893
    %7140 = vmatprep.subr.bf16.mxu0 %v6902
    %7141 = vmatpush1.bf16.msra.mxu0 %v6901
    %7142 = vmatprep.subr.bf16.mxu0 %v6910
    %7143 = vmatpush1.bf16.msra.mxu0 %v6909
    %7144 = vmatprep.subr.bf16.mxu0 %v6918
    %7145 = vmatpush1.bf16.msra.mxu0 %v6917
    %7146 = vmatprep.mubr.bf16.mxu0 %v6364
    %7147 = vmatmul.mubr.bf16.gmra.mrb[0].mxu0 %v6363
    %v7148 = vpop.f32.mrb[0].mxu0
    %v7149 = vadd.f32 %v6382, %v7148
    %v7150 = vpop.f32.mrb[0].mxu0
    %v7151 = vadd.f32 %v6386, %v7150
    %v7152 = vpop.f32.mrb[0].mxu0
    %v7153 = vadd.f32 %v6382, %v7152
    %v7154 = vpop.f32.mrb[0].mxu0
    %v7155 = vadd.f32 %v6386, %v7154
    %7156 = vmatprep.mubr.bf16.mxu0 %v6366
    %7157 = vmatmul.mubr.bf16.gmra.mrb[0].mxu0 %v6365
    %v7158 = vpop.f32.mrb[0].mxu0
    %v7159 = vadd.f32 %v6382, %v7158
    %v7160 = vpop.f32.mrb[0].mxu0
    %v7161 = vadd.f32 %v6386, %v7160
    %v7162 = vpop.f32.mrb[0].mxu0
    %v7163 = vadd.f32 %v6382, %v7162
    %v7164 = vpop.f32.mrb[0].mxu0
    %v7165 = vadd.f32 %v6386, %v7164
    %7166 = vmatprep.mubr.bf16.mxu0 %v6368
    %7167 = vmatmul.mubr.bf16.gmra.mrb[0].mxu0 %v6367
    %v7168 = vpop.f32.mrb[0].mxu0
    %v7169 = vadd.f32 %v6382, %v7168
    %v7170 = vpop.f32.mrb[0].mxu0
    %v7171 = vadd.f32 %v6386, %v7170
    %v7172 = vpop.f32.mrb[0].mxu0
    %v7173 = vadd.f32 %v6382, %v7172
    %v7174 = vpop.f32.mrb[0].mxu0
    %v7175 = vadd.f32 %v6386, %v7174
    %7176 = vdwg.mxu0
    %7177 = vmatprep.subr.bf16.mxu0 %v6800
    %7178 = vmatpush1.bf16.msra.mxu0 %v6799
    %7179 = vmatprep.subr.bf16.mxu0 %v6808
    %7180 = vmatpush1.bf16.msra.mxu0 %v6807
    %7181 = vmatprep.subr.bf16.mxu0 %v6816
    %7182 = vmatpush1.bf16.msra.mxu0 %v6815
    %7183 = vmatprep.subr.bf16.mxu0 %v6824
    %7184 = vmatpush1.bf16.msra.mxu0 %v6823
    %7185 = vmatprep.subr.bf16.mxu0 %v6832
    %7186 = vmatpush1.bf16.msra.mxu0 %v6831
    %7187 = vmatprep.subr.bf16.mxu0 %v6840
    %7188 = vmatpush1.bf16.msra.mxu0 %v6839
    %7189 = vmatprep.subr.bf16.mxu0 %v6848
    %7190 = vmatpush1.bf16.msra.mxu0 %v6847
    %7191 = vmatprep.subr.bf16.mxu0 %v6856
    %7192 = vmatpush1.bf16.msra.mxu0 %v6855
    %7193 = vmatprep.subr.bf16.mxu0 %v6864
    %7194 = vmatpush1.bf16.msra.mxu0 %v6863
    %7195 = vmatprep.subr.bf16.mxu0 %v6872
    %7196 = vmatpush1.bf16.msra.mxu0 %v6871
    %7197 = vmatprep.subr.bf16.mxu0 %v6880
    %7198 = vmatpush1.bf16.msra.mxu0 %v6879
    %7199 = vmatprep.subr.bf16.mxu0 %v6888
    %7200 = vmatpush1.bf16.msra.mxu0 %v6887
    %7201 = vmatprep.subr.bf16.mxu0 %v6896
    %7202 = vmatpush1.bf16.msra.mxu0 %v6895
    %7203 = vmatprep.subr.bf16.mxu0 %v6904
    %7204 = vmatpush1.bf16.msra.mxu0 %v6903
    %7205 = vmatprep.subr.bf16.mxu0 %v6912
    %7206 = vmatpush1.bf16.msra.mxu0 %v6911
    %7207 = vmatprep.subr.bf16.mxu0 %v6920
    %7208 = vmatpush1.bf16.msra.mxu0 %v6919
    %7209 = vmatprep.mubr.bf16.mxu0 %v6364
    %7210 = vmatmul.mubr.bf16.gmra.mrb[0].mxu0 %v6363
    %v7211 = vpop.f32.mrb[0].mxu0
    %v7212 = vadd.f32 %v6390, %v7211
    %v7213 = vpop.f32.mrb[0].mxu0
    %v7214 = vadd.f32 %v6394, %v7213
    %v7215 = vpop.f32.mrb[0].mxu0
    %v7216 = vadd.f32 %v6390, %v7215
    %v7217 = vpop.f32.mrb[0].mxu0
    %v7218 = vadd.f32 %v6394, %v7217
    %7219 = vmatprep.mubr.bf16.mxu0 %v6366
    %7220 = vmatmul.mubr.bf16.gmra.mrb[0].mxu0 %v6365
    %v7221 = vpop.f32.mrb[0].mxu0
    %v7222 = vadd.f32 %v6390, %v7221
    %v7223 = vpop.f32.mrb[0].mxu0
    %v7224 = vadd.f32 %v6394, %v7223
    %v7225 = vpop.f32.mrb[0].mxu0
    %v7226 = vadd.f32 %v6390, %v7225
    %v7227 = vpop.f32.mrb[0].mxu0
    %v7228 = vadd.f32 %v6394, %v7227
    %7229 = vmatprep.mubr.bf16.mxu0 %v6368
    %7230 = vmatmul.mubr.bf16.gmra.mrb[0].mxu0 %v6367
    %v7231 = vpop.f32.mrb[0].mxu0
    %v7232 = vadd.f32 %v6390, %v7231
    %v7233 = vpop.f32.mrb[0].mxu0
    %v7234 = vadd.f32 %v6394, %v7233
    %v7235 = vpop.f32.mrb[0].mxu0
    %v7236 = vadd.f32 %v6390, %v7235
    %v7237 = vpop.f32.mrb[0].mxu0
    %v7238 = vadd.f32 %v6394, %v7237
    %7239 = vdwg.mxu0
    %7240 = vmatprep.subr.bf16.mxu0 %v6802
    %7241 = vmatpush1.bf16.msra.mxu0 %v6801
    %7242 = vmatprep.subr.bf16.mxu0 %v6810
    %7243 = vmatpush1.bf16.msra.mxu0 %v6809
    %7244 = vmatprep.subr.bf16.mxu0 %v6818
    %7245 = vmatpush1.bf16.msra.mxu0 %v6817
    %7246 = vmatprep.subr.bf16.mxu0 %v6826
    %7247 = vmatpush1.bf16.msra.mxu0 %v6825
    %7248 = vmatprep.subr.bf16.mxu0 %v6834
    %7249 = vmatpush1.bf16.msra.mxu0 %v6833
    %7250 = vmatprep.subr.bf16.mxu0 %v6842
    %7251 = vmatpush1.bf16.msra.mxu0 %v6841
    %7252 = vmatprep.subr.bf16.mxu0 %v6850
    %7253 = vmatpush1.bf16.msra.mxu0 %v6849
    %7254 = vmatprep.subr.bf16.mxu0 %v6858
    %7255 = vmatpush1.bf16.msra.mxu0 %v6857
    %7256 = vmatprep.subr.bf16.mxu0 %v6866
    %7257 = vmatpush1.bf16.msra.mxu0 %v6865
    %7258 = vmatprep.subr.bf16.mxu0 %v6874
    %7259 = vmatpush1.bf16.msra.mxu0 %v6873
    %7260 = vmatprep.subr.bf16.mxu0 %v6882
    %7261 = vmatpush1.bf16.msra.mxu0 %v6881
    %7262 = vmatprep.subr.bf16.mxu0 %v6890
    %7263 = vmatpush1.bf16.msra.mxu0 %v6889
    %7264 = vmatprep.subr.bf16.mxu0 %v6898
    %7265 = vmatpush1.bf16.msra.mxu0 %v6897
    %7266 = vmatprep.subr.bf16.mxu0 %v6906
    %7267 = vmatpush1.bf16.msra.mxu0 %v6905
    %7268 = vmatprep.subr.bf16.mxu0 %v6914
    %7269 = vmatpush1.bf16.msra.mxu0 %v6913
    %7270 = vmatprep.subr.bf16.mxu0 %v6922
    %7271 = vmatpush1.bf16.msra.mxu0 %v6921
    %7272 = vmatprep.mubr.bf16.mxu0 %v6364
    %7273 = vmatmul.mubr.bf16.gmra.mrb[0].mxu0 %v6363
    %v7274 = vpop.f32.mrb[0].mxu0
    %v7275 = vadd.f32 %v6398, %v7274
    %v7276 = vpop.f32.mrb[0].mxu0
    %v7277 = vadd.f32 %v6402, %v7276
    %v7278 = vpop.f32.mrb[0].mxu0
    %v7279 = vadd.f32 %v6398, %v7278
    %v7280 = vpop.f32.mrb[0].mxu0
    %v7281 = vadd.f32 %v6402, %v7280
    %7282 = vmatprep.mubr.bf16.mxu0 %v6366
    %7283 = vmatmul.mubr.bf16.gmra.mrb[0].mxu0 %v6365
    %v7284 = vpop.f32.mrb[0].mxu0
    %v7285 = vadd.f32 %v6398, %v7284
    %v7286 = vpop.f32.mrb[0].mxu0
    %v7287 = vadd.f32 %v6402, %v7286
    %v7288 = vpop.f32.mrb[0].mxu0
    %v7289 = vadd.f32 %v6398, %v7288
    %v7290 = vpop.f32.mrb[0].mxu0
    %v7291 = vadd.f32 %v6402, %v7290
    %7292 = vmatprep.mubr.bf16.mxu0 %v6368
    %7293 = vmatmul.mubr.bf16.gmra.mrb[0].mxu0 %v6367
    %v7294 = vpop.f32.mrb[0].mxu0
    %v7295 = vadd.f32 %v6398, %v7294
    %v7296 = vpop.f32.mrb[0].mxu0
    %v7297 = vadd.f32 %v6402, %v7296
    %v7298 = vpop.f32.mrb[0].mxu0
    %v7299 = vadd.f32 %v6398, %v7298
    %v7300 = vpop.f32.mrb[0].mxu0
    %v7301 = vadd.f32 %v6402, %v7300
    %7302 = vdwg.mxu0
    %v7303 = vld [vmem:[#allocation20] sm:$0xff]
    %v7304 = vld [vmem:[#allocation20 + $0x8] sm:$0xff]
    %v7305 = vld [vmem:[#allocation20 + $0x10] sm:$0xff]
    %v7306 = vld [vmem:[#allocation20 + $0x18] sm:$0xff]
    %v7307 = vld [vmem:[#allocation20 + $0x20] sm:$0xff]
    %v7308 = vld [vmem:[#allocation20 + $0x28] sm:$0xff]
    %v7309 = vld [vmem:[#allocation20 + $0x30] sm:$0xff]
    %v7310 = vld [vmem:[#allocation20 + $0x38] sm:$0xff]
    %v7311 = vld [vmem:[#allocation20 + $0x40] sm:$0xff]
    %v7312 = vld [vmem:[#allocation20 + $0x48] sm:$0xff]
    %v7313 = vld [vmem:[#allocation20 + $0x50] sm:$0xff]
    %v7314 = vld [vmem:[#allocation20 + $0x58] sm:$0xff]
    %v7315 = vld [vmem:[#allocation20 + $0x60] sm:$0xff]
    %v7316 = vld [vmem:[#allocation20 + $0x68] sm:$0xff]
    %v7317 = vld [vmem:[#allocation20 + $0x70] sm:$0xff]
    %v7318 = vld [vmem:[#allocation20 + $0x78] sm:$0xff]
    %v7319 = vld [vmem:[#allocation20 + $0x80] sm:$0xff]
    %v7320 = vld [vmem:[#allocation20 + $0x88] sm:$0xff]
    %v7321 = vld [vmem:[#allocation20 + $0x90] sm:$0xff]
    %v7322 = vld [vmem:[#allocation20 + $0x98] sm:$0xff]
    %v7323 = vld [vmem:[#allocation20 + $0xa0] sm:$0xff]
    %v7324 = vld [vmem:[#allocation20 + $0xa8] sm:$0xff]
    %v7325 = vld [vmem:[#allocation20 + $0xb0] sm:$0xff]
    %v7326 = vld [vmem:[#allocation20 + $0xb8] sm:$0xff]
    %v7327 = vld [vmem:[#allocation20 + $0xc0] sm:$0xff]
    %v7328 = vld [vmem:[#allocation20 + $0xc8] sm:$0xff]
    %v7329 = vld [vmem:[#allocation20 + $0xd0] sm:$0xff]
    %v7330 = vld [vmem:[#allocation20 + $0xd8] sm:$0xff]
    %v7331 = vld [vmem:[#allocation20 + $0xe0] sm:$0xff]
    %v7332 = vld [vmem:[#allocation20 + $0xe8] sm:$0xff]
    %v7333 = vld [vmem:[#allocation20 + $0xf0] sm:$0xff]
    %v7334 = vld [vmem:[#allocation20 + $0xf8] sm:$0xff]
    %v7335 = vld [vmem:[#allocation20 + $0x100] sm:$0xff]
    %v7336 = vld [vmem:[#allocation20 + $0x108] sm:$0xff]
    %v7337 = vld [vmem:[#allocation20 + $0x110] sm:$0xff]
    %v7338 = vld [vmem:[#allocation20 + $0x118] sm:$0xff]
    %v7339 = vld [vmem:[#allocation20 + $0x120] sm:$0xff]
    %v7340 = vld [vmem:[#allocation20 + $0x128] sm:$0xff]
    %v7341 = vld [vmem:[#allocation20 + $0x130] sm:$0xff]
    %v7342 = vld [vmem:[#allocation20 + $0x138] sm:$0xff]
    %v7343 = vld [vmem:[#allocation20 + $0x140] sm:$0xff]
    %v7344 = vld [vmem:[#allocation20 + $0x148] sm:$0xff]
    %v7345 = vld [vmem:[#allocation20 + $0x150] sm:$0xff]
    %v7346 = vld [vmem:[#allocation20 + $0x158] sm:$0xff]
    %v7347 = vld [vmem:[#allocation20 + $0x160] sm:$0xff]
    %v7348 = vld [vmem:[#allocation20 + $0x168] sm:$0xff]
    %v7349 = vld [vmem:[#allocation20 + $0x170] sm:$0xff]
    %v7350 = vld [vmem:[#allocation20 + $0x178] sm:$0xff]
    %v7351 = vld [vmem:[#allocation20 + $0x180] sm:$0xff]
    %v7352 = vld [vmem:[#allocation20 + $0x188] sm:$0xff]
    %v7353 = vld [vmem:[#allocation20 + $0x190] sm:$0xff]
    %v7354 = vld [vmem:[#allocation20 + $0x198] sm:$0xff]
    %v7355 = vld [vmem:[#allocation20 + $0x1a0] sm:$0xff]
    %v7356 = vld [vmem:[#allocation20 + $0x1a8] sm:$0xff]
    %v7357 = vld [vmem:[#allocation20 + $0x1b0] sm:$0xff]
    %v7358 = vld [vmem:[#allocation20 + $0x1b8] sm:$0xff]
    %v7359 = vld [vmem:[#allocation20 + $0x1c0] sm:$0xff]
    %v7360 = vld [vmem:[#allocation20 + $0x1c8] sm:$0xff]
    %v7361 = vld [vmem:[#allocation20 + $0x1d0] sm:$0xff]
    %v7362 = vld [vmem:[#allocation20 + $0x1d8] sm:$0xff]
    %v7363 = vld [vmem:[#allocation20 + $0x1e0] sm:$0xff]
    %v7364 = vld [vmem:[#allocation20 + $0x1e8] sm:$0xff]
    %v7365 = vld [vmem:[#allocation20 + $0x1f0] sm:$0xff]
    %v7366 = vld [vmem:[#allocation20 + $0x1f8] sm:$0xff]
    %v7367 = vld [vmem:[#allocation20 + $0x200] sm:$0xff]
    %v7368 = vld [vmem:[#allocation20 + $0x208] sm:$0xff]
    %v7369 = vld [vmem:[#allocation20 + $0x210] sm:$0xff]
    %v7370 = vld [vmem:[#allocation20 + $0x218] sm:$0xff]
    %v7371 = vld [vmem:[#allocation20 + $0x220] sm:$0xff]
    %v7372 = vld [vmem:[#allocation20 + $0x228] sm:$0xff]
    %v7373 = vld [vmem:[#allocation20 + $0x230] sm:$0xff]
    %v7374 = vld [vmem:[#allocation20 + $0x238] sm:$0xff]
    %v7375 = vld [vmem:[#allocation20 + $0x240] sm:$0xff]
    %v7376 = vld [vmem:[#allocation20 + $0x248] sm:$0xff]
    %v7377 = vld [vmem:[#allocation20 + $0x250] sm:$0xff]
    %v7378 = vld [vmem:[#allocation20 + $0x258] sm:$0xff]
    %v7379 = vld [vmem:[#allocation20 + $0x260] sm:$0xff]
    %v7380 = vld [vmem:[#allocation20 + $0x268] sm:$0xff]
    %v7381 = vld [vmem:[#allocation20 + $0x270] sm:$0xff]
    %v7382 = vld [vmem:[#allocation20 + $0x278] sm:$0xff]
    %v7383 = vld [vmem:[#allocation20 + $0x280] sm:$0xff]
    %v7384 = vld [vmem:[#allocation20 + $0x288] sm:$0xff]
    %v7385 = vld [vmem:[#allocation20 + $0x290] sm:$0xff]
    %v7386 = vld [vmem:[#allocation20 + $0x298] sm:$0xff]
    %v7387 = vld [vmem:[#allocation20 + $0x2a0] sm:$0xff]
    %v7388 = vld [vmem:[#allocation20 + $0x2a8] sm:$0xff]
    %v7389 = vld [vmem:[#allocation20 + $0x2b0] sm:$0xff]
    %v7390 = vld [vmem:[#allocation20 + $0x2b8] sm:$0xff]
    %v7391 = vld [vmem:[#allocation20 + $0x2c0] sm:$0xff]
    %v7392 = vld [vmem:[#allocation20 + $0x2c8] sm:$0xff]
    %v7393 = vld [vmem:[#allocation20 + $0x2d0] sm:$0xff]
    %v7394 = vld [vmem:[#allocation20 + $0x2d8] sm:$0xff]
    %v7395 = vld [vmem:[#allocation20 + $0x2e0] sm:$0xff]
    %v7396 = vld [vmem:[#allocation20 + $0x2e8] sm:$0xff]
    %v7397 = vld [vmem:[#allocation20 + $0x2f0] sm:$0xff]
    %v7398 = vld [vmem:[#allocation20 + $0x2f8] sm:$0xff]
    %v7399 = vld [vmem:[#allocation20 + $0x300] sm:$0xff]
    %v7400 = vld [vmem:[#allocation20 + $0x308] sm:$0xff]
    %v7401 = vld [vmem:[#allocation20 + $0x310] sm:$0xff]
    %v7402 = vld [vmem:[#allocation20 + $0x318] sm:$0xff]
    %v7403 = vld [vmem:[#allocation20 + $0x320] sm:$0xff]
    %v7404 = vld [vmem:[#allocation20 + $0x328] sm:$0xff]
    %v7405 = vld [vmem:[#allocation20 + $0x330] sm:$0xff]
    %v7406 = vld [vmem:[#allocation20 + $0x338] sm:$0xff]
    %v7407 = vld [vmem:[#allocation20 + $0x340] sm:$0xff]
    %v7408 = vld [vmem:[#allocation20 + $0x348] sm:$0xff]
    %v7409 = vld [vmem:[#allocation20 + $0x350] sm:$0xff]
    %v7410 = vld [vmem:[#allocation20 + $0x358] sm:$0xff]
    %v7411 = vld [vmem:[#allocation20 + $0x360] sm:$0xff]
    %v7412 = vld [vmem:[#allocation20 + $0x368] sm:$0xff]
    %v7413 = vld [vmem:[#allocation20 + $0x370] sm:$0xff]
    %v7414 = vld [vmem:[#allocation20 + $0x378] sm:$0xff]
    %v7415 = vld [vmem:[#allocation20 + $0x380] sm:$0xff]
    %v7416 = vld [vmem:[#allocation20 + $0x388] sm:$0xff]
    %v7417 = vld [vmem:[#allocation20 + $0x390] sm:$0xff]
    %v7418 = vld [vmem:[#allocation20 + $0x398] sm:$0xff]
    %v7419 = vld [vmem:[#allocation20 + $0x3a0] sm:$0xff]
    %v7420 = vld [vmem:[#allocation20 + $0x3a8] sm:$0xff]
    %v7421 = vld [vmem:[#allocation20 + $0x3b0] sm:$0xff]
    %v7422 = vld [vmem:[#allocation20 + $0x3b8] sm:$0xff]
    %v7423 = vld [vmem:[#allocation20 + $0x3c0] sm:$0xff]
    %v7424 = vld [vmem:[#allocation20 + $0x3c8] sm:$0xff]
    %v7425 = vld [vmem:[#allocation20 + $0x3d0] sm:$0xff]
    %v7426 = vld [vmem:[#allocation20 + $0x3d8] sm:$0xff]
    %v7427 = vld [vmem:[#allocation20 + $0x3e0] sm:$0xff]
    %v7428 = vld [vmem:[#allocation20 + $0x3e8] sm:$0xff]
    %v7429 = vld [vmem:[#allocation20 + $0x3f0] sm:$0xff]
    %v7430 = vld [vmem:[#allocation20 + $0x3f8] sm:$0xff]
    %7431 = vst [vmem:[#allocation4] sm:$0xff] 0.0
    %7432 = vst [vmem:[#allocation4 + $0x8] sm:$0xff] 0.0
    %7433 = vst [vmem:[#allocation4 + $0x10] sm:$0xff] 0.0
    %7434 = vst [vmem:[#allocation4 + $0x18] sm:$0xff] 0.0
    %v7435 = vld [vmem:[#allocation4] sm:$0xff]
    %v7436 = vld [vmem:[#allocation4 + $0x8] sm:$0xff]
    %v7437 = vld [vmem:[#allocation4 + $0x10] sm:$0xff]
    %v7438 = vld [vmem:[#allocation4 + $0x18] sm:$0xff]
    %v7439 = vpack.c.bf16 %v7437, %v7435
    %v7440 = vpack.c.bf16 %v7438, %v7436
    %v7569 = vunpack.c.l.b16 %v7303
    %v7570 = vunpack.c.h.b16 %v7303
    %v7571 = vunpack.c.l.b16 %v7304
    %v7572 = vunpack.c.h.b16 %v7304
    %v7573 = vunpack.c.l.b16 %v7305
    %v7574 = vunpack.c.h.b16 %v7305
    %v7575 = vunpack.c.l.b16 %v7306
    %v7576 = vunpack.c.h.b16 %v7306
    %v7577 = vunpack.c.l.b16 %v7307
    %v7578 = vunpack.c.h.b16 %v7307
    %v7579 = vunpack.c.l.b16 %v7308
    %v7580 = vunpack.c.h.b16 %v7308
    %v7581 = vunpack.c.l.b16 %v7309
    %v7582 = vunpack.c.h.b16 %v7309
    %v7583 = vunpack.c.l.b16 %v7310
    %v7584 = vunpack.c.h.b16 %v7310
    %v7585 = vunpack.c.l.b16 %v7311
    %v7586 = vunpack.c.h.b16 %v7311
    %v7587 = vunpack.c.l.b16 %v7312
    %v7588 = vunpack.c.h.b16 %v7312
    %v7589 = vunpack.c.l.b16 %v7313
    %v7590 = vunpack.c.h.b16 %v7313
    %v7591 = vunpack.c.l.b16 %v7314
    %v7592 = vunpack.c.h.b16 %v7314
    %v7593 = vunpack.c.l.b16 %v7315
    %v7594 = vunpack.c.h.b16 %v7315
    %v7595 = vunpack.c.l.b16 %v7316
    %v7596 = vunpack.c.h.b16 %v7316
    %v7597 = vunpack.c.l.b16 %v7317
    %v7598 = vunpack.c.h.b16 %v7317
    %v7599 = vunpack.c.l.b16 %v7318
    %v7600 = vunpack.c.h.b16 %v7318
    %v7601 = vunpack.c.l.b16 %v7319
    %v7602 = vunpack.c.h.b16 %v7319
    %v7603 = vunpack.c.l.b16 %v7320
    %v7604 = vunpack.c.h.b16 %v7320
    %v7605 = vunpack.c.l.b16 %v7321
    %v7606 = vunpack.c.h.b16 %v7321
    %v7607 = vunpack.c.l.b16 %v7322
    %v7608 = vunpack.c.h.b16 %v7322
    %v7609 = vunpack.c.l.b16 %v7323
    %v7610 = vunpack.c.h.b16 %v7323
    %v7611 = vunpack.c.l.b16 %v7324
    %v7612 = vunpack.c.h.b16 %v7324
    %v7613 = vunpack.c.l.b16 %v7325
    %v7614 = vunpack.c.h.b16 %v7325
    %v7615 = vunpack.c.l.b16 %v7326
    %v7616 = vunpack.c.h.b16 %v7326
    %v7617 = vunpack.c.l.b16 %v7327
    %v7618 = vunpack.c.h.b16 %v7327
    %v7619 = vunpack.c.l.b16 %v7328
    %v7620 = vunpack.c.h.b16 %v7328
    %v7621 = vunpack.c.l.b16 %v7329
    %v7622 = vunpack.c.h.b16 %v7329
    %v7623 = vunpack.c.l.b16 %v7330
    %v7624 = vunpack.c.h.b16 %v7330
    %v7625 = vunpack.c.l.b16 %v7331
    %v7626 = vunpack.c.h.b16 %v7331
    %v7627 = vunpack.c.l.b16 %v7332
    %v7628 = vunpack.c.h.b16 %v7332
    %v7629 = vunpack.c.l.b16 %v7333
    %v7630 = vunpack.c.h.b16 %v7333
    %v7631 = vunpack.c.l.b16 %v7334
    %v7632 = vunpack.c.h.b16 %v7334
    %v7633 = vunpack.c.l.b16 %v7335
    %v7634 = vunpack.c.h.b16 %v7335
    %v7635 = vunpack.c.l.b16 %v7336
    %v7636 = vunpack.c.h.b16 %v7336
    %v7637 = vunpack.c.l.b16 %v7337
    %v7638 = vunpack.c.h.b16 %v7337
    %v7639 = vunpack.c.l.b16 %v7338
    %v7640 = vunpack.c.h.b16 %v7338
    %v7641 = vunpack.c.l.b16 %v7339
    %v7642 = vunpack.c.h.b16 %v7339
    %v7643 = vunpack.c.l.b16 %v7340
    %v7644 = vunpack.c.h.b16 %v7340
    %v7645 = vunpack.c.l.b16 %v7341
    %v7646 = vunpack.c.h.b16 %v7341
    %v7647 = vunpack.c.l.b16 %v7342
    %v7648 = vunpack.c.h.b16 %v7342
    %v7649 = vunpack.c.l.b16 %v7343
    %v7650 = vunpack.c.h.b16 %v7343
    %v7651 = vunpack.c.l.b16 %v7344
    %v7652 = vunpack.c.h.b16 %v7344
    %v7653 = vunpack.c.l.b16 %v7345
    %v7654 = vunpack.c.h.b16 %v7345
    %v7655 = vunpack.c.l.b16 %v7346
    %v7656 = vunpack.c.h.b16 %v7346
    %v7657 = vunpack.c.l.b16 %v7347
    %v7658 = vunpack.c.h.b16 %v7347
    %v7659 = vunpack.c.l.b16 %v7348
    %v7660 = vunpack.c.h.b16 %v7348
    %v7661 = vunpack.c.l.b16 %v7349
    %v7662 = vunpack.c.h.b16 %v7349
    %v7663 = vunpack.c.l.b16 %v7350
    %v7664 = vunpack.c.h.b16 %v7350
    %v7665 = vunpack.c.l.b16 %v7351
    %v7666 = vunpack.c.h.b16 %v7351
    %v7667 = vunpack.c.l.b16 %v7352
    %v7668 = vunpack.c.h.b16 %v7352
    %v7669 = vunpack.c.l.b16 %v7353
    %v7670 = vunpack.c.h.b16 %v7353
    %v7671 = vunpack.c.l.b16 %v7354
    %v7672 = vunpack.c.h.b16 %v7354
    %v7673 = vunpack.c.l.b16 %v7355
    %v7674 = vunpack.c.h.b16 %v7355
    %v7675 = vunpack.c.l.b16 %v7356
    %v7676 = vunpack.c.h.b16 %v7356
    %v7677 = vunpack.c.l.b16 %v7357
    %v7678 = vunpack.c.h.b16 %v7357
    %v7679 = vunpack.c.l.b16 %v7358
    %v7680 = vunpack.c.h.b16 %v7358
    %v7681 = vunpack.c.l.b16 %v7359
    %v7682 = vunpack.c.h.b16 %v7359
    %v7683 = vunpack.c.l.b16 %v7360
    %v7684 = vunpack.c.h.b16 %v7360
    %v7685 = vunpack.c.l.b16 %v7361
    %v7686 = vunpack.c.h.b16 %v7361
    %v7687 = vunpack.c.l.b16 %v7362
    %v7688 = vunpack.c.h.b16 %v7362
    %v7689 = vunpack.c.l.b16 %v7363
    %v7690 = vunpack.c.h.b16 %v7363
    %v7691 = vunpack.c.l.b16 %v7364
    %v7692 = vunpack.c.h.b16 %v7364
    %v7693 = vunpack.c.l.b16 %v7365
    %v7694 = vunpack.c.h.b16 %v7365
    %v7695 = vunpack.c.l.b16 %v7366
    %v7696 = vunpack.c.h.b16 %v7366
    %v7697 = vunpack.c.l.b16 %v7367
    %v7698 = vunpack.c.h.b16 %v7367
    %v7699 = vunpack.c.l.b16 %v7368
    %v7700 = vunpack.c.h.b16 %v7368
    %v7701 = vunpack.c.l.b16 %v7369
    %v7702 = vunpack.c.h.b16 %v7369
    %v7703 = vunpack.c.l.b16 %v7370
    %v7704 = vunpack.c.h.b16 %v7370
    %v7705 = vunpack.c.l.b16 %v7371
    %v7706 = vunpack.c.h.b16 %v7371
    %v7707 = vunpack.c.l.b16 %v7372
    %v7708 = vunpack.c.h.b16 %v7372
    %v7709 = vunpack.c.l.b16 %v7373
    %v7710 = vunpack.c.h.b16 %v7373
    %v7711 = vunpack.c.l.b16 %v7374
    %v7712 = vunpack.c.h.b16 %v7374
    %v7713 = vunpack.c.l.b16 %v7375
    %v7714 = vunpack.c.h.b16 %v7375
    %v7715 = vunpack.c.l.b16 %v7376
    %v7716 = vunpack.c.h.b16 %v7376
    %v7717 = vunpack.c.l.b16 %v7377
    %v7718 = vunpack.c.h.b16 %v7377
    %v7719 = vunpack.c.l.b16 %v7378
    %v7720 = vunpack.c.h.b16 %v7378
    %v7721 = vunpack.c.l.b16 %v7379
    %v7722 = vunpack.c.h.b16 %v7379
    %v7723 = vunpack.c.l.b16 %v7380
    %v7724 = vunpack.c.h.b16 %v7380
    %v7725 = vunpack.c.l.b16 %v7381
    %v7726 = vunpack.c.h.b16 %v7381
    %v7727 = vunpack.c.l.b16 %v7382
    %v7728 = vunpack.c.h.b16 %v7382
    %v7729 = vunpack.c.l.b16 %v7383
    %v7730 = vunpack.c.h.b16 %v7383
    %v7731 = vunpack.c.l.b16 %v7384
    %v7732 = vunpack.c.h.b16 %v7384
    %v7733 = vunpack.c.l.b16 %v7385
    %v7734 = vunpack.c.h.b16 %v7385
    %v7735 = vunpack.c.l.b16 %v7386
    %v7736 = vunpack.c.h.b16 %v7386
    %v7737 = vunpack.c.l.b16 %v7387
    %v7738 = vunpack.c.h.b16 %v7387
    %v7739 = vunpack.c.l.b16 %v7388
    %v7740 = vunpack.c.h.b16 %v7388
    %v7741 = vunpack.c.l.b16 %v7389
    %v7742 = vunpack.c.h.b16 %v7389
    %v7743 = vunpack.c.l.b16 %v7390
    %v7744 = vunpack.c.h.b16 %v7390
    %v7745 = vunpack.c.l.b16 %v7391
    %v7746 = vunpack.c.h.b16 %v7391
    %v7747 = vunpack.c.l.b16 %v7392
    %v7748 = vunpack.c.h.b16 %v7392
    %v7749 = vunpack.c.l.b16 %v7393
    %v7750 = vunpack.c.h.b16 %v7393
    %v7751 = vunpack.c.l.b16 %v7394
    %v7752 = vunpack.c.h.b16 %v7394
    %v7753 = vunpack.c.l.b16 %v7395
    %v7754 = vunpack.c.h.b16 %v7395
    %v7755 = vunpack.c.l.b16 %v7396
    %v7756 = vunpack.c.h.b16 %v7396
    %v7757 = vunpack.c.l.b16 %v7397
    %v7758 = vunpack.c.h.b16 %v7397
    %v7759 = vunpack.c.l.b16 %v7398
    %v7760 = vunpack.c.h.b16 %v7398
    %v7761 = vunpack.c.l.b16 %v7399
    %v7762 = vunpack.c.h.b16 %v7399
    %v7763 = vunpack.c.l.b16 %v7400
    %v7764 = vunpack.c.h.b16 %v7400
    %v7765 = vunpack.c.l.b16 %v7401
    %v7766 = vunpack.c.h.b16 %v7401
    %v7767 = vunpack.c.l.b16 %v7402
    %v7768 = vunpack.c.h.b16 %v7402
    %v7769 = vunpack.c.l.b16 %v7403
    %v7770 = vunpack.c.h.b16 %v7403
    %v7771 = vunpack.c.l.b16 %v7404
    %v7772 = vunpack.c.h.b16 %v7404
    %v7773 = vunpack.c.l.b16 %v7405
    %v7774 = vunpack.c.h.b16 %v7405
    %v7775 = vunpack.c.l.b16 %v7406
    %v7776 = vunpack.c.h.b16 %v7406
    %v7777 = vunpack.c.l.b16 %v7407
    %v7778 = vunpack.c.h.b16 %v7407
    %v7779 = vunpack.c.l.b16 %v7408
    %v7780 = vunpack.c.h.b16 %v7408
    %v7781 = vunpack.c.l.b16 %v7409
    %v7782 = vunpack.c.h.b16 %v7409
    %v7783 = vunpack.c.l.b16 %v7410
    %v7784 = vunpack.c.h.b16 %v7410
    %v7785 = vunpack.c.l.b16 %v7411
    %v7786 = vunpack.c.h.b16 %v7411
    %v7787 = vunpack.c.l.b16 %v7412
    %v7788 = vunpack.c.h.b16 %v7412
    %v7789 = vunpack.c.l.b16 %v7413
    %v7790 = vunpack.c.h.b16 %v7413
    %v7791 = vunpack.c.l.b16 %v7414
    %v7792 = vunpack.c.h.b16 %v7414
    %v7793 = vunpack.c.l.b16 %v7415
    %v7794 = vunpack.c.h.b16 %v7415
    %v7795 = vunpack.c.l.b16 %v7416
    %v7796 = vunpack.c.h.b16 %v7416
    %v7797 = vunpack.c.l.b16 %v7417
    %v7798 = vunpack.c.h.b16 %v7417
    %v7799 = vunpack.c.l.b16 %v7418
    %v7800 = vunpack.c.h.b16 %v7418
    %v7801 = vunpack.c.l.b16 %v7419
    %v7802 = vunpack.c.h.b16 %v7419
    %v7803 = vunpack.c.l.b16 %v7420
    %v7804 = vunpack.c.h.b16 %v7420
    %v7805 = vunpack.c.l.b16 %v7421
    %v7806 = vunpack.c.h.b16 %v7421
    %v7807 = vunpack.c.l.b16 %v7422
    %v7808 = vunpack.c.h.b16 %v7422
    %v7809 = vunpack.c.l.b16 %v7423
    %v7810 = vunpack.c.h.b16 %v7423
    %v7811 = vunpack.c.l.b16 %v7424
    %v7812 = vunpack.c.h.b16 %v7424
    %v7813 = vunpack.c.l.b16 %v7425
    %v7814 = vunpack.c.h.b16 %v7425
    %v7815 = vunpack.c.l.b16 %v7426
    %v7816 = vunpack.c.h.b16 %v7426
    %v7817 = vunpack.c.l.b16 %v7427
    %v7818 = vunpack.c.h.b16 %v7427
    %v7819 = vunpack.c.l.b16 %v7428
    %v7820 = vunpack.c.h.b16 %v7428
    %v7821 = vunpack.c.l.b16 %v7429
    %v7822 = vunpack.c.h.b16 %v7429
    %v7823 = vunpack.c.l.b16 %v7430
    %v7824 = vunpack.c.h.b16 %v7430
    %v7825 = vpack.c.b16 %v7577, %v7569
    %v7826 = vpack.c.b16 %v7578, %v7570
    %v7827 = vpack.c.b16 %v7579, %v7571
    %v7828 = vpack.c.b16 %v7580, %v7572
    %v7829 = vpack.c.b16 %v7581, %v7573
    %v7830 = vpack.c.b16 %v7582, %v7574
    %v7831 = vpack.c.b16 %v7583, %v7575
    %v7832 = vpack.c.b16 %v7584, %v7576
    %v7833 = vpack.c.b16 %v7593, %v7585
    %v7834 = vpack.c.b16 %v7594, %v7586
    %v7835 = vpack.c.b16 %v7595, %v7587
    %v7836 = vpack.c.b16 %v7596, %v7588
    %v7837 = vpack.c.b16 %v7597, %v7589
    %v7838 = vpack.c.b16 %v7598, %v7590
    %v7839 = vpack.c.b16 %v7599, %v7591
    %v7840 = vpack.c.b16 %v7600, %v7592
    %v7841 = vpack.c.b16 %v7609, %v7601
    %v7842 = vpack.c.b16 %v7610, %v7602
    %v7843 = vpack.c.b16 %v7611, %v7603
    %v7844 = vpack.c.b16 %v7612, %v7604
    %v7845 = vpack.c.b16 %v7613, %v7605
    %v7846 = vpack.c.b16 %v7614, %v7606
    %v7847 = vpack.c.b16 %v7615, %v7607
    %v7848 = vpack.c.b16 %v7616, %v7608
    %v7849 = vpack.c.b16 %v7625, %v7617
    %v7850 = vpack.c.b16 %v7626, %v7618
    %v7851 = vpack.c.b16 %v7627, %v7619
    %v7852 = vpack.c.b16 %v7628, %v7620
    %v7853 = vpack.c.b16 %v7629, %v7621
    %v7854 = vpack.c.b16 %v7630, %v7622
    %v7855 = vpack.c.b16 %v7631, %v7623
    %v7856 = vpack.c.b16 %v7632, %v7624
    %v7857 = vpack.c.b16 %v7641, %v7633
    %v7858 = vpack.c.b16 %v7642, %v7634
    %v7859 = vpack.c.b16 %v7643, %v7635
    %v7860 = vpack.c.b16 %v7644, %v7636
    %v7861 = vpack.c.b16 %v7645, %v7637
    %v7862 = vpack.c.b16 %v7646, %v7638
    %v7863 = vpack.c.b16 %v7647, %v7639
    %v7864 = vpack.c.b16 %v7648, %v7640
    %v7865 = vpack.c.b16 %v7657, %v7649
    %v7866 = vpack.c.b16 %v7658, %v7650
    %v7867 = vpack.c.b16 %v7659, %v7651
    %v7868 = vpack.c.b16 %v7660, %v7652
    %v7869 = vpack.c.b16 %v7661, %v7653
    %v7870 = vpack.c.b16 %v7662, %v7654
    %v7871 = vpack.c.b16 %v7663, %v7655
    %v7872 = vpack.c.b16 %v7664, %v7656
    %v7873 = vpack.c.b16 %v7673, %v7665
    %v7874 = vpack.c.b16 %v7674, %v7666
    %v7875 = vpack.c.b16 %v7675, %v7667
    %v7876 = vpack.c.b16 %v7676, %v7668
    %v7877 = vpack.c.b16 %v7677, %v7669
    %v7878 = vpack.c.b16 %v7678, %v7670
    %v7879 = vpack.c.b16 %v7679, %v7671
    %v7880 = vpack.c.b16 %v7680, %v7672
    %v7881 = vpack.c.b16 %v7689, %v7681
    %v7882 = vpack.c.b16 %v7690, %v7682
    %v7883 = vpack.c.b16 %v7691, %v7683
    %v7884 = vpack.c.b16 %v7692, %v7684
    %v7885 = vpack.c.b16 %v7693, %v7685
    %v7886 = vpack.c.b16 %v7694, %v7686
    %v7887 = vpack.c.b16 %v7695, %v7687
    %v7888 = vpack.c.b16 %v7696, %v7688
    %v7889 = vpack.c.b16 %v7705, %v7697
    %v7890 = vpack.c.b16 %v7706, %v7698
    %v7891 = vpack.c.b16 %v7707, %v7699
    %v7892 = vpack.c.b16 %v7708, %v7700
    %v7893 = vpack.c.b16 %v7709, %v7701
    %v7894 = vpack.c.b16 %v7710, %v7702
    %v7895 = vpack.c.b16 %v7711, %v7703
    %v7896 = vpack.c.b16 %v7712, %v7704
    %v7897 = vpack.c.b16 %v7721, %v7713
    %v7898 = vpack.c.b16 %v7722, %v7714
    %v7899 = vpack.c.b16 %v7723, %v7715
    %v7900 = vpack.c.b16 %v7724, %v7716
    %v7901 = vpack.c.b16 %v7725, %v7717
    %v7902 = vpack.c.b16 %v7726, %v7718
    %v7903 = vpack.c.b16 %v7727, %v7719
    %v7904 = vpack.c.b16 %v7728, %v7720
    %v7905 = vpack.c.b16 %v7737, %v7729
    %v7906 = vpack.c.b16 %v7738, %v7730
    %v7907 = vpack.c.b16 %v7739, %v7731
    %v7908 = vpack.c.b16 %v7740, %v7732
    %v7909 = vpack.c.b16 %v7741, %v7733
    %v7910 = vpack.c.b16 %v7742, %v7734
    %v7911 = vpack.c.b16 %v7743, %v7735
    %v7912 = vpack.c.b16 %v7744, %v7736
    %v7913 = vpack.c.b16 %v7753, %v7745
    %v7914 = vpack.c.b16 %v7754, %v7746
    %v7915 = vpack.c.b16 %v7755, %v7747
    %v7916 = vpack.c.b16 %v7756, %v7748
    %v7917 = vpack.c.b16 %v7757, %v7749
    %v7918 = vpack.c.b16 %v7758, %v7750
    %v7919 = vpack.c.b16 %v7759, %v7751
    %v7920 = vpack.c.b16 %v7760, %v7752
    %v7921 = vpack.c.b16 %v7769, %v7761
    %v7922 = vpack.c.b16 %v7770, %v7762
    %v7923 = vpack.c.b16 %v7771, %v7763
    %v7924 = vpack.c.b16 %v7772, %v7764
    %v7925 = vpack.c.b16 %v7773, %v7765
    %v7926 = vpack.c.b16 %v7774, %v7766
    %v7927 = vpack.c.b16 %v7775, %v7767
    %v7928 = vpack.c.b16 %v7776, %v7768
    %v7929 = vpack.c.b16 %v7785, %v7777
    %v7930 = vpack.c.b16 %v7786, %v7778
    %v7931 = vpack.c.b16 %v7787, %v7779
    %v7932 = vpack.c.b16 %v7788, %v7780
    %v7933 = vpack.c.b16 %v7789, %v7781
    %v7934 = vpack.c.b16 %v7790, %v7782
    %v7935 = vpack.c.b16 %v7791, %v7783
    %v7936 = vpack.c.b16 %v7792, %v7784
    %v7937 = vpack.c.b16 %v7801, %v7793
    %v7938 = vpack.c.b16 %v7802, %v7794
    %v7939 = vpack.c.b16 %v7803, %v7795
    %v7940 = vpack.c.b16 %v7804, %v7796
    %v7941 = vpack.c.b16 %v7805, %v7797
    %v7942 = vpack.c.b16 %v7806, %v7798
    %v7943 = vpack.c.b16 %v7807, %v7799
    %v7944 = vpack.c.b16 %v7808, %v7800
    %v7945 = vpack.c.b16 %v7817, %v7809
    %v7946 = vpack.c.b16 %v7818, %v7810
    %v7947 = vpack.c.b16 %v7819, %v7811
    %v7948 = vpack.c.b16 %v7820, %v7812
    %v7949 = vpack.c.b16 %v7821, %v7813
    %v7950 = vpack.c.b16 %v7822, %v7814
    %v7951 = vpack.c.b16 %v7823, %v7815
    %v7952 = vpack.c.b16 %v7824, %v7816
    %8081 = vmatprep.subr.bf16.mxu0 %v7826
    %8082 = vmatpush1.bf16.msra.mxu0 %v7825
    %8083 = vmatprep.subr.bf16.mxu0 %v7834
    %8084 = vmatpush1.bf16.msra.mxu0 %v7833
    %8085 = vmatprep.subr.bf16.mxu0 %v7842
    %8086 = vmatpush1.bf16.msra.mxu0 %v7841
    %8087 = vmatprep.subr.bf16.mxu0 %v7850
    %8088 = vmatpush1.bf16.msra.mxu0 %v7849
    %8089 = vmatprep.subr.bf16.mxu0 %v7858
    %8090 = vmatpush1.bf16.msra.mxu0 %v7857
    %8091 = vmatprep.subr.bf16.mxu0 %v7866
    %8092 = vmatpush1.bf16.msra.mxu0 %v7865
    %8093 = vmatprep.subr.bf16.mxu0 %v7874
    %8094 = vmatpush1.bf16.msra.mxu0 %v7873
    %8095 = vmatprep.subr.bf16.mxu0 %v7882
    %8096 = vmatpush1.bf16.msra.mxu0 %v7881
    %8097 = vmatprep.subr.bf16.mxu0 %v7890
    %8098 = vmatpush1.bf16.msra.mxu0 %v7889
    %8099 = vmatprep.subr.bf16.mxu0 %v7898
    %8100 = vmatpush1.bf16.msra.mxu0 %v7897
    %8101 = vmatprep.subr.bf16.mxu0 %v7906
    %8102 = vmatpush1.bf16.msra.mxu0 %v7905
    %8103 = vmatprep.subr.bf16.mxu0 %v7914
    %8104 = vmatpush1.bf16.msra.mxu0 %v7913
    %8105 = vmatprep.subr.bf16.mxu0 %v7922
    %8106 = vmatpush1.bf16.msra.mxu0 %v7921
    %8107 = vmatprep.subr.bf16.mxu0 %v7930
    %8108 = vmatpush1.bf16.msra.mxu0 %v7929
    %8109 = vmatprep.subr.bf16.mxu0 %v7938
    %8110 = vmatpush1.bf16.msra.mxu0 %v7937
    %8111 = vmatprep.subr.bf16.mxu0 %v7946
    %8112 = vmatpush1.bf16.msra.mxu0 %v7945
    %8113 = vmatprep.mubr.bf16.mxu0 %v7440
    %8114 = vmatmul.mubr.bf16.gmra.mrb[0].mxu0 %v7439
    %v8115 = vpop.f32.mrb[0].mxu0
    %v8116 = vadd.f32 0.0, %v8115
    %v8117 = vpop.f32.mrb[0].mxu0
    %v8118 = vadd.f32 0.0, %v8117
    %v8119 = vpop.f32.mrb[0].mxu0
    %v8120 = vadd.f32 0.0, %v8119
    %v8121 = vpop.f32.mrb[0].mxu0
    %v8122 = vadd.f32 0.0, %v8121
    %8123 = vdwg.mxu0
    %8124 = vmatprep.subr.bf16.mxu0 %v7828
    %8125 = vmatpush1.bf16.msra.mxu0 %v7827
    %8126 = vmatprep.subr.bf16.mxu0 %v7836
    %8127 = vmatpush1.bf16.msra.mxu0 %v7835
    %8128 = vmatprep.subr.bf16.mxu0 %v7844
    %8129 = vmatpush1.bf16.msra.mxu0 %v7843
    %8130 = vmatprep.subr.bf16.mxu0 %v7852
    %8131 = vmatpush1.bf16.msra.mxu0 %v7851
    %8132 = vmatprep.subr.bf16.mxu0 %v7860
    %8133 = vmatpush1.bf16.msra.mxu0 %v7859
    %8134 = vmatprep.subr.bf16.mxu0 %v7868
    %8135 = vmatpush1.bf16.msra.mxu0 %v7867
    %8136 = vmatprep.subr.bf16.mxu0 %v7876
    %8137 = vmatpush1.bf16.msra.mxu0 %v7875
    %8138 = vmatprep.subr.bf16.mxu0 %v7884
    %8139 = vmatpush1.bf16.msra.mxu0 %v7883
    %8140 = vmatprep.subr.bf16.mxu0 %v7892
    %8141 = vmatpush1.bf16.msra.mxu0 %v7891
    %8142 = vmatprep.subr.bf16.mxu0 %v7900
    %8143 = vmatpush1.bf16.msra.mxu0 %v7899
    %8144 = vmatprep.subr.bf16.mxu0 %v7908
    %8145 = vmatpush1.bf16.msra.mxu0 %v7907
    %8146 = vmatprep.subr.bf16.mxu0 %v7916
    %8147 = vmatpush1.bf16.msra.mxu0 %v7915
    %8148 = vmatprep.subr.bf16.mxu0 %v7924
    %8149 = vmatpush1.bf16.msra.mxu0 %v7923
    %8150 = vmatprep.subr.bf16.mxu0 %v7932
    %8151 = vmatpush1.bf16.msra.mxu0 %v7931
    %8152 = vmatprep.subr.bf16.mxu0 %v7940
    %8153 = vmatpush1.bf16.msra.mxu0 %v7939
    %8154 = vmatprep.subr.bf16.mxu0 %v7948
    %8155 = vmatpush1.bf16.msra.mxu0 %v7947
    %8156 = vmatprep.mubr.bf16.mxu0 %v7440
    %8157 = vmatmul.mubr.bf16.gmra.mrb[0].mxu0 %v7439
    %v8158 = vpop.f32.mrb[0].mxu0
    %v8159 = vadd.f32 0.0, %v8158
    %v8160 = vpop.f32.mrb[0].mxu0
    %v8161 = vadd.f32 0.0, %v8160
    %v8162 = vpop.f32.mrb[0].mxu0
    %v8163 = vadd.f32 0.0, %v8162
    %v8164 = vpop.f32.mrb[0].mxu0
    %v8165 = vadd.f32 0.0, %v8164
    %8166 = vdwg.mxu0
    %8167 = vmatprep.subr.bf16.mxu0 %v7830
    %8168 = vmatpush1.bf16.msra.mxu0 %v7829
    %8169 = vmatprep.subr.bf16.mxu0 %v7838
    %8170 = vmatpush1.bf16.msra.mxu0 %v7837
    %8171 = vmatprep.subr.bf16.mxu0 %v7846
    %8172 = vmatpush1.bf16.msra.mxu0 %v7845
    %8173 = vmatprep.subr.bf16.mxu0 %v7854
    %8174 = vmatpush1.bf16.msra.mxu0 %v7853
    %8175 = vmatprep.subr.bf16.mxu0 %v7862
    %8176 = vmatpush1.bf16.msra.mxu0 %v7861
    %8177 = vmatprep.subr.bf16.mxu0 %v7870
    %8178 = vmatpush1.bf16.msra.mxu0 %v7869
    %8179 = vmatprep.subr.bf16.mxu0 %v7878
    %8180 = vmatpush1.bf16.msra.mxu0 %v7877
    %8181 = vmatprep.subr.bf16.mxu0 %v7886
    %8182 = vmatpush1.bf16.msra.mxu0 %v7885
    %8183 = vmatprep.subr.bf16.mxu0 %v7894
    %8184 = vmatpush1.bf16.msra.mxu0 %v7893
    %8185 = vmatprep.subr.bf16.mxu0 %v7902
    %8186 = vmatpush1.bf16.msra.mxu0 %v7901
    %8187 = vmatprep.subr.bf16.mxu0 %v7910
    %8188 = vmatpush1.bf16.msra.mxu0 %v7909
    %8189 = vmatprep.subr.bf16.mxu0 %v7918
    %8190 = vmatpush1.bf16.msra.mxu0 %v7917
    %8191 = vmatprep.subr.bf16.mxu0 %v7926
    %8192 = vmatpush1.bf16.msra.mxu0 %v7925
    %8193 = vmatprep.subr.bf16.mxu0 %v7934
    %8194 = vmatpush1.bf16.msra.mxu0 %v7933
    %8195 = vmatprep.subr.bf16.mxu0 %v7942
    %8196 = vmatpush1.bf16.msra.mxu0 %v7941
    %8197 = vmatprep.subr.bf16.mxu0 %v7950
    %8198 = vmatpush1.bf16.msra.mxu0 %v7949
    %8199 = vmatprep.mubr.bf16.mxu0 %v7440
    %8200 = vmatmul.mubr.bf16.gmra.mrb[0].mxu0 %v7439
    %v8201 = vpop.f32.mrb[0].mxu0
    %v8202 = vadd.f32 0.0, %v8201
    %v8203 = vpop.f32.mrb[0].mxu0
    %v8204 = vadd.f32 0.0, %v8203
    %v8205 = vpop.f32.mrb[0].mxu0
    %v8206 = vadd.f32 0.0, %v8205
    %v8207 = vpop.f32.mrb[0].mxu0
    %v8208 = vadd.f32 0.0, %v8207
    %8209 = vdwg.mxu0
    %8210 = vmatprep.subr.bf16.mxu0 %v7832
    %8211 = vmatpush1.bf16.msra.mxu0 %v7831
    %8212 = vmatprep.subr.bf16.mxu0 %v7840
    %8213 = vmatpush1.bf16.msra.mxu0 %v7839
    %8214 = vmatprep.subr.bf16.mxu0 %v7848
    %8215 = vmatpush1.bf16.msra.mxu0 %v7847
    %8216 = vmatprep.subr.bf16.mxu0 %v7856
    %8217 = vmatpush1.bf16.msra.mxu0 %v7855
    %8218 = vmatprep.subr.bf16.mxu0 %v7864
    %8219 = vmatpush1.bf16.msra.mxu0 %v7863
    %8220 = vmatprep.subr.bf16.mxu0 %v7872
    %8221 = vmatpush1.bf16.msra.mxu0 %v7871
    %8222 = vmatprep.subr.bf16.mxu0 %v7880
    %8223 = vmatpush1.bf16.msra.mxu0 %v7879
    %8224 = vmatprep.subr.bf16.mxu0 %v7888
    %8225 = vmatpush1.bf16.msra.mxu0 %v7887
    %8226 = vmatprep.subr.bf16.mxu0 %v7896
    %8227 = vmatpush1.bf16.msra.mxu0 %v7895
    %8228 = vmatprep.subr.bf16.mxu0 %v7904
    %8229 = vmatpush1.bf16.msra.mxu0 %v7903
    %8230 = vmatprep.subr.bf16.mxu0 %v7912
    %8231 = vmatpush1.bf16.msra.mxu0 %v7911
    %8232 = vmatprep.subr.bf16.mxu0 %v7920
    %8233 = vmatpush1.bf16.msra.mxu0 %v7919
    %8234 = vmatprep.subr.bf16.mxu0 %v7928
    %8235 = vmatpush1.bf16.msra.mxu0 %v7927
    %8236 = vmatprep.subr.bf16.mxu0 %v7936
    %8237 = vmatpush1.bf16.msra.mxu0 %v7935
    %8238 = vmatprep.subr.bf16.mxu0 %v7944
    %8239 = vmatpush1.bf16.msra.mxu0 %v7943
    %8240 = vmatprep.subr.bf16.mxu0 %v7952
    %8241 = vmatpush1.bf16.msra.mxu0 %v7951
    %8242 = vmatprep.mubr.bf16.mxu0 %v7440
    %8243 = vmatmul.mubr.bf16.gmra.mrb[0].mxu0 %v7439
    %v8244 = vpop.f32.mrb[0].mxu0
    %v8245 = vadd.f32 0.0, %v8244
    %v8246 = vpop.f32.mrb[0].mxu0
    %v8247 = vadd.f32 0.0, %v8246
    %v8248 = vpop.f32.mrb[0].mxu0
    %v8249 = vadd.f32 0.0, %v8248
    %v8250 = vpop.f32.mrb[0].mxu0
    %v8251 = vadd.f32 0.0, %v8250
    %8252 = vdwg.mxu0
    %v8253 = vadd.f32 %v7086, %v8116
    %v8254 = vadd.f32 %v7088, %v8118
    %v8255 = vadd.f32 %v7149, %v8159
    %v8256 = vadd.f32 %v7151, %v8161
    %v8257 = vadd.f32 %v7090, %v8120
    %v8258 = vadd.f32 %v7092, %v8122
    %v8259 = vadd.f32 %v7153, %v8163
    %v8260 = vadd.f32 %v7155, %v8165
    %v8261 = vadd.f32 %v7232, %v8202
    %v8262 = vadd.f32 %v7234, %v8204
    %v8263 = vadd.f32 %v7295, %v8245
    %v8264 = vadd.f32 %v7297, %v8247
    %v8265 = vadd.f32 %v7236, %v8206
    %v8266 = vadd.f32 %v7238, %v8208
    %v8267 = vadd.f32 %v7299, %v8249
    %v8268 = vadd.f32 %v7301, %v8251
    %v8269 = vmul.f32 %v8253, 0.5
    %v8270 = vmul.f32 %v8257, 0.5
    %v8271 = vtanh.pop %v8269
    %v8272 = vtanh.pop %v8270
    %v8273 = vadd.f32 %v8271, 1.0
    %v8274 = vadd.f32 %v8272, 1.0
    %v8275 = vmul.f32 %v8273, 0.5
    %v8276 = vmul.f32 %v8274, 0.5
    %v8277 = vmul.f32 %v8254, 0.5
    %v8278 = vmul.f32 %v8258, 0.5
    %v8279 = vtanh.pop %v8277
    %v8280 = vtanh.pop %v8278
    %v8281 = vadd.f32 %v8279, 1.0
    %v8282 = vadd.f32 %v8280, 1.0
    %v8283 = vmul.f32 %v8281, 0.5
    %v8284 = vmul.f32 %v8282, 0.5
    %v8285 = vtanh.pop %v8255
    %v8286 = vtanh.pop %v8259
    %v8287 = vmul.f32 %v8256, 0.5
    %v8288 = vmul.f32 %v8260, 0.5
    %v8289 = vtanh.pop %v8287
    %v8290 = vtanh.pop %v8288
    %v8291 = vadd.f32 %v8289, 1.0
    %v8292 = vadd.f32 %v8290, 1.0
    %v8293 = vmul.f32 %v8291, 0.5
    %v8294 = vmul.f32 %v8292, 0.5
    %v8295 = vmul.f32 %v8283, 0.0
    %v8296 = vmul.f32 %v8284, 0.0
    %v8297 = vmul.f32 %v8275, %v8285
    %v8298 = vmul.f32 %v8276, %v8286
    %v8299 = vadd.f32 %v8295, %v8297
    %v8300 = vadd.f32 %v8296, %v8298
    %v8301 = vtanh.pop %v8299
    %v8302 = vtanh.pop %v8300
    %v8303 = vmul.f32 %v8293, %v8301
    %v8304 = vmul.f32 %v8294, %v8302
    %v8305 = vmul.f32 %v8261, 0.5
    %v8306 = vmul.f32 %v8265, 0.5
    %v8307 = vtanh.pop %v8305
    %v8308 = vtanh.pop %v8306
    %v8309 = vadd.f32 %v8307, 1.0
    %v8310 = vadd.f32 %v8308, 1.0
    %v8311 = vmul.f32 %v8309, 0.5
    %v8312 = vmul.f32 %v8310, 0.5
    %v8313 = vmul.f32 %v8262, 0.5
    %v8314 = vmul.f32 %v8266, 0.5
    %v8315 = vtanh.pop %v8313
    %v8316 = vtanh.pop %v8314
    %v8317 = vadd.f32 %v8315, 1.0
    %v8318 = vadd.f32 %v8316, 1.0
    %v8319 = vmul.f32 %v8317, 0.5
    %v8320 = vmul.f32 %v8318, 0.5
    %v8321 = vtanh.pop %v8263
    %v8322 = vtanh.pop %v8267
    %v8323 = vmul.f32 %v8264, 0.5
    %v8324 = vmul.f32 %v8268, 0.5
    %v8325 = vtanh.pop %v8323
    %v8326 = vtanh.pop %v8324
    %v8327 = vadd.f32 %v8325, 1.0
    %v8328 = vadd.f32 %v8326, 1.0
    %v8329 = vmul.f32 %v8327, 0.5
    %v8330 = vmul.f32 %v8328, 0.5
    %v8331 = vmul.f32 %v8319, 0.0
    %v8332 = vmul.f32 %v8320, 0.0
    %v8333 = vmul.f32 %v8311, %v8321
    %v8334 = vmul.f32 %v8312, %v8322
    %v8335 = vadd.f32 %v8331, %v8333
    %v8336 = vadd.f32 %v8332, %v8334
    %v8337 = vtanh.pop %v8335
    %v8338 = vtanh.pop %v8336
    %v8339 = vmul.f32 %v8329, %v8337
    %v8340 = vmul.f32 %v8330, %v8338
    %8341 = vst [vmem:[#allocation4] sm:$0xff] %v8303
    %8342 = vst [vmem:[#allocation4 + $0x10] sm:$0xff] %v8304
    %8343 = vst [vmem:[#allocation4 + $0x8] sm:$0xff] %v8339
    %8344 = vst [vmem:[#allocation4 + $0x18] sm:$0xff] %v8340
    %8345 = vst [vmem:[#allocation2] sm:$0xff] %v8303
    %8346 = vst [vmem:[#allocation2 + $0x10] sm:$0xff] %v8304
    %8347 = vst [vmem:[#allocation2 + $0x48] sm:$0xff] %v8339
    %8348 = vst [vmem:[#allocation2 + $0x58] sm:$0xff] %v8340
    %v8349 = vld [vmem:[#allocation4] sm:$0xff]
    %v8350 = vld [vmem:[#allocation4 + $0x8] sm:$0xff]
    %v8351 = vld [vmem:[#allocation4 + $0x10] sm:$0xff]
    %v8352 = vld [vmem:[#allocation4 + $0x18] sm:$0xff]
    %v8353 = vpack.c.bf16 %v8351, %v8349
    %v8354 = vpack.c.bf16 %v8352, %v8350
    %8355 = vmatprep.subr.bf16.mxu0 %v7826
    %8356 = vmatpush1.bf16.msra.mxu0 %v7825
    %8357 = vmatprep.subr.bf16.mxu0 %v7834
    %8358 = vmatpush1.bf16.msra.mxu0 %v7833
    %8359 = vmatprep.subr.bf16.mxu0 %v7842
    %8360 = vmatpush1.bf16.msra.mxu0 %v7841
    %8361 = vmatprep.subr.bf16.mxu0 %v7850
    %8362 = vmatpush1.bf16.msra.mxu0 %v7849
    %8363 = vmatprep.subr.bf16.mxu0 %v7858
    %8364 = vmatpush1.bf16.msra.mxu0 %v7857
    %8365 = vmatprep.subr.bf16.mxu0 %v7866
    %8366 = vmatpush1.bf16.msra.mxu0 %v7865
    %8367 = vmatprep.subr.bf16.mxu0 %v7874
    %8368 = vmatpush1.bf16.msra.mxu0 %v7873
    %8369 = vmatprep.subr.bf16.mxu0 %v7882
    %8370 = vmatpush1.bf16.msra.mxu0 %v7881
    %8371 = vmatprep.subr.bf16.mxu0 %v7890
    %8372 = vmatpush1.bf16.msra.mxu0 %v7889
    %8373 = vmatprep.subr.bf16.mxu0 %v7898
    %8374 = vmatpush1.bf16.msra.mxu0 %v7897
    %8375 = vmatprep.subr.bf16.mxu0 %v7906
    %8376 = vmatpush1.bf16.msra.mxu0 %v7905
    %8377 = vmatprep.subr.bf16.mxu0 %v7914
    %8378 = vmatpush1.bf16.msra.mxu0 %v7913
    %8379 = vmatprep.subr.bf16.mxu0 %v7922
    %8380 = vmatpush1.bf16.msra.mxu0 %v7921
    %8381 = vmatprep.subr.bf16.mxu0 %v7930
    %8382 = vmatpush1.bf16.msra.mxu0 %v7929
    %8383 = vmatprep.subr.bf16.mxu0 %v7938
    %8384 = vmatpush1.bf16.msra.mxu0 %v7937
    %8385 = vmatprep.subr.bf16.mxu0 %v7946
    %8386 = vmatpush1.bf16.msra.mxu0 %v7945
    %8387 = vmatprep.mubr.bf16.mxu0 %v8354
    %8388 = vmatmul.mubr.bf16.gmra.mrb[0].mxu0 %v8353
    %v8389 = vpop.f32.mrb[0].mxu0
    %v8390 = vadd.f32 0.0, %v8389
    %v8391 = vpop.f32.mrb[0].mxu0
    %v8392 = vadd.f32 0.0, %v8391
    %v8393 = vpop.f32.mrb[0].mxu0
    %v8394 = vadd.f32 0.0, %v8393
    %v8395 = vpop.f32.mrb[0].mxu0
    %v8396 = vadd.f32 0.0, %v8395
    %8397 = vdwg.mxu0
    %8398 = vmatprep.subr.bf16.mxu0 %v7828
    %8399 = vmatpush1.bf16.msra.mxu0 %v7827
    %8400 = vmatprep.subr.bf16.mxu0 %v7836
    %8401 = vmatpush1.bf16.msra.mxu0 %v7835
    %8402 = vmatprep.subr.bf16.mxu0 %v7844
    %8403 = vmatpush1.bf16.msra.mxu0 %v7843
    %8404 = vmatprep.subr.bf16.mxu0 %v7852
    %8405 = vmatpush1.bf16.msra.mxu0 %v7851
    %8406 = vmatprep.subr.bf16.mxu0 %v7860
    %8407 = vmatpush1.bf16.msra.mxu0 %v7859
    %8408 = vmatprep.subr.bf16.mxu0 %v7868
    %8409 = vmatpush1.bf16.msra.mxu0 %v7867
    %8410 = vmatprep.subr.bf16.mxu0 %v7876
    %8411 = vmatpush1.bf16.msra.mxu0 %v7875
    %8412 = vmatprep.subr.bf16.mxu0 %v7884
    %8413 = vmatpush1.bf16.msra.mxu0 %v7883
    %8414 = vmatprep.subr.bf16.mxu0 %v7892
    %8415 = vmatpush1.bf16.msra.mxu0 %v7891
    %8416 = vmatprep.subr.bf16.mxu0 %v7900
    %8417 = vmatpush1.bf16.msra.mxu0 %v7899
    %8418 = vmatprep.subr.bf16.mxu0 %v7908
    %8419 = vmatpush1.bf16.msra.mxu0 %v7907
    %8420 = vmatprep.subr.bf16.mxu0 %v7916
    %8421 = vmatpush1.bf16.msra.mxu0 %v7915
    %8422 = vmatprep.subr.bf16.mxu0 %v7924
    %8423 = vmatpush1.bf16.msra.mxu0 %v7923
    %8424 = vmatprep.subr.bf16.mxu0 %v7932
    %8425 = vmatpush1.bf16.msra.mxu0 %v7931
    %8426 = vmatprep.subr.bf16.mxu0 %v7940
    %8427 = vmatpush1.bf16.msra.mxu0 %v7939
    %8428 = vmatprep.subr.bf16.mxu0 %v7948
    %8429 = vmatpush1.bf16.msra.mxu0 %v7947
    %8430 = vmatprep.mubr.bf16.mxu0 %v8354
    %8431 = vmatmul.mubr.bf16.gmra.mrb[0].mxu0 %v8353
    %v8432 = vpop.f32.mrb[0].mxu0
    %v8433 = vadd.f32 0.0, %v8432
    %v8434 = vpop.f32.mrb[0].mxu0
    %v8435 = vadd.f32 0.0, %v8434
    %v8436 = vpop.f32.mrb[0].mxu0
    %v8437 = vadd.f32 0.0, %v8436
    %v8438 = vpop.f32.mrb[0].mxu0
    %v8439 = vadd.f32 0.0, %v8438
    %8440 = vdwg.mxu0
    %8441 = vmatprep.subr.bf16.mxu0 %v7830
    %8442 = vmatpush1.bf16.msra.mxu0 %v7829
    %8443 = vmatprep.subr.bf16.mxu0 %v7838
    %8444 = vmatpush1.bf16.msra.mxu0 %v7837
    %8445 = vmatprep.subr.bf16.mxu0 %v7846
    %8446 = vmatpush1.bf16.msra.mxu0 %v7845
    %8447 = vmatprep.subr.bf16.mxu0 %v7854
    %8448 = vmatpush1.bf16.msra.mxu0 %v7853
    %8449 = vmatprep.subr.bf16.mxu0 %v7862
    %8450 = vmatpush1.bf16.msra.mxu0 %v7861
    %8451 = vmatprep.subr.bf16.mxu0 %v7870
    %8452 = vmatpush1.bf16.msra.mxu0 %v7869
    %8453 = vmatprep.subr.bf16.mxu0 %v7878
    %8454 = vmatpush1.bf16.msra.mxu0 %v7877
    %8455 = vmatprep.subr.bf16.mxu0 %v7886
    %8456 = vmatpush1.bf16.msra.mxu0 %v7885
    %8457 = vmatprep.subr.bf16.mxu0 %v7894
    %8458 = vmatpush1.bf16.msra.mxu0 %v7893
    %8459 = vmatprep.subr.bf16.mxu0 %v7902
    %8460 = vmatpush1.bf16.msra.mxu0 %v7901
    %8461 = vmatprep.subr.bf16.mxu0 %v7910
    %8462 = vmatpush1.bf16.msra.mxu0 %v7909
    %8463 = vmatprep.subr.bf16.mxu0 %v7918
    %8464 = vmatpush1.bf16.msra.mxu0 %v7917
    %8465 = vmatprep.subr.bf16.mxu0 %v7926
    %8466 = vmatpush1.bf16.msra.mxu0 %v7925
    %8467 = vmatprep.subr.bf16.mxu0 %v7934
    %8468 = vmatpush1.bf16.msra.mxu0 %v7933
    %8469 = vmatprep.subr.bf16.mxu0 %v7942
    %8470 = vmatpush1.bf16.msra.mxu0 %v7941
    %8471 = vmatprep.subr.bf16.mxu0 %v7950
    %8472 = vmatpush1.bf16.msra.mxu0 %v7949
    %8473 = vmatprep.mubr.bf16.mxu0 %v8354
    %8474 = vmatmul.mubr.bf16.gmra.mrb[0].mxu0 %v8353
    %v8475 = vpop.f32.mrb[0].mxu0
    %v8476 = vadd.f32 0.0, %v8475
    %v8477 = vpop.f32.mrb[0].mxu0
    %v8478 = vadd.f32 0.0, %v8477
    %v8479 = vpop.f32.mrb[0].mxu0
    %v8480 = vadd.f32 0.0, %v8479
    %v8481 = vpop.f32.mrb[0].mxu0
    %v8482 = vadd.f32 0.0, %v8481
    %8483 = vdwg.mxu0
    %8484 = vmatprep.subr.bf16.mxu0 %v7832
    %8485 = vmatpush1.bf16.msra.mxu0 %v7831
    %8486 = vmatprep.subr.bf16.mxu0 %v7840
    %8487 = vmatpush1.bf16.msra.mxu0 %v7839
    %8488 = vmatprep.subr.bf16.mxu0 %v7848
    %8489 = vmatpush1.bf16.msra.mxu0 %v7847
    %8490 = vmatprep.subr.bf16.mxu0 %v7856
    %8491 = vmatpush1.bf16.msra.mxu0 %v7855
    %8492 = vmatprep.subr.bf16.mxu0 %v7864
    %8493 = vmatpush1.bf16.msra.mxu0 %v7863
    %8494 = vmatprep.subr.bf16.mxu0 %v7872
    %8495 = vmatpush1.bf16.msra.mxu0 %v7871
    %8496 = vmatprep.subr.bf16.mxu0 %v7880
    %8497 = vmatpush1.bf16.msra.mxu0 %v7879
    %8498 = vmatprep.subr.bf16.mxu0 %v7888
    %8499 = vmatpush1.bf16.msra.mxu0 %v7887
    %8500 = vmatprep.subr.bf16.mxu0 %v7896
    %8501 = vmatpush1.bf16.msra.mxu0 %v7895
    %8502 = vmatprep.subr.bf16.mxu0 %v7904
    %8503 = vmatpush1.bf16.msra.mxu0 %v7903
    %8504 = vmatprep.subr.bf16.mxu0 %v7912
    %8505 = vmatpush1.bf16.msra.mxu0 %v7911
    %8506 = vmatprep.subr.bf16.mxu0 %v7920
    %8507 = vmatpush1.bf16.msra.mxu0 %v7919
    %8508 = vmatprep.subr.bf16.mxu0 %v7928
    %8509 = vmatpush1.bf16.msra.mxu0 %v7927
    %8510 = vmatprep.subr.bf16.mxu0 %v7936
    %8511 = vmatpush1.bf16.msra.mxu0 %v7935
    %8512 = vmatprep.subr.bf16.mxu0 %v7944
    %8513 = vmatpush1.bf16.msra.mxu0 %v7943
    %8514 = vmatprep.subr.bf16.mxu0 %v7952
    %8515 = vmatpush1.bf16.msra.mxu0 %v7951
    %8516 = vmatprep.mubr.bf16.mxu0 %v8354
    %8517 = vmatmul.mubr.bf16.gmra.mrb[0].mxu0 %v8353
    %v8518 = vpop.f32.mrb[0].mxu0
    %v8519 = vadd.f32 0.0, %v8518
    %v8520 = vpop.f32.mrb[0].mxu0
    %v8521 = vadd.f32 0.0, %v8520
    %v8522 = vpop.f32.mrb[0].mxu0
    %v8523 = vadd.f32 0.0, %v8522
    %v8524 = vpop.f32.mrb[0].mxu0
    %v8525 = vadd.f32 0.0, %v8524
    %8526 = vdwg.mxu0
    %v8527 = vadd.f32 %v7096, %v8390
    %v8528 = vadd.f32 %v7098, %v8392
    %v8529 = vadd.f32 %v7159, %v8433
    %v8530 = vadd.f32 %v7161, %v8435
    %v8531 = vadd.f32 %v7100, %v8394
    %v8532 = vadd.f32 %v7102, %v8396
    %v8533 = vadd.f32 %v7163, %v8437
    %v8534 = vadd.f32 %v7165, %v8439
    %v8535 = vadd.f32 %v7222, %v8476
    %v8536 = vadd.f32 %v7224, %v8478
    %v8537 = vadd.f32 %v7285, %v8519
    %v8538 = vadd.f32 %v7287, %v8521
    %v8539 = vadd.f32 %v7226, %v8480
    %v8540 = vadd.f32 %v7228, %v8482
    %v8541 = vadd.f32 %v7289, %v8523
    %v8542 = vadd.f32 %v7291, %v8525
    %v8543 = vmul.f32 %v8527, 0.5
    %v8544 = vmul.f32 %v8531, 0.5
    %v8545 = vtanh.pop %v8543
    %v8546 = vtanh.pop %v8544
    %v8547 = vadd.f32 %v8545, 1.0
    %v8548 = vadd.f32 %v8546, 1.0
    %v8549 = vmul.f32 %v8547, 0.5
    %v8550 = vmul.f32 %v8548, 0.5
    %v8551 = vmul.f32 %v8528, 0.5
    %v8552 = vmul.f32 %v8532, 0.5
    %v8553 = vtanh.pop %v8551
    %v8554 = vtanh.pop %v8552
    %v8555 = vadd.f32 %v8553, 1.0
    %v8556 = vadd.f32 %v8554, 1.0
    %v8557 = vmul.f32 %v8555, 0.5
    %v8558 = vmul.f32 %v8556, 0.5
    %v8559 = vtanh.pop %v8529
    %v8560 = vtanh.pop %v8533
    %v8561 = vmul.f32 %v8530, 0.5
    %v8562 = vmul.f32 %v8534, 0.5
    %v8563 = vtanh.pop %v8561
    %v8564 = vtanh.pop %v8562
    %v8565 = vadd.f32 %v8563, 1.0
    %v8566 = vadd.f32 %v8564, 1.0
    %v8567 = vmul.f32 %v8565, 0.5
    %v8568 = vmul.f32 %v8566, 0.5
    %v8569 = vmul.f32 %v8557, %v8299
    %v8570 = vmul.f32 %v8558, %v8300
    %v8571 = vmul.f32 %v8549, %v8559
    %v8572 = vmul.f32 %v8550, %v8560
    %v8573 = vadd.f32 %v8569, %v8571
    %v8574 = vadd.f32 %v8570, %v8572
    %v8575 = vtanh.pop %v8573
    %v8576 = vtanh.pop %v8574
    %v8577 = vmul.f32 %v8567, %v8575
    %v8578 = vmul.f32 %v8568, %v8576
    %v8579 = vmul.f32 %v8535, 0.5
    %v8580 = vmul.f32 %v8539, 0.5
    %v8581 = vtanh.pop %v8579
    %v8582 = vtanh.pop %v8580
    %v8583 = vadd.f32 %v8581, 1.0
    %v8584 = vadd.f32 %v8582, 1.0
    %v8585 = vmul.f32 %v8583, 0.5
    %v8586 = vmul.f32 %v8584, 0.5
    %v8587 = vmul.f32 %v8536, 0.5
    %v8588 = vmul.f32 %v8540, 0.5
    %v8589 = vtanh.pop %v8587
    %v8590 = vtanh.pop %v8588
    %v8591 = vadd.f32 %v8589, 1.0
    %v8592 = vadd.f32 %v8590, 1.0
    %v8593 = vmul.f32 %v8591, 0.5
    %v8594 = vmul.f32 %v8592, 0.5
    %v8595 = vtanh.pop %v8537
    %v8596 = vtanh.pop %v8541
    %v8597 = vmul.f32 %v8538, 0.5
    %v8598 = vmul.f32 %v8542, 0.5
    %v8599 = vtanh.pop %v8597
    %v8600 = vtanh.pop %v8598
    %v8601 = vadd.f32 %v8599, 1.0
    %v8602 = vadd.f32 %v8600, 1.0
    %v8603 = vmul.f32 %v8601, 0.5
    %v8604 = vmul.f32 %v8602, 0.5
    %v8605 = vmul.f32 %v8593, %v8335
    %v8606 = vmul.f32 %v8594, %v8336
    %v8607 = vmul.f32 %v8585, %v8595
    %v8608 = vmul.f32 %v8586, %v8596
    %v8609 = vadd.f32 %v8605, %v8607
    %v8610 = vadd.f32 %v8606, %v8608
    %v8611 = vtanh.pop %v8609
    %v8612 = vtanh.pop %v8610
    %v8613 = vmul.f32 %v8603, %v8611
    %v8614 = vmul.f32 %v8604, %v8612
    %8615 = vst [vmem:[#allocation4] sm:$0xff] %v8577
    %8616 = vst [vmem:[#allocation4 + $0x10] sm:$0xff] %v8578
    %8617 = vst [vmem:[#allocation4 + $0x8] sm:$0xff] %v8613
    %8618 = vst [vmem:[#allocation4 + $0x18] sm:$0xff] %v8614
    %8619 = vst [vmem:[#allocation2 + $0x20] sm:$0xff] %v8577
    %8620 = vst [vmem:[#allocation2 + $0x30] sm:$0xff] %v8578
    %8621 = vst [vmem:[#allocation2 + $0x28] sm:$0xff] %v8613
    %8622 = vst [vmem:[#allocation2 + $0x38] sm:$0xff] %v8614
    %v8623 = vld [vmem:[#allocation4] sm:$0xff]
    %v8624 = vld [vmem:[#allocation4 + $0x8] sm:$0xff]
    %v8625 = vld [vmem:[#allocation4 + $0x10] sm:$0xff]
    %v8626 = vld [vmem:[#allocation4 + $0x18] sm:$0xff]
    %v8627 = vpack.c.bf16 %v8625, %v8623
    %v8628 = vpack.c.bf16 %v8626, %v8624
    %8629 = vmatprep.subr.bf16.mxu0 %v7826
    %8630 = vmatpush1.bf16.msra.mxu0 %v7825
    %8631 = vmatprep.subr.bf16.mxu0 %v7834
    %8632 = vmatpush1.bf16.msra.mxu0 %v7833
    %8633 = vmatprep.subr.bf16.mxu0 %v7842
    %8634 = vmatpush1.bf16.msra.mxu0 %v7841
    %8635 = vmatprep.subr.bf16.mxu0 %v7850
    %8636 = vmatpush1.bf16.msra.mxu0 %v7849
    %8637 = vmatprep.subr.bf16.mxu0 %v7858
    %8638 = vmatpush1.bf16.msra.mxu0 %v7857
    %8639 = vmatprep.subr.bf16.mxu0 %v7866
    %8640 = vmatpush1.bf16.msra.mxu0 %v7865
    %8641 = vmatprep.subr.bf16.mxu0 %v7874
    %8642 = vmatpush1.bf16.msra.mxu0 %v7873
    %8643 = vmatprep.subr.bf16.mxu0 %v7882
    %8644 = vmatpush1.bf16.msra.mxu0 %v7881
    %8645 = vmatprep.subr.bf16.mxu0 %v7890
    %8646 = vmatpush1.bf16.msra.mxu0 %v7889
    %8647 = vmatprep.subr.bf16.mxu0 %v7898
    %8648 = vmatpush1.bf16.msra.mxu0 %v7897
    %8649 = vmatprep.subr.bf16.mxu0 %v7906
    %8650 = vmatpush1.bf16.msra.mxu0 %v7905
    %8651 = vmatprep.subr.bf16.mxu0 %v7914
    %8652 = vmatpush1.bf16.msra.mxu0 %v7913
    %8653 = vmatprep.subr.bf16.mxu0 %v7922
    %8654 = vmatpush1.bf16.msra.mxu0 %v7921
    %8655 = vmatprep.subr.bf16.mxu0 %v7930
    %8656 = vmatpush1.bf16.msra.mxu0 %v7929
    %8657 = vmatprep.subr.bf16.mxu0 %v7938
    %8658 = vmatpush1.bf16.msra.mxu0 %v7937
    %8659 = vmatprep.subr.bf16.mxu0 %v7946
    %8660 = vmatpush1.bf16.msra.mxu0 %v7945
    %8661 = vmatprep.mubr.bf16.mxu0 %v8628
    %8662 = vmatmul.mubr.bf16.gmra.mrb[0].mxu0 %v8627
    %v8663 = vpop.f32.mrb[0].mxu0
    %v8664 = vadd.f32 0.0, %v8663
    %v8665 = vpop.f32.mrb[0].mxu0
    %v8666 = vadd.f32 0.0, %v8665
    %v8667 = vpop.f32.mrb[0].mxu0
    %v8668 = vadd.f32 0.0, %v8667
    %v8669 = vpop.f32.mrb[0].mxu0
    %v8670 = vadd.f32 0.0, %v8669
    %8671 = vdwg.mxu0
    %8672 = vmatprep.subr.bf16.mxu0 %v7828
    %8673 = vmatpush1.bf16.msra.mxu0 %v7827
    %8674 = vmatprep.subr.bf16.mxu0 %v7836
    %8675 = vmatpush1.bf16.msra.mxu0 %v7835
    %8676 = vmatprep.subr.bf16.mxu0 %v7844
    %8677 = vmatpush1.bf16.msra.mxu0 %v7843
    %8678 = vmatprep.subr.bf16.mxu0 %v7852
    %8679 = vmatpush1.bf16.msra.mxu0 %v7851
    %8680 = vmatprep.subr.bf16.mxu0 %v7860
    %8681 = vmatpush1.bf16.msra.mxu0 %v7859
    %8682 = vmatprep.subr.bf16.mxu0 %v7868
    %8683 = vmatpush1.bf16.msra.mxu0 %v7867
    %8684 = vmatprep.subr.bf16.mxu0 %v7876
    %8685 = vmatpush1.bf16.msra.mxu0 %v7875
    %8686 = vmatprep.subr.bf16.mxu0 %v7884
    %8687 = vmatpush1.bf16.msra.mxu0 %v7883
    %8688 = vmatprep.subr.bf16.mxu0 %v7892
    %8689 = vmatpush1.bf16.msra.mxu0 %v7891
    %8690 = vmatprep.subr.bf16.mxu0 %v7900
    %8691 = vmatpush1.bf16.msra.mxu0 %v7899
    %8692 = vmatprep.subr.bf16.mxu0 %v7908
    %8693 = vmatpush1.bf16.msra.mxu0 %v7907
    %8694 = vmatprep.subr.bf16.mxu0 %v7916
    %8695 = vmatpush1.bf16.msra.mxu0 %v7915
    %8696 = vmatprep.subr.bf16.mxu0 %v7924
    %8697 = vmatpush1.bf16.msra.mxu0 %v7923
    %8698 = vmatprep.subr.bf16.mxu0 %v7932
    %8699 = vmatpush1.bf16.msra.mxu0 %v7931
    %8700 = vmatprep.subr.bf16.mxu0 %v7940
    %8701 = vmatpush1.bf16.msra.mxu0 %v7939
    %8702 = vmatprep.subr.bf16.mxu0 %v7948
    %8703 = vmatpush1.bf16.msra.mxu0 %v7947
    %8704 = vmatprep.mubr.bf16.mxu0 %v8628
    %8705 = vmatmul.mubr.bf16.gmra.mrb[0].mxu0 %v8627
    %v8706 = vpop.f32.mrb[0].mxu0
    %v8707 = vadd.f32 0.0, %v8706
    %v8708 = vpop.f32.mrb[0].mxu0
    %v8709 = vadd.f32 0.0, %v8708
    %v8710 = vpop.f32.mrb[0].mxu0
    %v8711 = vadd.f32 0.0, %v8710
    %v8712 = vpop.f32.mrb[0].mxu0
    %v8713 = vadd.f32 0.0, %v8712
    %8714 = vdwg.mxu0
    %8715 = vmatprep.subr.bf16.mxu0 %v7830
    %8716 = vmatpush1.bf16.msra.mxu0 %v7829
    %8717 = vmatprep.subr.bf16.mxu0 %v7838
    %8718 = vmatpush1.bf16.msra.mxu0 %v7837
    %8719 = vmatprep.subr.bf16.mxu0 %v7846
    %8720 = vmatpush1.bf16.msra.mxu0 %v7845
    %8721 = vmatprep.subr.bf16.mxu0 %v7854
    %8722 = vmatpush1.bf16.msra.mxu0 %v7853
    %8723 = vmatprep.subr.bf16.mxu0 %v7862
    %8724 = vmatpush1.bf16.msra.mxu0 %v7861
    %8725 = vmatprep.subr.bf16.mxu0 %v7870
    %8726 = vmatpush1.bf16.msra.mxu0 %v7869
    %8727 = vmatprep.subr.bf16.mxu0 %v7878
    %8728 = vmatpush1.bf16.msra.mxu0 %v7877
    %8729 = vmatprep.subr.bf16.mxu0 %v7886
    %8730 = vmatpush1.bf16.msra.mxu0 %v7885
    %8731 = vmatprep.subr.bf16.mxu0 %v7894
    %8732 = vmatpush1.bf16.msra.mxu0 %v7893
    %8733 = vmatprep.subr.bf16.mxu0 %v7902
    %8734 = vmatpush1.bf16.msra.mxu0 %v7901
    %8735 = vmatprep.subr.bf16.mxu0 %v7910
    %8736 = vmatpush1.bf16.msra.mxu0 %v7909
    %8737 = vmatprep.subr.bf16.mxu0 %v7918
    %8738 = vmatpush1.bf16.msra.mxu0 %v7917
    %8739 = vmatprep.subr.bf16.mxu0 %v7926
    %8740 = vmatpush1.bf16.msra.mxu0 %v7925
    %8741 = vmatprep.subr.bf16.mxu0 %v7934
    %8742 = vmatpush1.bf16.msra.mxu0 %v7933
    %8743 = vmatprep.subr.bf16.mxu0 %v7942
    %8744 = vmatpush1.bf16.msra.mxu0 %v7941
    %8745 = vmatprep.subr.bf16.mxu0 %v7950
    %8746 = vmatpush1.bf16.msra.mxu0 %v7949
    %8747 = vmatprep.mubr.bf16.mxu0 %v8628
    %8748 = vmatmul.mubr.bf16.gmra.mrb[0].mxu0 %v8627
    %v8749 = vpop.f32.mrb[0].mxu0
    %v8750 = vadd.f32 0.0, %v8749
    %v8751 = vpop.f32.mrb[0].mxu0
    %v8752 = vadd.f32 0.0, %v8751
    %v8753 = vpop.f32.mrb[0].mxu0
    %v8754 = vadd.f32 0.0, %v8753
    %v8755 = vpop.f32.mrb[0].mxu0
    %v8756 = vadd.f32 0.0, %v8755
    %8757 = vdwg.mxu0
    %8758 = vmatprep.subr.bf16.mxu0 %v7832
    %8759 = vmatpush1.bf16.msra.mxu0 %v7831
    %8760 = vmatprep.subr.bf16.mxu0 %v7840
    %8761 = vmatpush1.bf16.msra.mxu0 %v7839
    %8762 = vmatprep.subr.bf16.mxu0 %v7848
    %8763 = vmatpush1.bf16.msra.mxu0 %v7847
    %8764 = vmatprep.subr.bf16.mxu0 %v7856
    %8765 = vmatpush1.bf16.msra.mxu0 %v7855
    %8766 = vmatprep.subr.bf16.mxu0 %v7864
    %8767 = vmatpush1.bf16.msra.mxu0 %v7863
    %8768 = vmatprep.subr.bf16.mxu0 %v7872
    %8769 = vmatpush1.bf16.msra.mxu0 %v7871
    %8770 = vmatprep.subr.bf16.mxu0 %v7880
    %8771 = vmatpush1.bf16.msra.mxu0 %v7879
    %8772 = vmatprep.subr.bf16.mxu0 %v7888
    %8773 = vmatpush1.bf16.msra.mxu0 %v7887
    %8774 = vmatprep.subr.bf16.mxu0 %v7896
    %8775 = vmatpush1.bf16.msra.mxu0 %v7895
    %8776 = vmatprep.subr.bf16.mxu0 %v7904
    %8777 = vmatpush1.bf16.msra.mxu0 %v7903
    %8778 = vmatprep.subr.bf16.mxu0 %v7912
    %8779 = vmatpush1.bf16.msra.mxu0 %v7911
    %8780 = vmatprep.subr.bf16.mxu0 %v7920
    %8781 = vmatpush1.bf16.msra.mxu0 %v7919
    %8782 = vmatprep.subr.bf16.mxu0 %v7928
    %8783 = vmatpush1.bf16.msra.mxu0 %v7927
    %8784 = vmatprep.subr.bf16.mxu0 %v7936
    %8785 = vmatpush1.bf16.msra.mxu0 %v7935
    %8786 = vmatprep.subr.bf16.mxu0 %v7944
    %8787 = vmatpush1.bf16.msra.mxu0 %v7943
    %8788 = vmatprep.subr.bf16.mxu0 %v7952
    %8789 = vmatpush1.bf16.msra.mxu0 %v7951
    %8790 = vmatprep.mubr.bf16.mxu0 %v8628
    %8791 = vmatmul.mubr.bf16.gmra.mrb[0].mxu0 %v8627
    %v8792 = vpop.f32.mrb[0].mxu0
    %v8793 = vadd.f32 0.0, %v8792
    %v8794 = vpop.f32.mrb[0].mxu0
    %v8795 = vadd.f32 0.0, %v8794
    %v8796 = vpop.f32.mrb[0].mxu0
    %v8797 = vadd.f32 0.0, %v8796
    %v8798 = vpop.f32.mrb[0].mxu0
    %v8799 = vadd.f32 0.0, %v8798
    %8800 = vdwg.mxu0
    %v8801 = vadd.f32 %v7106, %v8664
    %v8802 = vadd.f32 %v7108, %v8666
    %v8803 = vadd.f32 %v7169, %v8707
    %v8804 = vadd.f32 %v7171, %v8709
    %v8805 = vadd.f32 %v7110, %v8668
    %v8806 = vadd.f32 %v7112, %v8670
    %v8807 = vadd.f32 %v7173, %v8711
    %v8808 = vadd.f32 %v7175, %v8713
    %v8809 = vadd.f32 %v7212, %v8750
    %v8810 = vadd.f32 %v7214, %v8752
    %v8811 = vadd.f32 %v7275, %v8793
    %v8812 = vadd.f32 %v7277, %v8795
    %v8813 = vadd.f32 %v7216, %v8754
    %v8814 = vadd.f32 %v7218, %v8756
    %v8815 = vadd.f32 %v7279, %v8797
    %v8816 = vadd.f32 %v7281, %v8799
    %v8817 = vmul.f32 %v8801, 0.5
    %v8818 = vmul.f32 %v8805, 0.5
    %v8819 = vtanh.pop %v8817
    %v8820 = vtanh.pop %v8818
    %v8821 = vadd.f32 %v8819, 1.0
    %v8822 = vadd.f32 %v8820, 1.0
    %v8823 = vmul.f32 %v8821, 0.5
    %v8824 = vmul.f32 %v8822, 0.5
    %v8825 = vmul.f32 %v8802, 0.5
    %v8826 = vmul.f32 %v8806, 0.5
    %v8827 = vtanh.pop %v8825
    %v8828 = vtanh.pop %v8826
    %v8829 = vadd.f32 %v8827, 1.0
    %v8830 = vadd.f32 %v8828, 1.0
    %v8831 = vmul.f32 %v8829, 0.5
    %v8832 = vmul.f32 %v8830, 0.5
    %v8833 = vtanh.pop %v8803
    %v8834 = vtanh.pop %v8807
    %v8835 = vmul.f32 %v8804, 0.5
    %v8836 = vmul.f32 %v8808, 0.5
    %v8837 = vtanh.pop %v8835
    %v8838 = vtanh.pop %v8836
    %v8839 = vadd.f32 %v8837, 1.0
    %v8840 = vadd.f32 %v8838, 1.0
    %v8841 = vmul.f32 %v8839, 0.5
    %v8842 = vmul.f32 %v8840, 0.5
    %v8843 = vmul.f32 %v8831, %v8573
    %v8844 = vmul.f32 %v8832, %v8574
    %v8845 = vmul.f32 %v8823, %v8833
    %v8846 = vmul.f32 %v8824, %v8834
    %v8847 = vadd.f32 %v8843, %v8845
    %v8848 = vadd.f32 %v8844, %v8846
    %v8849 = vtanh.pop %v8847
    %v8850 = vtanh.pop %v8848
    %v8851 = vmul.f32 %v8841, %v8849
    %v8852 = vmul.f32 %v8842, %v8850
    %v8853 = vmul.f32 %v8809, 0.5
    %v8854 = vmul.f32 %v8813, 0.5
    %v8855 = vtanh.pop %v8853
    %v8856 = vtanh.pop %v8854
    %v8857 = vadd.f32 %v8855, 1.0
    %v8858 = vadd.f32 %v8856, 1.0
    %v8859 = vmul.f32 %v8857, 0.5
    %v8860 = vmul.f32 %v8858, 0.5
    %v8861 = vmul.f32 %v8810, 0.5
    %v8862 = vmul.f32 %v8814, 0.5
    %v8863 = vtanh.pop %v8861
    %v8864 = vtanh.pop %v8862
    %v8865 = vadd.f32 %v8863, 1.0
    %v8866 = vadd.f32 %v8864, 1.0
    %v8867 = vmul.f32 %v8865, 0.5
    %v8868 = vmul.f32 %v8866, 0.5
    %v8869 = vtanh.pop %v8811
    %v8870 = vtanh.pop %v8815
    %v8871 = vmul.f32 %v8812, 0.5
    %v8872 = vmul.f32 %v8816, 0.5
    %v8873 = vtanh.pop %v8871
    %v8874 = vtanh.pop %v8872
    %v8875 = vadd.f32 %v8873, 1.0
    %v8876 = vadd.f32 %v8874, 1.0
    %v8877 = vmul.f32 %v8875, 0.5
    %v8878 = vmul.f32 %v8876, 0.5
    %v8879 = vmul.f32 %v8867, %v8609
    %v8880 = vmul.f32 %v8868, %v8610
    %v8881 = vmul.f32 %v8859, %v8869
    %v8882 = vmul.f32 %v8860, %v8870
    %v8883 = vadd.f32 %v8879, %v8881
    %v8884 = vadd.f32 %v8880, %v8882
    %v8885 = vtanh.pop %v8883
    %v8886 = vtanh.pop %v8884
    %v8887 = vmul.f32 %v8877, %v8885
    %v8888 = vmul.f32 %v8878, %v8886
    %8889 = vst [vmem:[#allocation4] sm:$0xff] %v8851
    %8890 = vst [vmem:[#allocation4 + $0x10] sm:$0xff] %v8852
    %8891 = vst [vmem:[#allocation4 + $0x8] sm:$0xff] %v8887
    %8892 = vst [vmem:[#allocation4 + $0x18] sm:$0xff] %v8888
    %8893 = vst [vmem:[#allocation2 + $0x40] sm:$0xff] %v8851
    %8894 = vst [vmem:[#allocation2 + $0x50] sm:$0xff] %v8852
    %8895 = vst [vmem:[#allocation2 + $0x8] sm:$0xff] %v8887
    %8896 = vst [vmem:[#allocation2 + $0x18] sm:$0xff] %v8888
    %v8897 = vld [vmem:[#allocation2 + $0x40] sm:$0xff]
    %v8898 = vld [vmem:[#allocation2 + $0x48] sm:$0xff]
    %v8899 = vld [vmem:[#allocation2 + $0x50] sm:$0xff]
    %v8900 = vld [vmem:[#allocation2 + $0x58] sm:$0xff]
    %v8901 = vld [vmem:[#allocation23] sm:$0xf]
    %v8902 = vld [vmem:[#allocation23 + $0x4] sm:$0xf]
    %v8903 = vld [vmem:[#allocation23 + $0x8] sm:$0xf]
    %v8904 = vld [vmem:[#allocation23 + $0xc] sm:$0xf]
    %v8905 = vld [vmem:[#allocation23 + $0x10] sm:$0xf]
    %v8906 = vld [vmem:[#allocation23 + $0x14] sm:$0xf]
    %v8907 = vld [vmem:[#allocation23 + $0x18] sm:$0xf]
    %v8908 = vld [vmem:[#allocation23 + $0x1c] sm:$0xf]
    %v8909 = vld [vmem:[#allocation23 + $0x20] sm:$0xf]
    %v8910 = vld [vmem:[#allocation23 + $0x24] sm:$0xf]
    %v8911 = vld [vmem:[#allocation23 + $0x28] sm:$0xf]
    %v8912 = vld [vmem:[#allocation23 + $0x2c] sm:$0xf]
    %v8913 = vld [vmem:[#allocation23 + $0x30] sm:$0xf]
    %v8914 = vld [vmem:[#allocation23 + $0x34] sm:$0xf]
    %v8915 = vld [vmem:[#allocation23 + $0x38] sm:$0xf]
    %v8916 = vld [vmem:[#allocation23 + $0x3c] sm:$0xf]
    %v8917 = vld [vmem:[#allocation23 + $0x40] sm:$0xf]
    %v8918 = vld [vmem:[#allocation23 + $0x44] sm:$0xf]
    %v8919 = vld [vmem:[#allocation23 + $0x48] sm:$0xf]
    %v8920 = vld [vmem:[#allocation23 + $0x4c] sm:$0xf]
    %v8921 = vld [vmem:[#allocation23 + $0x50] sm:$0xf]
    %v8922 = vld [vmem:[#allocation23 + $0x54] sm:$0xf]
    %v8923 = vld [vmem:[#allocation23 + $0x58] sm:$0xf]
    %v8924 = vld [vmem:[#allocation23 + $0x5c] sm:$0xf]
    %v8925 = vld [vmem:[#allocation23 + $0x60] sm:$0xf]
    %v8926 = vld [vmem:[#allocation23 + $0x64] sm:$0xf]
    %v8927 = vld [vmem:[#allocation23 + $0x68] sm:$0xf]
    %v8928 = vld [vmem:[#allocation23 + $0x6c] sm:$0xf]
    %v8929 = vld [vmem:[#allocation23 + $0x70] sm:$0xf]
    %v8930 = vld [vmem:[#allocation23 + $0x74] sm:$0xf]
    %v8931 = vld [vmem:[#allocation23 + $0x78] sm:$0xf]
    %v8932 = vld [vmem:[#allocation23 + $0x7c] sm:$0xf]
    %v8933 = vpack.c.bf16 %v8899, %v8897
    %v8934 = vpack.c.bf16 %v8900, %v8898
    %v8935 = vld [vmem:[#allocation25] sm:$0x1]
    %v8937 = vlaneseq
    %v8938 = vshrl.u32 %v8937, 7
    %v8939 = vsub.s32 0, %v8938
    %v8940 = vrot.slane %v8935, %v8939
    %v8974 = vunpack.c.l.b16 %v8901
    %v8975 = vunpack.c.l.b16 %v8902
    %v8976 = vunpack.c.l.b16 %v8903
    %v8977 = vunpack.c.l.b16 %v8904
    %v8978 = vunpack.c.l.b16 %v8905
    %v8979 = vunpack.c.l.b16 %v8906
    %v8980 = vunpack.c.l.b16 %v8907
    %v8981 = vunpack.c.l.b16 %v8908
    %v8982 = vunpack.c.l.b16 %v8909
    %v8983 = vunpack.c.l.b16 %v8910
    %v8984 = vunpack.c.l.b16 %v8911
    %v8985 = vunpack.c.l.b16 %v8912
    %v8986 = vunpack.c.l.b16 %v8913
    %v8987 = vunpack.c.l.b16 %v8914
    %v8988 = vunpack.c.l.b16 %v8915
    %v8989 = vunpack.c.l.b16 %v8916
    %v8990 = vunpack.c.l.b16 %v8917
    %v8991 = vunpack.c.l.b16 %v8918
    %v8992 = vunpack.c.l.b16 %v8919
    %v8993 = vunpack.c.l.b16 %v8920
    %v8994 = vunpack.c.l.b16 %v8921
    %v8995 = vunpack.c.l.b16 %v8922
    %v8996 = vunpack.c.l.b16 %v8923
    %v8997 = vunpack.c.l.b16 %v8924
    %v8998 = vunpack.c.l.b16 %v8925
    %v8999 = vunpack.c.l.b16 %v8926
    %v9000 = vunpack.c.l.b16 %v8927
    %v9001 = vunpack.c.l.b16 %v8928
    %v9002 = vunpack.c.l.b16 %v8929
    %v9003 = vunpack.c.l.b16 %v8930
    %v9004 = vunpack.c.l.b16 %v8931
    %v9005 = vunpack.c.l.b16 %v8932
    %v9006 = vpack.c.b16 %v8975, %v8974
    %v9007 = vpack.c.b16 %v8977, %v8976
    %v9008 = vpack.c.b16 %v8979, %v8978
    %v9009 = vpack.c.b16 %v8981, %v8980
    %v9010 = vpack.c.b16 %v8983, %v8982
    %v9011 = vpack.c.b16 %v8985, %v8984
    %v9012 = vpack.c.b16 %v8987, %v8986
    %v9013 = vpack.c.b16 %v8989, %v8988
    %v9014 = vpack.c.b16 %v8991, %v8990
    %v9015 = vpack.c.b16 %v8993, %v8992
    %v9016 = vpack.c.b16 %v8995, %v8994
    %v9017 = vpack.c.b16 %v8997, %v8996
    %v9018 = vpack.c.b16 %v8999, %v8998
    %v9019 = vpack.c.b16 %v9001, %v9000
    %v9020 = vpack.c.b16 %v9003, %v9002
    %v9021 = vpack.c.b16 %v9005, %v9004
    %9038 = vmatprep.subr.bf16.mxu0 0
    %9039 = vmatpush1.bf16.msra.mxu0 %v9006
    %9040 = vmatprep.subr.bf16.mxu0 0
    %9041 = vmatpush1.bf16.msra.mxu0 %v9007
    %9042 = vmatprep.subr.bf16.mxu0 0
    %9043 = vmatpush1.bf16.msra.mxu0 %v9008
    %9044 = vmatprep.subr.bf16.mxu0 0
    %9045 = vmatpush1.bf16.msra.mxu0 %v9009
    %9046 = vmatprep.subr.bf16.mxu0 0
    %9047 = vmatpush1.bf16.msra.mxu0 %v9010
    %9048 = vmatprep.subr.bf16.mxu0 0
    %9049 = vmatpush1.bf16.msra.mxu0 %v9011
    %9050 = vmatprep.subr.bf16.mxu0 0
    %9051 = vmatpush1.bf16.msra.mxu0 %v9012
    %9052 = vmatprep.subr.bf16.mxu0 0
    %9053 = vmatpush1.bf16.msra.mxu0 %v9013
    %9054 = vmatprep.subr.bf16.mxu0 0
    %9055 = vmatpush1.bf16.msra.mxu0 %v9014
    %9056 = vmatprep.subr.bf16.mxu0 0
    %9057 = vmatpush1.bf16.msra.mxu0 %v9015
    %9058 = vmatprep.subr.bf16.mxu0 0
    %9059 = vmatpush1.bf16.msra.mxu0 %v9016
    %9060 = vmatprep.subr.bf16.mxu0 0
    %9061 = vmatpush1.bf16.msra.mxu0 %v9017
    %9062 = vmatprep.subr.bf16.mxu0 0
    %9063 = vmatpush1.bf16.msra.mxu0 %v9018
    %9064 = vmatprep.subr.bf16.mxu0 0
    %9065 = vmatpush1.bf16.msra.mxu0 %v9019
    %9066 = vmatprep.subr.bf16.mxu0 0
    %9067 = vmatpush1.bf16.msra.mxu0 %v9020
    %9068 = vmatprep.subr.bf16.mxu0 0
    %9069 = vmatpush1.bf16.msra.mxu0 %v9021
    %9070 = vmatprep.mubr.bf16.mxu0 %v8934
    %9071 = vmatmul.mubr.bf16.gmra.mrb[0].mxu0 %v8933
    %v9072 = vpop.f32.mrb[0].mxu0
    %v9073 = vadd.f32 %v8940, %v9072
    %v9074 = vpop.f32.mrb[0].mxu0
    %v9075 = vpop.f32.mrb[0].mxu0
    %v9076 = vadd.f32 %v8940, %v9075
    %v9077 = vpop.f32.mrb[0].mxu0
    %9078 = vdwg.mxu0
    %v9079 = vld [vmem:[#allocation28] sm:$0x1]
    %v9080 = vld [vmem:[#allocation26] sm:$0xf]
    %v9081 = vld [vmem:[#allocation26 + $0x4] sm:$0xf]
    %v9082 = vld [vmem:[#allocation26 + $0x8] sm:$0xf]
    %v9083 = vld [vmem:[#allocation26 + $0xc] sm:$0xf]
    %v9084 = vld [vmem:[#allocation26 + $0x10] sm:$0xf]
    %v9085 = vld [vmem:[#allocation26 + $0x14] sm:$0xf]
    %v9086 = vld [vmem:[#allocation26 + $0x18] sm:$0xf]
    %v9087 = vld [vmem:[#allocation26 + $0x1c] sm:$0xf]
    %v9088 = vld [vmem:[#allocation26 + $0x20] sm:$0xf]
    %v9089 = vld [vmem:[#allocation26 + $0x24] sm:$0xf]
    %v9090 = vld [vmem:[#allocation26 + $0x28] sm:$0xf]
    %v9091 = vld [vmem:[#allocation26 + $0x2c] sm:$0xf]
    %v9092 = vld [vmem:[#allocation26 + $0x30] sm:$0xf]
    %v9093 = vld [vmem:[#allocation26 + $0x34] sm:$0xf]
    %v9094 = vld [vmem:[#allocation26 + $0x38] sm:$0xf]
    %v9095 = vld [vmem:[#allocation26 + $0x3c] sm:$0xf]
    %v9112 = vunpack.c.l.b16 %v9080
    %v9113 = vunpack.c.l.b16 %v9081
    %v9114 = vunpack.c.l.b16 %v9082
    %v9115 = vunpack.c.l.b16 %v9083
    %v9116 = vunpack.c.l.b16 %v9084
    %v9117 = vunpack.c.l.b16 %v9085
    %v9118 = vunpack.c.l.b16 %v9086
    %v9119 = vunpack.c.l.b16 %v9087
    %v9120 = vunpack.c.l.b16 %v9088
    %v9121 = vunpack.c.l.b16 %v9089
    %v9122 = vunpack.c.l.b16 %v9090
    %v9123 = vunpack.c.l.b16 %v9091
    %v9124 = vunpack.c.l.b16 %v9092
    %v9125 = vunpack.c.l.b16 %v9093
    %v9126 = vunpack.c.l.b16 %v9094
    %v9127 = vunpack.c.l.b16 %v9095
    %v9128 = vpack.c.b16 %v9113, %v9112
    %v9129 = vpack.c.b16 %v9115, %v9114
    %v9130 = vpack.c.b16 %v9117, %v9116
    %v9131 = vpack.c.b16 %v9119, %v9118
    %v9132 = vpack.c.b16 %v9121, %v9120
    %v9133 = vpack.c.b16 %v9123, %v9122
    %v9134 = vpack.c.b16 %v9125, %v9124
    %v9135 = vpack.c.b16 %v9127, %v9126
    %9144 = vmatprep.subr.bf16.mxu0 0
    %9145 = vmatpush1.bf16.msra.mxu0 %v9128
    %9146 = vmatprep.subr.bf16.mxu0 0
    %9147 = vmatpush1.bf16.msra.mxu0 %v9129
    %9148 = vmatprep.subr.bf16.mxu0 0
    %9149 = vmatpush1.bf16.msra.mxu0 %v9130
    %9150 = vmatprep.subr.bf16.mxu0 0
    %9151 = vmatpush1.bf16.msra.mxu0 %v9131
    %9152 = vmatprep.subr.bf16.mxu0 0
    %9153 = vmatpush1.bf16.msra.mxu0 %v9132
    %9154 = vmatprep.subr.bf16.mxu0 0
    %9155 = vmatpush1.bf16.msra.mxu0 %v9133
    %9156 = vmatprep.subr.bf16.mxu0 0
    %9157 = vmatpush1.bf16.msra.mxu0 %v9134
    %9158 = vmatprep.subr.bf16.mxu0 0
    %9159 = vmatpush1.bf16.msra.mxu0 %v9135
    %9160 = vmatprep.subr.bf16.mxu0 0
    %9161 = vmatpush1.bf16.msra.mxu0 0
    %9162 = vmatprep.subr.bf16.mxu0 0
    %9163 = vmatpush1.bf16.msra.mxu0 0
    %9164 = vmatprep.subr.bf16.mxu0 0
    %9165 = vmatpush1.bf16.msra.mxu0 0
    %9166 = vmatprep.subr.bf16.mxu0 0
    %9167 = vmatpush1.bf16.msra.mxu0 0
    %9168 = vmatprep.subr.bf16.mxu0 0
    %9169 = vmatpush1.bf16.msra.mxu0 0
    %9170 = vmatprep.subr.bf16.mxu0 0
    %9171 = vmatpush1.bf16.msra.mxu0 0
    %9172 = vmatprep.subr.bf16.mxu0 0
    %9173 = vmatpush1.bf16.msra.mxu0 0
    %9174 = vmatprep.subr.bf16.mxu0 0
    %9175 = vmatpush1.bf16.msra.mxu0 0
    %9176 = vmatprep.mubr.bf16.mxu0 0
    %9177 = vmatmul.mubr.bf16.gmra.mrb[0].mxu0 %v1338
    %v9178 = vpop.f32.mrb[0].mxu0
    %v9179 = vadd.f32 0.0, %v9178
    %v9180 = vpop.f32.mrb[0].mxu0
    %v9181 = vpop.f32.mrb[0].mxu0
    %v9182 = vadd.f32 0.0, %v9181
    %v9183 = vpop.f32.mrb[0].mxu0
    %9184 = vdwg.mxu0
    %v9186 = vlaneseq
    %v9187 = vshrl.u32 %v9186, 7
    %v9188 = vsub.s32 0, %v9187
    %v9189 = vrot.slane %v9079, %v9188
    %v9191 = vadd.f32 %v9189, %v9179
    %v9192 = vadd.f32 %v9189, %v9182
    %v9193 = vld [vmem:[#allocation26 + $0x40] sm:$0xf]
    %v9194 = vld [vmem:[#allocation26 + $0x44] sm:$0xf]
    %v9195 = vld [vmem:[#allocation26 + $0x48] sm:$0xf]
    %v9196 = vld [vmem:[#allocation26 + $0x4c] sm:$0xf]
    %v9197 = vld [vmem:[#allocation26 + $0x50] sm:$0xf]
    %v9198 = vld [vmem:[#allocation26 + $0x54] sm:$0xf]
    %v9199 = vld [vmem:[#allocation26 + $0x58] sm:$0xf]
    %v9200 = vld [vmem:[#allocation26 + $0x5c] sm:$0xf]
    %v9201 = vld [vmem:[#allocation26 + $0x60] sm:$0xf]
    %v9202 = vld [vmem:[#allocation26 + $0x64] sm:$0xf]
    %v9203 = vld [vmem:[#allocation26 + $0x68] sm:$0xf]
    %v9204 = vld [vmem:[#allocation26 + $0x6c] sm:$0xf]
    %v9205 = vld [vmem:[#allocation26 + $0x70] sm:$0xf]
    %v9206 = vld [vmem:[#allocation26 + $0x74] sm:$0xf]
    %v9207 = vld [vmem:[#allocation26 + $0x78] sm:$0xf]
    %v9208 = vld [vmem:[#allocation26 + $0x7c] sm:$0xf]
    %v9225 = vunpack.c.l.b16 %v9193
    %v9226 = vunpack.c.l.b16 %v9194
    %v9227 = vunpack.c.l.b16 %v9195
    %v9228 = vunpack.c.l.b16 %v9196
    %v9229 = vunpack.c.l.b16 %v9197
    %v9230 = vunpack.c.l.b16 %v9198
    %v9231 = vunpack.c.l.b16 %v9199
    %v9232 = vunpack.c.l.b16 %v9200
    %v9233 = vunpack.c.l.b16 %v9201
    %v9234 = vunpack.c.l.b16 %v9202
    %v9235 = vunpack.c.l.b16 %v9203
    %v9236 = vunpack.c.l.b16 %v9204
    %v9237 = vunpack.c.l.b16 %v9205
    %v9238 = vunpack.c.l.b16 %v9206
    %v9239 = vunpack.c.l.b16 %v9207
    %v9240 = vunpack.c.l.b16 %v9208
    %v9241 = vpack.c.b16 %v9226, %v9225
    %v9242 = vpack.c.b16 %v9228, %v9227
    %v9243 = vpack.c.b16 %v9230, %v9229
    %v9244 = vpack.c.b16 %v9232, %v9231
    %v9245 = vpack.c.b16 %v9234, %v9233
    %v9246 = vpack.c.b16 %v9236, %v9235
    %v9247 = vpack.c.b16 %v9238, %v9237
    %v9248 = vpack.c.b16 %v9240, %v9239
    %9257 = vmatprep.subr.bf16.mxu0 0
    %9258 = vmatpush1.bf16.msra.mxu0 %v9241
    %9259 = vmatprep.subr.bf16.mxu0 0
    %9260 = vmatpush1.bf16.msra.mxu0 %v9242
    %9261 = vmatprep.subr.bf16.mxu0 0
    %9262 = vmatpush1.bf16.msra.mxu0 %v9243
    %9263 = vmatprep.subr.bf16.mxu0 0
    %9264 = vmatpush1.bf16.msra.mxu0 %v9244
    %9265 = vmatprep.subr.bf16.mxu0 0
    %9266 = vmatpush1.bf16.msra.mxu0 %v9245
    %9267 = vmatprep.subr.bf16.mxu0 0
    %9268 = vmatpush1.bf16.msra.mxu0 %v9246
    %9269 = vmatprep.subr.bf16.mxu0 0
    %9270 = vmatpush1.bf16.msra.mxu0 %v9247
    %9271 = vmatprep.subr.bf16.mxu0 0
    %9272 = vmatpush1.bf16.msra.mxu0 %v9248
    %9273 = vmatprep.subr.bf16.mxu0 0
    %9274 = vmatpush1.bf16.msra.mxu0 0
    %9275 = vmatprep.subr.bf16.mxu0 0
    %9276 = vmatpush1.bf16.msra.mxu0 0
    %9277 = vmatprep.subr.bf16.mxu0 0
    %9278 = vmatpush1.bf16.msra.mxu0 0
    %9279 = vmatprep.subr.bf16.mxu0 0
    %9280 = vmatpush1.bf16.msra.mxu0 0
    %9281 = vmatprep.subr.bf16.mxu0 0
    %9282 = vmatpush1.bf16.msra.mxu0 0
    %9283 = vmatprep.subr.bf16.mxu0 0
    %9284 = vmatpush1.bf16.msra.mxu0 0
    %9285 = vmatprep.subr.bf16.mxu0 0
    %9286 = vmatpush1.bf16.msra.mxu0 0
    %9287 = vmatprep.subr.bf16.mxu0 0
    %9288 = vmatpush1.bf16.msra.mxu0 0
    %9289 = vmatprep.mubr.bf16.mxu0 0
    %9290 = vmatmul.mubr.bf16.gmra.mrb[0].mxu0 %v1339
    %v9291 = vpop.f32.mrb[0].mxu0
    %v9292 = vadd.f32 0.0, %v9291
    %v9293 = vpop.f32.mrb[0].mxu0
    %v9294 = vpop.f32.mrb[0].mxu0
    %v9295 = vadd.f32 0.0, %v9294
    %v9296 = vpop.f32.mrb[0].mxu0
    %9297 = vdwg.mxu0
    %v9298 = vadd.f32 %v9191, %v9292
    %v9299 = vadd.f32 %v9192, %v9295
    %v9300 = vld [vmem:[#allocation26 + $0x80] sm:$0xf]
    %v9301 = vld [vmem:[#allocation26 + $0x84] sm:$0xf]
    %v9302 = vld [vmem:[#allocation26 + $0x88] sm:$0xf]
    %v9303 = vld [vmem:[#allocation26 + $0x8c] sm:$0xf]
    %v9304 = vld [vmem:[#allocation26 + $0x90] sm:$0xf]
    %v9305 = vld [vmem:[#allocation26 + $0x94] sm:$0xf]
    %v9306 = vld [vmem:[#allocation26 + $0x98] sm:$0xf]
    %v9307 = vld [vmem:[#allocation26 + $0x9c] sm:$0xf]
    %v9308 = vld [vmem:[#allocation26 + $0xa0] sm:$0xf]
    %v9309 = vld [vmem:[#allocation26 + $0xa4] sm:$0xf]
    %v9310 = vld [vmem:[#allocation26 + $0xa8] sm:$0xf]
    %v9311 = vld [vmem:[#allocation26 + $0xac] sm:$0xf]
    %v9312 = vld [vmem:[#allocation26 + $0xb0] sm:$0xf]
    %v9313 = vld [vmem:[#allocation26 + $0xb4] sm:$0xf]
    %v9314 = vld [vmem:[#allocation26 + $0xb8] sm:$0xf]
    %v9315 = vld [vmem:[#allocation26 + $0xbc] sm:$0xf]
    %v9332 = vunpack.c.l.b16 %v9300
    %v9333 = vunpack.c.l.b16 %v9301
    %v9334 = vunpack.c.l.b16 %v9302
    %v9335 = vunpack.c.l.b16 %v9303
    %v9336 = vunpack.c.l.b16 %v9304
    %v9337 = vunpack.c.l.b16 %v9305
    %v9338 = vunpack.c.l.b16 %v9306
    %v9339 = vunpack.c.l.b16 %v9307
    %v9340 = vunpack.c.l.b16 %v9308
    %v9341 = vunpack.c.l.b16 %v9309
    %v9342 = vunpack.c.l.b16 %v9310
    %v9343 = vunpack.c.l.b16 %v9311
    %v9344 = vunpack.c.l.b16 %v9312
    %v9345 = vunpack.c.l.b16 %v9313
    %v9346 = vunpack.c.l.b16 %v9314
    %v9347 = vunpack.c.l.b16 %v9315
    %v9348 = vpack.c.b16 %v9333, %v9332
    %v9349 = vpack.c.b16 %v9335, %v9334
    %v9350 = vpack.c.b16 %v9337, %v9336
    %v9351 = vpack.c.b16 %v9339, %v9338
    %v9352 = vpack.c.b16 %v9341, %v9340
    %v9353 = vpack.c.b16 %v9343, %v9342
    %v9354 = vpack.c.b16 %v9345, %v9344
    %v9355 = vpack.c.b16 %v9347, %v9346
    %9364 = vmatprep.subr.bf16.mxu0 0
    %9365 = vmatpush1.bf16.msra.mxu0 %v9348
    %9366 = vmatprep.subr.bf16.mxu0 0
    %9367 = vmatpush1.bf16.msra.mxu0 %v9349
    %9368 = vmatprep.subr.bf16.mxu0 0
    %9369 = vmatpush1.bf16.msra.mxu0 %v9350
    %9370 = vmatprep.subr.bf16.mxu0 0
    %9371 = vmatpush1.bf16.msra.mxu0 %v9351
    %9372 = vmatprep.subr.bf16.mxu0 0
    %9373 = vmatpush1.bf16.msra.mxu0 %v9352
    %9374 = vmatprep.subr.bf16.mxu0 0
    %9375 = vmatpush1.bf16.msra.mxu0 %v9353
    %9376 = vmatprep.subr.bf16.mxu0 0
    %9377 = vmatpush1.bf16.msra.mxu0 %v9354
    %9378 = vmatprep.subr.bf16.mxu0 0
    %9379 = vmatpush1.bf16.msra.mxu0 %v9355
    %9380 = vmatprep.subr.bf16.mxu0 0
    %9381 = vmatpush1.bf16.msra.mxu0 0
    %9382 = vmatprep.subr.bf16.mxu0 0
    %9383 = vmatpush1.bf16.msra.mxu0 0
    %9384 = vmatprep.subr.bf16.mxu0 0
    %9385 = vmatpush1.bf16.msra.mxu0 0
    %9386 = vmatprep.subr.bf16.mxu0 0
    %9387 = vmatpush1.bf16.msra.mxu0 0
    %9388 = vmatprep.subr.bf16.mxu0 0
    %9389 = vmatpush1.bf16.msra.mxu0 0
    %9390 = vmatprep.subr.bf16.mxu0 0
    %9391 = vmatpush1.bf16.msra.mxu0 0
    %9392 = vmatprep.subr.bf16.mxu0 0
    %9393 = vmatpush1.bf16.msra.mxu0 0
    %9394 = vmatprep.subr.bf16.mxu0 0
    %9395 = vmatpush1.bf16.msra.mxu0 0
    %9396 = vmatprep.mubr.bf16.mxu0 0
    %9397 = vmatmul.mubr.bf16.gmra.mrb[0].mxu0 %v1340
    %v9398 = vpop.f32.mrb[0].mxu0
    %v9399 = vadd.f32 0.0, %v9398
    %v9400 = vpop.f32.mrb[0].mxu0
    %v9401 = vpop.f32.mrb[0].mxu0
    %v9402 = vadd.f32 0.0, %v9401
    %v9403 = vpop.f32.mrb[0].mxu0
    %9404 = vdwg.mxu0
    %v9405 = vadd.f32 %v9298, %v9399
    %v9406 = vadd.f32 %v9299, %v9402
    %v9407 = vld [vmem:[%s17] sm:$0xf]
    %v9408 = vld [vmem:[%s17 + $0x4] sm:$0xf]
    %v9409 = vld [vmem:[%s17 + $0x8] sm:$0xf]
    %v9410 = vld [vmem:[%s17 + $0xc] sm:$0xf]
    %v9411 = vld [vmem:[%s17 + $0x10] sm:$0xf]
    %v9412 = vld [vmem:[%s17 + $0x14] sm:$0xf]
    %v9413 = vld [vmem:[%s17 + $0x18] sm:$0xf]
    %v9414 = vld [vmem:[%s17 + $0x1c] sm:$0xf]
    %v9415 = vld [vmem:[%s17 + $0x20] sm:$0xf]
    %v9416 = vld [vmem:[%s17 + $0x24] sm:$0xf]
    %v9417 = vld [vmem:[%s17 + $0x28] sm:$0xf]
    %v9418 = vld [vmem:[%s17 + $0x2c] sm:$0xf]
    %v9419 = vld [vmem:[%s17 + $0x30] sm:$0xf]
    %v9420 = vld [vmem:[%s17 + $0x34] sm:$0xf]
    %v9421 = vld [vmem:[%s17 + $0x38] sm:$0xf]
    %v9422 = vld [vmem:[%s17 + $0x3c] sm:$0xf]
    %v9423 = vpack.c.bf16 %v9076, %v9073
    %v9424 = vld [vmem:[#allocation29] sm:$0xf]
    %v9425 = vld [vmem:[#allocation29 + $0x4] sm:$0xf]
    %v9426 = vld [vmem:[#allocation29 + $0x8] sm:$0xf]
    %v9427 = vld [vmem:[#allocation29 + $0xc] sm:$0xf]
    %v9428 = vld [vmem:[#allocation29 + $0x10] sm:$0xf]
    %v9429 = vld [vmem:[#allocation29 + $0x14] sm:$0xf]
    %v9430 = vld [vmem:[#allocation29 + $0x18] sm:$0xf]
    %v9431 = vld [vmem:[#allocation29 + $0x1c] sm:$0xf]
    %v9432 = vld [vmem:[#allocation29 + $0x20] sm:$0xf]
    %v9433 = vld [vmem:[#allocation29 + $0x24] sm:$0xf]
    %v9434 = vld [vmem:[#allocation29 + $0x28] sm:$0xf]
    %v9435 = vld [vmem:[#allocation29 + $0x2c] sm:$0xf]
    %v9436 = vld [vmem:[#allocation29 + $0x30] sm:$0xf]
    %v9437 = vld [vmem:[#allocation29 + $0x34] sm:$0xf]
    %v9438 = vld [vmem:[#allocation29 + $0x38] sm:$0xf]
    %v9439 = vld [vmem:[#allocation29 + $0x3c] sm:$0xf]
    %v9440 = vpack.c.bf16 %v9406, %v9405
    %v9457 = vunpack.c.l.b16 %v9424
    %v9458 = vunpack.c.l.b16 %v9425
    %v9459 = vunpack.c.l.b16 %v9426
    %v9460 = vunpack.c.l.b16 %v9427
    %v9461 = vunpack.c.l.b16 %v9428
    %v9462 = vunpack.c.l.b16 %v9429
    %v9463 = vunpack.c.l.b16 %v9430
    %v9464 = vunpack.c.l.b16 %v9431
    %v9465 = vunpack.c.l.b16 %v9432
    %v9466 = vunpack.c.l.b16 %v9433
    %v9467 = vunpack.c.l.b16 %v9434
    %v9468 = vunpack.c.l.b16 %v9435
    %v9469 = vunpack.c.l.b16 %v9436
    %v9470 = vunpack.c.l.b16 %v9437
    %v9471 = vunpack.c.l.b16 %v9438
    %v9472 = vunpack.c.l.b16 %v9439
    %v9473 = vpack.c.b16 %v9458, %v9457
    %v9474 = vpack.c.b16 %v9460, %v9459
    %v9475 = vpack.c.b16 %v9462, %v9461
    %v9476 = vpack.c.b16 %v9464, %v9463
    %v9477 = vpack.c.b16 %v9466, %v9465
    %v9478 = vpack.c.b16 %v9468, %v9467
    %v9479 = vpack.c.b16 %v9470, %v9469
    %v9480 = vpack.c.b16 %v9472, %v9471
    %9489 = vmatprep.subr.bf16.mxu0 0
    %9490 = vmatpush1.bf16.msra.mxu0 %v9473
    %9491 = vmatprep.subr.bf16.mxu0 0
    %9492 = vmatpush1.bf16.msra.mxu0 %v9474
    %9493 = vmatprep.subr.bf16.mxu0 0
    %9494 = vmatpush1.bf16.msra.mxu0 %v9475
    %9495 = vmatprep.subr.bf16.mxu0 0
    %9496 = vmatpush1.bf16.msra.mxu0 %v9476
    %9497 = vmatprep.subr.bf16.mxu0 0
    %9498 = vmatpush1.bf16.msra.mxu0 %v9477
    %9499 = vmatprep.subr.bf16.mxu0 0
    %9500 = vmatpush1.bf16.msra.mxu0 %v9478
    %9501 = vmatprep.subr.bf16.mxu0 0
    %9502 = vmatpush1.bf16.msra.mxu0 %v9479
    %9503 = vmatprep.subr.bf16.mxu0 0
    %9504 = vmatpush1.bf16.msra.mxu0 %v9480
    %9505 = vmatprep.subr.bf16.mxu0 0
    %9506 = vmatpush1.bf16.msra.mxu0 0
    %9507 = vmatprep.subr.bf16.mxu0 0
    %9508 = vmatpush1.bf16.msra.mxu0 0
    %9509 = vmatprep.subr.bf16.mxu0 0
    %9510 = vmatpush1.bf16.msra.mxu0 0
    %9511 = vmatprep.subr.bf16.mxu0 0
    %9512 = vmatpush1.bf16.msra.mxu0 0
    %9513 = vmatprep.subr.bf16.mxu0 0
    %9514 = vmatpush1.bf16.msra.mxu0 0
    %9515 = vmatprep.subr.bf16.mxu0 0
    %9516 = vmatpush1.bf16.msra.mxu0 0
    %9517 = vmatprep.subr.bf16.mxu0 0
    %9518 = vmatpush1.bf16.msra.mxu0 0
    %9519 = vmatprep.subr.bf16.mxu0 0
    %9520 = vmatpush1.bf16.msra.mxu0 0
    %9521 = vmatprep.mubr.bf16.mxu0 0
    %9522 = vmatmul.mubr.bf16.gmra.mrb[0].mxu0 %v9440
    %v9523 = vpop.f32.mrb[0].mxu0
    %v9524 = vadd.f32 0.0, %v9523
    %v9525 = vpop.f32.mrb[0].mxu0
    %v9526 = vpop.f32.mrb[0].mxu0
    %v9527 = vadd.f32 0.0, %v9526
    %v9528 = vpop.f32.mrb[0].mxu0
    %9529 = vdwg.mxu0
    %v9546 = vunpack.c.l.b16 %v9407
    %v9547 = vunpack.c.l.b16 %v9408
    %v9548 = vunpack.c.l.b16 %v9409
    %v9549 = vunpack.c.l.b16 %v9410
    %v9550 = vunpack.c.l.b16 %v9411
    %v9551 = vunpack.c.l.b16 %v9412
    %v9552 = vunpack.c.l.b16 %v9413
    %v9553 = vunpack.c.l.b16 %v9414
    %v9554 = vunpack.c.l.b16 %v9415
    %v9555 = vunpack.c.l.b16 %v9416
    %v9556 = vunpack.c.l.b16 %v9417
    %v9557 = vunpack.c.l.b16 %v9418
    %v9558 = vunpack.c.l.b16 %v9419
    %v9559 = vunpack.c.l.b16 %v9420
    %v9560 = vunpack.c.l.b16 %v9421
    %v9561 = vunpack.c.l.b16 %v9422
    %v9562 = vpack.c.b16 %v9547, %v9546
    %v9563 = vpack.c.b16 %v9549, %v9548
    %v9564 = vpack.c.b16 %v9551, %v9550
    %v9565 = vpack.c.b16 %v9553, %v9552
    %v9566 = vpack.c.b16 %v9555, %v9554
    %v9567 = vpack.c.b16 %v9557, %v9556
    %v9568 = vpack.c.b16 %v9559, %v9558
    %v9569 = vpack.c.b16 %v9561, %v9560
    %9578 = vmatprep.subr.bf16.mxu0 0
    %9579 = vmatpush1.bf16.msra.mxu0 %v9562
    %9580 = vmatprep.subr.bf16.mxu0 0
    %9581 = vmatpush1.bf16.msra.mxu0 %v9563
    %9582 = vmatprep.subr.bf16.mxu0 0
    %9583 = vmatpush1.bf16.msra.mxu0 %v9564
    %9584 = vmatprep.subr.bf16.mxu0 0
    %9585 = vmatpush1.bf16.msra.mxu0 %v9565
    %9586 = vmatprep.subr.bf16.mxu0 0
    %9587 = vmatpush1.bf16.msra.mxu0 %v9566
    %9588 = vmatprep.subr.bf16.mxu0 0
    %9589 = vmatpush1.bf16.msra.mxu0 %v9567
    %9590 = vmatprep.subr.bf16.mxu0 0
    %9591 = vmatpush1.bf16.msra.mxu0 %v9568
    %9592 = vmatprep.subr.bf16.mxu0 0
    %9593 = vmatpush1.bf16.msra.mxu0 %v9569
    %9594 = vmatprep.subr.bf16.mxu0 0
    %9595 = vmatpush1.bf16.msra.mxu0 0
    %9596 = vmatprep.subr.bf16.mxu0 0
    %9597 = vmatpush1.bf16.msra.mxu0 0
    %9598 = vmatprep.subr.bf16.mxu0 0
    %9599 = vmatpush1.bf16.msra.mxu0 0
    %9600 = vmatprep.subr.bf16.mxu0 0
    %9601 = vmatpush1.bf16.msra.mxu0 0
    %9602 = vmatprep.subr.bf16.mxu0 0
    %9603 = vmatpush1.bf16.msra.mxu0 0
    %9604 = vmatprep.subr.bf16.mxu0 0
    %9605 = vmatpush1.bf16.msra.mxu0 0
    %9606 = vmatprep.subr.bf16.mxu0 0
    %9607 = vmatpush1.bf16.msra.mxu0 0
    %9608 = vmatprep.subr.bf16.mxu0 0
    %9609 = vmatpush1.bf16.msra.mxu0 0
    %9610 = vmatprep.mubr.bf16.mxu0 0
    %9611 = vmatmul.mubr.bf16.gmra.mrb[0].mxu0 %v9423
    %v9612 = vpop.f32.mrb[0].mxu0
    %v9613 = vadd.f32 %v9524, %v9612
    %v9614 = vpop.f32.mrb[0].mxu0
    %v9615 = vpop.f32.mrb[0].mxu0
    %v9616 = vadd.f32 %v9527, %v9615
    %v9617 = vpop.f32.mrb[0].mxu0
    %9618 = vdwg.mxu0
    %v9619 = vld [vmem:[%s19] sm:$0x1]
    %v9621 = vlaneseq
    %v9622 = vshrl.u32 %v9621, 7
    %v9623 = vsub.s32 0, %v9622
    %v9624 = vrot.slane %v9619, %v9623
    %v9626 = vadd.f32 %v9613, %v9624
    %v9627 = vadd.f32 %v9616, %v9624
    %v9628 = vtanh.pop %v9626
    %v9629 = vtanh.pop %v9627
    %v9630 = vld [vmem:[%s20] sm:$0x1]
    %v9632 = vlaneseq
    %v9633 = vshrl.u32 %v9632, 7
    %v9634 = vsub.s32 0, %v9633
    %v9635 = vrot.slane %v9630, %v9634
    %v9637 = vmul.f32 %v9628, %v9635
    %v9638 = vmul.f32 %v9629, %v9635
    %9639 = vadd.xlane.f32.xlu0 %v9637
    %v9640 = vpop.xlane.xlu0 %9639
    %9641 = vadd.xlane.f32.xlu0 %v9638
    %v9642 = vpop.xlane.xlu0 %9641
    %v9643 = vld [vmem:[#allocation5] sm:$0x1]
    %v9645 = vlaneseq
    %v9646 = vshrl.u32 %v9645, 7
    %v9647 = vsub.s32 0, %v9646
    %v9648 = vrot.slane %v9643, %v9647
    %v9650 = vadd.f32 %v9640, %v9648
    %v9651 = vadd.f32 %v9642, %v9648
    %v9652 = vmul.f32 %v9650, 0.5
    %v9653 = vmul.f32 %v9651, 0.5
    %v9654 = vtanh.pop %v9652
    %v9655 = vtanh.pop %v9653
    %v9656 = vadd.f32 %v9654, 1.0
    %v9657 = vadd.f32 %v9655, 1.0
    %v9658 = vmul.f32 %v9656, 0.5
    %v9659 = vmul.f32 %v9657, 0.5
    %vm9660 = vcmask 7168
    %9661 = vst.msk [vmem:[%s22] sm:$0xff] %vm9660, %v9658
    %9662 = vst.msk [vmem:[%s22 + $0x8] sm:$0xff] %vm9660, %v9659
    // Predicated region
    $region154: #{tpu_custom_call.1} parent=1 // pred_check
      _
    $region155: #{tpu_custom_call.1} parent=1 // pred_check_branch
      %9664 = sbr.rel (0) target = $region157
    $region156: #{tpu_custom_call.1} parent=1 // pred_region
      _
    $region157: #{tpu_custom_call.1} parent=1 // pred_fallthru
      _
    // Predicated region
    $region158: #{tpu_custom_call.1} parent=1 // pred_check
      _
    $region159: #{tpu_custom_call.1} parent=1 // pred_check_branch
      %9666 = sbr.rel (0) target = $region161
    $region160: #{tpu_custom_call.1} parent=1 // pred_region
      _
    $region161: #{tpu_custom_call.1} parent=1 // pred_fallthru
      _
    %9667 = vsyncpa [#allocation7], 1
    %9668 = vsyncpa [#allocation9], 1
    %9669 = vsyncpa [#allocation12], 1
    %9670 = vsyncpa [#allocation15], 1
    %9671 = vsyncpa [#allocation18], 1
    %9672 = vsyncpa [#allocation21], 1
    %9673 = vsyncpa [#allocation24], 1
    %9674 = vsyncpa [#allocation27], 1
    %9675 = vsyncpa [#allocation30], 1

</llo_original>
